<compile_context>
chip_gen: v7x
topology: tpu7x:2x2x1
jax: 0.10.0
libtpu: 0.0.40
codegen_flags: <defaults>
</compile_context>

<pallas_src>
import jax
import jax.numpy as jnp
from jax.experimental import pallas as pl
from jax.experimental.pallas import tpu as pltpu

EPS = 1e-5     # PyTorch BatchNorm2d default eps
LANES = 128    # TPU lane width; per-gate channel padding target


def _round_up(x, m):
    return ((x + m - 1) // m) * m


def _pad_rows(a, m_pad):
    m = a.shape[0]
    return a if m == m_pad else jnp.pad(a, ((0, m_pad - m), (0, 0)))


# ----------------------------------------------------------------------------
# Pallas kernels: bf16 MXU matmul (f32 accumulate), optional fused BN stats
# ----------------------------------------------------------------------------
def _matmul_kernel(a_ref, b_ref, o_ref):
    o_ref[...] = jnp.dot(a_ref[...], b_ref[...],
                         preferred_element_type=jnp.float32).astype(o_ref.dtype)


def _matmul_stats_kernel(a_ref, b_ref, o_ref, sum_ref, sq_ref):
    # Per-block partial sums (no cross-iteration accumulator) so the grid axis
    # can be "parallel" and shard across both TensorCores on v7x.
    y = jnp.dot(a_ref[...], b_ref[...], preferred_element_type=jnp.float32)
    o_ref[...] = y.astype(o_ref.dtype)
    # Padded (zero) rows of A give zero rows of y -> sums are unaffected.
    # (Relies on bias=False convs; a bias would corrupt the stats.)
    sum_ref[...] = jnp.sum(y, axis=0, keepdims=True)
    sq_ref[...] = jnp.sum(y * y, axis=0, keepdims=True)


def pallas_matmul(a_bf16, b_bf16, tm, out_dtype=jnp.bfloat16):
    """(M, K) bf16 @ (K, N) bf16 -> (M_pad, N) out_dtype, lane-dense output."""
    m, k = a_bf16.shape
    n_out = b_bf16.shape[1]
    m_pad = _round_up(m, tm)
    a_bf16 = _pad_rows(a_bf16, m_pad)
    return pl.pallas_call(
        _matmul_kernel,
        out_shape=jax.ShapeDtypeStruct((m_pad, n_out), out_dtype),
        grid=(m_pad // tm,),
        in_specs=[pl.BlockSpec((tm, k), lambda i: (i, 0)),
                  pl.BlockSpec((k, n_out), lambda i: (0, 0))],
        out_specs=pl.BlockSpec((tm, n_out), lambda i: (i, 0)),
        compiler_params=pltpu.CompilerParams(
            dimension_semantics=("parallel",)),
    )(a_bf16, b_bf16)


def pallas_matmul_stats(a_bf16, b_bf16, tm, out_dtype=jnp.bfloat16):
    """Matmul plus per-column mean / biased variance (fused in the epilogue)."""
    m, k = a_bf16.shape
    n_out = b_bf16.shape[1]
    m_pad = _round_up(m, tm)
    nblk = m_pad // tm
    a_bf16 = _pad_rows(a_bf16, m_pad)
    out, s, sq = pl.pallas_call(
        _matmul_stats_kernel,
        out_shape=(jax.ShapeDtypeStruct((m_pad, n_out), out_dtype),
                   jax.ShapeDtypeStruct((nblk, n_out), jnp.float32),
                   jax.ShapeDtypeStruct((nblk, n_out), jnp.float32)),
        grid=(nblk,),
        in_specs=[pl.BlockSpec((tm, k), lambda i: (i, 0)),
                  pl.BlockSpec((k, n_out), lambda i: (0, 0))],
        out_specs=(pl.BlockSpec((tm, n_out), lambda i: (i, 0)),
                   pl.BlockSpec((1, n_out), lambda i: (i, 0)),
                   pl.BlockSpec((1, n_out), lambda i: (i, 0))),
        compiler_params=pltpu.CompilerParams(
            dimension_semantics=("parallel",)),
    )(a_bf16, b_bf16)
    mean = jnp.sum(s, axis=0) / m                        # true row count, not padded
    var = jnp.maximum(jnp.sum(sq, axis=0) / m - mean * mean, 0.0)
    return out, mean, var


# ----------------------------------------------------------------------------
# Pallas kernels: lane-dense elementwise gate / output math (f32 internally)
# ----------------------------------------------------------------------------
def _gate_kernel(pre_ref, sh_ref, sr_ref, br_ref, sz_ref, bz_ref,
                 ns_ref, z_ref):
    pre_r = pre_ref[:, :LANES].astype(jnp.float32)       # fused rz: r in [0,128)
    pre_z = pre_ref[:, LANES:].astype(jnp.float32)       #           z in [128,256)
    sh = sh_ref[...].astype(jnp.float32)
    r = jax.nn.sigmoid(pre_r * sr_ref[...] + br_ref[...])
    z = jax.nn.sigmoid(pre_z * sz_ref[...] + bz_ref[...])
    ns_ref[...] = (r * sh).astype(ns_ref.dtype)
    z_ref[...] = z.astype(z_ref.dtype)


def _output_kernel(pre_ref, z_ref, sh_ref, s_ref, b_ref, out_ref):
    hidden = jnp.tanh(pre_ref[...].astype(jnp.float32) * s_ref[...] + b_ref[...])
    z = z_ref[...].astype(jnp.float32)
    sh = sh_ref[...].astype(jnp.float32)
    out_ref[...] = ((1.0 - z) * sh + z * hidden).astype(out_ref.dtype)


def pallas_gates(pre_rz, sh, sr, br, sz, bz, tr):
    m_pad = pre_rz.shape[0]
    big2 = pl.BlockSpec((tr, 2 * LANES), lambda i: (i, 0))
    big = pl.BlockSpec((tr, LANES), lambda i: (i, 0))
    row = pl.BlockSpec((1, LANES), lambda i: (0, 0))
    return pl.pallas_call(
        _gate_kernel,
        out_shape=(jax.ShapeDtypeStruct((m_pad, LANES), jnp.bfloat16),  # new_state
                   jax.ShapeDtypeStruct((m_pad, LANES), jnp.bfloat16)),  # z
        grid=(m_pad // tr,),
        in_specs=[big2, big, row, row, row, row],
        out_specs=(big, big),
        compiler_params=pltpu.CompilerParams(
            dimension_semantics=("parallel",)),
    )(pre_rz, sh, sr, br, sz, bz)


def pallas_output(pre_h, z, sh, s_row, b_row, tr):
    m_pad = pre_h.shape[0]
    big = pl.BlockSpec((tr, LANES), lambda i: (i, 0))
    row = pl.BlockSpec((1, LANES), lambda i: (0, 0))
    return pl.pallas_call(
        _output_kernel,
        out_shape=jax.ShapeDtypeStruct((m_pad, LANES), jnp.float32),
        grid=(m_pad // tr,),
        in_specs=[big, big, big, row, row],
        out_specs=big,
        compiler_params=pltpu.CompilerParams(
            dimension_semantics=("parallel",)),
    )(pre_h, z, sh, s_row, b_row)


# ----------------------------------------------------------------------------
# Glue: im2col (pure slicing, bf16 in / bf16 out) + weight reshapes
# ----------------------------------------------------------------------------
def im2col_nhwc(x, k, pad):
    """x: (N, H, W, C) -> patches (N*Ho*Wo, k*k*C) for a stride-1 conv."""
    N, H, W, C = x.shape
    xp = jnp.pad(x, ((0, 0), (pad, pad), (pad, pad), (0, 0)))
    Ho = H + 2 * pad - k + 1
    Wo = W + 2 * pad - k + 1
    cols = [xp[:, di:di + Ho, dj:dj + Wo, :]
            for di in range(k) for dj in range(k)]
    patches = jnp.concatenate(cols, axis=-1)             # (N, Ho, Wo, k*k*C)
    return patches.reshape(N * Ho * Wo, k * k * C)


def conv_weight_to_mat(w, n_pad=LANES):
    """(Cout, Cin, kH, kW) -> (kH*kW*Cin, n_pad) bf16, output zero-padded to 128."""
    cout = w.shape[0]
    mat = jnp.transpose(w, (2, 3, 1, 0)).reshape(-1, cout)
    return jnp.pad(mat, ((0, 0), (0, n_pad - cout))).astype(jnp.bfloat16)


def transconv_phase_weights(w_up, n_pad=LANES):
    """ConvTranspose2d(k=4, s=2, p=1) weight (Cin, Cout, 4, 4) -> fused 4-phase
    matrix (2*2*Cin, 4*n_pad) bf16 matching a 2x2 im2col (pad=1) on the input.

    Output pixel (2p+a, 2q+b) uses input window rows p-1+a..p+a, cols q-1+b..q+b
    with kernel taps ky = (3-a)-2*dy, kx = (3-b)-2*dx.
    """
    cin, cout = w_up.shape[0], w_up.shape[1]
    mats = []
    for a in (0, 1):
        for b in (0, 1):
            sub = jnp.stack(
                [jnp.stack([w_up[:, :, (3 - a) - 2 * dy, (3 - b) - 2 * dx]
                            for dx in (0, 1)], axis=0)
                 for dy in (0, 1)], axis=0)               # (dy, dx, Cin, Cout)
            mat = sub.reshape(4 * cin, cout)
            mats.append(jnp.pad(mat, ((0, 0), (0, n_pad - cout))))
    return jnp.concatenate(mats, axis=1).astype(jnp.bfloat16)   # (4*Cin, 4*128)


def _bn_scale_bias(gamma, beta, mean, var):
    """Per-channel BN affine folded into scale/bias, as lane-dense (1,128) rows."""
    c = gamma.shape[0]
    g = jnp.zeros((LANES,), jnp.float32).at[:c].set(gamma.astype(jnp.float32))
    b = jnp.zeros((LANES,), jnp.float32).at[:c].set(beta.astype(jnp.float32))
    scale = g * jax.lax.rsqrt(var + EPS)                 # padded cols: gamma=0 -> 0
    bias = b - mean * scale
    return scale.reshape(1, LANES), bias.reshape(1, LANES)


# ----------------------------------------------------------------------------
# ConvGRUCell forward (Pallas path)
# ----------------------------------------------------------------------------
def conv_gru_cell_forward(params, x, old_state, attr):
    """x: (N, in_dim, 2h, 2w), old_state: (N, 2*in_dim, h, w), attr: (N, n_attrs)."""
    n_attrs = attr.shape[1]
    k = params['w_r'].shape[-1]
    c = params['w_r'].shape[0]                 # out_dim
    n, _, h, w = old_state.shape
    hh, ww = 2 * h, 2 * w
    m = n * hh * ww

    if c > LANES:
        # TODO(synk): tile channels over multiple 128-lane groups for out_dim > 128.
        raise NotImplementedError("out_dim > 128 not supported")

    to_nhwc = lambda a: jnp.transpose(a, (0, 2, 3, 1))
    to_nchw = lambda a: jnp.transpose(a, (0, 3, 1, 2))

    # bf16 BEFORE concat/im2col: halves the bytes of the biggest intermediates.
    x_nhwc = to_nhwc(x).astype(jnp.bfloat16)
    old_nhwc = to_nhwc(old_state).astype(jnp.bfloat16)
    attr_map = jnp.broadcast_to(
        attr.reshape(n, 1, 1, n_attrs).astype(jnp.bfloat16), (n, h, w, n_attrs))
    ct_in = jnp.concatenate([old_nhwc, attr_map], axis=-1)

    # --- ConvTranspose2d(4, 2, 1): 4-phase decomposition, one fused matmul ---
    # TODO(synk): build the 2x2/3x3 taps inside the matmul kernel (spatial row
    #   tiles + 1-row halo) instead of XLA-side im2col -- the remaining big lever.
    patches_up = im2col_nhwc(ct_in, 2, 1)                 # (n*(h+1)*(w+1), 4*Cin)
    m_up = patches_up.shape[0]
    tm_up = min(512, _round_up(m_up, 16))
    res = pallas_matmul(patches_up, transconv_phase_weights(params['w_up']),
                        tm=tm_up)                         # (m_up_pad, 4*128) bf16
    res = res[:m_up].reshape(n, h + 1, w + 1, 4, LANES)
    # phase (a,b): output pixel (2p+a, 2q+b) uses patch (p+a, q+b)
    ee = res[:, :h, :w, 0]
    eo = res[:, :h, 1:, 1]
    oe = res[:, 1:, :w, 2]
    oo = res[:, 1:, 1:, 3]
    # (n,h,2,w,2,128) is bitwise identical to (n,2h,2w,128): final reshape is free.
    # TODO(synk): fuse this de-interleave into the up-conv matmul's out_specs.
    state_hat = jnp.stack([jnp.stack([ee, eo], axis=3),
                           jnp.stack([oe, oo], axis=3)], axis=2)
    state_hat = state_hat.reshape(n, hh, ww, LANES)       # bf16, channels 0..c-1 valid

    # Row tile shared by the gate/hidden matmuls and the elementwise kernels so
    # the (m_pad, 128/256) slabs flow between pallas_calls with zero repacking.
    tr = min(1024, _round_up(m, 16))
    m_pad = _round_up(m, tr)

    # --- reset + update gates: ONE fused conv matmul + BN stats in epilogue --
    rz_in = jnp.concatenate([x_nhwc, state_hat[..., :c]], axis=-1)
    patches_rz = im2col_nhwc(rz_in, k, (k - 1) // 2)      # (m, k*k*(in+c)) bf16
    w_rz = jnp.concatenate([conv_weight_to_mat(params['w_r']),
                            conv_weight_to_mat(params['w_z'])], axis=1)
    pre_rz, mean_rz, var_rz = pallas_matmul_stats(patches_rz, w_rz, tm=tr)

    scale_r, bias_r = _bn_scale_bias(params['bn_r_gamma'], params['bn_r_beta'],
                                     mean_rz[:LANES], var_rz[:LANES])
    scale_z, bias_z = _bn_scale_bias(params['bn_z_gamma'], params['bn_z_beta'],
                                     mean_rz[LANES:], var_rz[LANES:])

    sh_slab = _pad_rows(state_hat.reshape(m, LANES), m_pad)

    ns_slab, z_slab = pallas_gates(pre_rz, sh_slab, scale_r, bias_r,
                                   scale_z, bias_z, tr)
    new_state = ns_slab[:m].reshape(n, hh, ww, LANES)     # bf16

    # --- hidden: conv matmul + fused BN stats, then tanh + gated blend -------
    h_in = jnp.concatenate([x_nhwc, new_state[..., :c]], axis=-1)
    patches_h = im2col_nhwc(h_in, k, (k - 1) // 2)
    pre_h, mean_h, var_h = pallas_matmul_stats(
        patches_h, conv_weight_to_mat(params['w_h']), tm=tr)
    scale_h, bias_h = _bn_scale_bias(params['bn_h_gamma'], params['bn_h_beta'],
                                     mean_h, var_h)

    out_slab = pallas_output(pre_h, z_slab, sh_slab, scale_h, bias_h, tr)
    out_nhwc = out_slab[:m].reshape(n, hh, ww, LANES)[..., :c]
    new_state_nhwc = new_state[..., :c].astype(jnp.float32)

    return to_nchw(out_nhwc), to_nchw(new_state_nhwc)


# ----------------------------------------------------------------------------
# Pure-JAX reference (lax.conv based) for correctness checking
# ----------------------------------------------------------------------------
def reference_forward(params, x, old_state, attr):
    n_attrs = attr.shape[1]
    N, _, h, w = old_state.shape
    dn = ('NCHW', 'OIHW', 'NCHW')

    attr_map = jnp.broadcast_to(attr.reshape(N, n_attrs, 1, 1),
                                (N, n_attrs, h, w))
    ct_in = jnp.concatenate([old_state, attr_map], axis=1)
    w_up_conv = jnp.flip(jnp.transpose(params['w_up'], (1, 0, 2, 3)),
                         axis=(2, 3))
    state_hat = jax.lax.conv_general_dilated(
        ct_in, w_up_conv, window_strides=(1, 1), padding=((2, 2), (2, 2)),
        lhs_dilation=(2, 2), dimension_numbers=dn)

    def conv_bn(xin, wconv, gamma, beta, act):
        y = jax.lax.conv_general_dilated(xin, wconv, (1, 1),
                                         ((1, 1), (1, 1)),
                                         dimension_numbers=dn)
        mean = jnp.mean(y, axis=(0, 2, 3), keepdims=True)
        var = jnp.mean((y - mean) ** 2, axis=(0, 2, 3), keepdims=True)
        yhat = (y - mean) / jnp.sqrt(var + EPS)
        yhat = yhat * gamma.reshape(1, -1, 1, 1) + beta.reshape(1, -1, 1, 1)
        return act(yhat)

    rz_in = jnp.concatenate([x, state_hat], axis=1)
    r = conv_bn(rz_in, params['w_r'], params['bn_r_gamma'],
                params['bn_r_beta'], jax.nn.sigmoid)
    z = conv_bn(rz_in, params['w_z'], params['bn_z_gamma'],
                params['bn_z_beta'], jax.nn.sigmoid)
    new_state = r * state_hat
    h_in = jnp.concatenate([x, new_state], axis=1)
    hidden = conv_bn(h_in, params['w_h'], params['bn_h_gamma'],
                     params['bn_h_beta'], jnp.tanh)
    output = (1 - z) * state_hat + z * hidden
    return output, new_state


# ----------------------------------------------------------------------------
# Deterministic parameter init (shapes from ConvGRUCell.__init__)
# ----------------------------------------------------------------------------
def init_params(key, n_attrs, in_dim, out_dim, kernel_size=3):
    ks = jax.random.split(key, 10)
    cin_ct = in_dim * 2 + n_attrs
    cin_g = in_dim + out_dim
    wn = lambda k, shape: 0.1 * jax.random.normal(k, shape, jnp.float32)
    return dict(
        # ConvTranspose2d weight: (Cin, Cout, 4, 4)
        w_up=wn(ks[0], (cin_ct, out_dim, 4, 4)),
        # Conv2d weights: (Cout, Cin, k, k)
        w_r=wn(ks[1], (out_dim, cin_g, kernel_size, kernel_size)),
        w_z=wn(ks[2], (out_dim, cin_g, kernel_size, kernel_size)),
        w_h=wn(ks[3], (out_dim, cin_g, kernel_size, kernel_size)),
        # BatchNorm affine params (training-mode batch stats are used)
        bn_r_gamma=1.0 + 0.1 * jax.random.normal(ks[4], (out_dim,), jnp.float32),
        bn_r_beta=0.1 * jax.random.normal(ks[5], (out_dim,), jnp.float32),
        bn_z_gamma=1.0 + 0.1 * jax.random.normal(ks[6], (out_dim,), jnp.float32),
        bn_z_beta=0.1 * jax.random.normal(ks[7], (out_dim,), jnp.float32),
        bn_h_gamma=1.0 + 0.1 * jax.random.normal(ks[8], (out_dim,), jnp.float32),
        bn_h_beta=0.1 * jax.random.normal(ks[9], (out_dim,), jnp.float32),
    )


if __name__ == "__main__":
    key = jax.random.PRNGKey(0)
    n_attrs, in_dim, out_dim = 4, 4, 8
    n, h, w = 2, 8, 8                      # old_state spatial; input is 2h x 2w

    kp, kx, ks_, ka = jax.random.split(key, 4)
    params = init_params(kp, n_attrs, in_dim, out_dim)
    x = jax.random.normal(kx, (n, in_dim, 2 * h, 2 * w), jnp.float32)
    old_state = jax.random.normal(ks_, (n, 2 * in_dim, h, w), jnp.float32)
    attr = jax.random.normal(ka, (n, n_attrs), jnp.float32)

    fwd = jax.jit(conv_gru_cell_forward)
    output, new_state = jax.block_until_ready(fwd(params, x, old_state, attr))

    ref_out, ref_ns = reference_forward(params, x, old_state, attr)
    assert output.shape == (n, out_dim, 2 * h, 2 * w)
    assert new_state.shape == (n, out_dim, 2 * h, 2 * w)
    # bf16 MXU operands + bf16-stored intermediate streams (f32 accumulation /
    # f32 gate math) -> slightly looser tolerance than a pure-f32 path.
    assert jnp.allclose(output, ref_out, atol=4e-2, rtol=4e-2), \
        float(jnp.max(jnp.abs(output - ref_out)))
    assert jnp.allclose(new_state, ref_ns, atol=4e-2, rtol=4e-2), \
        float(jnp.max(jnp.abs(new_state - ref_ns)))
    print("KERNEL_OK")
</pallas_src>

<mosaic_0001>
module attributes {stable_mosaic.version = 11 : i64} {
  func.func @_matmul_kernel(%arg0: i32, %arg1: memref<176x48xbf16, #tpu.memory_space<vmem>>, %arg2: memref<48x512xbf16, #tpu.memory_space<vmem>>, %arg3: memref<176x512xbf16, #tpu.memory_space<vmem>>) attributes {dimension_semantics = [#tpu.dimension_semantics<parallel>], iteration_bounds = array<i64: 1>, scalar_prefetch = 0 : i64, scratch_operands = 0 : i64, tpu.core_type = #tpu.core_type<tc>, window_params = [{transform_indices = @transform_0, window_bounds = array<i64: 176, 48>}, {pipeline_mode = #tpu.pipeline_mode<synchronous>, transform_indices = @transform_1, window_bounds = array<i64: 48, 512>}, {transform_indices = @transform_2, window_bounds = array<i64: 176, 512>}]} {
    %c0 = arith.constant 0 : index
    %c0_0 = arith.constant 0 : index
    %0 = vector.load %arg1[%c0, %c0_0] : memref<176x48xbf16, #tpu.memory_space<vmem>>, vector<176x48xbf16>
    %c0_1 = arith.constant 0 : index
    %c0_2 = arith.constant 0 : index
    %1 = vector.load %arg2[%c0_1, %c0_2] : memref<48x512xbf16, #tpu.memory_space<vmem>>, vector<48x512xbf16>
    %cst = arith.constant dense<0.000000e+00> : vector<176x512xf32>
    %2 = tpu.matmul %0, %1, %cst {dimension_numbers = #tpu.dot_dimension_numbers<[1], [0], [0], [1], [0, 0, 1, 1], [], []>} : vector<176x48xbf16>, vector<48x512xbf16>, vector<176x512xf32> -> vector<176x512xf32>
    %3 = arith.truncf %2 : vector<176x512xf32> to vector<176x512xbf16>
    %c0_3 = arith.constant 0 : index
    %c0_4 = arith.constant 0 : index
    %4 = vector.load %arg3[%c0_3, %c0_4] : memref<176x512xbf16, #tpu.memory_space<vmem>>, vector<176x512xbf16>
    tpu.vector_store %arg3[%c0_3, %c0_4], %3 {strides = array<i32>} : memref<176x512xbf16, #tpu.memory_space<vmem>>, vector<176x512xbf16>,
    return
  }
  func.func @transform_0(%arg0: i32) -> (i32, i32) {
    %c0_i32 = arith.constant 0 : i32
    %c0_i32_0 = arith.constant 0 : i32
    return %arg0, %c0_i32 : i32, i32
  }
  func.func @transform_1(%arg0: i32) -> (i32, i32) {
    %c0_i32 = arith.constant 0 : i32
    %c0_i32_0 = arith.constant 0 : i32
    %c0_i32_1 = arith.constant 0 : i32
    return %c0_i32, %c0_i32_0 : i32, i32
  }
  func.func @transform_2(%arg0: i32) -> (i32, i32) {
    %c0_i32 = arith.constant 0 : i32
    %c0_i32_0 = arith.constant 0 : i32
    return %arg0, %c0_i32 : i32, i32
  }
}

module attributes {stable_mosaic.version = 11 : i64} {
  func.func @_matmul_stats_kernel(%arg0: i32, %arg1: memref<512x108xbf16, #tpu.memory_space<vmem>>, %arg2: memref<108x256xbf16, #tpu.memory_space<vmem>>, %arg3: memref<512x256xbf16, #tpu.memory_space<vmem>>, %arg4: memref<1x256xf32, #tpu.memory_space<vmem>>, %arg5: memref<1x256xf32, #tpu.memory_space<vmem>>) attributes {dimension_semantics = [#tpu.dimension_semantics<parallel>], iteration_bounds = array<i64: 1>, scalar_prefetch = 0 : i64, scratch_operands = 0 : i64, tpu.core_type = #tpu.core_type<tc>, window_params = [{transform_indices = @transform_0, window_bounds = array<i64: 512, 108>}, {pipeline_mode = #tpu.pipeline_mode<synchronous>, transform_indices = @transform_1, window_bounds = array<i64: 108, 256>}, {transform_indices = @transform_2, window_bounds = array<i64: 512, 256>}, {transform_indices = @transform_3, window_bounds = array<i64: 1, 256>}, {transform_indices = @transform_4, window_bounds = array<i64: 1, 256>}]} {
    %c0 = arith.constant 0 : index
    %c0_0 = arith.constant 0 : index
    %0 = vector.load %arg1[%c0, %c0_0] : memref<512x108xbf16, #tpu.memory_space<vmem>>, vector<512x108xbf16>
    %c0_1 = arith.constant 0 : index
    %c0_2 = arith.constant 0 : index
    %1 = vector.load %arg2[%c0_1, %c0_2] : memref<108x256xbf16, #tpu.memory_space<vmem>>, vector<108x256xbf16>
    %cst = arith.constant dense<0.000000e+00> : vector<512x256xf32>
    %2 = tpu.matmul %0, %1, %cst {dimension_numbers = #tpu.dot_dimension_numbers<[1], [0], [0], [1], [0, 0, 1, 1], [], []>} : vector<512x108xbf16>, vector<108x256xbf16>, vector<512x256xf32> -> vector<512x256xf32>
    %3 = arith.truncf %2 : vector<512x256xf32> to vector<512x256xbf16>
    %c0_3 = arith.constant 0 : index
    %c0_4 = arith.constant 0 : index
    %4 = vector.load %arg3[%c0_3, %c0_4] : memref<512x256xbf16, #tpu.memory_space<vmem>>, vector<512x256xbf16>
    tpu.vector_store %arg3[%c0_3, %c0_4], %3 {strides = array<i32>} : memref<512x256xbf16, #tpu.memory_space<vmem>>, vector<512x256xbf16>,
    %cst_5 = arith.constant dense<0.000000e+00> : vector<256xf32>
    %5 = vector.multi_reduction <add>, %2, %cst_5 [0] : vector<512x256xf32> to vector<256xf32>
    %6 = vector.shape_cast %5 : vector<256xf32> to vector<1x256xf32>
    %c0_6 = arith.constant 0 : index
    %c0_7 = arith.constant 0 : index
    %7 = vector.load %arg4[%c0_6, %c0_7] : memref<1x256xf32, #tpu.memory_space<vmem>>, vector<1x256xf32>
    tpu.vector_store %arg4[%c0_6, %c0_7], %6 {strides = array<i32>} : memref<1x256xf32, #tpu.memory_space<vmem>>, vector<1x256xf32>,
    %8 = arith.mulf %2, %2 : vector<512x256xf32>
    %cst_8 = arith.constant dense<0.000000e+00> : vector<256xf32>
    %9 = vector.multi_reduction <add>, %8, %cst_8 [0] : vector<512x256xf32> to vector<256xf32>
    %10 = vector.shape_cast %9 : vector<256xf32> to vector<1x256xf32>
    %c0_9 = arith.constant 0 : index
    %c0_10 = arith.constant 0 : index
    %11 = vector.load %arg5[%c0_9, %c0_10] : memref<1x256xf32, #tpu.memory_space<vmem>>, vector<1x256xf32>
    tpu.vector_store %arg5[%c0_9, %c0_10], %10 {strides = array<i32>} : memref<1x256xf32, #tpu.memory_space<vmem>>, vector<1x256xf32>,
    return
  }
  func.func @transform_0(%arg0: i32) -> (i32, i32) {
    %c0_i32 = arith.constant 0 : i32
    %c0_i32_0 = arith.constant 0 : i32
    return %arg0, %c0_i32 : i32, i32
  }
  func.func @transform_1(%arg0: i32) -> (i32, i32) {
    %c0_i32 = arith.constant 0 : i32
    %c0_i32_0 = arith.constant 0 : i32
    %c0_i32_1 = arith.constant 0 : i32
    return %c0_i32, %c0_i32_0 : i32, i32
  }
  func.func @transform_2(%arg0: i32) -> (i32, i32) {
    %c0_i32 = arith.constant 0 : i32
    %c0_i32_0 = arith.constant 0 : i32
    return %arg0, %c0_i32 : i32, i32
  }
  func.func @transform_3(%arg0: i32) -> (i32, i32) {
    %c0_i32 = arith.constant 0 : i32
    %c0_i32_0 = arith.constant 0 : i32
    return %arg0, %c0_i32 : i32, i32
  }
  func.func @transform_4(%arg0: i32) -> (i32, i32) {
    %c0_i32 = arith.constant 0 : i32
    %c0_i32_0 = arith.constant 0 : i32
    return %arg0, %c0_i32 : i32, i32
  }
}

module attributes {stable_mosaic.version = 11 : i64} {
  func.func @_gate_kernel(%arg0: i32, %arg1: memref<512x256xbf16, #tpu.memory_space<vmem>>, %arg2: memref<512x128xbf16, #tpu.memory_space<vmem>>, %arg3: memref<1x128xf32, #tpu.memory_space<vmem>>, %arg4: memref<1x128xf32, #tpu.memory_space<vmem>>, %arg5: memref<1x128xf32, #tpu.memory_space<vmem>>, %arg6: memref<1x128xf32, #tpu.memory_space<vmem>>, %arg7: memref<512x128xbf16, #tpu.memory_space<vmem>>, %arg8: memref<512x128xbf16, #tpu.memory_space<vmem>>) attributes {dimension_semantics = [#tpu.dimension_semantics<parallel>], iteration_bounds = array<i64: 1>, scalar_prefetch = 0 : i64, scratch_operands = 0 : i64, tpu.core_type = #tpu.core_type<tc>, window_params = [{transform_indices = @transform_0, window_bounds = array<i64: 512, 256>}, {transform_indices = @transform_1, window_bounds = array<i64: 512, 128>}, {pipeline_mode = #tpu.pipeline_mode<synchronous>, transform_indices = @transform_2, window_bounds = array<i64: 1, 128>}, {pipeline_mode = #tpu.pipeline_mode<synchronous>, transform_indices = @transform_3, window_bounds = array<i64: 1, 128>}, {pipeline_mode = #tpu.pipeline_mode<synchronous>, transform_indices = @transform_4, window_bounds = array<i64: 1, 128>}, {pipeline_mode = #tpu.pipeline_mode<synchronous>, transform_indices = @transform_5, window_bounds = array<i64: 1, 128>}, {transform_indices = @transform_6, window_bounds = array<i64: 512, 128>}, {transform_indices = @transform_7, window_bounds = array<i64: 512, 128>}]} {
    %c0 = arith.constant 0 : index
    %c0_0 = arith.constant 0 : index
    %0 = vector.load %arg1[%c0, %c0_0] : memref<512x256xbf16, #tpu.memory_space<vmem>>, vector<512x128xbf16>
    %1 = arith.extf %0 : vector<512x128xbf16> to vector<512x128xf32>
    %c0_1 = arith.constant 0 : index
    %c128 = arith.constant 128 : index
    %2 = vector.load %arg1[%c0_1, %c128] : memref<512x256xbf16, #tpu.memory_space<vmem>>, vector<512x128xbf16>
    %3 = arith.extf %2 : vector<512x128xbf16> to vector<512x128xf32>
    %c0_2 = arith.constant 0 : index
    %c0_3 = arith.constant 0 : index
    %4 = vector.load %arg2[%c0_2, %c0_3] : memref<512x128xbf16, #tpu.memory_space<vmem>>, vector<512x128xbf16>
    %5 = arith.extf %4 : vector<512x128xbf16> to vector<512x128xf32>
    %c0_4 = arith.constant 0 : index
    %c0_5 = arith.constant 0 : index
    %6 = vector.load %arg3[%c0_4, %c0_5] : memref<1x128xf32, #tpu.memory_space<vmem>>, vector<1x128xf32>
    %7 = vector.broadcast %6 : vector<1x128xf32> to vector<512x128xf32>
    %8 = arith.mulf %1, %7 : vector<512x128xf32>
    %c0_6 = arith.constant 0 : index
    %c0_7 = arith.constant 0 : index
    %9 = vector.load %arg4[%c0_6, %c0_7] : memref<1x128xf32, #tpu.memory_space<vmem>>, vector<1x128xf32>
    %10 = vector.broadcast %9 : vector<1x128xf32> to vector<512x128xf32>
    %11 = arith.addf %8, %10 : vector<512x128xf32>
    %12 = arith.negf %11 : vector<512x128xf32>
    %13 = math.exp %12 : vector<512x128xf32>
    %cst = arith.constant 1.000000e+00 : f32
    %14 = vector.broadcast %cst : f32 to vector<512x128xf32>
    %15 = arith.addf %14, %13 : vector<512x128xf32>
    %16 = arith.divf %14, %15 : vector<512x128xf32>
    %c0_8 = arith.constant 0 : index
    %c0_9 = arith.constant 0 : index
    %17 = vector.load %arg5[%c0_8, %c0_9] : memref<1x128xf32, #tpu.memory_space<vmem>>, vector<1x128xf32>
    %18 = vector.broadcast %17 : vector<1x128xf32> to vector<512x128xf32>
    %19 = arith.mulf %3, %18 : vector<512x128xf32>
    %c0_10 = arith.constant 0 : index
    %c0_11 = arith.constant 0 : index
    %20 = vector.load %arg6[%c0_10, %c0_11] : memref<1x128xf32, #tpu.memory_space<vmem>>, vector<1x128xf32>
    %21 = vector.broadcast %20 : vector<1x128xf32> to vector<512x128xf32>
    %22 = arith.addf %19, %21 : vector<512x128xf32>
    %23 = arith.negf %22 : vector<512x128xf32>
    %24 = math.exp %23 : vector<512x128xf32>
    %cst_12 = arith.constant 1.000000e+00 : f32
    %25 = vector.broadcast %cst_12 : f32 to vector<512x128xf32>
    %26 = arith.addf %25, %24 : vector<512x128xf32>
    %27 = arith.divf %25, %26 : vector<512x128xf32>
    %28 = arith.mulf %16, %5 : vector<512x128xf32>
    %29 = arith.truncf %28 : vector<512x128xf32> to vector<512x128xbf16>
    %c0_13 = arith.constant 0 : index
    %c0_14 = arith.constant 0 : index
    %30 = vector.load %arg7[%c0_13, %c0_14] : memref<512x128xbf16, #tpu.memory_space<vmem>>, vector<512x128xbf16>
    tpu.vector_store %arg7[%c0_13, %c0_14], %29 {strides = array<i32>} : memref<512x128xbf16, #tpu.memory_space<vmem>>, vector<512x128xbf16>,
    %31 = arith.truncf %27 : vector<512x128xf32> to vector<512x128xbf16>
    %c0_15 = arith.constant 0 : index
    %c0_16 = arith.constant 0 : index
    %32 = vector.load %arg8[%c0_15, %c0_16] : memref<512x128xbf16, #tpu.memory_space<vmem>>, vector<512x128xbf16>
    tpu.vector_store %arg8[%c0_15, %c0_16], %31 {strides = array<i32>} : memref<512x128xbf16, #tpu.memory_space<vmem>>, vector<512x128xbf16>,
    return
  }
  func.func @transform_0(%arg0: i32) -> (i32, i32) {
    %c0_i32 = arith.constant 0 : i32
    %c0_i32_0 = arith.constant 0 : i32
    return %arg0, %c0_i32 : i32, i32
  }
  func.func @transform_1(%arg0: i32) -> (i32, i32) {
    %c0_i32 = arith.constant 0 : i32
    %c0_i32_0 = arith.constant 0 : i32
    return %arg0, %c0_i32 : i32, i32
  }
  func.func @transform_2(%arg0: i32) -> (i32, i32) {
    %c0_i32 = arith.constant 0 : i32
    %c0_i32_0 = arith.constant 0 : i32
    %c0_i32_1 = arith.constant 0 : i32
    return %c0_i32, %c0_i32_0 : i32, i32
  }
  func.func @transform_3(%arg0: i32) -> (i32, i32) {
    %c0_i32 = arith.constant 0 : i32
    %c0_i32_0 = arith.constant 0 : i32
    %c0_i32_1 = arith.constant 0 : i32
    return %c0_i32, %c0_i32_0 : i32, i32
  }
  func.func @transform_4(%arg0: i32) -> (i32, i32) {
    %c0_i32 = arith.constant 0 : i32
    %c0_i32_0 = arith.constant 0 : i32
    %c0_i32_1 = arith.constant 0 : i32
    return %c0_i32, %c0_i32_0 : i32, i32
  }
  func.func @transform_5(%arg0: i32) -> (i32, i32) {
    %c0_i32 = arith.constant 0 : i32
    %c0_i32_0 = arith.constant 0 : i32
    %c0_i32_1 = arith.constant 0 : i32
    return %c0_i32, %c0_i32_0 : i32, i32
  }
  func.func @transform_6(%arg0: i32) -> (i32, i32) {
    %c0_i32 = arith.constant 0 : i32
    %c0_i32_0 = arith.constant 0 : i32
    return %arg0, %c0_i32 : i32, i32
  }
  func.func @transform_7(%arg0: i32) -> (i32, i32) {
    %c0_i32 = arith.constant 0 : i32
    %c0_i32_0 = arith.constant 0 : i32
    return %arg0, %c0_i32 : i32, i32
  }
}

module attributes {stable_mosaic.version = 11 : i64} {
  func.func @_matmul_stats_kernel(%arg0: i32, %arg1: memref<512x108xbf16, #tpu.memory_space<vmem>>, %arg2: memref<108x128xbf16, #tpu.memory_space<vmem>>, %arg3: memref<512x128xbf16, #tpu.memory_space<vmem>>, %arg4: memref<1x128xf32, #tpu.memory_space<vmem>>, %arg5: memref<1x128xf32, #tpu.memory_space<vmem>>) attributes {dimension_semantics = [#tpu.dimension_semantics<parallel>], iteration_bounds = array<i64: 1>, scalar_prefetch = 0 : i64, scratch_operands = 0 : i64, tpu.core_type = #tpu.core_type<tc>, window_params = [{transform_indices = @transform_0, window_bounds = array<i64: 512, 108>}, {pipeline_mode = #tpu.pipeline_mode<synchronous>, transform_indices = @transform_1, window_bounds = array<i64: 108, 128>}, {transform_indices = @transform_2, window_bounds = array<i64: 512, 128>}, {transform_indices = @transform_3, window_bounds = array<i64: 1, 128>}, {transform_indices = @transform_4, window_bounds = array<i64: 1, 128>}]} {
    %c0 = arith.constant 0 : index
    %c0_0 = arith.constant 0 : index
    %0 = vector.load %arg1[%c0, %c0_0] : memref<512x108xbf16, #tpu.memory_space<vmem>>, vector<512x108xbf16>
    %c0_1 = arith.constant 0 : index
    %c0_2 = arith.constant 0 : index
    %1 = vector.load %arg2[%c0_1, %c0_2] : memref<108x128xbf16, #tpu.memory_space<vmem>>, vector<108x128xbf16>
    %cst = arith.constant dense<0.000000e+00> : vector<512x128xf32>
    %2 = tpu.matmul %0, %1, %cst {dimension_numbers = #tpu.dot_dimension_numbers<[1], [0], [0], [1], [0, 0, 1, 1], [], []>} : vector<512x108xbf16>, vector<108x128xbf16>, vector<512x128xf32> -> vector<512x128xf32>
    %3 = arith.truncf %2 : vector<512x128xf32> to vector<512x128xbf16>
    %c0_3 = arith.constant 0 : index
    %c0_4 = arith.constant 0 : index
    %4 = vector.load %arg3[%c0_3, %c0_4] : memref<512x128xbf16, #tpu.memory_space<vmem>>, vector<512x128xbf16>
    tpu.vector_store %arg3[%c0_3, %c0_4], %3 {strides = array<i32>} : memref<512x128xbf16, #tpu.memory_space<vmem>>, vector<512x128xbf16>,
    %cst_5 = arith.constant dense<0.000000e+00> : vector<128xf32>
    %5 = vector.multi_reduction <add>, %2, %cst_5 [0] : vector<512x128xf32> to vector<128xf32>
    %6 = vector.shape_cast %5 : vector<128xf32> to vector<1x128xf32>
    %c0_6 = arith.constant 0 : index
    %c0_7 = arith.constant 0 : index
    %7 = vector.load %arg4[%c0_6, %c0_7] : memref<1x128xf32, #tpu.memory_space<vmem>>, vector<1x128xf32>
    tpu.vector_store %arg4[%c0_6, %c0_7], %6 {strides = array<i32>} : memref<1x128xf32, #tpu.memory_space<vmem>>, vector<1x128xf32>,
    %8 = arith.mulf %2, %2 : vector<512x128xf32>
    %cst_8 = arith.constant dense<0.000000e+00> : vector<128xf32>
    %9 = vector.multi_reduction <add>, %8, %cst_8 [0] : vector<512x128xf32> to vector<128xf32>
    %10 = vector.shape_cast %9 : vector<128xf32> to vector<1x128xf32>
    %c0_9 = arith.constant 0 : index
    %c0_10 = arith.constant 0 : index
    %11 = vector.load %arg5[%c0_9, %c0_10] : memref<1x128xf32, #tpu.memory_space<vmem>>, vector<1x128xf32>
    tpu.vector_store %arg5[%c0_9, %c0_10], %10 {strides = array<i32>} : memref<1x128xf32, #tpu.memory_space<vmem>>, vector<1x128xf32>,
    return
  }
  func.func @transform_0(%arg0: i32) -> (i32, i32) {
    %c0_i32 = arith.constant 0 : i32
    %c0_i32_0 = arith.constant 0 : i32
    return %arg0, %c0_i32 : i32, i32
  }
  func.func @transform_1(%arg0: i32) -> (i32, i32) {
    %c0_i32 = arith.constant 0 : i32
    %c0_i32_0 = arith.constant 0 : i32
    %c0_i32_1 = arith.constant 0 : i32
    return %c0_i32, %c0_i32_0 : i32, i32
  }
  func.func @transform_2(%arg0: i32) -> (i32, i32) {
    %c0_i32 = arith.constant 0 : i32
    %c0_i32_0 = arith.constant 0 : i32
    return %arg0, %c0_i32 : i32, i32
  }
  func.func @transform_3(%arg0: i32) -> (i32, i32) {
    %c0_i32 = arith.constant 0 : i32
    %c0_i32_0 = arith.constant 0 : i32
    return %arg0, %c0_i32 : i32, i32
  }
  func.func @transform_4(%arg0: i32) -> (i32, i32) {
    %c0_i32 = arith.constant 0 : i32
    %c0_i32_0 = arith.constant 0 : i32
    return %arg0, %c0_i32 : i32, i32
  }
}

module attributes {stable_mosaic.version = 11 : i64} {
  func.func @_output_kernel(%arg0: i32, %arg1: memref<512x128xbf16, #tpu.memory_space<vmem>>, %arg2: memref<512x128xbf16, #tpu.memory_space<vmem>>, %arg3: memref<512x128xbf16, #tpu.memory_space<vmem>>, %arg4: memref<1x128xf32, #tpu.memory_space<vmem>>, %arg5: memref<1x128xf32, #tpu.memory_space<vmem>>, %arg6: memref<512x128xf32, #tpu.memory_space<vmem>>) attributes {dimension_semantics = [#tpu.dimension_semantics<parallel>], iteration_bounds = array<i64: 1>, scalar_prefetch = 0 : i64, scratch_operands = 0 : i64, tpu.core_type = #tpu.core_type<tc>, window_params = [{transform_indices = @transform_0, window_bounds = array<i64: 512, 128>}, {transform_indices = @transform_1, window_bounds = array<i64: 512, 128>}, {transform_indices = @transform_2, window_bounds = array<i64: 512, 128>}, {pipeline_mode = #tpu.pipeline_mode<synchronous>, transform_indices = @transform_3, window_bounds = array<i64: 1, 128>}, {pipeline_mode = #tpu.pipeline_mode<synchronous>, transform_indices = @transform_4, window_bounds = array<i64: 1, 128>}, {transform_indices = @transform_5, window_bounds = array<i64: 512, 128>}]} {
    %c0 = arith.constant 0 : index
    %c0_0 = arith.constant 0 : index
    %0 = vector.load %arg1[%c0, %c0_0] : memref<512x128xbf16, #tpu.memory_space<vmem>>, vector<512x128xbf16>
    %1 = arith.extf %0 : vector<512x128xbf16> to vector<512x128xf32>
    %c0_1 = arith.constant 0 : index
    %c0_2 = arith.constant 0 : index
    %2 = vector.load %arg4[%c0_1, %c0_2] : memref<1x128xf32, #tpu.memory_space<vmem>>, vector<1x128xf32>
    %3 = vector.broadcast %2 : vector<1x128xf32> to vector<512x128xf32>
    %4 = arith.mulf %1, %3 : vector<512x128xf32>
    %c0_3 = arith.constant 0 : index
    %c0_4 = arith.constant 0 : index
    %5 = vector.load %arg5[%c0_3, %c0_4] : memref<1x128xf32, #tpu.memory_space<vmem>>, vector<1x128xf32>
    %6 = vector.broadcast %5 : vector<1x128xf32> to vector<512x128xf32>
    %7 = arith.addf %4, %6 : vector<512x128xf32>
    %8 = math.tanh %7 : vector<512x128xf32>
    %c0_5 = arith.constant 0 : index
    %c0_6 = arith.constant 0 : index
    %9 = vector.load %arg2[%c0_5, %c0_6] : memref<512x128xbf16, #tpu.memory_space<vmem>>, vector<512x128xbf16>
    %10 = arith.extf %9 : vector<512x128xbf16> to vector<512x128xf32>
    %c0_7 = arith.constant 0 : index
    %c0_8 = arith.constant 0 : index
    %11 = vector.load %arg3[%c0_7, %c0_8] : memref<512x128xbf16, #tpu.memory_space<vmem>>, vector<512x128xbf16>
    %12 = arith.extf %11 : vector<512x128xbf16> to vector<512x128xf32>
    %cst = arith.constant 1.000000e+00 : f32
    %13 = vector.broadcast %cst : f32 to vector<512x128xf32>
    %14 = arith.subf %13, %10 : vector<512x128xf32>
    %15 = arith.mulf %14, %12 : vector<512x128xf32>
    %16 = arith.mulf %10, %8 : vector<512x128xf32>
    %17 = arith.addf %15, %16 : vector<512x128xf32>
    %c0_9 = arith.constant 0 : index
    %c0_10 = arith.constant 0 : index
    %18 = vector.load %arg6[%c0_9, %c0_10] : memref<512x128xf32, #tpu.memory_space<vmem>>, vector<512x128xf32>
    tpu.vector_store %arg6[%c0_9, %c0_10], %17 {strides = array<i32>} : memref<512x128xf32, #tpu.memory_space<vmem>>, vector<512x128xf32>,
    return
  }
  func.func @transform_0(%arg0: i32) -> (i32, i32) {
    %c0_i32 = arith.constant 0 : i32
    %c0_i32_0 = arith.constant 0 : i32
    return %arg0, %c0_i32 : i32, i32
  }
  func.func @transform_1(%arg0: i32) -> (i32, i32) {
    %c0_i32 = arith.constant 0 : i32
    %c0_i32_0 = arith.constant 0 : i32
    return %arg0, %c0_i32 : i32, i32
  }
  func.func @transform_2(%arg0: i32) -> (i32, i32) {
    %c0_i32 = arith.constant 0 : i32
    %c0_i32_0 = arith.constant 0 : i32
    return %arg0, %c0_i32 : i32, i32
  }
  func.func @transform_3(%arg0: i32) -> (i32, i32) {
    %c0_i32 = arith.constant 0 : i32
    %c0_i32_0 = arith.constant 0 : i32
    %c0_i32_1 = arith.constant 0 : i32
    return %c0_i32, %c0_i32_0 : i32, i32
  }
  func.func @transform_4(%arg0: i32) -> (i32, i32) {
    %c0_i32 = arith.constant 0 : i32
    %c0_i32_0 = arith.constant 0 : i32
    %c0_i32_1 = arith.constant 0 : i32
    return %c0_i32, %c0_i32_0 : i32, i32
  }
  func.func @transform_5(%arg0: i32) -> (i32, i32) {
    %c0_i32 = arith.constant 0 : i32
    %c0_i32_0 = arith.constant 0 : i32
    return %arg0, %c0_i32 : i32, i32
  }
}

</mosaic_0001>

<llo_original>
// kernel: conv_gru_cell_forward.5
$region0: #{conv_gru_cell_forward.5}
  #allocation0 [shape = 'u32[]', space=smem, size = 0x4, offset = 0x4, fixed_abs, tag = 'smem constant byte address 0x4 - core index']
  #allocation1 [shape = 'u32[144,128]{1,0:T(1,128)}', space=vmem, size = 0x12000, scoped, tag = 'internal scratch']
  %s0 = inlined_call_operand.vmem [shape: bf16[176,48], index: 0, kind: input, shape index: {}]
  %s1 = inlined_call_operand.vmem [shape: bf16[48,512], index: 1, kind: input, shape index: {}]
  %s2 = inlined_call_operand.vmem [shape: bf16[176,512], index: 2, kind: output, shape index: {}]
  %s3 = sld [smem:[#allocation0]]
  $region18: #{conv_gru_cell_forward.5} parent=0
    _
  %s5 = ssub.s32 1, %s3
  %s6 = scalar_select 0, %s5, %s3
  // Predicated region
  $region2: #{conv_gru_cell_forward.5} parent=0 // pred_check
    _
  $region3: #{conv_gru_cell_forward.5} parent=0 // pred_check_branch
    %8 = sbr.rel (0) target = $region5
  $region4: #{conv_gru_cell_forward.5} parent=0 // pred_region
    _
  $region5: #{conv_gru_cell_forward.5} parent=0 // pred_fallthru
    _
  // Predicated region
  $region6: #{conv_gru_cell_forward.5} parent=0 // pred_check
    _
  $region7: #{conv_gru_cell_forward.5} parent=0 // pred_check_branch
    %10 = sbr.rel (0) target = $region9
  $region8: #{conv_gru_cell_forward.5} parent=0 // pred_region
    _
  $region9: #{conv_gru_cell_forward.5} parent=0 // pred_fallthru
    _
  %v12 = vld [vmem:[%s0] sm:$0xf]
  %v13 = vld [vmem:[%s0 + $0x4] sm:$0xf]
  %v14 = vld [vmem:[%s0 + $0x8] sm:$0xf]
  %v15 = vld [vmem:[%s0 + $0xc] sm:$0xf]
  %v16 = vld [vmem:[%s0 + $0x10] sm:$0xf]
  %v17 = vld [vmem:[%s0 + $0x14] sm:$0xf]
  %v18 = vld [vmem:[%s0 + $0x18] sm:$0xf]
  %v19 = vld [vmem:[%s0 + $0x1c] sm:$0xf]
  %v20 = vld [vmem:[%s0 + $0x20] sm:$0xf]
  %v21 = vld [vmem:[%s0 + $0x24] sm:$0xf]
  %v22 = vld [vmem:[%s0 + $0x28] sm:$0xf]
  %v23 = vld [vmem:[%s0 + $0x2c] sm:$0xf]
  %v24 = vld [vmem:[%s0 + $0x30] sm:$0xf]
  %v25 = vld [vmem:[%s0 + $0x34] sm:$0xf]
  %v26 = vld [vmem:[%s0 + $0x38] sm:$0xf]
  %v27 = vld [vmem:[%s0 + $0x3c] sm:$0xf]
  %v28 = vld [vmem:[%s0 + $0x40] sm:$0xf]
  %v29 = vld [vmem:[%s0 + $0x44] sm:$0xf]
  %v30 = vld [vmem:[%s0 + $0x48] sm:$0xf]
  %v31 = vld [vmem:[%s0 + $0x4c] sm:$0xf]
  %v32 = vld [vmem:[%s0 + $0x50] sm:$0xf]
  %v33 = vld [vmem:[%s0 + $0x54] sm:$0xf]
  %v34 = vld [vmem:[%s1] sm:$0xff]
  %v35 = vld [vmem:[%s1 + $0x8] sm:$0xff]
  %v36 = vld [vmem:[%s1 + $0x10] sm:$0xff]
  %v37 = vld [vmem:[%s1 + $0x18] sm:$0xff]
  %v38 = vld [vmem:[%s1 + $0x20] sm:$0xff]
  %v39 = vld [vmem:[%s1 + $0x28] sm:$0xff]
  %v40 = vld [vmem:[%s1 + $0x30] sm:$0xff]
  %v41 = vld [vmem:[%s1 + $0x38] sm:$0xff]
  %v42 = vld [vmem:[%s1 + $0x40] sm:$0xff]
  %v43 = vld [vmem:[%s1 + $0x48] sm:$0xff]
  %v44 = vld [vmem:[%s1 + $0x50] sm:$0xff]
  %v45 = vld [vmem:[%s1 + $0x58] sm:$0xff]
  %v68 = vunpack.c.l.b16 %v12
  %v69 = vunpack.c.l.b16 %v13
  %v70 = vunpack.c.l.b16 %v14
  %v71 = vunpack.c.l.b16 %v15
  %v72 = vunpack.c.l.b16 %v16
  %v73 = vunpack.c.l.b16 %v17
  %v74 = vunpack.c.l.b16 %v18
  %v75 = vunpack.c.l.b16 %v19
  %v76 = vunpack.c.l.b16 %v20
  %v77 = vunpack.c.l.b16 %v21
  %v78 = vunpack.c.l.b16 %v22
  %v79 = vunpack.c.l.b16 %v23
  %v80 = vunpack.c.l.b16 %v24
  %v81 = vunpack.c.l.b16 %v25
  %v82 = vunpack.c.l.b16 %v26
  %v83 = vunpack.c.l.b16 %v27
  %v84 = vunpack.c.l.b16 %v28
  %v85 = vunpack.c.l.b16 %v29
  %v86 = vunpack.c.l.b16 %v30
  %v87 = vunpack.c.l.b16 %v31
  %v88 = vunpack.c.l.b16 %v32
  %v89 = vunpack.c.l.b16 %v33
  %v90 = vpack.c.b16 %v69, %v68
  %v91 = vpack.c.b16 %v71, %v70
  %v92 = vpack.c.b16 %v73, %v72
  %v93 = vpack.c.b16 %v75, %v74
  %v94 = vpack.c.b16 %v77, %v76
  %v95 = vpack.c.b16 %v79, %v78
  %v96 = vpack.c.b16 %v81, %v80
  %v97 = vpack.c.b16 %v83, %v82
  %v98 = vpack.c.b16 %v85, %v84
  %v99 = vpack.c.b16 %v87, %v86
  %v100 = vpack.c.b16 %v89, %v88
  %v113 = vunpack.c.l.b16 %v34
  %v114 = vunpack.c.h.b16 %v34
  %v115 = vunpack.c.l.b16 %v35
  %v116 = vunpack.c.h.b16 %v35
  %v117 = vunpack.c.l.b16 %v36
  %v118 = vunpack.c.h.b16 %v36
  %v119 = vunpack.c.l.b16 %v37
  %v120 = vunpack.c.h.b16 %v37
  %v121 = vunpack.c.l.b16 %v38
  %v122 = vunpack.c.h.b16 %v38
  %v123 = vunpack.c.l.b16 %v39
  %v124 = vunpack.c.h.b16 %v39
  %v125 = vunpack.c.l.b16 %v40
  %v126 = vunpack.c.h.b16 %v40
  %v127 = vunpack.c.l.b16 %v41
  %v128 = vunpack.c.h.b16 %v41
  %v129 = vunpack.c.l.b16 %v42
  %v130 = vunpack.c.h.b16 %v42
  %v131 = vunpack.c.l.b16 %v43
  %v132 = vunpack.c.h.b16 %v43
  %v133 = vunpack.c.l.b16 %v44
  %v134 = vunpack.c.h.b16 %v44
  %v135 = vunpack.c.l.b16 %v45
  %v136 = vunpack.c.h.b16 %v45
  %v137 = vpack.c.b16 %v117, %v113
  %v138 = vpack.c.b16 %v118, %v114
  %v139 = vpack.c.b16 %v119, %v115
  %v140 = vpack.c.b16 %v120, %v116
  %v141 = vpack.c.b16 %v125, %v121
  %v142 = vpack.c.b16 %v126, %v122
  %v143 = vpack.c.b16 %v127, %v123
  %v144 = vpack.c.b16 %v128, %v124
  %v145 = vpack.c.b16 %v133, %v129
  %v146 = vpack.c.b16 %v134, %v130
  %v147 = vpack.c.b16 %v135, %v131
  %v148 = vpack.c.b16 %v136, %v132
  %vm161 = vcmask 392192
  %v163 = vsel %vm161, %v90, 0
  %v166 = vsel %vm161, %v91, 0
  %v169 = vsel %vm161, %v92, 0
  %v172 = vsel %vm161, %v93, 0
  %v175 = vsel %vm161, %v94, 0
  %v178 = vsel %vm161, %v95, 0
  %v181 = vsel %vm161, %v96, 0
  %v184 = vsel %vm161, %v97, 0
  %v187 = vsel %vm161, %v98, 0
  %v190 = vsel %vm161, %v99, 0
  %v193 = vsel %vm161, %v100, 0
  %195 = vmatprep.subr.bf16.mxu0 %v138
  %196 = vmatpush1.bf16.msra.mxu0 %v137
  %197 = vmatprep.subr.bf16.mxu0 %v142
  %198 = vmatpush1.bf16.msra.mxu0 %v141
  %199 = vmatprep.subr.bf16.mxu0 %v146
  %200 = vmatpush1.bf16.msra.mxu0 %v145
  %201 = vmatprep.subr.bf16.mxu0 0
  %202 = vmatpush1.bf16.msra.mxu0 0
  %203 = vmatprep.subr.bf16.mxu0 0
  %204 = vmatpush1.bf16.msra.mxu0 0
  %205 = vmatprep.subr.bf16.mxu0 0
  %206 = vmatpush1.bf16.msra.mxu0 0
  %207 = vmatprep.subr.bf16.mxu0 0
  %208 = vmatpush1.bf16.msra.mxu0 0
  %209 = vmatprep.subr.bf16.mxu0 0
  %210 = vmatpush1.bf16.msra.mxu0 0
  %211 = vmatprep.subr.bf16.mxu0 0
  %212 = vmatpush1.bf16.msra.mxu0 0
  %213 = vmatprep.subr.bf16.mxu0 0
  %214 = vmatpush1.bf16.msra.mxu0 0
  %215 = vmatprep.subr.bf16.mxu0 0
  %216 = vmatpush1.bf16.msra.mxu0 0
  %217 = vmatprep.subr.bf16.mxu0 0
  %218 = vmatpush1.bf16.msra.mxu0 0
  %219 = vmatprep.subr.bf16.mxu0 0
  %220 = vmatpush1.bf16.msra.mxu0 0
  %221 = vmatprep.subr.bf16.mxu0 0
  %222 = vmatpush1.bf16.msra.mxu0 0
  %223 = vmatprep.subr.bf16.mxu0 0
  %224 = vmatpush1.bf16.msra.mxu0 0
  %225 = vmatprep.subr.bf16.mxu0 0
  %226 = vmatpush1.bf16.msra.mxu0 0
  %227 = vmatprep.mubr.bf16.mxu0 0
  %228 = vmatmul.mubr.bf16.gmra.mrb[0].mxu0 %v163
  %v229 = vpop.f32.mrb[0].mxu0
  %v230 = vadd.f32 0.0, %v229
  %v231 = vpop.f32.mrb[0].mxu0
  %v232 = vadd.f32 0.0, %v231
  %v233 = vpop.f32.mrb[0].mxu0
  %v234 = vadd.f32 0.0, %v233
  %v235 = vpop.f32.mrb[0].mxu0
  %v236 = vadd.f32 0.0, %v235
  %237 = vmatprep.mubr.bf16.mxu0 0
  %238 = vmatmul.mubr.bf16.gmra.mrb[0].mxu0 %v166
  %v239 = vpop.f32.mrb[0].mxu0
  %v240 = vadd.f32 0.0, %v239
  %v241 = vpop.f32.mrb[0].mxu0
  %v242 = vadd.f32 0.0, %v241
  %v243 = vpop.f32.mrb[0].mxu0
  %v244 = vadd.f32 0.0, %v243
  %v245 = vpop.f32.mrb[0].mxu0
  %v246 = vadd.f32 0.0, %v245
  %247 = vmatprep.mubr.bf16.mxu0 0
  %248 = vmatmul.mubr.bf16.gmra.mrb[0].mxu0 %v169
  %v249 = vpop.f32.mrb[0].mxu0
  %v250 = vadd.f32 0.0, %v249
  %v251 = vpop.f32.mrb[0].mxu0
  %v252 = vadd.f32 0.0, %v251
  %v253 = vpop.f32.mrb[0].mxu0
  %v254 = vadd.f32 0.0, %v253
  %v255 = vpop.f32.mrb[0].mxu0
  %v256 = vadd.f32 0.0, %v255
  %257 = vmatprep.mubr.bf16.mxu0 0
  %258 = vmatmul.mubr.bf16.gmra.mrb[0].mxu0 %v172
  %v259 = vpop.f32.mrb[0].mxu0
  %v260 = vadd.f32 0.0, %v259
  %v261 = vpop.f32.mrb[0].mxu0
  %v262 = vadd.f32 0.0, %v261
  %v263 = vpop.f32.mrb[0].mxu0
  %v264 = vadd.f32 0.0, %v263
  %v265 = vpop.f32.mrb[0].mxu0
  %v266 = vadd.f32 0.0, %v265
  %267 = vmatprep.mubr.bf16.mxu0 0
  %268 = vmatmul.mubr.bf16.gmra.mrb[0].mxu0 %v175
  %v269 = vpop.f32.mrb[0].mxu0
  %v270 = vadd.f32 0.0, %v269
  %v271 = vpop.f32.mrb[0].mxu0
  %v272 = vadd.f32 0.0, %v271
  %v273 = vpop.f32.mrb[0].mxu0
  %v274 = vadd.f32 0.0, %v273
  %v275 = vpop.f32.mrb[0].mxu0
  %v276 = vadd.f32 0.0, %v275
  %277 = vmatprep.mubr.bf16.mxu0 0
  %278 = vmatmul.mubr.bf16.gmra.mrb[0].mxu0 %v178
  %v279 = vpop.f32.mrb[0].mxu0
  %v280 = vadd.f32 0.0, %v279
  %v281 = vpop.f32.mrb[0].mxu0
  %v282 = vadd.f32 0.0, %v281
  %v283 = vpop.f32.mrb[0].mxu0
  %v284 = vadd.f32 0.0, %v283
  %v285 = vpop.f32.mrb[0].mxu0
  %v286 = vadd.f32 0.0, %v285
  %287 = vmatprep.mubr.bf16.mxu0 0
  %288 = vmatmul.mubr.bf16.gmra.mrb[0].mxu0 %v181
  %v289 = vpop.f32.mrb[0].mxu0
  %v290 = vadd.f32 0.0, %v289
  %v291 = vpop.f32.mrb[0].mxu0
  %v292 = vadd.f32 0.0, %v291
  %v293 = vpop.f32.mrb[0].mxu0
  %v294 = vadd.f32 0.0, %v293
  %v295 = vpop.f32.mrb[0].mxu0
  %v296 = vadd.f32 0.0, %v295
  %297 = vmatprep.mubr.bf16.mxu0 0
  %298 = vmatmul.mubr.bf16.gmra.mrb[0].mxu0 %v184
  %v299 = vpop.f32.mrb[0].mxu0
  %v300 = vadd.f32 0.0, %v299
  %v301 = vpop.f32.mrb[0].mxu0
  %v302 = vadd.f32 0.0, %v301
  %v303 = vpop.f32.mrb[0].mxu0
  %v304 = vadd.f32 0.0, %v303
  %v305 = vpop.f32.mrb[0].mxu0
  %v306 = vadd.f32 0.0, %v305
  %307 = vmatprep.mubr.bf16.mxu0 0
  %308 = vmatmul.mubr.bf16.gmra.mrb[0].mxu0 %v187
  %v309 = vpop.f32.mrb[0].mxu0
  %v310 = vadd.f32 0.0, %v309
  %v311 = vpop.f32.mrb[0].mxu0
  %v312 = vadd.f32 0.0, %v311
  %v313 = vpop.f32.mrb[0].mxu0
  %v314 = vadd.f32 0.0, %v313
  %v315 = vpop.f32.mrb[0].mxu0
  %v316 = vadd.f32 0.0, %v315
  %317 = vmatprep.mubr.bf16.mxu0 0
  %318 = vmatmul.mubr.bf16.gmra.mrb[0].mxu0 %v190
  %v319 = vpop.f32.mrb[0].mxu0
  %v320 = vadd.f32 0.0, %v319
  %v321 = vpop.f32.mrb[0].mxu0
  %v322 = vadd.f32 0.0, %v321
  %v323 = vpop.f32.mrb[0].mxu0
  %v324 = vadd.f32 0.0, %v323
  %v325 = vpop.f32.mrb[0].mxu0
  %v326 = vadd.f32 0.0, %v325
  %327 = vmatprep.mubr.bf16.mxu0 0
  %328 = vmatmul.mubr.bf16.gmra.mrb[0].mxu0 %v193
  %v329 = vpop.f32.mrb[0].mxu0
  %v330 = vadd.f32 0.0, %v329
  %v331 = vpop.f32.mrb[0].mxu0
  %v332 = vadd.f32 0.0, %v331
  %v333 = vpop.f32.mrb[0].mxu0
  %v334 = vadd.f32 0.0, %v333
  %v335 = vpop.f32.mrb[0].mxu0
  %v336 = vadd.f32 0.0, %v335
  %337 = vdwg.mxu0
  %338 = vmatprep.subr.bf16.mxu0 %v140
  %339 = vmatpush1.bf16.msra.mxu0 %v139
  %340 = vmatprep.subr.bf16.mxu0 %v144
  %341 = vmatpush1.bf16.msra.mxu0 %v143
  %342 = vmatprep.subr.bf16.mxu0 %v148
  %343 = vmatpush1.bf16.msra.mxu0 %v147
  %344 = vmatprep.subr.bf16.mxu0 0
  %345 = vmatpush1.bf16.msra.mxu0 0
  %346 = vmatprep.subr.bf16.mxu0 0
  %347 = vmatpush1.bf16.msra.mxu0 0
  %348 = vmatprep.subr.bf16.mxu0 0
  %349 = vmatpush1.bf16.msra.mxu0 0
  %350 = vmatprep.subr.bf16.mxu0 0
  %351 = vmatpush1.bf16.msra.mxu0 0
  %352 = vmatprep.subr.bf16.mxu0 0
  %353 = vmatpush1.bf16.msra.mxu0 0
  %354 = vmatprep.subr.bf16.mxu0 0
  %355 = vmatpush1.bf16.msra.mxu0 0
  %356 = vmatprep.subr.bf16.mxu0 0
  %357 = vmatpush1.bf16.msra.mxu0 0
  %358 = vmatprep.subr.bf16.mxu0 0
  %359 = vmatpush1.bf16.msra.mxu0 0
  %360 = vmatprep.subr.bf16.mxu0 0
  %361 = vmatpush1.bf16.msra.mxu0 0
  %362 = vmatprep.subr.bf16.mxu0 0
  %363 = vmatpush1.bf16.msra.mxu0 0
  %364 = vmatprep.subr.bf16.mxu0 0
  %365 = vmatpush1.bf16.msra.mxu0 0
  %366 = vmatprep.subr.bf16.mxu0 0
  %367 = vmatpush1.bf16.msra.mxu0 0
  %368 = vmatprep.subr.bf16.mxu0 0
  %369 = vmatpush1.bf16.msra.mxu0 0
  %370 = vmatprep.mubr.bf16.mxu0 0
  %371 = vmatmul.mubr.bf16.gmra.mrb[0].mxu0 %v163
  %v372 = vpop.f32.mrb[0].mxu0
  %v373 = vadd.f32 0.0, %v372
  %v374 = vpop.f32.mrb[0].mxu0
  %v375 = vadd.f32 0.0, %v374
  %v376 = vpop.f32.mrb[0].mxu0
  %v377 = vadd.f32 0.0, %v376
  %v378 = vpop.f32.mrb[0].mxu0
  %v379 = vadd.f32 0.0, %v378
  %380 = vmatprep.mubr.bf16.mxu0 0
  %381 = vmatmul.mubr.bf16.gmra.mrb[0].mxu0 %v166
  %v382 = vpop.f32.mrb[0].mxu0
  %v383 = vadd.f32 0.0, %v382
  %v384 = vpop.f32.mrb[0].mxu0
  %v385 = vadd.f32 0.0, %v384
  %v386 = vpop.f32.mrb[0].mxu0
  %v387 = vadd.f32 0.0, %v386
  %v388 = vpop.f32.mrb[0].mxu0
  %v389 = vadd.f32 0.0, %v388
  %390 = vmatprep.mubr.bf16.mxu0 0
  %391 = vmatmul.mubr.bf16.gmra.mrb[0].mxu0 %v169
  %v392 = vpop.f32.mrb[0].mxu0
  %v393 = vadd.f32 0.0, %v392
  %v394 = vpop.f32.mrb[0].mxu0
  %v395 = vadd.f32 0.0, %v394
  %v396 = vpop.f32.mrb[0].mxu0
  %v397 = vadd.f32 0.0, %v396
  %v398 = vpop.f32.mrb[0].mxu0
  %v399 = vadd.f32 0.0, %v398
  %400 = vmatprep.mubr.bf16.mxu0 0
  %401 = vmatmul.mubr.bf16.gmra.mrb[0].mxu0 %v172
  %v402 = vpop.f32.mrb[0].mxu0
  %v403 = vadd.f32 0.0, %v402
  %v404 = vpop.f32.mrb[0].mxu0
  %v405 = vadd.f32 0.0, %v404
  %v406 = vpop.f32.mrb[0].mxu0
  %v407 = vadd.f32 0.0, %v406
  %v408 = vpop.f32.mrb[0].mxu0
  %v409 = vadd.f32 0.0, %v408
  %410 = vmatprep.mubr.bf16.mxu0 0
  %411 = vmatmul.mubr.bf16.gmra.mrb[0].mxu0 %v175
  %v412 = vpop.f32.mrb[0].mxu0
  %v413 = vadd.f32 0.0, %v412
  %v414 = vpop.f32.mrb[0].mxu0
  %v415 = vadd.f32 0.0, %v414
  %v416 = vpop.f32.mrb[0].mxu0
  %v417 = vadd.f32 0.0, %v416
  %v418 = vpop.f32.mrb[0].mxu0
  %v419 = vadd.f32 0.0, %v418
  %420 = vmatprep.mubr.bf16.mxu0 0
  %421 = vmatmul.mubr.bf16.gmra.mrb[0].mxu0 %v178
  %v422 = vpop.f32.mrb[0].mxu0
  %v423 = vadd.f32 0.0, %v422
  %v424 = vpop.f32.mrb[0].mxu0
  %v425 = vadd.f32 0.0, %v424
  %v426 = vpop.f32.mrb[0].mxu0
  %v427 = vadd.f32 0.0, %v426
  %v428 = vpop.f32.mrb[0].mxu0
  %v429 = vadd.f32 0.0, %v428
  %430 = vmatprep.mubr.bf16.mxu0 0
  %431 = vmatmul.mubr.bf16.gmra.mrb[0].mxu0 %v181
  %v432 = vpop.f32.mrb[0].mxu0
  %v433 = vadd.f32 0.0, %v432
  %v434 = vpop.f32.mrb[0].mxu0
  %v435 = vadd.f32 0.0, %v434
  %v436 = vpop.f32.mrb[0].mxu0
  %v437 = vadd.f32 0.0, %v436
  %v438 = vpop.f32.mrb[0].mxu0
  %v439 = vadd.f32 0.0, %v438
  %440 = vmatprep.mubr.bf16.mxu0 0
  %441 = vmatmul.mubr.bf16.gmra.mrb[0].mxu0 %v184
  %v442 = vpop.f32.mrb[0].mxu0
  %v443 = vadd.f32 0.0, %v442
  %v444 = vpop.f32.mrb[0].mxu0
  %v445 = vadd.f32 0.0, %v444
  %v446 = vpop.f32.mrb[0].mxu0
  %v447 = vadd.f32 0.0, %v446
  %v448 = vpop.f32.mrb[0].mxu0
  %v449 = vadd.f32 0.0, %v448
  %450 = vmatprep.mubr.bf16.mxu0 0
  %451 = vmatmul.mubr.bf16.gmra.mrb[0].mxu0 %v187
  %v452 = vpop.f32.mrb[0].mxu0
  %v453 = vadd.f32 0.0, %v452
  %v454 = vpop.f32.mrb[0].mxu0
  %v455 = vadd.f32 0.0, %v454
  %v456 = vpop.f32.mrb[0].mxu0
  %v457 = vadd.f32 0.0, %v456
  %v458 = vpop.f32.mrb[0].mxu0
  %v459 = vadd.f32 0.0, %v458
  %460 = vmatprep.mubr.bf16.mxu0 0
  %461 = vmatmul.mubr.bf16.gmra.mrb[0].mxu0 %v190
  %v462 = vpop.f32.mrb[0].mxu0
  %v463 = vadd.f32 0.0, %v462
  %v464 = vpop.f32.mrb[0].mxu0
  %v465 = vadd.f32 0.0, %v464
  %v466 = vpop.f32.mrb[0].mxu0
  %v467 = vadd.f32 0.0, %v466
  %v468 = vpop.f32.mrb[0].mxu0
  %v469 = vadd.f32 0.0, %v468
  %470 = vmatprep.mubr.bf16.mxu0 0
  %471 = vmatmul.mubr.bf16.gmra.mrb[0].mxu0 %v193
  %v472 = vpop.f32.mrb[0].mxu0
  %v473 = vadd.f32 0.0, %v472
  %v474 = vpop.f32.mrb[0].mxu0
  %v475 = vadd.f32 0.0, %v474
  %v476 = vpop.f32.mrb[0].mxu0
  %v477 = vadd.f32 0.0, %v476
  %v478 = vpop.f32.mrb[0].mxu0
  %v479 = vadd.f32 0.0, %v478
  %480 = vdwg.mxu0
  %v481 = vpack.c.bf16 %v234, %v230
  %v482 = vpack.c.bf16 %v236, %v232
  %v483 = vpack.c.bf16 %v377, %v373
  %v484 = vpack.c.bf16 %v379, %v375
  %v485 = vpack.c.bf16 %v244, %v240
  %v486 = vpack.c.bf16 %v246, %v242
  %v487 = vpack.c.bf16 %v387, %v383
  %v488 = vpack.c.bf16 %v389, %v385
  %v489 = vpack.c.bf16 %v254, %v250
  %v490 = vpack.c.bf16 %v256, %v252
  %v491 = vpack.c.bf16 %v397, %v393
  %v492 = vpack.c.bf16 %v399, %v395
  %v493 = vpack.c.bf16 %v264, %v260
  %v494 = vpack.c.bf16 %v266, %v262
  %v495 = vpack.c.bf16 %v407, %v403
  %v496 = vpack.c.bf16 %v409, %v405
  %v497 = vpack.c.bf16 %v274, %v270
  %v498 = vpack.c.bf16 %v276, %v272
  %v499 = vpack.c.bf16 %v417, %v413
  %v500 = vpack.c.bf16 %v419, %v415
  %v501 = vpack.c.bf16 %v284, %v280
  %v502 = vpack.c.bf16 %v286, %v282
  %v503 = vpack.c.bf16 %v427, %v423
  %v504 = vpack.c.bf16 %v429, %v425
  %v505 = vpack.c.bf16 %v294, %v290
  %v506 = vpack.c.bf16 %v296, %v292
  %v507 = vpack.c.bf16 %v437, %v433
  %v508 = vpack.c.bf16 %v439, %v435
  %v509 = vpack.c.bf16 %v304, %v300
  %v510 = vpack.c.bf16 %v306, %v302
  %v511 = vpack.c.bf16 %v447, %v443
  %v512 = vpack.c.bf16 %v449, %v445
  %v513 = vpack.c.bf16 %v314, %v310
  %v514 = vpack.c.bf16 %v316, %v312
  %v515 = vpack.c.bf16 %v457, %v453
  %v516 = vpack.c.bf16 %v459, %v455
  %v517 = vpack.c.bf16 %v324, %v320
  %v518 = vpack.c.bf16 %v326, %v322
  %v519 = vpack.c.bf16 %v467, %v463
  %v520 = vpack.c.bf16 %v469, %v465
  %v521 = vpack.c.bf16 %v334, %v330
  %v522 = vpack.c.bf16 %v336, %v332
  %v523 = vpack.c.bf16 %v477, %v473
  %v524 = vpack.c.bf16 %v479, %v475
  %v569 = vunpack.c.l.b16 %v481
  %v570 = vunpack.c.l.b16 %v482
  %v571 = vunpack.c.l.b16 %v483
  %v572 = vunpack.c.l.b16 %v484
  %v573 = vunpack.c.h.b16 %v481
  %v574 = vunpack.c.h.b16 %v482
  %v575 = vunpack.c.h.b16 %v483
  %v576 = vunpack.c.h.b16 %v484
  %v577 = vunpack.c.l.b16 %v485
  %v578 = vunpack.c.l.b16 %v486
  %v579 = vunpack.c.l.b16 %v487
  %v580 = vunpack.c.l.b16 %v488
  %v581 = vunpack.c.h.b16 %v485
  %v582 = vunpack.c.h.b16 %v486
  %v583 = vunpack.c.h.b16 %v487
  %v584 = vunpack.c.h.b16 %v488
  %v585 = vunpack.c.l.b16 %v489
  %v586 = vunpack.c.l.b16 %v490
  %v587 = vunpack.c.l.b16 %v491
  %v588 = vunpack.c.l.b16 %v492
  %v589 = vunpack.c.h.b16 %v489
  %v590 = vunpack.c.h.b16 %v490
  %v591 = vunpack.c.h.b16 %v491
  %v592 = vunpack.c.h.b16 %v492
  %v593 = vunpack.c.l.b16 %v493
  %v594 = vunpack.c.l.b16 %v494
  %v595 = vunpack.c.l.b16 %v495
  %v596 = vunpack.c.l.b16 %v496
  %v597 = vunpack.c.h.b16 %v493
  %v598 = vunpack.c.h.b16 %v494
  %v599 = vunpack.c.h.b16 %v495
  %v600 = vunpack.c.h.b16 %v496
  %v601 = vunpack.c.l.b16 %v497
  %v602 = vunpack.c.l.b16 %v498
  %v603 = vunpack.c.l.b16 %v499
  %v604 = vunpack.c.l.b16 %v500
  %v605 = vunpack.c.h.b16 %v497
  %v606 = vunpack.c.h.b16 %v498
  %v607 = vunpack.c.h.b16 %v499
  %v608 = vunpack.c.h.b16 %v500
  %v609 = vunpack.c.l.b16 %v501
  %v610 = vunpack.c.l.b16 %v502
  %v611 = vunpack.c.l.b16 %v503
  %v612 = vunpack.c.l.b16 %v504
  %v613 = vunpack.c.h.b16 %v501
  %v614 = vunpack.c.h.b16 %v502
  %v615 = vunpack.c.h.b16 %v503
  %v616 = vunpack.c.h.b16 %v504
  %v617 = vunpack.c.l.b16 %v505
  %v618 = vunpack.c.l.b16 %v506
  %v619 = vunpack.c.l.b16 %v507
  %v620 = vunpack.c.l.b16 %v508
  %v621 = vunpack.c.h.b16 %v505
  %v622 = vunpack.c.h.b16 %v506
  %v623 = vunpack.c.h.b16 %v507
  %v624 = vunpack.c.h.b16 %v508
  %v625 = vunpack.c.l.b16 %v509
  %v626 = vunpack.c.l.b16 %v510
  %v627 = vunpack.c.l.b16 %v511
  %v628 = vunpack.c.l.b16 %v512
  %v629 = vunpack.c.h.b16 %v509
  %v630 = vunpack.c.h.b16 %v510
  %v631 = vunpack.c.h.b16 %v511
  %v632 = vunpack.c.h.b16 %v512
  %v633 = vunpack.c.l.b16 %v513
  %v634 = vunpack.c.l.b16 %v514
  %v635 = vunpack.c.l.b16 %v515
  %v636 = vunpack.c.l.b16 %v516
  %v637 = vunpack.c.h.b16 %v513
  %v638 = vunpack.c.h.b16 %v514
  %v639 = vunpack.c.h.b16 %v515
  %v640 = vunpack.c.h.b16 %v516
  %v641 = vunpack.c.l.b16 %v517
  %v642 = vunpack.c.l.b16 %v518
  %v643 = vunpack.c.l.b16 %v519
  %v644 = vunpack.c.l.b16 %v520
  %v645 = vunpack.c.h.b16 %v517
  %v646 = vunpack.c.h.b16 %v518
  %v647 = vunpack.c.h.b16 %v519
  %v648 = vunpack.c.h.b16 %v520
  %v649 = vunpack.c.l.b16 %v521
  %v650 = vunpack.c.l.b16 %v522
  %v651 = vunpack.c.l.b16 %v523
  %v652 = vunpack.c.l.b16 %v524
  %v653 = vunpack.c.h.b16 %v521
  %v654 = vunpack.c.h.b16 %v522
  %v655 = vunpack.c.h.b16 %v523
  %v656 = vunpack.c.h.b16 %v524
  %v657 = vpack.c.b16 %v570, %v569
  %v658 = vpack.c.b16 %v572, %v571
  %v659 = vpack.c.b16 %v574, %v573
  %v660 = vpack.c.b16 %v576, %v575
  %v661 = vpack.c.b16 %v578, %v577
  %v662 = vpack.c.b16 %v580, %v579
  %v663 = vpack.c.b16 %v582, %v581
  %v664 = vpack.c.b16 %v584, %v583
  %v665 = vpack.c.b16 %v586, %v585
  %v666 = vpack.c.b16 %v588, %v587
  %v667 = vpack.c.b16 %v590, %v589
  %v668 = vpack.c.b16 %v592, %v591
  %v669 = vpack.c.b16 %v594, %v593
  %v670 = vpack.c.b16 %v596, %v595
  %v671 = vpack.c.b16 %v598, %v597
  %v672 = vpack.c.b16 %v600, %v599
  %v673 = vpack.c.b16 %v602, %v601
  %v674 = vpack.c.b16 %v604, %v603
  %v675 = vpack.c.b16 %v606, %v605
  %v676 = vpack.c.b16 %v608, %v607
  %v677 = vpack.c.b16 %v610, %v609
  %v678 = vpack.c.b16 %v612, %v611
  %v679 = vpack.c.b16 %v614, %v613
  %v680 = vpack.c.b16 %v616, %v615
  %v681 = vpack.c.b16 %v618, %v617
  %v682 = vpack.c.b16 %v620, %v619
  %v683 = vpack.c.b16 %v622, %v621
  %v684 = vpack.c.b16 %v624, %v623
  %v685 = vpack.c.b16 %v626, %v625
  %v686 = vpack.c.b16 %v628, %v627
  %v687 = vpack.c.b16 %v630, %v629
  %v688 = vpack.c.b16 %v632, %v631
  %v689 = vpack.c.b16 %v634, %v633
  %v690 = vpack.c.b16 %v636, %v635
  %v691 = vpack.c.b16 %v638, %v637
  %v692 = vpack.c.b16 %v640, %v639
  %v693 = vpack.c.b16 %v642, %v641
  %v694 = vpack.c.b16 %v644, %v643
  %v695 = vpack.c.b16 %v646, %v645
  %v696 = vpack.c.b16 %v648, %v647
  %v697 = vpack.c.b16 %v650, %v649
  %v698 = vpack.c.b16 %v652, %v651
  %v699 = vpack.c.b16 %v654, %v653
  %v700 = vpack.c.b16 %v656, %v655
  %745 = vst [vmem:[%s2] sm:$0xff] %v657
  %746 = vst [vmem:[%s2 + $0x8] sm:$0xff] %v658
  %747 = vst [vmem:[%s2 + $0x10] sm:$0xff] %v659
  %748 = vst [vmem:[%s2 + $0x18] sm:$0xff] %v660
  %749 = vst [vmem:[%s2 + $0x20] sm:$0xff] %v661
  %750 = vst [vmem:[%s2 + $0x28] sm:$0xff] %v662
  %751 = vst [vmem:[%s2 + $0x30] sm:$0xff] %v663
  %752 = vst [vmem:[%s2 + $0x38] sm:$0xff] %v664
  %753 = vst [vmem:[%s2 + $0x40] sm:$0xff] %v665
  %754 = vst [vmem:[%s2 + $0x48] sm:$0xff] %v666
  %755 = vst [vmem:[%s2 + $0x50] sm:$0xff] %v667
  %756 = vst [vmem:[%s2 + $0x58] sm:$0xff] %v668
  %757 = vst [vmem:[%s2 + $0x60] sm:$0xff] %v669
  %758 = vst [vmem:[%s2 + $0x68] sm:$0xff] %v670
  %759 = vst [vmem:[%s2 + $0x70] sm:$0xff] %v671
  %760 = vst [vmem:[%s2 + $0x78] sm:$0xff] %v672
  %761 = vst [vmem:[%s2 + $0x80] sm:$0xff] %v673
  %762 = vst [vmem:[%s2 + $0x88] sm:$0xff] %v674
  %763 = vst [vmem:[%s2 + $0x90] sm:$0xff] %v675
  %764 = vst [vmem:[%s2 + $0x98] sm:$0xff] %v676
  %765 = vst [vmem:[%s2 + $0xa0] sm:$0xff] %v677
  %766 = vst [vmem:[%s2 + $0xa8] sm:$0xff] %v678
  %767 = vst [vmem:[%s2 + $0xb0] sm:$0xff] %v679
  %768 = vst [vmem:[%s2 + $0xb8] sm:$0xff] %v680
  %769 = vst [vmem:[%s2 + $0xc0] sm:$0xff] %v681
  %770 = vst [vmem:[%s2 + $0xc8] sm:$0xff] %v682
  %771 = vst [vmem:[%s2 + $0xd0] sm:$0xff] %v683
  %772 = vst [vmem:[%s2 + $0xd8] sm:$0xff] %v684
  %773 = vst [vmem:[%s2 + $0xe0] sm:$0xff] %v685
  %774 = vst [vmem:[%s2 + $0xe8] sm:$0xff] %v686
  %775 = vst [vmem:[%s2 + $0xf0] sm:$0xff] %v687
  %776 = vst [vmem:[%s2 + $0xf8] sm:$0xff] %v688
  %777 = vst [vmem:[%s2 + $0x100] sm:$0xff] %v689
  %778 = vst [vmem:[%s2 + $0x108] sm:$0xff] %v690
  %779 = vst [vmem:[%s2 + $0x110] sm:$0xff] %v691
  %780 = vst [vmem:[%s2 + $0x118] sm:$0xff] %v692
  %781 = vst [vmem:[%s2 + $0x120] sm:$0xff] %v693
  %782 = vst [vmem:[%s2 + $0x128] sm:$0xff] %v694
  %783 = vst [vmem:[%s2 + $0x130] sm:$0xff] %v695
  %784 = vst [vmem:[%s2 + $0x138] sm:$0xff] %v696
  %785 = vst [vmem:[%s2 + $0x140] sm:$0xff] %v697
  %786 = vst [vmem:[%s2 + $0x148] sm:$0xff] %v698
  %787 = vst [vmem:[%s2 + $0x150] sm:$0xff] %v699
  %788 = vst [vmem:[%s2 + $0x158] sm:$0xff] %v700
  // Predicated region
  $region10: #{conv_gru_cell_forward.5} parent=0 // pred_check
    _
  $region11: #{conv_gru_cell_forward.5} parent=0 // pred_check_branch
    %790 = sbr.rel (0) target = $region13
  $region12: #{conv_gru_cell_forward.5} parent=0 // pred_region
    _
  $region13: #{conv_gru_cell_forward.5} parent=0 // pred_fallthru
    _
  // Predicated region
  $region14: #{conv_gru_cell_forward.5} parent=0 // pred_check
    _
  $region15: #{conv_gru_cell_forward.5} parent=0 // pred_check_branch
    %792 = sbr.rel (0) target = $region17
  $region16: #{conv_gru_cell_forward.5} parent=0 // pred_region
    _
  $region17: #{conv_gru_cell_forward.5} parent=0 // pred_fallthru
    _

// kernel: conv_gru_cell_forward.6
$region0: #{conv_gru_cell_forward.6}
  #allocation0 [shape = 'u32[]', space=smem, size = 0x4, offset = 0x4, fixed_abs, tag = 'smem constant byte address 0x4 - core index']
  #allocation1 [shape = 'u32[144,128]{1,0:T(1,128)}', space=vmem, size = 0x12000, scoped, tag = 'internal scratch']
  %s0 = inlined_call_operand.vmem [shape: bf16[512,108], index: 0, kind: input, shape index: {}]
  %s1 = inlined_call_operand.vmem [shape: bf16[108,256], index: 1, kind: input, shape index: {}]
  %s2 = inlined_call_operand.vmem [shape: bf16[512,256], index: 2, kind: output, shape index: {0}]
  %s3 = inlined_call_operand.vmem [shape: f32[1,256], index: 3, kind: output, shape index: {1}]
  %s4 = inlined_call_operand.vmem [shape: f32[1,256], index: 4, kind: output, shape index: {2}]
  %5 = xla_tuple %s2, %s3, %s4
  %s6 = sld [smem:[#allocation0]]
  $region34: #{conv_gru_cell_forward.6} parent=0
    _
  %s8 = ssub.s32 1, %s6
  %s9 = scalar_select 0, %s8, %s6
  // Predicated region
  $region2: #{conv_gru_cell_forward.6} parent=0 // pred_check
    _
  $region3: #{conv_gru_cell_forward.6} parent=0 // pred_check_branch
    %11 = sbr.rel (0) target = $region5
  $region4: #{conv_gru_cell_forward.6} parent=0 // pred_region
    _
  $region5: #{conv_gru_cell_forward.6} parent=0 // pred_fallthru
    _
  // Predicated region
  $region6: #{conv_gru_cell_forward.6} parent=0 // pred_check
    _
  $region7: #{conv_gru_cell_forward.6} parent=0 // pred_check_branch
    %13 = sbr.rel (0) target = $region9
  $region8: #{conv_gru_cell_forward.6} parent=0 // pred_region
    _
  $region9: #{conv_gru_cell_forward.6} parent=0 // pred_fallthru
    _
  %v15 = vld [vmem:[%s0] sm:$0xf]
  %v16 = vld [vmem:[%s0 + $0x4] sm:$0xf]
  %v17 = vld [vmem:[%s0 + $0x8] sm:$0xf]
  %v18 = vld [vmem:[%s0 + $0xc] sm:$0xf]
  %v19 = vld [vmem:[%s0 + $0x10] sm:$0xf]
  %v20 = vld [vmem:[%s0 + $0x14] sm:$0xf]
  %v21 = vld [vmem:[%s0 + $0x18] sm:$0xf]
  %v22 = vld [vmem:[%s0 + $0x1c] sm:$0xf]
  %v23 = vld [vmem:[%s0 + $0x20] sm:$0xf]
  %v24 = vld [vmem:[%s0 + $0x24] sm:$0xf]
  %v25 = vld [vmem:[%s0 + $0x28] sm:$0xf]
  %v26 = vld [vmem:[%s0 + $0x2c] sm:$0xf]
  %v27 = vld [vmem:[%s0 + $0x30] sm:$0xf]
  %v28 = vld [vmem:[%s0 + $0x34] sm:$0xf]
  %v29 = vld [vmem:[%s0 + $0x38] sm:$0xf]
  %v30 = vld [vmem:[%s0 + $0x3c] sm:$0xf]
  %v31 = vld [vmem:[%s0 + $0x40] sm:$0xf]
  %v32 = vld [vmem:[%s0 + $0x44] sm:$0xf]
  %v33 = vld [vmem:[%s0 + $0x48] sm:$0xf]
  %v34 = vld [vmem:[%s0 + $0x4c] sm:$0xf]
  %v35 = vld [vmem:[%s0 + $0x50] sm:$0xf]
  %v36 = vld [vmem:[%s0 + $0x54] sm:$0xf]
  %v37 = vld [vmem:[%s0 + $0x58] sm:$0xf]
  %v38 = vld [vmem:[%s0 + $0x5c] sm:$0xf]
  %v39 = vld [vmem:[%s0 + $0x60] sm:$0xf]
  %v40 = vld [vmem:[%s0 + $0x64] sm:$0xf]
  %v41 = vld [vmem:[%s0 + $0x68] sm:$0xf]
  %v42 = vld [vmem:[%s0 + $0x6c] sm:$0xf]
  %v43 = vld [vmem:[%s0 + $0x70] sm:$0xf]
  %v44 = vld [vmem:[%s0 + $0x74] sm:$0xf]
  %v45 = vld [vmem:[%s0 + $0x78] sm:$0xf]
  %v46 = vld [vmem:[%s0 + $0x7c] sm:$0xf]
  %v47 = vld [vmem:[%s0 + $0x80] sm:$0xf]
  %v48 = vld [vmem:[%s0 + $0x84] sm:$0xf]
  %v49 = vld [vmem:[%s0 + $0x88] sm:$0xf]
  %v50 = vld [vmem:[%s0 + $0x8c] sm:$0xf]
  %v51 = vld [vmem:[%s0 + $0x90] sm:$0xf]
  %v52 = vld [vmem:[%s0 + $0x94] sm:$0xf]
  %v53 = vld [vmem:[%s0 + $0x98] sm:$0xf]
  %v54 = vld [vmem:[%s0 + $0x9c] sm:$0xf]
  %v55 = vld [vmem:[%s0 + $0xa0] sm:$0xf]
  %v56 = vld [vmem:[%s0 + $0xa4] sm:$0xf]
  %v57 = vld [vmem:[%s0 + $0xa8] sm:$0xf]
  %v58 = vld [vmem:[%s0 + $0xac] sm:$0xf]
  %v59 = vld [vmem:[%s0 + $0xb0] sm:$0xf]
  %v60 = vld [vmem:[%s0 + $0xb4] sm:$0xf]
  %v61 = vld [vmem:[%s0 + $0xb8] sm:$0xf]
  %v62 = vld [vmem:[%s0 + $0xbc] sm:$0xf]
  %v63 = vld [vmem:[%s0 + $0xc0] sm:$0xf]
  %v64 = vld [vmem:[%s0 + $0xc4] sm:$0xf]
  %v65 = vld [vmem:[%s0 + $0xc8] sm:$0xf]
  %v66 = vld [vmem:[%s0 + $0xcc] sm:$0xf]
  %v67 = vld [vmem:[%s0 + $0xd0] sm:$0xf]
  %v68 = vld [vmem:[%s0 + $0xd4] sm:$0xf]
  %v69 = vld [vmem:[%s0 + $0xd8] sm:$0xf]
  %v70 = vld [vmem:[%s0 + $0xdc] sm:$0xf]
  %v71 = vld [vmem:[%s0 + $0xe0] sm:$0xf]
  %v72 = vld [vmem:[%s0 + $0xe4] sm:$0xf]
  %v73 = vld [vmem:[%s0 + $0xe8] sm:$0xf]
  %v74 = vld [vmem:[%s0 + $0xec] sm:$0xf]
  %v75 = vld [vmem:[%s0 + $0xf0] sm:$0xf]
  %v76 = vld [vmem:[%s0 + $0xf4] sm:$0xf]
  %v77 = vld [vmem:[%s0 + $0xf8] sm:$0xf]
  %v78 = vld [vmem:[%s0 + $0xfc] sm:$0xf]
  %v79 = vld [vmem:[%s1] sm:$0xff]
  %v80 = vld [vmem:[%s1 + $0x8] sm:$0xff]
  %v81 = vld [vmem:[%s1 + $0x10] sm:$0xff]
  %v82 = vld [vmem:[%s1 + $0x18] sm:$0xff]
  %v83 = vld [vmem:[%s1 + $0x20] sm:$0xff]
  %v84 = vld [vmem:[%s1 + $0x28] sm:$0xff]
  %v85 = vld [vmem:[%s1 + $0x30] sm:$0xff]
  %v86 = vld [vmem:[%s1 + $0x38] sm:$0xff]
  %v87 = vld [vmem:[%s1 + $0x40] sm:$0xff]
  %v88 = vld [vmem:[%s1 + $0x48] sm:$0xff]
  %v89 = vld [vmem:[%s1 + $0x50] sm:$0xff]
  %v90 = vld [vmem:[%s1 + $0x58] sm:$0xff]
  %v91 = vld [vmem:[%s1 + $0x60] sm:$0xff]
  %v92 = vld [vmem:[%s1 + $0x68] sm:$0x33]
  %v157 = vunpack.c.l.b16 %v15
  %v158 = vunpack.c.l.b16 %v16
  %v159 = vunpack.c.l.b16 %v17
  %v160 = vunpack.c.l.b16 %v18
  %v161 = vunpack.c.l.b16 %v19
  %v162 = vunpack.c.l.b16 %v20
  %v163 = vunpack.c.l.b16 %v21
  %v164 = vunpack.c.l.b16 %v22
  %v165 = vunpack.c.l.b16 %v23
  %v166 = vunpack.c.l.b16 %v24
  %v167 = vunpack.c.l.b16 %v25
  %v168 = vunpack.c.l.b16 %v26
  %v169 = vunpack.c.l.b16 %v27
  %v170 = vunpack.c.l.b16 %v28
  %v171 = vunpack.c.l.b16 %v29
  %v172 = vunpack.c.l.b16 %v30
  %v173 = vunpack.c.l.b16 %v31
  %v174 = vunpack.c.l.b16 %v32
  %v175 = vunpack.c.l.b16 %v33
  %v176 = vunpack.c.l.b16 %v34
  %v177 = vunpack.c.l.b16 %v35
  %v178 = vunpack.c.l.b16 %v36
  %v179 = vunpack.c.l.b16 %v37
  %v180 = vunpack.c.l.b16 %v38
  %v181 = vunpack.c.l.b16 %v39
  %v182 = vunpack.c.l.b16 %v40
  %v183 = vunpack.c.l.b16 %v41
  %v184 = vunpack.c.l.b16 %v42
  %v185 = vunpack.c.l.b16 %v43
  %v186 = vunpack.c.l.b16 %v44
  %v187 = vunpack.c.l.b16 %v45
  %v188 = vunpack.c.l.b16 %v46
  %v189 = vunpack.c.l.b16 %v47
  %v190 = vunpack.c.l.b16 %v48
  %v191 = vunpack.c.l.b16 %v49
  %v192 = vunpack.c.l.b16 %v50
  %v193 = vunpack.c.l.b16 %v51
  %v194 = vunpack.c.l.b16 %v52
  %v195 = vunpack.c.l.b16 %v53
  %v196 = vunpack.c.l.b16 %v54
  %v197 = vunpack.c.l.b16 %v55
  %v198 = vunpack.c.l.b16 %v56
  %v199 = vunpack.c.l.b16 %v57
  %v200 = vunpack.c.l.b16 %v58
  %v201 = vunpack.c.l.b16 %v59
  %v202 = vunpack.c.l.b16 %v60
  %v203 = vunpack.c.l.b16 %v61
  %v204 = vunpack.c.l.b16 %v62
  %v205 = vunpack.c.l.b16 %v63
  %v206 = vunpack.c.l.b16 %v64
  %v207 = vunpack.c.l.b16 %v65
  %v208 = vunpack.c.l.b16 %v66
  %v209 = vunpack.c.l.b16 %v67
  %v210 = vunpack.c.l.b16 %v68
  %v211 = vunpack.c.l.b16 %v69
  %v212 = vunpack.c.l.b16 %v70
  %v213 = vunpack.c.l.b16 %v71
  %v214 = vunpack.c.l.b16 %v72
  %v215 = vunpack.c.l.b16 %v73
  %v216 = vunpack.c.l.b16 %v74
  %v217 = vunpack.c.l.b16 %v75
  %v218 = vunpack.c.l.b16 %v76
  %v219 = vunpack.c.l.b16 %v77
  %v220 = vunpack.c.l.b16 %v78
  %v221 = vpack.c.b16 %v158, %v157
  %v222 = vpack.c.b16 %v160, %v159
  %v223 = vpack.c.b16 %v162, %v161
  %v224 = vpack.c.b16 %v164, %v163
  %v225 = vpack.c.b16 %v166, %v165
  %v226 = vpack.c.b16 %v168, %v167
  %v227 = vpack.c.b16 %v170, %v169
  %v228 = vpack.c.b16 %v172, %v171
  %v229 = vpack.c.b16 %v174, %v173
  %v230 = vpack.c.b16 %v176, %v175
  %v231 = vpack.c.b16 %v178, %v177
  %v232 = vpack.c.b16 %v180, %v179
  %v233 = vpack.c.b16 %v182, %v181
  %v234 = vpack.c.b16 %v184, %v183
  %v235 = vpack.c.b16 %v186, %v185
  %v236 = vpack.c.b16 %v188, %v187
  %v237 = vpack.c.b16 %v190, %v189
  %v238 = vpack.c.b16 %v192, %v191
  %v239 = vpack.c.b16 %v194, %v193
  %v240 = vpack.c.b16 %v196, %v195
  %v241 = vpack.c.b16 %v198, %v197
  %v242 = vpack.c.b16 %v200, %v199
  %v243 = vpack.c.b16 %v202, %v201
  %v244 = vpack.c.b16 %v204, %v203
  %v245 = vpack.c.b16 %v206, %v205
  %v246 = vpack.c.b16 %v208, %v207
  %v247 = vpack.c.b16 %v210, %v209
  %v248 = vpack.c.b16 %v212, %v211
  %v249 = vpack.c.b16 %v214, %v213
  %v250 = vpack.c.b16 %v216, %v215
  %v251 = vpack.c.b16 %v218, %v217
  %v252 = vpack.c.b16 %v220, %v219
  %v267 = vunpack.c.l.b16 %v79
  %v268 = vunpack.c.h.b16 %v79
  %v269 = vunpack.c.l.b16 %v80
  %v270 = vunpack.c.h.b16 %v80
  %v271 = vunpack.c.l.b16 %v81
  %v272 = vunpack.c.h.b16 %v81
  %v273 = vunpack.c.l.b16 %v82
  %v274 = vunpack.c.h.b16 %v82
  %v275 = vunpack.c.l.b16 %v83
  %v276 = vunpack.c.h.b16 %v83
  %v277 = vunpack.c.l.b16 %v84
  %v278 = vunpack.c.h.b16 %v84
  %v279 = vunpack.c.l.b16 %v85
  %v280 = vunpack.c.h.b16 %v85
  %v281 = vunpack.c.l.b16 %v86
  %v282 = vunpack.c.h.b16 %v86
  %v283 = vunpack.c.l.b16 %v87
  %v284 = vunpack.c.h.b16 %v87
  %v285 = vunpack.c.l.b16 %v88
  %v286 = vunpack.c.h.b16 %v88
  %v287 = vunpack.c.l.b16 %v89
  %v288 = vunpack.c.h.b16 %v89
  %v289 = vunpack.c.l.b16 %v90
  %v290 = vunpack.c.h.b16 %v90
  %v291 = vunpack.c.l.b16 %v91
  %v292 = vunpack.c.h.b16 %v91
  %v293 = vunpack.c.l.b16 %v92
  %v294 = vunpack.c.h.b16 %v92
  %v295 = vpack.c.b16 %v269, %v267
  %v296 = vpack.c.b16 %v270, %v268
  %v297 = vpack.c.b16 %v273, %v271
  %v298 = vpack.c.b16 %v274, %v272
  %v299 = vpack.c.b16 %v277, %v275
  %v300 = vpack.c.b16 %v278, %v276
  %v301 = vpack.c.b16 %v281, %v279
  %v302 = vpack.c.b16 %v282, %v280
  %v303 = vpack.c.b16 %v285, %v283
  %v304 = vpack.c.b16 %v286, %v284
  %v305 = vpack.c.b16 %v289, %v287
  %v306 = vpack.c.b16 %v290, %v288
  %v307 = vpack.c.b16 %v293, %v291
  %v308 = vpack.c.b16 %v294, %v292
  %vm321 = vcmask 883712
  %v323 = vsel %vm321, %v221, 0
  %v326 = vsel %vm321, %v222, 0
  %v329 = vsel %vm321, %v223, 0
  %v332 = vsel %vm321, %v224, 0
  %v335 = vsel %vm321, %v225, 0
  %v338 = vsel %vm321, %v226, 0
  %v341 = vsel %vm321, %v227, 0
  %v344 = vsel %vm321, %v228, 0
  %v347 = vsel %vm321, %v229, 0
  %v350 = vsel %vm321, %v230, 0
  %v353 = vsel %vm321, %v231, 0
  %v356 = vsel %vm321, %v232, 0
  %v359 = vsel %vm321, %v233, 0
  %v362 = vsel %vm321, %v234, 0
  %v365 = vsel %vm321, %v235, 0
  %v368 = vsel %vm321, %v236, 0
  %v371 = vsel %vm321, %v237, 0
  %v374 = vsel %vm321, %v238, 0
  %v377 = vsel %vm321, %v239, 0
  %v380 = vsel %vm321, %v240, 0
  %v383 = vsel %vm321, %v241, 0
  %v386 = vsel %vm321, %v242, 0
  %v389 = vsel %vm321, %v243, 0
  %v392 = vsel %vm321, %v244, 0
  %v395 = vsel %vm321, %v245, 0
  %v398 = vsel %vm321, %v246, 0
  %v401 = vsel %vm321, %v247, 0
  %v404 = vsel %vm321, %v248, 0
  %v407 = vsel %vm321, %v249, 0
  %v410 = vsel %vm321, %v250, 0
  %v413 = vsel %vm321, %v251, 0
  %v416 = vsel %vm321, %v252, 0
  %vm418 = vcmask 1045504
  %v420 = vsel %vm418, %v307, 0
  %v423 = vsel %vm418, %v308, 0
  %425 = vmatprep.subr.bf16.mxu0 %v296
  %426 = vmatpush1.bf16.msra.mxu0 %v295
  %427 = vmatprep.subr.bf16.mxu0 %v298
  %428 = vmatpush1.bf16.msra.mxu0 %v297
  %429 = vmatprep.subr.bf16.mxu0 %v300
  %430 = vmatpush1.bf16.msra.mxu0 %v299
  %431 = vmatprep.subr.bf16.mxu0 %v302
  %432 = vmatpush1.bf16.msra.mxu0 %v301
  %433 = vmatprep.subr.bf16.mxu0 %v304
  %434 = vmatpush1.bf16.msra.mxu0 %v303
  %435 = vmatprep.subr.bf16.mxu0 %v306
  %436 = vmatpush1.bf16.msra.mxu0 %v305
  %437 = vmatprep.subr.bf16.mxu0 %v423
  %438 = vmatpush1.bf16.msra.mxu0 %v420
  %439 = vmatprep.subr.bf16.mxu0 0
  %440 = vmatpush1.bf16.msra.mxu0 0
  %441 = vmatprep.subr.bf16.mxu0 0
  %442 = vmatpush1.bf16.msra.mxu0 0
  %443 = vmatprep.subr.bf16.mxu0 0
  %444 = vmatpush1.bf16.msra.mxu0 0
  %445 = vmatprep.subr.bf16.mxu0 0
  %446 = vmatpush1.bf16.msra.mxu0 0
  %447 = vmatprep.subr.bf16.mxu0 0
  %448 = vmatpush1.bf16.msra.mxu0 0
  %449 = vmatprep.subr.bf16.mxu0 0
  %450 = vmatpush1.bf16.msra.mxu0 0
  %451 = vmatprep.subr.bf16.mxu0 0
  %452 = vmatpush1.bf16.msra.mxu0 0
  %453 = vmatprep.subr.bf16.mxu0 0
  %454 = vmatpush1.bf16.msra.mxu0 0
  %455 = vmatprep.subr.bf16.mxu0 0
  %456 = vmatpush1.bf16.msra.mxu0 0
  %457 = vmatprep.mubr.bf16.mxu0 0
  %458 = vmatmul.mubr.bf16.gmra.mrb[0].mxu0 %v323
  %v459 = vpop.f32.mrb[0].mxu0
  %v460 = vadd.f32 0.0, %v459
  %v461 = vpop.f32.mrb[0].mxu0
  %v462 = vadd.f32 0.0, %v461
  %v463 = vpop.f32.mrb[0].mxu0
  %v464 = vadd.f32 0.0, %v463
  %v465 = vpop.f32.mrb[0].mxu0
  %v466 = vadd.f32 0.0, %v465
  %467 = vmatprep.mubr.bf16.mxu0 0
  %468 = vmatmul.mubr.bf16.gmra.mrb[0].mxu0 %v326
  %v469 = vpop.f32.mrb[0].mxu0
  %v470 = vadd.f32 0.0, %v469
  %v471 = vpop.f32.mrb[0].mxu0
  %v472 = vadd.f32 0.0, %v471
  %v473 = vpop.f32.mrb[0].mxu0
  %v474 = vadd.f32 0.0, %v473
  %v475 = vpop.f32.mrb[0].mxu0
  %v476 = vadd.f32 0.0, %v475
  %477 = vmatprep.mubr.bf16.mxu0 0
  %478 = vmatmul.mubr.bf16.gmra.mrb[0].mxu0 %v329
  %v479 = vpop.f32.mrb[0].mxu0
  %v480 = vadd.f32 0.0, %v479
  %v481 = vpop.f32.mrb[0].mxu0
  %v482 = vadd.f32 0.0, %v481
  %v483 = vpop.f32.mrb[0].mxu0
  %v484 = vadd.f32 0.0, %v483
  %v485 = vpop.f32.mrb[0].mxu0
  %v486 = vadd.f32 0.0, %v485
  %487 = vmatprep.mubr.bf16.mxu0 0
  %488 = vmatmul.mubr.bf16.gmra.mrb[0].mxu0 %v332
  %v489 = vpop.f32.mrb[0].mxu0
  %v490 = vadd.f32 0.0, %v489
  %v491 = vpop.f32.mrb[0].mxu0
  %v492 = vadd.f32 0.0, %v491
  %v493 = vpop.f32.mrb[0].mxu0
  %v494 = vadd.f32 0.0, %v493
  %v495 = vpop.f32.mrb[0].mxu0
  %v496 = vadd.f32 0.0, %v495
  %497 = vmatprep.mubr.bf16.mxu0 0
  %498 = vmatmul.mubr.bf16.gmra.mrb[0].mxu0 %v335
  %v499 = vpop.f32.mrb[0].mxu0
  %v500 = vadd.f32 0.0, %v499
  %v501 = vpop.f32.mrb[0].mxu0
  %v502 = vadd.f32 0.0, %v501
  %v503 = vpop.f32.mrb[0].mxu0
  %v504 = vadd.f32 0.0, %v503
  %v505 = vpop.f32.mrb[0].mxu0
  %v506 = vadd.f32 0.0, %v505
  %507 = vmatprep.mubr.bf16.mxu0 0
  %508 = vmatmul.mubr.bf16.gmra.mrb[0].mxu0 %v338
  %v509 = vpop.f32.mrb[0].mxu0
  %v510 = vadd.f32 0.0, %v509
  %v511 = vpop.f32.mrb[0].mxu0
  %v512 = vadd.f32 0.0, %v511
  %v513 = vpop.f32.mrb[0].mxu0
  %v514 = vadd.f32 0.0, %v513
  %v515 = vpop.f32.mrb[0].mxu0
  %v516 = vadd.f32 0.0, %v515
  %517 = vmatprep.mubr.bf16.mxu0 0
  %518 = vmatmul.mubr.bf16.gmra.mrb[0].mxu0 %v341
  %v519 = vpop.f32.mrb[0].mxu0
  %v520 = vadd.f32 0.0, %v519
  %v521 = vpop.f32.mrb[0].mxu0
  %v522 = vadd.f32 0.0, %v521
  %v523 = vpop.f32.mrb[0].mxu0
  %v524 = vadd.f32 0.0, %v523
  %v525 = vpop.f32.mrb[0].mxu0
  %v526 = vadd.f32 0.0, %v525
  %527 = vmatprep.mubr.bf16.mxu0 0
  %528 = vmatmul.mubr.bf16.gmra.mrb[0].mxu0 %v344
  %v529 = vpop.f32.mrb[0].mxu0
  %v530 = vadd.f32 0.0, %v529
  %v531 = vpop.f32.mrb[0].mxu0
  %v532 = vadd.f32 0.0, %v531
  %v533 = vpop.f32.mrb[0].mxu0
  %v534 = vadd.f32 0.0, %v533
  %v535 = vpop.f32.mrb[0].mxu0
  %v536 = vadd.f32 0.0, %v535
  %537 = vmatprep.mubr.bf16.mxu0 0
  %538 = vmatmul.mubr.bf16.gmra.mrb[0].mxu0 %v347
  %v539 = vpop.f32.mrb[0].mxu0
  %v540 = vadd.f32 0.0, %v539
  %v541 = vpop.f32.mrb[0].mxu0
  %v542 = vadd.f32 0.0, %v541
  %v543 = vpop.f32.mrb[0].mxu0
  %v544 = vadd.f32 0.0, %v543
  %v545 = vpop.f32.mrb[0].mxu0
  %v546 = vadd.f32 0.0, %v545
  %547 = vmatprep.mubr.bf16.mxu0 0
  %548 = vmatmul.mubr.bf16.gmra.mrb[0].mxu0 %v350
  %v549 = vpop.f32.mrb[0].mxu0
  %v550 = vadd.f32 0.0, %v549
  %v551 = vpop.f32.mrb[0].mxu0
  %v552 = vadd.f32 0.0, %v551
  %v553 = vpop.f32.mrb[0].mxu0
  %v554 = vadd.f32 0.0, %v553
  %v555 = vpop.f32.mrb[0].mxu0
  %v556 = vadd.f32 0.0, %v555
  %557 = vmatprep.mubr.bf16.mxu0 0
  %558 = vmatmul.mubr.bf16.gmra.mrb[0].mxu0 %v353
  %v559 = vpop.f32.mrb[0].mxu0
  %v560 = vadd.f32 0.0, %v559
  %v561 = vpop.f32.mrb[0].mxu0
  %v562 = vadd.f32 0.0, %v561
  %v563 = vpop.f32.mrb[0].mxu0
  %v564 = vadd.f32 0.0, %v563
  %v565 = vpop.f32.mrb[0].mxu0
  %v566 = vadd.f32 0.0, %v565
  %567 = vmatprep.mubr.bf16.mxu0 0
  %568 = vmatmul.mubr.bf16.gmra.mrb[0].mxu0 %v356
  %v569 = vpop.f32.mrb[0].mxu0
  %v570 = vadd.f32 0.0, %v569
  %v571 = vpop.f32.mrb[0].mxu0
  %v572 = vadd.f32 0.0, %v571
  %v573 = vpop.f32.mrb[0].mxu0
  %v574 = vadd.f32 0.0, %v573
  %v575 = vpop.f32.mrb[0].mxu0
  %v576 = vadd.f32 0.0, %v575
  %577 = vmatprep.mubr.bf16.mxu0 0
  %578 = vmatmul.mubr.bf16.gmra.mrb[0].mxu0 %v359
  %v579 = vpop.f32.mrb[0].mxu0
  %v580 = vadd.f32 0.0, %v579
  %v581 = vpop.f32.mrb[0].mxu0
  %v582 = vadd.f32 0.0, %v581
  %v583 = vpop.f32.mrb[0].mxu0
  %v584 = vadd.f32 0.0, %v583
  %v585 = vpop.f32.mrb[0].mxu0
  %v586 = vadd.f32 0.0, %v585
  %587 = vmatprep.mubr.bf16.mxu0 0
  %588 = vmatmul.mubr.bf16.gmra.mrb[0].mxu0 %v362
  %v589 = vpop.f32.mrb[0].mxu0
  %v590 = vadd.f32 0.0, %v589
  %v591 = vpop.f32.mrb[0].mxu0
  %v592 = vadd.f32 0.0, %v591
  %v593 = vpop.f32.mrb[0].mxu0
  %v594 = vadd.f32 0.0, %v593
  %v595 = vpop.f32.mrb[0].mxu0
  %v596 = vadd.f32 0.0, %v595
  %597 = vmatprep.mubr.bf16.mxu0 0
  %598 = vmatmul.mubr.bf16.gmra.mrb[0].mxu0 %v365
  %v599 = vpop.f32.mrb[0].mxu0
  %v600 = vadd.f32 0.0, %v599
  %v601 = vpop.f32.mrb[0].mxu0
  %v602 = vadd.f32 0.0, %v601
  %v603 = vpop.f32.mrb[0].mxu0
  %v604 = vadd.f32 0.0, %v603
  %v605 = vpop.f32.mrb[0].mxu0
  %v606 = vadd.f32 0.0, %v605
  %607 = vmatprep.mubr.bf16.mxu0 0
  %608 = vmatmul.mubr.bf16.gmra.mrb[0].mxu0 %v368
  %v609 = vpop.f32.mrb[0].mxu0
  %v610 = vadd.f32 0.0, %v609
  %v611 = vpop.f32.mrb[0].mxu0
  %v612 = vadd.f32 0.0, %v611
  %v613 = vpop.f32.mrb[0].mxu0
  %v614 = vadd.f32 0.0, %v613
  %v615 = vpop.f32.mrb[0].mxu0
  %v616 = vadd.f32 0.0, %v615
  %617 = vmatprep.mubr.bf16.mxu0 0
  %618 = vmatmul.mubr.bf16.gmra.mrb[0].mxu0 %v371
  %v619 = vpop.f32.mrb[0].mxu0
  %v620 = vadd.f32 0.0, %v619
  %v621 = vpop.f32.mrb[0].mxu0
  %v622 = vadd.f32 0.0, %v621
  %v623 = vpop.f32.mrb[0].mxu0
  %v624 = vadd.f32 0.0, %v623
  %v625 = vpop.f32.mrb[0].mxu0
  %v626 = vadd.f32 0.0, %v625
  %627 = vmatprep.mubr.bf16.mxu0 0
  %628 = vmatmul.mubr.bf16.gmra.mrb[0].mxu0 %v374
  %v629 = vpop.f32.mrb[0].mxu0
  %v630 = vadd.f32 0.0, %v629
  %v631 = vpop.f32.mrb[0].mxu0
  %v632 = vadd.f32 0.0, %v631
  %v633 = vpop.f32.mrb[0].mxu0
  %v634 = vadd.f32 0.0, %v633
  %v635 = vpop.f32.mrb[0].mxu0
  %v636 = vadd.f32 0.0, %v635
  %637 = vmatprep.mubr.bf16.mxu0 0
  %638 = vmatmul.mubr.bf16.gmra.mrb[0].mxu0 %v377
  %v639 = vpop.f32.mrb[0].mxu0
  %v640 = vadd.f32 0.0, %v639
  %v641 = vpop.f32.mrb[0].mxu0
  %v642 = vadd.f32 0.0, %v641
  %v643 = vpop.f32.mrb[0].mxu0
  %v644 = vadd.f32 0.0, %v643
  %v645 = vpop.f32.mrb[0].mxu0
  %v646 = vadd.f32 0.0, %v645
  %647 = vmatprep.mubr.bf16.mxu0 0
  %648 = vmatmul.mubr.bf16.gmra.mrb[0].mxu0 %v380
  %v649 = vpop.f32.mrb[0].mxu0
  %v650 = vadd.f32 0.0, %v649
  %v651 = vpop.f32.mrb[0].mxu0
  %v652 = vadd.f32 0.0, %v651
  %v653 = vpop.f32.mrb[0].mxu0
  %v654 = vadd.f32 0.0, %v653
  %v655 = vpop.f32.mrb[0].mxu0
  %v656 = vadd.f32 0.0, %v655
  %657 = vmatprep.mubr.bf16.mxu0 0
  %658 = vmatmul.mubr.bf16.gmra.mrb[0].mxu0 %v383
  %v659 = vpop.f32.mrb[0].mxu0
  %v660 = vadd.f32 0.0, %v659
  %v661 = vpop.f32.mrb[0].mxu0
  %v662 = vadd.f32 0.0, %v661
  %v663 = vpop.f32.mrb[0].mxu0
  %v664 = vadd.f32 0.0, %v663
  %v665 = vpop.f32.mrb[0].mxu0
  %v666 = vadd.f32 0.0, %v665
  %667 = vmatprep.mubr.bf16.mxu0 0
  %668 = vmatmul.mubr.bf16.gmra.mrb[0].mxu0 %v386
  %v669 = vpop.f32.mrb[0].mxu0
  %v670 = vadd.f32 0.0, %v669
  %v671 = vpop.f32.mrb[0].mxu0
  %v672 = vadd.f32 0.0, %v671
  %v673 = vpop.f32.mrb[0].mxu0
  %v674 = vadd.f32 0.0, %v673
  %v675 = vpop.f32.mrb[0].mxu0
  %v676 = vadd.f32 0.0, %v675
  %677 = vmatprep.mubr.bf16.mxu0 0
  %678 = vmatmul.mubr.bf16.gmra.mrb[0].mxu0 %v389
  %v679 = vpop.f32.mrb[0].mxu0
  %v680 = vadd.f32 0.0, %v679
  %v681 = vpop.f32.mrb[0].mxu0
  %v682 = vadd.f32 0.0, %v681
  %v683 = vpop.f32.mrb[0].mxu0
  %v684 = vadd.f32 0.0, %v683
  %v685 = vpop.f32.mrb[0].mxu0
  %v686 = vadd.f32 0.0, %v685
  %687 = vmatprep.mubr.bf16.mxu0 0
  %688 = vmatmul.mubr.bf16.gmra.mrb[0].mxu0 %v392
  %v689 = vpop.f32.mrb[0].mxu0
  %v690 = vadd.f32 0.0, %v689
  %v691 = vpop.f32.mrb[0].mxu0
  %v692 = vadd.f32 0.0, %v691
  %v693 = vpop.f32.mrb[0].mxu0
  %v694 = vadd.f32 0.0, %v693
  %v695 = vpop.f32.mrb[0].mxu0
  %v696 = vadd.f32 0.0, %v695
  %697 = vmatprep.mubr.bf16.mxu0 0
  %698 = vmatmul.mubr.bf16.gmra.mrb[0].mxu0 %v395
  %v699 = vpop.f32.mrb[0].mxu0
  %v700 = vadd.f32 0.0, %v699
  %v701 = vpop.f32.mrb[0].mxu0
  %v702 = vadd.f32 0.0, %v701
  %v703 = vpop.f32.mrb[0].mxu0
  %v704 = vadd.f32 0.0, %v703
  %v705 = vpop.f32.mrb[0].mxu0
  %v706 = vadd.f32 0.0, %v705
  %707 = vmatprep.mubr.bf16.mxu0 0
  %708 = vmatmul.mubr.bf16.gmra.mrb[0].mxu0 %v398
  %v709 = vpop.f32.mrb[0].mxu0
  %v710 = vadd.f32 0.0, %v709
  %v711 = vpop.f32.mrb[0].mxu0
  %v712 = vadd.f32 0.0, %v711
  %v713 = vpop.f32.mrb[0].mxu0
  %v714 = vadd.f32 0.0, %v713
  %v715 = vpop.f32.mrb[0].mxu0
  %v716 = vadd.f32 0.0, %v715
  %717 = vmatprep.mubr.bf16.mxu0 0
  %718 = vmatmul.mubr.bf16.gmra.mrb[0].mxu0 %v401
  %v719 = vpop.f32.mrb[0].mxu0
  %v720 = vadd.f32 0.0, %v719
  %v721 = vpop.f32.mrb[0].mxu0
  %v722 = vadd.f32 0.0, %v721
  %v723 = vpop.f32.mrb[0].mxu0
  %v724 = vadd.f32 0.0, %v723
  %v725 = vpop.f32.mrb[0].mxu0
  %v726 = vadd.f32 0.0, %v725
  %727 = vmatprep.mubr.bf16.mxu0 0
  %728 = vmatmul.mubr.bf16.gmra.mrb[0].mxu0 %v404
  %v729 = vpop.f32.mrb[0].mxu0
  %v730 = vadd.f32 0.0, %v729
  %v731 = vpop.f32.mrb[0].mxu0
  %v732 = vadd.f32 0.0, %v731
  %v733 = vpop.f32.mrb[0].mxu0
  %v734 = vadd.f32 0.0, %v733
  %v735 = vpop.f32.mrb[0].mxu0
  %v736 = vadd.f32 0.0, %v735
  %737 = vmatprep.mubr.bf16.mxu0 0
  %738 = vmatmul.mubr.bf16.gmra.mrb[0].mxu0 %v407
  %v739 = vpop.f32.mrb[0].mxu0
  %v740 = vadd.f32 0.0, %v739
  %v741 = vpop.f32.mrb[0].mxu0
  %v742 = vadd.f32 0.0, %v741
  %v743 = vpop.f32.mrb[0].mxu0
  %v744 = vadd.f32 0.0, %v743
  %v745 = vpop.f32.mrb[0].mxu0
  %v746 = vadd.f32 0.0, %v745
  %747 = vmatprep.mubr.bf16.mxu0 0
  %748 = vmatmul.mubr.bf16.gmra.mrb[0].mxu0 %v410
  %v749 = vpop.f32.mrb[0].mxu0
  %v750 = vadd.f32 0.0, %v749
  %v751 = vpop.f32.mrb[0].mxu0
  %v752 = vadd.f32 0.0, %v751
  %v753 = vpop.f32.mrb[0].mxu0
  %v754 = vadd.f32 0.0, %v753
  %v755 = vpop.f32.mrb[0].mxu0
  %v756 = vadd.f32 0.0, %v755
  %757 = vmatprep.mubr.bf16.mxu0 0
  %758 = vmatmul.mubr.bf16.gmra.mrb[0].mxu0 %v413
  %v759 = vpop.f32.mrb[0].mxu0
  %v760 = vadd.f32 0.0, %v759
  %v761 = vpop.f32.mrb[0].mxu0
  %v762 = vadd.f32 0.0, %v761
  %v763 = vpop.f32.mrb[0].mxu0
  %v764 = vadd.f32 0.0, %v763
  %v765 = vpop.f32.mrb[0].mxu0
  %v766 = vadd.f32 0.0, %v765
  %767 = vmatprep.mubr.bf16.mxu0 0
  %768 = vmatmul.mubr.bf16.gmra.mrb[0].mxu0 %v416
  %v769 = vpop.f32.mrb[0].mxu0
  %v770 = vadd.f32 0.0, %v769
  %v771 = vpop.f32.mrb[0].mxu0
  %v772 = vadd.f32 0.0, %v771
  %v773 = vpop.f32.mrb[0].mxu0
  %v774 = vadd.f32 0.0, %v773
  %v775 = vpop.f32.mrb[0].mxu0
  %v776 = vadd.f32 0.0, %v775
  %777 = vdwg.mxu0
  %v778 = vpack.c.bf16 %v464, %v460
  %v779 = vpack.c.bf16 %v466, %v462
  %v780 = vpack.c.bf16 %v474, %v470
  %v781 = vpack.c.bf16 %v476, %v472
  %v782 = vpack.c.bf16 %v484, %v480
  %v783 = vpack.c.bf16 %v486, %v482
  %v784 = vpack.c.bf16 %v494, %v490
  %v785 = vpack.c.bf16 %v496, %v492
  %v786 = vpack.c.bf16 %v504, %v500
  %v787 = vpack.c.bf16 %v506, %v502
  %v788 = vpack.c.bf16 %v514, %v510
  %v789 = vpack.c.bf16 %v516, %v512
  %v790 = vpack.c.bf16 %v524, %v520
  %v791 = vpack.c.bf16 %v526, %v522
  %v792 = vpack.c.bf16 %v534, %v530
  %v793 = vpack.c.bf16 %v536, %v532
  %v794 = vpack.c.bf16 %v544, %v540
  %v795 = vpack.c.bf16 %v546, %v542
  %v796 = vpack.c.bf16 %v554, %v550
  %v797 = vpack.c.bf16 %v556, %v552
  %v798 = vpack.c.bf16 %v564, %v560
  %v799 = vpack.c.bf16 %v566, %v562
  %v800 = vpack.c.bf16 %v574, %v570
  %v801 = vpack.c.bf16 %v576, %v572
  %v802 = vpack.c.bf16 %v584, %v580
  %v803 = vpack.c.bf16 %v586, %v582
  %v804 = vpack.c.bf16 %v594, %v590
  %v805 = vpack.c.bf16 %v596, %v592
  %v806 = vpack.c.bf16 %v604, %v600
  %v807 = vpack.c.bf16 %v606, %v602
  %v808 = vpack.c.bf16 %v614, %v610
  %v809 = vpack.c.bf16 %v616, %v612
  %v810 = vpack.c.bf16 %v624, %v620
  %v811 = vpack.c.bf16 %v626, %v622
  %v812 = vpack.c.bf16 %v634, %v630
  %v813 = vpack.c.bf16 %v636, %v632
  %v814 = vpack.c.bf16 %v644, %v640
  %v815 = vpack.c.bf16 %v646, %v642
  %v816 = vpack.c.bf16 %v654, %v650
  %v817 = vpack.c.bf16 %v656, %v652
  %v818 = vpack.c.bf16 %v664, %v660
  %v819 = vpack.c.bf16 %v666, %v662
  %v820 = vpack.c.bf16 %v674, %v670
  %v821 = vpack.c.bf16 %v676, %v672
  %v822 = vpack.c.bf16 %v684, %v680
  %v823 = vpack.c.bf16 %v686, %v682
  %v824 = vpack.c.bf16 %v694, %v690
  %v825 = vpack.c.bf16 %v696, %v692
  %v826 = vpack.c.bf16 %v704, %v700
  %v827 = vpack.c.bf16 %v706, %v702
  %v828 = vpack.c.bf16 %v714, %v710
  %v829 = vpack.c.bf16 %v716, %v712
  %v830 = vpack.c.bf16 %v724, %v720
  %v831 = vpack.c.bf16 %v726, %v722
  %v832 = vpack.c.bf16 %v734, %v730
  %v833 = vpack.c.bf16 %v736, %v732
  %v834 = vpack.c.bf16 %v744, %v740
  %v835 = vpack.c.bf16 %v746, %v742
  %v836 = vpack.c.bf16 %v754, %v750
  %v837 = vpack.c.bf16 %v756, %v752
  %v838 = vpack.c.bf16 %v764, %v760
  %v839 = vpack.c.bf16 %v766, %v762
  %v840 = vpack.c.bf16 %v774, %v770
  %v841 = vpack.c.bf16 %v776, %v772
  %v906 = vunpack.c.l.b16 %v778
  %v907 = vunpack.c.l.b16 %v779
  %v908 = vunpack.c.h.b16 %v778
  %v909 = vunpack.c.h.b16 %v779
  %v910 = vunpack.c.l.b16 %v780
  %v911 = vunpack.c.l.b16 %v781
  %v912 = vunpack.c.h.b16 %v780
  %v913 = vunpack.c.h.b16 %v781
  %v914 = vunpack.c.l.b16 %v782
  %v915 = vunpack.c.l.b16 %v783
  %v916 = vunpack.c.h.b16 %v782
  %v917 = vunpack.c.h.b16 %v783
  %v918 = vunpack.c.l.b16 %v784
  %v919 = vunpack.c.l.b16 %v785
  %v920 = vunpack.c.h.b16 %v784
  %v921 = vunpack.c.h.b16 %v785
  %v922 = vunpack.c.l.b16 %v786
  %v923 = vunpack.c.l.b16 %v787
  %v924 = vunpack.c.h.b16 %v786
  %v925 = vunpack.c.h.b16 %v787
  %v926 = vunpack.c.l.b16 %v788
  %v927 = vunpack.c.l.b16 %v789
  %v928 = vunpack.c.h.b16 %v788
  %v929 = vunpack.c.h.b16 %v789
  %v930 = vunpack.c.l.b16 %v790
  %v931 = vunpack.c.l.b16 %v791
  %v932 = vunpack.c.h.b16 %v790
  %v933 = vunpack.c.h.b16 %v791
  %v934 = vunpack.c.l.b16 %v792
  %v935 = vunpack.c.l.b16 %v793
  %v936 = vunpack.c.h.b16 %v792
  %v937 = vunpack.c.h.b16 %v793
  %v938 = vunpack.c.l.b16 %v794
  %v939 = vunpack.c.l.b16 %v795
  %v940 = vunpack.c.h.b16 %v794
  %v941 = vunpack.c.h.b16 %v795
  %v942 = vunpack.c.l.b16 %v796
  %v943 = vunpack.c.l.b16 %v797
  %v944 = vunpack.c.h.b16 %v796
  %v945 = vunpack.c.h.b16 %v797
  %v946 = vunpack.c.l.b16 %v798
  %v947 = vunpack.c.l.b16 %v799
  %v948 = vunpack.c.h.b16 %v798
  %v949 = vunpack.c.h.b16 %v799
  %v950 = vunpack.c.l.b16 %v800
  %v951 = vunpack.c.l.b16 %v801
  %v952 = vunpack.c.h.b16 %v800
  %v953 = vunpack.c.h.b16 %v801
  %v954 = vunpack.c.l.b16 %v802
  %v955 = vunpack.c.l.b16 %v803
  %v956 = vunpack.c.h.b16 %v802
  %v957 = vunpack.c.h.b16 %v803
  %v958 = vunpack.c.l.b16 %v804
  %v959 = vunpack.c.l.b16 %v805
  %v960 = vunpack.c.h.b16 %v804
  %v961 = vunpack.c.h.b16 %v805
  %v962 = vunpack.c.l.b16 %v806
  %v963 = vunpack.c.l.b16 %v807
  %v964 = vunpack.c.h.b16 %v806
  %v965 = vunpack.c.h.b16 %v807
  %v966 = vunpack.c.l.b16 %v808
  %v967 = vunpack.c.l.b16 %v809
  %v968 = vunpack.c.h.b16 %v808
  %v969 = vunpack.c.h.b16 %v809
  %v970 = vunpack.c.l.b16 %v810
  %v971 = vunpack.c.l.b16 %v811
  %v972 = vunpack.c.h.b16 %v810
  %v973 = vunpack.c.h.b16 %v811
  %v974 = vunpack.c.l.b16 %v812
  %v975 = vunpack.c.l.b16 %v813
  %v976 = vunpack.c.h.b16 %v812
  %v977 = vunpack.c.h.b16 %v813
  %v978 = vunpack.c.l.b16 %v814
  %v979 = vunpack.c.l.b16 %v815
  %v980 = vunpack.c.h.b16 %v814
  %v981 = vunpack.c.h.b16 %v815
  %v982 = vunpack.c.l.b16 %v816
  %v983 = vunpack.c.l.b16 %v817
  %v984 = vunpack.c.h.b16 %v816
  %v985 = vunpack.c.h.b16 %v817
  %v986 = vunpack.c.l.b16 %v818
  %v987 = vunpack.c.l.b16 %v819
  %v988 = vunpack.c.h.b16 %v818
  %v989 = vunpack.c.h.b16 %v819
  %v990 = vunpack.c.l.b16 %v820
  %v991 = vunpack.c.l.b16 %v821
  %v992 = vunpack.c.h.b16 %v820
  %v993 = vunpack.c.h.b16 %v821
  %v994 = vunpack.c.l.b16 %v822
  %v995 = vunpack.c.l.b16 %v823
  %v996 = vunpack.c.h.b16 %v822
  %v997 = vunpack.c.h.b16 %v823
  %v998 = vunpack.c.l.b16 %v824
  %v999 = vunpack.c.l.b16 %v825
  %v1000 = vunpack.c.h.b16 %v824
  %v1001 = vunpack.c.h.b16 %v825
  %v1002 = vunpack.c.l.b16 %v826
  %v1003 = vunpack.c.l.b16 %v827
  %v1004 = vunpack.c.h.b16 %v826
  %v1005 = vunpack.c.h.b16 %v827
  %v1006 = vunpack.c.l.b16 %v828
  %v1007 = vunpack.c.l.b16 %v829
  %v1008 = vunpack.c.h.b16 %v828
  %v1009 = vunpack.c.h.b16 %v829
  %v1010 = vunpack.c.l.b16 %v830
  %v1011 = vunpack.c.l.b16 %v831
  %v1012 = vunpack.c.h.b16 %v830
  %v1013 = vunpack.c.h.b16 %v831
  %v1014 = vunpack.c.l.b16 %v832
  %v1015 = vunpack.c.l.b16 %v833
  %v1016 = vunpack.c.h.b16 %v832
  %v1017 = vunpack.c.h.b16 %v833
  %v1018 = vunpack.c.l.b16 %v834
  %v1019 = vunpack.c.l.b16 %v835
  %v1020 = vunpack.c.h.b16 %v834
  %v1021 = vunpack.c.h.b16 %v835
  %v1022 = vunpack.c.l.b16 %v836
  %v1023 = vunpack.c.l.b16 %v837
  %v1024 = vunpack.c.h.b16 %v836
  %v1025 = vunpack.c.h.b16 %v837
  %v1026 = vunpack.c.l.b16 %v838
  %v1027 = vunpack.c.l.b16 %v839
  %v1028 = vunpack.c.h.b16 %v838
  %v1029 = vunpack.c.h.b16 %v839
  %v1030 = vunpack.c.l.b16 %v840
  %v1031 = vunpack.c.l.b16 %v841
  %v1032 = vunpack.c.h.b16 %v840
  %v1033 = vunpack.c.h.b16 %v841
  %v1034 = vpack.c.b16 %v907, %v906
  %v1035 = vpack.c.b16 %v909, %v908
  %v1036 = vpack.c.b16 %v911, %v910
  %v1037 = vpack.c.b16 %v913, %v912
  %v1038 = vpack.c.b16 %v915, %v914
  %v1039 = vpack.c.b16 %v917, %v916
  %v1040 = vpack.c.b16 %v919, %v918
  %v1041 = vpack.c.b16 %v921, %v920
  %v1042 = vpack.c.b16 %v923, %v922
  %v1043 = vpack.c.b16 %v925, %v924
  %v1044 = vpack.c.b16 %v927, %v926
  %v1045 = vpack.c.b16 %v929, %v928
  %v1046 = vpack.c.b16 %v931, %v930
  %v1047 = vpack.c.b16 %v933, %v932
  %v1048 = vpack.c.b16 %v935, %v934
  %v1049 = vpack.c.b16 %v937, %v936
  %v1050 = vpack.c.b16 %v939, %v938
  %v1051 = vpack.c.b16 %v941, %v940
  %v1052 = vpack.c.b16 %v943, %v942
  %v1053 = vpack.c.b16 %v945, %v944
  %v1054 = vpack.c.b16 %v947, %v946
  %v1055 = vpack.c.b16 %v949, %v948
  %v1056 = vpack.c.b16 %v951, %v950
  %v1057 = vpack.c.b16 %v953, %v952
  %v1058 = vpack.c.b16 %v955, %v954
  %v1059 = vpack.c.b16 %v957, %v956
  %v1060 = vpack.c.b16 %v959, %v958
  %v1061 = vpack.c.b16 %v961, %v960
  %v1062 = vpack.c.b16 %v963, %v962
  %v1063 = vpack.c.b16 %v965, %v964
  %v1064 = vpack.c.b16 %v967, %v966
  %v1065 = vpack.c.b16 %v969, %v968
  %v1066 = vpack.c.b16 %v971, %v970
  %v1067 = vpack.c.b16 %v973, %v972
  %v1068 = vpack.c.b16 %v975, %v974
  %v1069 = vpack.c.b16 %v977, %v976
  %v1070 = vpack.c.b16 %v979, %v978
  %v1071 = vpack.c.b16 %v981, %v980
  %v1072 = vpack.c.b16 %v983, %v982
  %v1073 = vpack.c.b16 %v985, %v984
  %v1074 = vpack.c.b16 %v987, %v986
  %v1075 = vpack.c.b16 %v989, %v988
  %v1076 = vpack.c.b16 %v991, %v990
  %v1077 = vpack.c.b16 %v993, %v992
  %v1078 = vpack.c.b16 %v995, %v994
  %v1079 = vpack.c.b16 %v997, %v996
  %v1080 = vpack.c.b16 %v999, %v998
  %v1081 = vpack.c.b16 %v1001, %v1000
  %v1082 = vpack.c.b16 %v1003, %v1002
  %v1083 = vpack.c.b16 %v1005, %v1004
  %v1084 = vpack.c.b16 %v1007, %v1006
  %v1085 = vpack.c.b16 %v1009, %v1008
  %v1086 = vpack.c.b16 %v1011, %v1010
  %v1087 = vpack.c.b16 %v1013, %v1012
  %v1088 = vpack.c.b16 %v1015, %v1014
  %v1089 = vpack.c.b16 %v1017, %v1016
  %v1090 = vpack.c.b16 %v1019, %v1018
  %v1091 = vpack.c.b16 %v1021, %v1020
  %v1092 = vpack.c.b16 %v1023, %v1022
  %v1093 = vpack.c.b16 %v1025, %v1024
  %v1094 = vpack.c.b16 %v1027, %v1026
  %v1095 = vpack.c.b16 %v1029, %v1028
  %v1096 = vpack.c.b16 %v1031, %v1030
  %v1097 = vpack.c.b16 %v1033, %v1032
  %1162 = vst [vmem:[%s2] sm:$0xff] %v1034
  %1163 = vst [vmem:[%s2 + $0x8] sm:$0xff] %v1035
  %1164 = vst [vmem:[%s2 + $0x10] sm:$0xff] %v1036
  %1165 = vst [vmem:[%s2 + $0x18] sm:$0xff] %v1037
  %1166 = vst [vmem:[%s2 + $0x20] sm:$0xff] %v1038
  %1167 = vst [vmem:[%s2 + $0x28] sm:$0xff] %v1039
  %1168 = vst [vmem:[%s2 + $0x30] sm:$0xff] %v1040
  %1169 = vst [vmem:[%s2 + $0x38] sm:$0xff] %v1041
  %1170 = vst [vmem:[%s2 + $0x40] sm:$0xff] %v1042
  %1171 = vst [vmem:[%s2 + $0x48] sm:$0xff] %v1043
  %1172 = vst [vmem:[%s2 + $0x50] sm:$0xff] %v1044
  %1173 = vst [vmem:[%s2 + $0x58] sm:$0xff] %v1045
  %1174 = vst [vmem:[%s2 + $0x60] sm:$0xff] %v1046
  %1175 = vst [vmem:[%s2 + $0x68] sm:$0xff] %v1047
  %1176 = vst [vmem:[%s2 + $0x70] sm:$0xff] %v1048
  %1177 = vst [vmem:[%s2 + $0x78] sm:$0xff] %v1049
  %1178 = vst [vmem:[%s2 + $0x80] sm:$0xff] %v1050
  %1179 = vst [vmem:[%s2 + $0x88] sm:$0xff] %v1051
  %1180 = vst [vmem:[%s2 + $0x90] sm:$0xff] %v1052
  %1181 = vst [vmem:[%s2 + $0x98] sm:$0xff] %v1053
  %1182 = vst [vmem:[%s2 + $0xa0] sm:$0xff] %v1054
  %1183 = vst [vmem:[%s2 + $0xa8] sm:$0xff] %v1055
  %1184 = vst [vmem:[%s2 + $0xb0] sm:$0xff] %v1056
  %1185 = vst [vmem:[%s2 + $0xb8] sm:$0xff] %v1057
  %1186 = vst [vmem:[%s2 + $0xc0] sm:$0xff] %v1058
  %1187 = vst [vmem:[%s2 + $0xc8] sm:$0xff] %v1059
  %1188 = vst [vmem:[%s2 + $0xd0] sm:$0xff] %v1060
  %1189 = vst [vmem:[%s2 + $0xd8] sm:$0xff] %v1061
  %1190 = vst [vmem:[%s2 + $0xe0] sm:$0xff] %v1062
  %1191 = vst [vmem:[%s2 + $0xe8] sm:$0xff] %v1063
  %1192 = vst [vmem:[%s2 + $0xf0] sm:$0xff] %v1064
  %1193 = vst [vmem:[%s2 + $0xf8] sm:$0xff] %v1065
  %1194 = vst [vmem:[%s2 + $0x100] sm:$0xff] %v1066
  %1195 = vst [vmem:[%s2 + $0x108] sm:$0xff] %v1067
  %1196 = vst [vmem:[%s2 + $0x110] sm:$0xff] %v1068
  %1197 = vst [vmem:[%s2 + $0x118] sm:$0xff] %v1069
  %1198 = vst [vmem:[%s2 + $0x120] sm:$0xff] %v1070
  %1199 = vst [vmem:[%s2 + $0x128] sm:$0xff] %v1071
  %1200 = vst [vmem:[%s2 + $0x130] sm:$0xff] %v1072
  %1201 = vst [vmem:[%s2 + $0x138] sm:$0xff] %v1073
  %1202 = vst [vmem:[%s2 + $0x140] sm:$0xff] %v1074
  %1203 = vst [vmem:[%s2 + $0x148] sm:$0xff] %v1075
  %1204 = vst [vmem:[%s2 + $0x150] sm:$0xff] %v1076
  %1205 = vst [vmem:[%s2 + $0x158] sm:$0xff] %v1077
  %1206 = vst [vmem:[%s2 + $0x160] sm:$0xff] %v1078
  %1207 = vst [vmem:[%s2 + $0x168] sm:$0xff] %v1079
  %1208 = vst [vmem:[%s2 + $0x170] sm:$0xff] %v1080
  %1209 = vst [vmem:[%s2 + $0x178] sm:$0xff] %v1081
  %1210 = vst [vmem:[%s2 + $0x180] sm:$0xff] %v1082
  %1211 = vst [vmem:[%s2 + $0x188] sm:$0xff] %v1083
  %1212 = vst [vmem:[%s2 + $0x190] sm:$0xff] %v1084
  %1213 = vst [vmem:[%s2 + $0x198] sm:$0xff] %v1085
  %1214 = vst [vmem:[%s2 + $0x1a0] sm:$0xff] %v1086
  %1215 = vst [vmem:[%s2 + $0x1a8] sm:$0xff] %v1087
  %1216 = vst [vmem:[%s2 + $0x1b0] sm:$0xff] %v1088
  %1217 = vst [vmem:[%s2 + $0x1b8] sm:$0xff] %v1089
  %1218 = vst [vmem:[%s2 + $0x1c0] sm:$0xff] %v1090
  %1219 = vst [vmem:[%s2 + $0x1c8] sm:$0xff] %v1091
  %1220 = vst [vmem:[%s2 + $0x1d0] sm:$0xff] %v1092
  %1221 = vst [vmem:[%s2 + $0x1d8] sm:$0xff] %v1093
  %1222 = vst [vmem:[%s2 + $0x1e0] sm:$0xff] %v1094
  %1223 = vst [vmem:[%s2 + $0x1e8] sm:$0xff] %v1095
  %1224 = vst [vmem:[%s2 + $0x1f0] sm:$0xff] %v1096
  %1225 = vst [vmem:[%s2 + $0x1f8] sm:$0xff] %v1097
  %v1226 = vadd.f32 %v460, %v464
  %v1227 = vadd.f32 %v1226, %v470
  %v1228 = vadd.f32 %v1227, %v474
  %v1229 = vadd.f32 %v1228, %v480
  %v1230 = vadd.f32 %v1229, %v484
  %v1231 = vadd.f32 %v1230, %v490
  %v1232 = vadd.f32 %v1231, %v494
  %v1233 = vadd.f32 %v1232, %v500
  %v1234 = vadd.f32 %v1233, %v504
  %v1235 = vadd.f32 %v1234, %v510
  %v1236 = vadd.f32 %v1235, %v514
  %v1237 = vadd.f32 %v1236, %v520
  %v1238 = vadd.f32 %v1237, %v524
  %v1239 = vadd.f32 %v1238, %v530
  %v1240 = vadd.f32 %v1239, %v534
  %v1241 = vadd.f32 %v1240, %v540
  %v1242 = vadd.f32 %v1241, %v544
  %v1243 = vadd.f32 %v1242, %v550
  %v1244 = vadd.f32 %v1243, %v554
  %v1245 = vadd.f32 %v1244, %v560
  %v1246 = vadd.f32 %v1245, %v564
  %v1247 = vadd.f32 %v1246, %v570
  %v1248 = vadd.f32 %v1247, %v574
  %v1249 = vadd.f32 %v1248, %v580
  %v1250 = vadd.f32 %v1249, %v584
  %v1251 = vadd.f32 %v1250, %v590
  %v1252 = vadd.f32 %v1251, %v594
  %v1253 = vadd.f32 %v1252, %v600
  %v1254 = vadd.f32 %v1253, %v604
  %v1255 = vadd.f32 %v1254, %v610
  %v1256 = vadd.f32 %v1255, %v614
  %v1257 = vadd.f32 %v1256, %v620
  %v1258 = vadd.f32 %v1257, %v624
  %v1259 = vadd.f32 %v1258, %v630
  %v1260 = vadd.f32 %v1259, %v634
  %v1261 = vadd.f32 %v1260, %v640
  %v1262 = vadd.f32 %v1261, %v644
  %v1263 = vadd.f32 %v1262, %v650
  %v1264 = vadd.f32 %v1263, %v654
  %v1265 = vadd.f32 %v1264, %v660
  %v1266 = vadd.f32 %v1265, %v664
  %v1267 = vadd.f32 %v1266, %v670
  %v1268 = vadd.f32 %v1267, %v674
  %v1269 = vadd.f32 %v1268, %v680
  %v1270 = vadd.f32 %v1269, %v684
  %v1271 = vadd.f32 %v1270, %v690
  %v1272 = vadd.f32 %v1271, %v694
  %v1273 = vadd.f32 %v1272, %v700
  %v1274 = vadd.f32 %v1273, %v704
  %v1275 = vadd.f32 %v1274, %v710
  %v1276 = vadd.f32 %v1275, %v714
  %v1277 = vadd.f32 %v1276, %v720
  %v1278 = vadd.f32 %v1277, %v724
  %v1279 = vadd.f32 %v1278, %v730
  %v1280 = vadd.f32 %v1279, %v734
  %v1281 = vadd.f32 %v1280, %v740
  %v1282 = vadd.f32 %v1281, %v744
  %v1283 = vadd.f32 %v1282, %v750
  %v1284 = vadd.f32 %v1283, %v754
  %v1285 = vadd.f32 %v1284, %v760
  %v1286 = vadd.f32 %v1285, %v764
  %v1287 = vadd.f32 %v1286, %v770
  %v1288 = vadd.f32 %v1287, %v774
  %v1289 = vrot.slane %v1288, 4
  %v1290 = vadd.f32 %v1288, %v1289
  %v1291 = vrot.slane %v1290, 2
  %v1292 = vadd.f32 %v1290, %v1291
  %v1293 = vrot.slane %v1292, 1
  %v1294 = vadd.f32 %v1292, %v1293
  %v1295 = vadd.f32 %v462, %v466
  %v1296 = vadd.f32 %v1295, %v472
  %v1297 = vadd.f32 %v1296, %v476
  %v1298 = vadd.f32 %v1297, %v482
  %v1299 = vadd.f32 %v1298, %v486
  %v1300 = vadd.f32 %v1299, %v492
  %v1301 = vadd.f32 %v1300, %v496
  %v1302 = vadd.f32 %v1301, %v502
  %v1303 = vadd.f32 %v1302, %v506
  %v1304 = vadd.f32 %v1303, %v512
  %v1305 = vadd.f32 %v1304, %v516
  %v1306 = vadd.f32 %v1305, %v522
  %v1307 = vadd.f32 %v1306, %v526
  %v1308 = vadd.f32 %v1307, %v532
  %v1309 = vadd.f32 %v1308, %v536
  %v1310 = vadd.f32 %v1309, %v542
  %v1311 = vadd.f32 %v1310, %v546
  %v1312 = vadd.f32 %v1311, %v552
  %v1313 = vadd.f32 %v1312, %v556
  %v1314 = vadd.f32 %v1313, %v562
  %v1315 = vadd.f32 %v1314, %v566
  %v1316 = vadd.f32 %v1315, %v572
  %v1317 = vadd.f32 %v1316, %v576
  %v1318 = vadd.f32 %v1317, %v582
  %v1319 = vadd.f32 %v1318, %v586
  %v1320 = vadd.f32 %v1319, %v592
  %v1321 = vadd.f32 %v1320, %v596
  %v1322 = vadd.f32 %v1321, %v602
  %v1323 = vadd.f32 %v1322, %v606
  %v1324 = vadd.f32 %v1323, %v612
  %v1325 = vadd.f32 %v1324, %v616
  %v1326 = vadd.f32 %v1325, %v622
  %v1327 = vadd.f32 %v1326, %v626
  %v1328 = vadd.f32 %v1327, %v632
  %v1329 = vadd.f32 %v1328, %v636
  %v1330 = vadd.f32 %v1329, %v642
  %v1331 = vadd.f32 %v1330, %v646
  %v1332 = vadd.f32 %v1331, %v652
  %v1333 = vadd.f32 %v1332, %v656
  %v1334 = vadd.f32 %v1333, %v662
  %v1335 = vadd.f32 %v1334, %v666
  %v1336 = vadd.f32 %v1335, %v672
  %v1337 = vadd.f32 %v1336, %v676
  %v1338 = vadd.f32 %v1337, %v682
  %v1339 = vadd.f32 %v1338, %v686
  %v1340 = vadd.f32 %v1339, %v692
  %v1341 = vadd.f32 %v1340, %v696
  %v1342 = vadd.f32 %v1341, %v702
  %v1343 = vadd.f32 %v1342, %v706
  %v1344 = vadd.f32 %v1343, %v712
  %v1345 = vadd.f32 %v1344, %v716
  %v1346 = vadd.f32 %v1345, %v722
  %v1347 = vadd.f32 %v1346, %v726
  %v1348 = vadd.f32 %v1347, %v732
  %v1349 = vadd.f32 %v1348, %v736
  %v1350 = vadd.f32 %v1349, %v742
  %v1351 = vadd.f32 %v1350, %v746
  %v1352 = vadd.f32 %v1351, %v752
  %v1353 = vadd.f32 %v1352, %v756
  %v1354 = vadd.f32 %v1353, %v762
  %v1355 = vadd.f32 %v1354, %v766
  %v1356 = vadd.f32 %v1355, %v772
  %v1357 = vadd.f32 %v1356, %v776
  %v1358 = vrot.slane %v1357, 4
  %v1359 = vadd.f32 %v1357, %v1358
  %v1360 = vrot.slane %v1359, 2
  %v1361 = vadd.f32 %v1359, %v1360
  %v1362 = vrot.slane %v1361, 1
  %v1363 = vadd.f32 %v1361, %v1362
  %v1366 = vcombine.low %v1294, %v1363
  %v1368 = vunpack.c.l.s4 1966171168
  %v1369 = vunpack.c.0.s8 %v1368
  %v1370 = vlaneseq
  %v1371 = vshrl.u32 %v1370, 7
  %v1372 = vsub.s32 %v1369, %v1371
  %v1373 = vrot.slane %v1366, %v1372
  %v1375 = vunpack.c.l.s4 1966171168
  %v1376 = vunpack.c.0.s8 %v1375
  %v1377 = vlaneseq
  %v1378 = vshrl.u32 %v1377, 7
  %v1379 = vsub.s32 %v1376, %v1378
  %v1380 = vrot.slane %v1373, %v1379
  %v1382 = vlaneseq
  %vm1383 = vcmp.ge.s32.totalorder %v1382, 0
  %vm1384 = vcmp.lt.s32.totalorder %v1382, 256
  %vm1385 = vmand %vm1383, %vm1384
  %1386 = vst.msk [vmem:[%s3] sm:$0x3] %vm1385, %v1380
  %v1387 = vmul.f32 %v460, %v460
  %v1388 = vmul.f32 %v462, %v462
  %v1389 = vmul.f32 %v464, %v464
  %v1390 = vmul.f32 %v466, %v466
  %v1391 = vmul.f32 %v470, %v470
  %v1392 = vmul.f32 %v472, %v472
  %v1393 = vmul.f32 %v474, %v474
  %v1394 = vmul.f32 %v476, %v476
  %v1395 = vmul.f32 %v480, %v480
  %v1396 = vmul.f32 %v482, %v482
  %v1397 = vmul.f32 %v484, %v484
  %v1398 = vmul.f32 %v486, %v486
  %v1399 = vmul.f32 %v490, %v490
  %v1400 = vmul.f32 %v492, %v492
  %v1401 = vmul.f32 %v494, %v494
  %v1402 = vmul.f32 %v496, %v496
  %v1403 = vmul.f32 %v500, %v500
  %v1404 = vmul.f32 %v502, %v502
  %v1405 = vmul.f32 %v504, %v504
  %v1406 = vmul.f32 %v506, %v506
  %v1407 = vmul.f32 %v510, %v510
  %v1408 = vmul.f32 %v512, %v512
  %v1409 = vmul.f32 %v514, %v514
  %v1410 = vmul.f32 %v516, %v516
  %v1411 = vmul.f32 %v520, %v520
  %v1412 = vmul.f32 %v522, %v522
  %v1413 = vmul.f32 %v524, %v524
  %v1414 = vmul.f32 %v526, %v526
  %v1415 = vmul.f32 %v530, %v530
  %v1416 = vmul.f32 %v532, %v532
  %v1417 = vmul.f32 %v534, %v534
  %v1418 = vmul.f32 %v536, %v536
  %v1419 = vmul.f32 %v540, %v540
  %v1420 = vmul.f32 %v542, %v542
  %v1421 = vmul.f32 %v544, %v544
  %v1422 = vmul.f32 %v546, %v546
  %v1423 = vmul.f32 %v550, %v550
  %v1424 = vmul.f32 %v552, %v552
  %v1425 = vmul.f32 %v554, %v554
  %v1426 = vmul.f32 %v556, %v556
  %v1427 = vmul.f32 %v560, %v560
  %v1428 = vmul.f32 %v562, %v562
  %v1429 = vmul.f32 %v564, %v564
  %v1430 = vmul.f32 %v566, %v566
  %v1431 = vmul.f32 %v570, %v570
  %v1432 = vmul.f32 %v572, %v572
  %v1433 = vmul.f32 %v574, %v574
  %v1434 = vmul.f32 %v576, %v576
  %v1435 = vmul.f32 %v580, %v580
  %v1436 = vmul.f32 %v582, %v582
  %v1437 = vmul.f32 %v584, %v584
  %v1438 = vmul.f32 %v586, %v586
  %v1439 = vmul.f32 %v590, %v590
  %v1440 = vmul.f32 %v592, %v592
  %v1441 = vmul.f32 %v594, %v594
  %v1442 = vmul.f32 %v596, %v596
  %v1443 = vmul.f32 %v600, %v600
  %v1444 = vmul.f32 %v602, %v602
  %v1445 = vmul.f32 %v604, %v604
  %v1446 = vmul.f32 %v606, %v606
  %v1447 = vmul.f32 %v610, %v610
  %v1448 = vmul.f32 %v612, %v612
  %v1449 = vmul.f32 %v614, %v614
  %v1450 = vmul.f32 %v616, %v616
  %v1451 = vmul.f32 %v620, %v620
  %v1452 = vmul.f32 %v622, %v622
  %v1453 = vmul.f32 %v624, %v624
  %v1454 = vmul.f32 %v626, %v626
  %v1455 = vmul.f32 %v630, %v630
  %v1456 = vmul.f32 %v632, %v632
  %v1457 = vmul.f32 %v634, %v634
  %v1458 = vmul.f32 %v636, %v636
  %v1459 = vmul.f32 %v640, %v640
  %v1460 = vmul.f32 %v642, %v642
  %v1461 = vmul.f32 %v644, %v644
  %v1462 = vmul.f32 %v646, %v646
  %v1463 = vmul.f32 %v650, %v650
  %v1464 = vmul.f32 %v652, %v652
  %v1465 = vmul.f32 %v654, %v654
  %v1466 = vmul.f32 %v656, %v656
  %v1467 = vmul.f32 %v660, %v660
  %v1468 = vmul.f32 %v662, %v662
  %v1469 = vmul.f32 %v664, %v664
  %v1470 = vmul.f32 %v666, %v666
  %v1471 = vmul.f32 %v670, %v670
  %v1472 = vmul.f32 %v672, %v672
  %v1473 = vmul.f32 %v674, %v674
  %v1474 = vmul.f32 %v676, %v676
  %v1475 = vmul.f32 %v680, %v680
  %v1476 = vmul.f32 %v682, %v682
  %v1477 = vmul.f32 %v684, %v684
  %v1478 = vmul.f32 %v686, %v686
  %v1479 = vmul.f32 %v690, %v690
  %v1480 = vmul.f32 %v692, %v692
  %v1481 = vmul.f32 %v694, %v694
  %v1482 = vmul.f32 %v696, %v696
  %v1483 = vmul.f32 %v700, %v700
  %v1484 = vmul.f32 %v702, %v702
  %v1485 = vmul.f32 %v704, %v704
  %v1486 = vmul.f32 %v706, %v706
  %v1487 = vmul.f32 %v710, %v710
  %v1488 = vmul.f32 %v712, %v712
  %v1489 = vmul.f32 %v714, %v714
  %v1490 = vmul.f32 %v716, %v716
  %v1491 = vmul.f32 %v720, %v720
  %v1492 = vmul.f32 %v722, %v722
  %v1493 = vmul.f32 %v724, %v724
  %v1494 = vmul.f32 %v726, %v726
  %v1495 = vmul.f32 %v730, %v730
  %v1496 = vmul.f32 %v732, %v732
  %v1497 = vmul.f32 %v734, %v734
  %v1498 = vmul.f32 %v736, %v736
  %v1499 = vmul.f32 %v740, %v740
  %v1500 = vmul.f32 %v742, %v742
  %v1501 = vmul.f32 %v744, %v744
  %v1502 = vmul.f32 %v746, %v746
  %v1503 = vmul.f32 %v750, %v750
  %v1504 = vmul.f32 %v752, %v752
  %v1505 = vmul.f32 %v754, %v754
  %v1506 = vmul.f32 %v756, %v756
  %v1507 = vmul.f32 %v760, %v760
  %v1508 = vmul.f32 %v762, %v762
  %v1509 = vmul.f32 %v764, %v764
  %v1510 = vmul.f32 %v766, %v766
  %v1511 = vmul.f32 %v770, %v770
  %v1512 = vmul.f32 %v772, %v772
  %v1513 = vmul.f32 %v774, %v774
  %v1514 = vmul.f32 %v776, %v776
  %v1515 = vadd.f32 %v1387, %v1389
  %v1516 = vadd.f32 %v1515, %v1391
  %v1517 = vadd.f32 %v1516, %v1393
  %v1518 = vadd.f32 %v1517, %v1395
  %v1519 = vadd.f32 %v1518, %v1397
  %v1520 = vadd.f32 %v1519, %v1399
  %v1521 = vadd.f32 %v1520, %v1401
  %v1522 = vadd.f32 %v1521, %v1403
  %v1523 = vadd.f32 %v1522, %v1405
  %v1524 = vadd.f32 %v1523, %v1407
  %v1525 = vadd.f32 %v1524, %v1409
  %v1526 = vadd.f32 %v1525, %v1411
  %v1527 = vadd.f32 %v1526, %v1413
  %v1528 = vadd.f32 %v1527, %v1415
  %v1529 = vadd.f32 %v1528, %v1417
  %v1530 = vadd.f32 %v1529, %v1419
  %v1531 = vadd.f32 %v1530, %v1421
  %v1532 = vadd.f32 %v1531, %v1423
  %v1533 = vadd.f32 %v1532, %v1425
  %v1534 = vadd.f32 %v1533, %v1427
  %v1535 = vadd.f32 %v1534, %v1429
  %v1536 = vadd.f32 %v1535, %v1431
  %v1537 = vadd.f32 %v1536, %v1433
  %v1538 = vadd.f32 %v1537, %v1435
  %v1539 = vadd.f32 %v1538, %v1437
  %v1540 = vadd.f32 %v1539, %v1439
  %v1541 = vadd.f32 %v1540, %v1441
  %v1542 = vadd.f32 %v1541, %v1443
  %v1543 = vadd.f32 %v1542, %v1445
  %v1544 = vadd.f32 %v1543, %v1447
  %v1545 = vadd.f32 %v1544, %v1449
  %v1546 = vadd.f32 %v1545, %v1451
  %v1547 = vadd.f32 %v1546, %v1453
  %v1548 = vadd.f32 %v1547, %v1455
  %v1549 = vadd.f32 %v1548, %v1457
  %v1550 = vadd.f32 %v1549, %v1459
  %v1551 = vadd.f32 %v1550, %v1461
  %v1552 = vadd.f32 %v1551, %v1463
  %v1553 = vadd.f32 %v1552, %v1465
  %v1554 = vadd.f32 %v1553, %v1467
  %v1555 = vadd.f32 %v1554, %v1469
  %v1556 = vadd.f32 %v1555, %v1471
  %v1557 = vadd.f32 %v1556, %v1473
  %v1558 = vadd.f32 %v1557, %v1475
  %v1559 = vadd.f32 %v1558, %v1477
  %v1560 = vadd.f32 %v1559, %v1479
  %v1561 = vadd.f32 %v1560, %v1481
  %v1562 = vadd.f32 %v1561, %v1483
  %v1563 = vadd.f32 %v1562, %v1485
  %v1564 = vadd.f32 %v1563, %v1487
  %v1565 = vadd.f32 %v1564, %v1489
  %v1566 = vadd.f32 %v1565, %v1491
  %v1567 = vadd.f32 %v1566, %v1493
  %v1568 = vadd.f32 %v1567, %v1495
  %v1569 = vadd.f32 %v1568, %v1497
  %v1570 = vadd.f32 %v1569, %v1499
  %v1571 = vadd.f32 %v1570, %v1501
  %v1572 = vadd.f32 %v1571, %v1503
  %v1573 = vadd.f32 %v1572, %v1505
  %v1574 = vadd.f32 %v1573, %v1507
  %v1575 = vadd.f32 %v1574, %v1509
  %v1576 = vadd.f32 %v1575, %v1511
  %v1577 = vadd.f32 %v1576, %v1513
  %v1578 = vrot.slane %v1577, 4
  %v1579 = vadd.f32 %v1577, %v1578
  %v1580 = vrot.slane %v1579, 2
  %v1581 = vadd.f32 %v1579, %v1580
  %v1582 = vrot.slane %v1581, 1
  %v1583 = vadd.f32 %v1581, %v1582
  %v1584 = vadd.f32 %v1388, %v1390
  %v1585 = vadd.f32 %v1584, %v1392
  %v1586 = vadd.f32 %v1585, %v1394
  %v1587 = vadd.f32 %v1586, %v1396
  %v1588 = vadd.f32 %v1587, %v1398
  %v1589 = vadd.f32 %v1588, %v1400
  %v1590 = vadd.f32 %v1589, %v1402
  %v1591 = vadd.f32 %v1590, %v1404
  %v1592 = vadd.f32 %v1591, %v1406
  %v1593 = vadd.f32 %v1592, %v1408
  %v1594 = vadd.f32 %v1593, %v1410
  %v1595 = vadd.f32 %v1594, %v1412
  %v1596 = vadd.f32 %v1595, %v1414
  %v1597 = vadd.f32 %v1596, %v1416
  %v1598 = vadd.f32 %v1597, %v1418
  %v1599 = vadd.f32 %v1598, %v1420
  %v1600 = vadd.f32 %v1599, %v1422
  %v1601 = vadd.f32 %v1600, %v1424
  %v1602 = vadd.f32 %v1601, %v1426
  %v1603 = vadd.f32 %v1602, %v1428
  %v1604 = vadd.f32 %v1603, %v1430
  %v1605 = vadd.f32 %v1604, %v1432
  %v1606 = vadd.f32 %v1605, %v1434
  %v1607 = vadd.f32 %v1606, %v1436
  %v1608 = vadd.f32 %v1607, %v1438
  %v1609 = vadd.f32 %v1608, %v1440
  %v1610 = vadd.f32 %v1609, %v1442
  %v1611 = vadd.f32 %v1610, %v1444
  %v1612 = vadd.f32 %v1611, %v1446
  %v1613 = vadd.f32 %v1612, %v1448
  %v1614 = vadd.f32 %v1613, %v1450
  %v1615 = vadd.f32 %v1614, %v1452
  %v1616 = vadd.f32 %v1615, %v1454
  %v1617 = vadd.f32 %v1616, %v1456
  %v1618 = vadd.f32 %v1617, %v1458
  %v1619 = vadd.f32 %v1618, %v1460
  %v1620 = vadd.f32 %v1619, %v1462
  %v1621 = vadd.f32 %v1620, %v1464
  %v1622 = vadd.f32 %v1621, %v1466
  %v1623 = vadd.f32 %v1622, %v1468
  %v1624 = vadd.f32 %v1623, %v1470
  %v1625 = vadd.f32 %v1624, %v1472
  %v1626 = vadd.f32 %v1625, %v1474
  %v1627 = vadd.f32 %v1626, %v1476
  %v1628 = vadd.f32 %v1627, %v1478
  %v1629 = vadd.f32 %v1628, %v1480
  %v1630 = vadd.f32 %v1629, %v1482
  %v1631 = vadd.f32 %v1630, %v1484
  %v1632 = vadd.f32 %v1631, %v1486
  %v1633 = vadd.f32 %v1632, %v1488
  %v1634 = vadd.f32 %v1633, %v1490
  %v1635 = vadd.f32 %v1634, %v1492
  %v1636 = vadd.f32 %v1635, %v1494
  %v1637 = vadd.f32 %v1636, %v1496
  %v1638 = vadd.f32 %v1637, %v1498
  %v1639 = vadd.f32 %v1638, %v1500
  %v1640 = vadd.f32 %v1639, %v1502
  %v1641 = vadd.f32 %v1640, %v1504
  %v1642 = vadd.f32 %v1641, %v1506
  %v1643 = vadd.f32 %v1642, %v1508
  %v1644 = vadd.f32 %v1643, %v1510
  %v1645 = vadd.f32 %v1644, %v1512
  %v1646 = vadd.f32 %v1645, %v1514
  %v1647 = vrot.slane %v1646, 4
  %v1648 = vadd.f32 %v1646, %v1647
  %v1649 = vrot.slane %v1648, 2
  %v1650 = vadd.f32 %v1648, %v1649
  %v1651 = vrot.slane %v1650, 1
  %v1652 = vadd.f32 %v1650, %v1651
  %v1655 = vcombine.low %v1583, %v1652
  %v1657 = vunpack.c.l.s4 1966171168
  %v1658 = vunpack.c.0.s8 %v1657
  %v1659 = vlaneseq
  %v1660 = vshrl.u32 %v1659, 7
  %v1661 = vsub.s32 %v1658, %v1660
  %v1662 = vrot.slane %v1655, %v1661
  %v1664 = vunpack.c.l.s4 1966171168
  %v1665 = vunpack.c.0.s8 %v1664
  %v1666 = vlaneseq
  %v1667 = vshrl.u32 %v1666, 7
  %v1668 = vsub.s32 %v1665, %v1667
  %v1669 = vrot.slane %v1662, %v1668
  %1671 = vst.msk [vmem:[%s4] sm:$0x3] %vm1385, %v1669
  // Predicated region
  $region10: #{conv_gru_cell_forward.6} parent=0 // pred_check
    _
  $region11: #{conv_gru_cell_forward.6} parent=0 // pred_check_branch
    %1673 = sbr.rel (0) target = $region13
  $region12: #{conv_gru_cell_forward.6} parent=0 // pred_region
    _
  $region13: #{conv_gru_cell_forward.6} parent=0 // pred_fallthru
    _
  // Predicated region
  $region14: #{conv_gru_cell_forward.6} parent=0 // pred_check
    _
  $region15: #{conv_gru_cell_forward.6} parent=0 // pred_check_branch
    %1675 = sbr.rel (0) target = $region17
  $region16: #{conv_gru_cell_forward.6} parent=0 // pred_region
    _
  $region17: #{conv_gru_cell_forward.6} parent=0 // pred_fallthru
    _
  // Predicated region
  $region18: #{conv_gru_cell_forward.6} parent=0 // pred_check
    _
  $region19: #{conv_gru_cell_forward.6} parent=0 // pred_check_branch
    %1677 = sbr.rel (0) target = $region21
  $region20: #{conv_gru_cell_forward.6} parent=0 // pred_region
    _
  $region21: #{conv_gru_cell_forward.6} parent=0 // pred_fallthru
    _
  // Predicated region
  $region22: #{conv_gru_cell_forward.6} parent=0 // pred_check
    _
  $region23: #{conv_gru_cell_forward.6} parent=0 // pred_check_branch
    %1679 = sbr.rel (0) target = $region25
  $region24: #{conv_gru_cell_forward.6} parent=0 // pred_region
    _
  $region25: #{conv_gru_cell_forward.6} parent=0 // pred_fallthru
    _
  // Predicated region
  $region26: #{conv_gru_cell_forward.6} parent=0 // pred_check
    _
  $region27: #{conv_gru_cell_forward.6} parent=0 // pred_check_branch
    %1681 = sbr.rel (0) target = $region29
  $region28: #{conv_gru_cell_forward.6} parent=0 // pred_region
    _
  $region29: #{conv_gru_cell_forward.6} parent=0 // pred_fallthru
    _
  // Predicated region
  $region30: #{conv_gru_cell_forward.6} parent=0 // pred_check
    _
  $region31: #{conv_gru_cell_forward.6} parent=0 // pred_check_branch
    %1683 = sbr.rel (0) target = $region33
  $region32: #{conv_gru_cell_forward.6} parent=0 // pred_region
    _
  $region33: #{conv_gru_cell_forward.6} parent=0 // pred_fallthru
    _

// kernel: conv_gru_cell_forward.7
$region0: #{conv_gru_cell_forward.7}
  #allocation0 [shape = 'u32[]', space=smem, size = 0x4, offset = 0x4, fixed_abs, tag = 'smem constant byte address 0x4 - core index']
  #allocation1 [shape = 'u32[144,128]{1,0:T(1,128)}', space=vmem, size = 0x12000, scoped, tag = 'internal scratch']
  %s0 = inlined_call_operand.vmem [shape: bf16[512,256], index: 0, kind: input, shape index: {}]
  %s1 = inlined_call_operand.vmem [shape: bf16[512,128], index: 1, kind: input, shape index: {}]
  %s2 = inlined_call_operand.vmem [shape: f32[1,128], index: 2, kind: input, shape index: {}]
  %s3 = inlined_call_operand.vmem [shape: f32[1,128], index: 3, kind: input, shape index: {}]
  %s4 = inlined_call_operand.vmem [shape: f32[1,128], index: 4, kind: input, shape index: {}]
  %s5 = inlined_call_operand.vmem [shape: f32[1,128], index: 5, kind: input, shape index: {}]
  %s6 = inlined_call_operand.vmem [shape: bf16[512,128], index: 6, kind: output, shape index: {0}]
  %s7 = inlined_call_operand.vmem [shape: bf16[512,128], index: 7, kind: output, shape index: {1}]
  %8 = xla_tuple %s6, %s7
  %s9 = sld [smem:[#allocation0]]
  $region42: #{conv_gru_cell_forward.7} parent=0
    _
  %s11 = ssub.s32 1, %s9
  %s12 = scalar_select 0, %s11, %s9
  // Predicated region
  $region2: #{conv_gru_cell_forward.7} parent=0 // pred_check
    _
  $region3: #{conv_gru_cell_forward.7} parent=0 // pred_check_branch
    %14 = sbr.rel (0) target = $region5
  $region4: #{conv_gru_cell_forward.7} parent=0 // pred_region
    _
  $region5: #{conv_gru_cell_forward.7} parent=0 // pred_fallthru
    _
  // Predicated region
  $region6: #{conv_gru_cell_forward.7} parent=0 // pred_check
    _
  $region7: #{conv_gru_cell_forward.7} parent=0 // pred_check_branch
    %16 = sbr.rel (0) target = $region9
  $region8: #{conv_gru_cell_forward.7} parent=0 // pred_region
    _
  $region9: #{conv_gru_cell_forward.7} parent=0 // pred_fallthru
    _
  // Predicated region
  $region10: #{conv_gru_cell_forward.7} parent=0 // pred_check
    _
  $region11: #{conv_gru_cell_forward.7} parent=0 // pred_check_branch
    %18 = sbr.rel (0) target = $region13
  $region12: #{conv_gru_cell_forward.7} parent=0 // pred_region
    _
  $region13: #{conv_gru_cell_forward.7} parent=0 // pred_fallthru
    _
  // Predicated region
  $region14: #{conv_gru_cell_forward.7} parent=0 // pred_check
    _
  $region15: #{conv_gru_cell_forward.7} parent=0 // pred_check_branch
    %20 = sbr.rel (0) target = $region17
  $region16: #{conv_gru_cell_forward.7} parent=0 // pred_region
    _
  $region17: #{conv_gru_cell_forward.7} parent=0 // pred_fallthru
    _
  // Predicated region
  $region18: #{conv_gru_cell_forward.7} parent=0 // pred_check
    _
  $region19: #{conv_gru_cell_forward.7} parent=0 // pred_check_branch
    %22 = sbr.rel (0) target = $region21
  $region20: #{conv_gru_cell_forward.7} parent=0 // pred_region
    _
  $region21: #{conv_gru_cell_forward.7} parent=0 // pred_fallthru
    _
  // Predicated region
  $region22: #{conv_gru_cell_forward.7} parent=0 // pred_check
    _
  $region23: #{conv_gru_cell_forward.7} parent=0 // pred_check_branch
    %24 = sbr.rel (0) target = $region25
  $region24: #{conv_gru_cell_forward.7} parent=0 // pred_region
    _
  $region25: #{conv_gru_cell_forward.7} parent=0 // pred_fallthru
    _
  %v25 = vld [vmem:[%s0] sm:$0xf]
  %v26 = vld [vmem:[%s0 + $0x8] sm:$0xf]
  %v27 = vld [vmem:[%s0 + $0x10] sm:$0xf]
  %v28 = vld [vmem:[%s0 + $0x18] sm:$0xf]
  %v29 = vld [vmem:[%s0 + $0x20] sm:$0xf]
  %v30 = vld [vmem:[%s0 + $0x28] sm:$0xf]
  %v31 = vld [vmem:[%s0 + $0x30] sm:$0xf]
  %v32 = vld [vmem:[%s0 + $0x38] sm:$0xf]
  %v33 = vld [vmem:[%s0 + $0x40] sm:$0xf]
  %v34 = vld [vmem:[%s0 + $0x48] sm:$0xf]
  %v35 = vld [vmem:[%s0 + $0x50] sm:$0xf]
  %v36 = vld [vmem:[%s0 + $0x58] sm:$0xf]
  %v37 = vld [vmem:[%s0 + $0x60] sm:$0xf]
  %v38 = vld [vmem:[%s0 + $0x68] sm:$0xf]
  %v39 = vld [vmem:[%s0 + $0x70] sm:$0xf]
  %v40 = vld [vmem:[%s0 + $0x78] sm:$0xf]
  %v41 = vld [vmem:[%s0 + $0x80] sm:$0xf]
  %v42 = vld [vmem:[%s0 + $0x88] sm:$0xf]
  %v43 = vld [vmem:[%s0 + $0x90] sm:$0xf]
  %v44 = vld [vmem:[%s0 + $0x98] sm:$0xf]
  %v45 = vld [vmem:[%s0 + $0xa0] sm:$0xf]
  %v46 = vld [vmem:[%s0 + $0xa8] sm:$0xf]
  %v47 = vld [vmem:[%s0 + $0xb0] sm:$0xf]
  %v48 = vld [vmem:[%s0 + $0xb8] sm:$0xf]
  %v49 = vld [vmem:[%s0 + $0xc0] sm:$0xf]
  %v50 = vld [vmem:[%s0 + $0xc8] sm:$0xf]
  %v51 = vld [vmem:[%s0 + $0xd0] sm:$0xf]
  %v52 = vld [vmem:[%s0 + $0xd8] sm:$0xf]
  %v53 = vld [vmem:[%s0 + $0xe0] sm:$0xf]
  %v54 = vld [vmem:[%s0 + $0xe8] sm:$0xf]
  %v55 = vld [vmem:[%s0 + $0xf0] sm:$0xf]
  %v56 = vld [vmem:[%s0 + $0xf8] sm:$0xf]
  %v57 = vld [vmem:[%s0 + $0x100] sm:$0xf]
  %v58 = vld [vmem:[%s0 + $0x108] sm:$0xf]
  %v59 = vld [vmem:[%s0 + $0x110] sm:$0xf]
  %v60 = vld [vmem:[%s0 + $0x118] sm:$0xf]
  %v61 = vld [vmem:[%s0 + $0x120] sm:$0xf]
  %v62 = vld [vmem:[%s0 + $0x128] sm:$0xf]
  %v63 = vld [vmem:[%s0 + $0x130] sm:$0xf]
  %v64 = vld [vmem:[%s0 + $0x138] sm:$0xf]
  %v65 = vld [vmem:[%s0 + $0x140] sm:$0xf]
  %v66 = vld [vmem:[%s0 + $0x148] sm:$0xf]
  %v67 = vld [vmem:[%s0 + $0x150] sm:$0xf]
  %v68 = vld [vmem:[%s0 + $0x158] sm:$0xf]
  %v69 = vld [vmem:[%s0 + $0x160] sm:$0xf]
  %v70 = vld [vmem:[%s0 + $0x168] sm:$0xf]
  %v71 = vld [vmem:[%s0 + $0x170] sm:$0xf]
  %v72 = vld [vmem:[%s0 + $0x178] sm:$0xf]
  %v73 = vld [vmem:[%s0 + $0x180] sm:$0xf]
  %v74 = vld [vmem:[%s0 + $0x188] sm:$0xf]
  %v75 = vld [vmem:[%s0 + $0x190] sm:$0xf]
  %v76 = vld [vmem:[%s0 + $0x198] sm:$0xf]
  %v77 = vld [vmem:[%s0 + $0x1a0] sm:$0xf]
  %v78 = vld [vmem:[%s0 + $0x1a8] sm:$0xf]
  %v79 = vld [vmem:[%s0 + $0x1b0] sm:$0xf]
  %v80 = vld [vmem:[%s0 + $0x1b8] sm:$0xf]
  %v81 = vld [vmem:[%s0 + $0x1c0] sm:$0xf]
  %v82 = vld [vmem:[%s0 + $0x1c8] sm:$0xf]
  %v83 = vld [vmem:[%s0 + $0x1d0] sm:$0xf]
  %v84 = vld [vmem:[%s0 + $0x1d8] sm:$0xf]
  %v85 = vld [vmem:[%s0 + $0x1e0] sm:$0xf]
  %v86 = vld [vmem:[%s0 + $0x1e8] sm:$0xf]
  %v87 = vld [vmem:[%s0 + $0x1f0] sm:$0xf]
  %v88 = vld [vmem:[%s0 + $0x1f8] sm:$0xf]
  %v89 = vunpack.c.l.bf16 %v25
  %v90 = vunpack.c.l.bf16 %v26
  %v91 = vunpack.c.l.bf16 %v27
  %v92 = vunpack.c.l.bf16 %v28
  %v93 = vunpack.c.l.bf16 %v29
  %v94 = vunpack.c.l.bf16 %v30
  %v95 = vunpack.c.l.bf16 %v31
  %v96 = vunpack.c.l.bf16 %v32
  %v97 = vunpack.c.l.bf16 %v33
  %v98 = vunpack.c.l.bf16 %v34
  %v99 = vunpack.c.l.bf16 %v35
  %v100 = vunpack.c.l.bf16 %v36
  %v101 = vunpack.c.l.bf16 %v37
  %v102 = vunpack.c.l.bf16 %v38
  %v103 = vunpack.c.l.bf16 %v39
  %v104 = vunpack.c.l.bf16 %v40
  %v105 = vunpack.c.l.bf16 %v41
  %v106 = vunpack.c.l.bf16 %v42
  %v107 = vunpack.c.l.bf16 %v43
  %v108 = vunpack.c.l.bf16 %v44
  %v109 = vunpack.c.l.bf16 %v45
  %v110 = vunpack.c.l.bf16 %v46
  %v111 = vunpack.c.l.bf16 %v47
  %v112 = vunpack.c.l.bf16 %v48
  %v113 = vunpack.c.l.bf16 %v49
  %v114 = vunpack.c.l.bf16 %v50
  %v115 = vunpack.c.l.bf16 %v51
  %v116 = vunpack.c.l.bf16 %v52
  %v117 = vunpack.c.l.bf16 %v53
  %v118 = vunpack.c.l.bf16 %v54
  %v119 = vunpack.c.l.bf16 %v55
  %v120 = vunpack.c.l.bf16 %v56
  %v121 = vunpack.c.l.bf16 %v57
  %v122 = vunpack.c.l.bf16 %v58
  %v123 = vunpack.c.l.bf16 %v59
  %v124 = vunpack.c.l.bf16 %v60
  %v125 = vunpack.c.l.bf16 %v61
  %v126 = vunpack.c.l.bf16 %v62
  %v127 = vunpack.c.l.bf16 %v63
  %v128 = vunpack.c.l.bf16 %v64
  %v129 = vunpack.c.l.bf16 %v65
  %v130 = vunpack.c.l.bf16 %v66
  %v131 = vunpack.c.l.bf16 %v67
  %v132 = vunpack.c.l.bf16 %v68
  %v133 = vunpack.c.l.bf16 %v69
  %v134 = vunpack.c.l.bf16 %v70
  %v135 = vunpack.c.l.bf16 %v71
  %v136 = vunpack.c.l.bf16 %v72
  %v137 = vunpack.c.l.bf16 %v73
  %v138 = vunpack.c.l.bf16 %v74
  %v139 = vunpack.c.l.bf16 %v75
  %v140 = vunpack.c.l.bf16 %v76
  %v141 = vunpack.c.l.bf16 %v77
  %v142 = vunpack.c.l.bf16 %v78
  %v143 = vunpack.c.l.bf16 %v79
  %v144 = vunpack.c.l.bf16 %v80
  %v145 = vunpack.c.l.bf16 %v81
  %v146 = vunpack.c.l.bf16 %v82
  %v147 = vunpack.c.l.bf16 %v83
  %v148 = vunpack.c.l.bf16 %v84
  %v149 = vunpack.c.l.bf16 %v85
  %v150 = vunpack.c.l.bf16 %v86
  %v151 = vunpack.c.l.bf16 %v87
  %v152 = vunpack.c.l.bf16 %v88
  %v153 = vld [vmem:[%s0 + $0x4] sm:$0xf]
  %v154 = vld [vmem:[%s0 + $0xc] sm:$0xf]
  %v155 = vld [vmem:[%s0 + $0x14] sm:$0xf]
  %v156 = vld [vmem:[%s0 + $0x1c] sm:$0xf]
  %v157 = vld [vmem:[%s0 + $0x24] sm:$0xf]
  %v158 = vld [vmem:[%s0 + $0x2c] sm:$0xf]
  %v159 = vld [vmem:[%s0 + $0x34] sm:$0xf]
  %v160 = vld [vmem:[%s0 + $0x3c] sm:$0xf]
  %v161 = vld [vmem:[%s0 + $0x44] sm:$0xf]
  %v162 = vld [vmem:[%s0 + $0x4c] sm:$0xf]
  %v163 = vld [vmem:[%s0 + $0x54] sm:$0xf]
  %v164 = vld [vmem:[%s0 + $0x5c] sm:$0xf]
  %v165 = vld [vmem:[%s0 + $0x64] sm:$0xf]
  %v166 = vld [vmem:[%s0 + $0x6c] sm:$0xf]
  %v167 = vld [vmem:[%s0 + $0x74] sm:$0xf]
  %v168 = vld [vmem:[%s0 + $0x7c] sm:$0xf]
  %v169 = vld [vmem:[%s0 + $0x84] sm:$0xf]
  %v170 = vld [vmem:[%s0 + $0x8c] sm:$0xf]
  %v171 = vld [vmem:[%s0 + $0x94] sm:$0xf]
  %v172 = vld [vmem:[%s0 + $0x9c] sm:$0xf]
  %v173 = vld [vmem:[%s0 + $0xa4] sm:$0xf]
  %v174 = vld [vmem:[%s0 + $0xac] sm:$0xf]
  %v175 = vld [vmem:[%s0 + $0xb4] sm:$0xf]
  %v176 = vld [vmem:[%s0 + $0xbc] sm:$0xf]
  %v177 = vld [vmem:[%s0 + $0xc4] sm:$0xf]
  %v178 = vld [vmem:[%s0 + $0xcc] sm:$0xf]
  %v179 = vld [vmem:[%s0 + $0xd4] sm:$0xf]
  %v180 = vld [vmem:[%s0 + $0xdc] sm:$0xf]
  %v181 = vld [vmem:[%s0 + $0xe4] sm:$0xf]
  %v182 = vld [vmem:[%s0 + $0xec] sm:$0xf]
  %v183 = vld [vmem:[%s0 + $0xf4] sm:$0xf]
  %v184 = vld [vmem:[%s0 + $0xfc] sm:$0xf]
  %v185 = vld [vmem:[%s0 + $0x104] sm:$0xf]
  %v186 = vld [vmem:[%s0 + $0x10c] sm:$0xf]
  %v187 = vld [vmem:[%s0 + $0x114] sm:$0xf]
  %v188 = vld [vmem:[%s0 + $0x11c] sm:$0xf]
  %v189 = vld [vmem:[%s0 + $0x124] sm:$0xf]
  %v190 = vld [vmem:[%s0 + $0x12c] sm:$0xf]
  %v191 = vld [vmem:[%s0 + $0x134] sm:$0xf]
  %v192 = vld [vmem:[%s0 + $0x13c] sm:$0xf]
  %v193 = vld [vmem:[%s0 + $0x144] sm:$0xf]
  %v194 = vld [vmem:[%s0 + $0x14c] sm:$0xf]
  %v195 = vld [vmem:[%s0 + $0x154] sm:$0xf]
  %v196 = vld [vmem:[%s0 + $0x15c] sm:$0xf]
  %v197 = vld [vmem:[%s0 + $0x164] sm:$0xf]
  %v198 = vld [vmem:[%s0 + $0x16c] sm:$0xf]
  %v199 = vld [vmem:[%s0 + $0x174] sm:$0xf]
  %v200 = vld [vmem:[%s0 + $0x17c] sm:$0xf]
  %v201 = vld [vmem:[%s0 + $0x184] sm:$0xf]
  %v202 = vld [vmem:[%s0 + $0x18c] sm:$0xf]
  %v203 = vld [vmem:[%s0 + $0x194] sm:$0xf]
  %v204 = vld [vmem:[%s0 + $0x19c] sm:$0xf]
  %v205 = vld [vmem:[%s0 + $0x1a4] sm:$0xf]
  %v206 = vld [vmem:[%s0 + $0x1ac] sm:$0xf]
  %v207 = vld [vmem:[%s0 + $0x1b4] sm:$0xf]
  %v208 = vld [vmem:[%s0 + $0x1bc] sm:$0xf]
  %v209 = vld [vmem:[%s0 + $0x1c4] sm:$0xf]
  %v210 = vld [vmem:[%s0 + $0x1cc] sm:$0xf]
  %v211 = vld [vmem:[%s0 + $0x1d4] sm:$0xf]
  %v212 = vld [vmem:[%s0 + $0x1dc] sm:$0xf]
  %v213 = vld [vmem:[%s0 + $0x1e4] sm:$0xf]
  %v214 = vld [vmem:[%s0 + $0x1ec] sm:$0xf]
  %v215 = vld [vmem:[%s0 + $0x1f4] sm:$0xf]
  %v216 = vld [vmem:[%s0 + $0x1fc] sm:$0xf]
  %v217 = vunpack.c.l.bf16 %v153
  %v218 = vunpack.c.l.bf16 %v154
  %v219 = vunpack.c.l.bf16 %v155
  %v220 = vunpack.c.l.bf16 %v156
  %v221 = vunpack.c.l.bf16 %v157
  %v222 = vunpack.c.l.bf16 %v158
  %v223 = vunpack.c.l.bf16 %v159
  %v224 = vunpack.c.l.bf16 %v160
  %v225 = vunpack.c.l.bf16 %v161
  %v226 = vunpack.c.l.bf16 %v162
  %v227 = vunpack.c.l.bf16 %v163
  %v228 = vunpack.c.l.bf16 %v164
  %v229 = vunpack.c.l.bf16 %v165
  %v230 = vunpack.c.l.bf16 %v166
  %v231 = vunpack.c.l.bf16 %v167
  %v232 = vunpack.c.l.bf16 %v168
  %v233 = vunpack.c.l.bf16 %v169
  %v234 = vunpack.c.l.bf16 %v170
  %v235 = vunpack.c.l.bf16 %v171
  %v236 = vunpack.c.l.bf16 %v172
  %v237 = vunpack.c.l.bf16 %v173
  %v238 = vunpack.c.l.bf16 %v174
  %v239 = vunpack.c.l.bf16 %v175
  %v240 = vunpack.c.l.bf16 %v176
  %v241 = vunpack.c.l.bf16 %v177
  %v242 = vunpack.c.l.bf16 %v178
  %v243 = vunpack.c.l.bf16 %v179
  %v244 = vunpack.c.l.bf16 %v180
  %v245 = vunpack.c.l.bf16 %v181
  %v246 = vunpack.c.l.bf16 %v182
  %v247 = vunpack.c.l.bf16 %v183
  %v248 = vunpack.c.l.bf16 %v184
  %v249 = vunpack.c.l.bf16 %v185
  %v250 = vunpack.c.l.bf16 %v186
  %v251 = vunpack.c.l.bf16 %v187
  %v252 = vunpack.c.l.bf16 %v188
  %v253 = vunpack.c.l.bf16 %v189
  %v254 = vunpack.c.l.bf16 %v190
  %v255 = vunpack.c.l.bf16 %v191
  %v256 = vunpack.c.l.bf16 %v192
  %v257 = vunpack.c.l.bf16 %v193
  %v258 = vunpack.c.l.bf16 %v194
  %v259 = vunpack.c.l.bf16 %v195
  %v260 = vunpack.c.l.bf16 %v196
  %v261 = vunpack.c.l.bf16 %v197
  %v262 = vunpack.c.l.bf16 %v198
  %v263 = vunpack.c.l.bf16 %v199
  %v264 = vunpack.c.l.bf16 %v200
  %v265 = vunpack.c.l.bf16 %v201
  %v266 = vunpack.c.l.bf16 %v202
  %v267 = vunpack.c.l.bf16 %v203
  %v268 = vunpack.c.l.bf16 %v204
  %v269 = vunpack.c.l.bf16 %v205
  %v270 = vunpack.c.l.bf16 %v206
  %v271 = vunpack.c.l.bf16 %v207
  %v272 = vunpack.c.l.bf16 %v208
  %v273 = vunpack.c.l.bf16 %v209
  %v274 = vunpack.c.l.bf16 %v210
  %v275 = vunpack.c.l.bf16 %v211
  %v276 = vunpack.c.l.bf16 %v212
  %v277 = vunpack.c.l.bf16 %v213
  %v278 = vunpack.c.l.bf16 %v214
  %v279 = vunpack.c.l.bf16 %v215
  %v280 = vunpack.c.l.bf16 %v216
  %v281 = vld [vmem:[%s1] sm:$0xf]
  %v282 = vld [vmem:[%s1 + $0x4] sm:$0xf]
  %v283 = vld [vmem:[%s1 + $0x8] sm:$0xf]
  %v284 = vld [vmem:[%s1 + $0xc] sm:$0xf]
  %v285 = vld [vmem:[%s1 + $0x10] sm:$0xf]
  %v286 = vld [vmem:[%s1 + $0x14] sm:$0xf]
  %v287 = vld [vmem:[%s1 + $0x18] sm:$0xf]
  %v288 = vld [vmem:[%s1 + $0x1c] sm:$0xf]
  %v289 = vld [vmem:[%s1 + $0x20] sm:$0xf]
  %v290 = vld [vmem:[%s1 + $0x24] sm:$0xf]
  %v291 = vld [vmem:[%s1 + $0x28] sm:$0xf]
  %v292 = vld [vmem:[%s1 + $0x2c] sm:$0xf]
  %v293 = vld [vmem:[%s1 + $0x30] sm:$0xf]
  %v294 = vld [vmem:[%s1 + $0x34] sm:$0xf]
  %v295 = vld [vmem:[%s1 + $0x38] sm:$0xf]
  %v296 = vld [vmem:[%s1 + $0x3c] sm:$0xf]
  %v297 = vld [vmem:[%s1 + $0x40] sm:$0xf]
  %v298 = vld [vmem:[%s1 + $0x44] sm:$0xf]
  %v299 = vld [vmem:[%s1 + $0x48] sm:$0xf]
  %v300 = vld [vmem:[%s1 + $0x4c] sm:$0xf]
  %v301 = vld [vmem:[%s1 + $0x50] sm:$0xf]
  %v302 = vld [vmem:[%s1 + $0x54] sm:$0xf]
  %v303 = vld [vmem:[%s1 + $0x58] sm:$0xf]
  %v304 = vld [vmem:[%s1 + $0x5c] sm:$0xf]
  %v305 = vld [vmem:[%s1 + $0x60] sm:$0xf]
  %v306 = vld [vmem:[%s1 + $0x64] sm:$0xf]
  %v307 = vld [vmem:[%s1 + $0x68] sm:$0xf]
  %v308 = vld [vmem:[%s1 + $0x6c] sm:$0xf]
  %v309 = vld [vmem:[%s1 + $0x70] sm:$0xf]
  %v310 = vld [vmem:[%s1 + $0x74] sm:$0xf]
  %v311 = vld [vmem:[%s1 + $0x78] sm:$0xf]
  %v312 = vld [vmem:[%s1 + $0x7c] sm:$0xf]
  %v313 = vld [vmem:[%s1 + $0x80] sm:$0xf]
  %v314 = vld [vmem:[%s1 + $0x84] sm:$0xf]
  %v315 = vld [vmem:[%s1 + $0x88] sm:$0xf]
  %v316 = vld [vmem:[%s1 + $0x8c] sm:$0xf]
  %v317 = vld [vmem:[%s1 + $0x90] sm:$0xf]
  %v318 = vld [vmem:[%s1 + $0x94] sm:$0xf]
  %v319 = vld [vmem:[%s1 + $0x98] sm:$0xf]
  %v320 = vld [vmem:[%s1 + $0x9c] sm:$0xf]
  %v321 = vld [vmem:[%s1 + $0xa0] sm:$0xf]
  %v322 = vld [vmem:[%s1 + $0xa4] sm:$0xf]
  %v323 = vld [vmem:[%s1 + $0xa8] sm:$0xf]
  %v324 = vld [vmem:[%s1 + $0xac] sm:$0xf]
  %v325 = vld [vmem:[%s1 + $0xb0] sm:$0xf]
  %v326 = vld [vmem:[%s1 + $0xb4] sm:$0xf]
  %v327 = vld [vmem:[%s1 + $0xb8] sm:$0xf]
  %v328 = vld [vmem:[%s1 + $0xbc] sm:$0xf]
  %v329 = vld [vmem:[%s1 + $0xc0] sm:$0xf]
  %v330 = vld [vmem:[%s1 + $0xc4] sm:$0xf]
  %v331 = vld [vmem:[%s1 + $0xc8] sm:$0xf]
  %v332 = vld [vmem:[%s1 + $0xcc] sm:$0xf]
  %v333 = vld [vmem:[%s1 + $0xd0] sm:$0xf]
  %v334 = vld [vmem:[%s1 + $0xd4] sm:$0xf]
  %v335 = vld [vmem:[%s1 + $0xd8] sm:$0xf]
  %v336 = vld [vmem:[%s1 + $0xdc] sm:$0xf]
  %v337 = vld [vmem:[%s1 + $0xe0] sm:$0xf]
  %v338 = vld [vmem:[%s1 + $0xe4] sm:$0xf]
  %v339 = vld [vmem:[%s1 + $0xe8] sm:$0xf]
  %v340 = vld [vmem:[%s1 + $0xec] sm:$0xf]
  %v341 = vld [vmem:[%s1 + $0xf0] sm:$0xf]
  %v342 = vld [vmem:[%s1 + $0xf4] sm:$0xf]
  %v343 = vld [vmem:[%s1 + $0xf8] sm:$0xf]
  %v344 = vld [vmem:[%s1 + $0xfc] sm:$0xf]
  %v345 = vunpack.c.l.bf16 %v281
  %v346 = vunpack.c.l.bf16 %v282
  %v347 = vunpack.c.l.bf16 %v283
  %v348 = vunpack.c.l.bf16 %v284
  %v349 = vunpack.c.l.bf16 %v285
  %v350 = vunpack.c.l.bf16 %v286
  %v351 = vunpack.c.l.bf16 %v287
  %v352 = vunpack.c.l.bf16 %v288
  %v353 = vunpack.c.l.bf16 %v289
  %v354 = vunpack.c.l.bf16 %v290
  %v355 = vunpack.c.l.bf16 %v291
  %v356 = vunpack.c.l.bf16 %v292
  %v357 = vunpack.c.l.bf16 %v293
  %v358 = vunpack.c.l.bf16 %v294
  %v359 = vunpack.c.l.bf16 %v295
  %v360 = vunpack.c.l.bf16 %v296
  %v361 = vunpack.c.l.bf16 %v297
  %v362 = vunpack.c.l.bf16 %v298
  %v363 = vunpack.c.l.bf16 %v299
  %v364 = vunpack.c.l.bf16 %v300
  %v365 = vunpack.c.l.bf16 %v301
  %v366 = vunpack.c.l.bf16 %v302
  %v367 = vunpack.c.l.bf16 %v303
  %v368 = vunpack.c.l.bf16 %v304
  %v369 = vunpack.c.l.bf16 %v305
  %v370 = vunpack.c.l.bf16 %v306
  %v371 = vunpack.c.l.bf16 %v307
  %v372 = vunpack.c.l.bf16 %v308
  %v373 = vunpack.c.l.bf16 %v309
  %v374 = vunpack.c.l.bf16 %v310
  %v375 = vunpack.c.l.bf16 %v311
  %v376 = vunpack.c.l.bf16 %v312
  %v377 = vunpack.c.l.bf16 %v313
  %v378 = vunpack.c.l.bf16 %v314
  %v379 = vunpack.c.l.bf16 %v315
  %v380 = vunpack.c.l.bf16 %v316
  %v381 = vunpack.c.l.bf16 %v317
  %v382 = vunpack.c.l.bf16 %v318
  %v383 = vunpack.c.l.bf16 %v319
  %v384 = vunpack.c.l.bf16 %v320
  %v385 = vunpack.c.l.bf16 %v321
  %v386 = vunpack.c.l.bf16 %v322
  %v387 = vunpack.c.l.bf16 %v323
  %v388 = vunpack.c.l.bf16 %v324
  %v389 = vunpack.c.l.bf16 %v325
  %v390 = vunpack.c.l.bf16 %v326
  %v391 = vunpack.c.l.bf16 %v327
  %v392 = vunpack.c.l.bf16 %v328
  %v393 = vunpack.c.l.bf16 %v329
  %v394 = vunpack.c.l.bf16 %v330
  %v395 = vunpack.c.l.bf16 %v331
  %v396 = vunpack.c.l.bf16 %v332
  %v397 = vunpack.c.l.bf16 %v333
  %v398 = vunpack.c.l.bf16 %v334
  %v399 = vunpack.c.l.bf16 %v335
  %v400 = vunpack.c.l.bf16 %v336
  %v401 = vunpack.c.l.bf16 %v337
  %v402 = vunpack.c.l.bf16 %v338
  %v403 = vunpack.c.l.bf16 %v339
  %v404 = vunpack.c.l.bf16 %v340
  %v405 = vunpack.c.l.bf16 %v341
  %v406 = vunpack.c.l.bf16 %v342
  %v407 = vunpack.c.l.bf16 %v343
  %v408 = vunpack.c.l.bf16 %v344
  %v409 = vld [vmem:[%s2] sm:$0x1]
  %v411 = vlaneseq
  %v412 = vshrl.u32 %v411, 7
  %v413 = vsub.s32 0, %v412
  %v414 = vrot.slane %v409, %v413
  %v416 = vmul.f32 %v89, %v414
  %v417 = vmul.f32 %v90, %v414
  %v418 = vmul.f32 %v91, %v414
  %v419 = vmul.f32 %v92, %v414
  %v420 = vmul.f32 %v93, %v414
  %v421 = vmul.f32 %v94, %v414
  %v422 = vmul.f32 %v95, %v414
  %v423 = vmul.f32 %v96, %v414
  %v424 = vmul.f32 %v97, %v414
  %v425 = vmul.f32 %v98, %v414
  %v426 = vmul.f32 %v99, %v414
  %v427 = vmul.f32 %v100, %v414
  %v428 = vmul.f32 %v101, %v414
  %v429 = vmul.f32 %v102, %v414
  %v430 = vmul.f32 %v103, %v414
  %v431 = vmul.f32 %v104, %v414
  %v432 = vmul.f32 %v105, %v414
  %v433 = vmul.f32 %v106, %v414
  %v434 = vmul.f32 %v107, %v414
  %v435 = vmul.f32 %v108, %v414
  %v436 = vmul.f32 %v109, %v414
  %v437 = vmul.f32 %v110, %v414
  %v438 = vmul.f32 %v111, %v414
  %v439 = vmul.f32 %v112, %v414
  %v440 = vmul.f32 %v113, %v414
  %v441 = vmul.f32 %v114, %v414
  %v442 = vmul.f32 %v115, %v414
  %v443 = vmul.f32 %v116, %v414
  %v444 = vmul.f32 %v117, %v414
  %v445 = vmul.f32 %v118, %v414
  %v446 = vmul.f32 %v119, %v414
  %v447 = vmul.f32 %v120, %v414
  %v448 = vmul.f32 %v121, %v414
  %v449 = vmul.f32 %v122, %v414
  %v450 = vmul.f32 %v123, %v414
  %v451 = vmul.f32 %v124, %v414
  %v452 = vmul.f32 %v125, %v414
  %v453 = vmul.f32 %v126, %v414
  %v454 = vmul.f32 %v127, %v414
  %v455 = vmul.f32 %v128, %v414
  %v456 = vmul.f32 %v129, %v414
  %v457 = vmul.f32 %v130, %v414
  %v458 = vmul.f32 %v131, %v414
  %v459 = vmul.f32 %v132, %v414
  %v460 = vmul.f32 %v133, %v414
  %v461 = vmul.f32 %v134, %v414
  %v462 = vmul.f32 %v135, %v414
  %v463 = vmul.f32 %v136, %v414
  %v464 = vmul.f32 %v137, %v414
  %v465 = vmul.f32 %v138, %v414
  %v466 = vmul.f32 %v139, %v414
  %v467 = vmul.f32 %v140, %v414
  %v468 = vmul.f32 %v141, %v414
  %v469 = vmul.f32 %v142, %v414
  %v470 = vmul.f32 %v143, %v414
  %v471 = vmul.f32 %v144, %v414
  %v472 = vmul.f32 %v145, %v414
  %v473 = vmul.f32 %v146, %v414
  %v474 = vmul.f32 %v147, %v414
  %v475 = vmul.f32 %v148, %v414
  %v476 = vmul.f32 %v149, %v414
  %v477 = vmul.f32 %v150, %v414
  %v478 = vmul.f32 %v151, %v414
  %v479 = vmul.f32 %v152, %v414
  %v480 = vld [vmem:[%s3] sm:$0x1]
  %v482 = vlaneseq
  %v483 = vshrl.u32 %v482, 7
  %v484 = vsub.s32 0, %v483
  %v485 = vrot.slane %v480, %v484
  %v487 = vadd.f32 %v416, %v485
  %v488 = vadd.f32 %v417, %v485
  %v489 = vadd.f32 %v418, %v485
  %v490 = vadd.f32 %v419, %v485
  %v491 = vadd.f32 %v420, %v485
  %v492 = vadd.f32 %v421, %v485
  %v493 = vadd.f32 %v422, %v485
  %v494 = vadd.f32 %v423, %v485
  %v495 = vadd.f32 %v424, %v485
  %v496 = vadd.f32 %v425, %v485
  %v497 = vadd.f32 %v426, %v485
  %v498 = vadd.f32 %v427, %v485
  %v499 = vadd.f32 %v428, %v485
  %v500 = vadd.f32 %v429, %v485
  %v501 = vadd.f32 %v430, %v485
  %v502 = vadd.f32 %v431, %v485
  %v503 = vadd.f32 %v432, %v485
  %v504 = vadd.f32 %v433, %v485
  %v505 = vadd.f32 %v434, %v485
  %v506 = vadd.f32 %v435, %v485
  %v507 = vadd.f32 %v436, %v485
  %v508 = vadd.f32 %v437, %v485
  %v509 = vadd.f32 %v438, %v485
  %v510 = vadd.f32 %v439, %v485
  %v511 = vadd.f32 %v440, %v485
  %v512 = vadd.f32 %v441, %v485
  %v513 = vadd.f32 %v442, %v485
  %v514 = vadd.f32 %v443, %v485
  %v515 = vadd.f32 %v444, %v485
  %v516 = vadd.f32 %v445, %v485
  %v517 = vadd.f32 %v446, %v485
  %v518 = vadd.f32 %v447, %v485
  %v519 = vadd.f32 %v448, %v485
  %v520 = vadd.f32 %v449, %v485
  %v521 = vadd.f32 %v450, %v485
  %v522 = vadd.f32 %v451, %v485
  %v523 = vadd.f32 %v452, %v485
  %v524 = vadd.f32 %v453, %v485
  %v525 = vadd.f32 %v454, %v485
  %v526 = vadd.f32 %v455, %v485
  %v527 = vadd.f32 %v456, %v485
  %v528 = vadd.f32 %v457, %v485
  %v529 = vadd.f32 %v458, %v485
  %v530 = vadd.f32 %v459, %v485
  %v531 = vadd.f32 %v460, %v485
  %v532 = vadd.f32 %v461, %v485
  %v533 = vadd.f32 %v462, %v485
  %v534 = vadd.f32 %v463, %v485
  %v535 = vadd.f32 %v464, %v485
  %v536 = vadd.f32 %v465, %v485
  %v537 = vadd.f32 %v466, %v485
  %v538 = vadd.f32 %v467, %v485
  %v539 = vadd.f32 %v468, %v485
  %v540 = vadd.f32 %v469, %v485
  %v541 = vadd.f32 %v470, %v485
  %v542 = vadd.f32 %v471, %v485
  %v543 = vadd.f32 %v472, %v485
  %v544 = vadd.f32 %v473, %v485
  %v545 = vadd.f32 %v474, %v485
  %v546 = vadd.f32 %v475, %v485
  %v547 = vadd.f32 %v476, %v485
  %v548 = vadd.f32 %v477, %v485
  %v549 = vadd.f32 %v478, %v485
  %v550 = vadd.f32 %v479, %v485
  %v551 = vxor.u32 %v487, 2147483648
  %v552 = vxor.u32 %v488, 2147483648
  %v553 = vxor.u32 %v489, 2147483648
  %v554 = vxor.u32 %v490, 2147483648
  %v555 = vxor.u32 %v491, 2147483648
  %v556 = vxor.u32 %v492, 2147483648
  %v557 = vxor.u32 %v493, 2147483648
  %v558 = vxor.u32 %v494, 2147483648
  %v559 = vxor.u32 %v495, 2147483648
  %v560 = vxor.u32 %v496, 2147483648
  %v561 = vxor.u32 %v497, 2147483648
  %v562 = vxor.u32 %v498, 2147483648
  %v563 = vxor.u32 %v499, 2147483648
  %v564 = vxor.u32 %v500, 2147483648
  %v565 = vxor.u32 %v501, 2147483648
  %v566 = vxor.u32 %v502, 2147483648
  %v567 = vxor.u32 %v503, 2147483648
  %v568 = vxor.u32 %v504, 2147483648
  %v569 = vxor.u32 %v505, 2147483648
  %v570 = vxor.u32 %v506, 2147483648
  %v571 = vxor.u32 %v507, 2147483648
  %v572 = vxor.u32 %v508, 2147483648
  %v573 = vxor.u32 %v509, 2147483648
  %v574 = vxor.u32 %v510, 2147483648
  %v575 = vxor.u32 %v511, 2147483648
  %v576 = vxor.u32 %v512, 2147483648
  %v577 = vxor.u32 %v513, 2147483648
  %v578 = vxor.u32 %v514, 2147483648
  %v579 = vxor.u32 %v515, 2147483648
  %v580 = vxor.u32 %v516, 2147483648
  %v581 = vxor.u32 %v517, 2147483648
  %v582 = vxor.u32 %v518, 2147483648
  %v583 = vxor.u32 %v519, 2147483648
  %v584 = vxor.u32 %v520, 2147483648
  %v585 = vxor.u32 %v521, 2147483648
  %v586 = vxor.u32 %v522, 2147483648
  %v587 = vxor.u32 %v523, 2147483648
  %v588 = vxor.u32 %v524, 2147483648
  %v589 = vxor.u32 %v525, 2147483648
  %v590 = vxor.u32 %v526, 2147483648
  %v591 = vxor.u32 %v527, 2147483648
  %v592 = vxor.u32 %v528, 2147483648
  %v593 = vxor.u32 %v529, 2147483648
  %v594 = vxor.u32 %v530, 2147483648
  %v595 = vxor.u32 %v531, 2147483648
  %v596 = vxor.u32 %v532, 2147483648
  %v597 = vxor.u32 %v533, 2147483648
  %v598 = vxor.u32 %v534, 2147483648
  %v599 = vxor.u32 %v535, 2147483648
  %v600 = vxor.u32 %v536, 2147483648
  %v601 = vxor.u32 %v537, 2147483648
  %v602 = vxor.u32 %v538, 2147483648
  %v603 = vxor.u32 %v539, 2147483648
  %v604 = vxor.u32 %v540, 2147483648
  %v605 = vxor.u32 %v541, 2147483648
  %v606 = vxor.u32 %v542, 2147483648
  %v607 = vxor.u32 %v543, 2147483648
  %v608 = vxor.u32 %v544, 2147483648
  %v609 = vxor.u32 %v545, 2147483648
  %v610 = vxor.u32 %v546, 2147483648
  %v611 = vxor.u32 %v547, 2147483648
  %v612 = vxor.u32 %v548, 2147483648
  %v613 = vxor.u32 %v549, 2147483648
  %v614 = vxor.u32 %v550, 2147483648
  %v615 = vmul.f32 %v551, 1.442695
  %v616 = vpow.pop %v615
  %v617 = vmul.f32 %v552, 1.442695
  %v618 = vpow.pop %v617
  %v619 = vmul.f32 %v553, 1.442695
  %v620 = vpow.pop %v619
  %v621 = vmul.f32 %v554, 1.442695
  %v622 = vpow.pop %v621
  %v623 = vmul.f32 %v555, 1.442695
  %v624 = vpow.pop %v623
  %v625 = vmul.f32 %v556, 1.442695
  %v626 = vpow.pop %v625
  %v627 = vmul.f32 %v557, 1.442695
  %v628 = vpow.pop %v627
  %v629 = vmul.f32 %v558, 1.442695
  %v630 = vpow.pop %v629
  %v631 = vmul.f32 %v559, 1.442695
  %v632 = vpow.pop %v631
  %v633 = vmul.f32 %v560, 1.442695
  %v634 = vpow.pop %v633
  %v635 = vmul.f32 %v561, 1.442695
  %v636 = vpow.pop %v635
  %v637 = vmul.f32 %v562, 1.442695
  %v638 = vpow.pop %v637
  %v639 = vmul.f32 %v563, 1.442695
  %v640 = vpow.pop %v639
  %v641 = vmul.f32 %v564, 1.442695
  %v642 = vpow.pop %v641
  %v643 = vmul.f32 %v565, 1.442695
  %v644 = vpow.pop %v643
  %v645 = vmul.f32 %v566, 1.442695
  %v646 = vpow.pop %v645
  %v647 = vmul.f32 %v567, 1.442695
  %v648 = vpow.pop %v647
  %v649 = vmul.f32 %v568, 1.442695
  %v650 = vpow.pop %v649
  %v651 = vmul.f32 %v569, 1.442695
  %v652 = vpow.pop %v651
  %v653 = vmul.f32 %v570, 1.442695
  %v654 = vpow.pop %v653
  %v655 = vmul.f32 %v571, 1.442695
  %v656 = vpow.pop %v655
  %v657 = vmul.f32 %v572, 1.442695
  %v658 = vpow.pop %v657
  %v659 = vmul.f32 %v573, 1.442695
  %v660 = vpow.pop %v659
  %v661 = vmul.f32 %v574, 1.442695
  %v662 = vpow.pop %v661
  %v663 = vmul.f32 %v575, 1.442695
  %v664 = vpow.pop %v663
  %v665 = vmul.f32 %v576, 1.442695
  %v666 = vpow.pop %v665
  %v667 = vmul.f32 %v577, 1.442695
  %v668 = vpow.pop %v667
  %v669 = vmul.f32 %v578, 1.442695
  %v670 = vpow.pop %v669
  %v671 = vmul.f32 %v579, 1.442695
  %v672 = vpow.pop %v671
  %v673 = vmul.f32 %v580, 1.442695
  %v674 = vpow.pop %v673
  %v675 = vmul.f32 %v581, 1.442695
  %v676 = vpow.pop %v675
  %v677 = vmul.f32 %v582, 1.442695
  %v678 = vpow.pop %v677
  %v679 = vmul.f32 %v583, 1.442695
  %v680 = vpow.pop %v679
  %v681 = vmul.f32 %v584, 1.442695
  %v682 = vpow.pop %v681
  %v683 = vmul.f32 %v585, 1.442695
  %v684 = vpow.pop %v683
  %v685 = vmul.f32 %v586, 1.442695
  %v686 = vpow.pop %v685
  %v687 = vmul.f32 %v587, 1.442695
  %v688 = vpow.pop %v687
  %v689 = vmul.f32 %v588, 1.442695
  %v690 = vpow.pop %v689
  %v691 = vmul.f32 %v589, 1.442695
  %v692 = vpow.pop %v691
  %v693 = vmul.f32 %v590, 1.442695
  %v694 = vpow.pop %v693
  %v695 = vmul.f32 %v591, 1.442695
  %v696 = vpow.pop %v695
  %v697 = vmul.f32 %v592, 1.442695
  %v698 = vpow.pop %v697
  %v699 = vmul.f32 %v593, 1.442695
  %v700 = vpow.pop %v699
  %v701 = vmul.f32 %v594, 1.442695
  %v702 = vpow.pop %v701
  %v703 = vmul.f32 %v595, 1.442695
  %v704 = vpow.pop %v703
  %v705 = vmul.f32 %v596, 1.442695
  %v706 = vpow.pop %v705
  %v707 = vmul.f32 %v597, 1.442695
  %v708 = vpow.pop %v707
  %v709 = vmul.f32 %v598, 1.442695
  %v710 = vpow.pop %v709
  %v711 = vmul.f32 %v599, 1.442695
  %v712 = vpow.pop %v711
  %v713 = vmul.f32 %v600, 1.442695
  %v714 = vpow.pop %v713
  %v715 = vmul.f32 %v601, 1.442695
  %v716 = vpow.pop %v715
  %v717 = vmul.f32 %v602, 1.442695
  %v718 = vpow.pop %v717
  %v719 = vmul.f32 %v603, 1.442695
  %v720 = vpow.pop %v719
  %v721 = vmul.f32 %v604, 1.442695
  %v722 = vpow.pop %v721
  %v723 = vmul.f32 %v605, 1.442695
  %v724 = vpow.pop %v723
  %v725 = vmul.f32 %v606, 1.442695
  %v726 = vpow.pop %v725
  %v727 = vmul.f32 %v607, 1.442695
  %v728 = vpow.pop %v727
  %v729 = vmul.f32 %v608, 1.442695
  %v730 = vpow.pop %v729
  %v731 = vmul.f32 %v609, 1.442695
  %v732 = vpow.pop %v731
  %v733 = vmul.f32 %v610, 1.442695
  %v734 = vpow.pop %v733
  %v735 = vmul.f32 %v611, 1.442695
  %v736 = vpow.pop %v735
  %v737 = vmul.f32 %v612, 1.442695
  %v738 = vpow.pop %v737
  %v739 = vmul.f32 %v613, 1.442695
  %v740 = vpow.pop %v739
  %v741 = vmul.f32 %v614, 1.442695
  %v742 = vpow.pop %v741
  %v743 = vadd.f32 %v616, 1.0
  %v744 = vadd.f32 %v618, 1.0
  %v745 = vadd.f32 %v620, 1.0
  %v746 = vadd.f32 %v622, 1.0
  %v747 = vadd.f32 %v624, 1.0
  %v748 = vadd.f32 %v626, 1.0
  %v749 = vadd.f32 %v628, 1.0
  %v750 = vadd.f32 %v630, 1.0
  %v751 = vadd.f32 %v632, 1.0
  %v752 = vadd.f32 %v634, 1.0
  %v753 = vadd.f32 %v636, 1.0
  %v754 = vadd.f32 %v638, 1.0
  %v755 = vadd.f32 %v640, 1.0
  %v756 = vadd.f32 %v642, 1.0
  %v757 = vadd.f32 %v644, 1.0
  %v758 = vadd.f32 %v646, 1.0
  %v759 = vadd.f32 %v648, 1.0
  %v760 = vadd.f32 %v650, 1.0
  %v761 = vadd.f32 %v652, 1.0
  %v762 = vadd.f32 %v654, 1.0
  %v763 = vadd.f32 %v656, 1.0
  %v764 = vadd.f32 %v658, 1.0
  %v765 = vadd.f32 %v660, 1.0
  %v766 = vadd.f32 %v662, 1.0
  %v767 = vadd.f32 %v664, 1.0
  %v768 = vadd.f32 %v666, 1.0
  %v769 = vadd.f32 %v668, 1.0
  %v770 = vadd.f32 %v670, 1.0
  %v771 = vadd.f32 %v672, 1.0
  %v772 = vadd.f32 %v674, 1.0
  %v773 = vadd.f32 %v676, 1.0
  %v774 = vadd.f32 %v678, 1.0
  %v775 = vadd.f32 %v680, 1.0
  %v776 = vadd.f32 %v682, 1.0
  %v777 = vadd.f32 %v684, 1.0
  %v778 = vadd.f32 %v686, 1.0
  %v779 = vadd.f32 %v688, 1.0
  %v780 = vadd.f32 %v690, 1.0
  %v781 = vadd.f32 %v692, 1.0
  %v782 = vadd.f32 %v694, 1.0
  %v783 = vadd.f32 %v696, 1.0
  %v784 = vadd.f32 %v698, 1.0
  %v785 = vadd.f32 %v700, 1.0
  %v786 = vadd.f32 %v702, 1.0
  %v787 = vadd.f32 %v704, 1.0
  %v788 = vadd.f32 %v706, 1.0
  %v789 = vadd.f32 %v708, 1.0
  %v790 = vadd.f32 %v710, 1.0
  %v791 = vadd.f32 %v712, 1.0
  %v792 = vadd.f32 %v714, 1.0
  %v793 = vadd.f32 %v716, 1.0
  %v794 = vadd.f32 %v718, 1.0
  %v795 = vadd.f32 %v720, 1.0
  %v796 = vadd.f32 %v722, 1.0
  %v797 = vadd.f32 %v724, 1.0
  %v798 = vadd.f32 %v726, 1.0
  %v799 = vadd.f32 %v728, 1.0
  %v800 = vadd.f32 %v730, 1.0
  %v801 = vadd.f32 %v732, 1.0
  %v802 = vadd.f32 %v734, 1.0
  %v803 = vadd.f32 %v736, 1.0
  %v804 = vadd.f32 %v738, 1.0
  %v805 = vadd.f32 %v740, 1.0
  %v806 = vadd.f32 %v742, 1.0
  %v807 = vrcp.pop %v743
  %v808 = vmul.f32 1.0, %v807
  %v809 = vrcp.pop %v744
  %v810 = vmul.f32 1.0, %v809
  %v811 = vrcp.pop %v745
  %v812 = vmul.f32 1.0, %v811
  %v813 = vrcp.pop %v746
  %v814 = vmul.f32 1.0, %v813
  %v815 = vrcp.pop %v747
  %v816 = vmul.f32 1.0, %v815
  %v817 = vrcp.pop %v748
  %v818 = vmul.f32 1.0, %v817
  %v819 = vrcp.pop %v749
  %v820 = vmul.f32 1.0, %v819
  %v821 = vrcp.pop %v750
  %v822 = vmul.f32 1.0, %v821
  %v823 = vrcp.pop %v751
  %v824 = vmul.f32 1.0, %v823
  %v825 = vrcp.pop %v752
  %v826 = vmul.f32 1.0, %v825
  %v827 = vrcp.pop %v753
  %v828 = vmul.f32 1.0, %v827
  %v829 = vrcp.pop %v754
  %v830 = vmul.f32 1.0, %v829
  %v831 = vrcp.pop %v755
  %v832 = vmul.f32 1.0, %v831
  %v833 = vrcp.pop %v756
  %v834 = vmul.f32 1.0, %v833
  %v835 = vrcp.pop %v757
  %v836 = vmul.f32 1.0, %v835
  %v837 = vrcp.pop %v758
  %v838 = vmul.f32 1.0, %v837
  %v839 = vrcp.pop %v759
  %v840 = vmul.f32 1.0, %v839
  %v841 = vrcp.pop %v760
  %v842 = vmul.f32 1.0, %v841
  %v843 = vrcp.pop %v761
  %v844 = vmul.f32 1.0, %v843
  %v845 = vrcp.pop %v762
  %v846 = vmul.f32 1.0, %v845
  %v847 = vrcp.pop %v763
  %v848 = vmul.f32 1.0, %v847
  %v849 = vrcp.pop %v764
  %v850 = vmul.f32 1.0, %v849
  %v851 = vrcp.pop %v765
  %v852 = vmul.f32 1.0, %v851
  %v853 = vrcp.pop %v766
  %v854 = vmul.f32 1.0, %v853
  %v855 = vrcp.pop %v767
  %v856 = vmul.f32 1.0, %v855
  %v857 = vrcp.pop %v768
  %v858 = vmul.f32 1.0, %v857
  %v859 = vrcp.pop %v769
  %v860 = vmul.f32 1.0, %v859
  %v861 = vrcp.pop %v770
  %v862 = vmul.f32 1.0, %v861
  %v863 = vrcp.pop %v771
  %v864 = vmul.f32 1.0, %v863
  %v865 = vrcp.pop %v772
  %v866 = vmul.f32 1.0, %v865
  %v867 = vrcp.pop %v773
  %v868 = vmul.f32 1.0, %v867
  %v869 = vrcp.pop %v774
  %v870 = vmul.f32 1.0, %v869
  %v871 = vrcp.pop %v775
  %v872 = vmul.f32 1.0, %v871
  %v873 = vrcp.pop %v776
  %v874 = vmul.f32 1.0, %v873
  %v875 = vrcp.pop %v777
  %v876 = vmul.f32 1.0, %v875
  %v877 = vrcp.pop %v778
  %v878 = vmul.f32 1.0, %v877
  %v879 = vrcp.pop %v779
  %v880 = vmul.f32 1.0, %v879
  %v881 = vrcp.pop %v780
  %v882 = vmul.f32 1.0, %v881
  %v883 = vrcp.pop %v781
  %v884 = vmul.f32 1.0, %v883
  %v885 = vrcp.pop %v782
  %v886 = vmul.f32 1.0, %v885
  %v887 = vrcp.pop %v783
  %v888 = vmul.f32 1.0, %v887
  %v889 = vrcp.pop %v784
  %v890 = vmul.f32 1.0, %v889
  %v891 = vrcp.pop %v785
  %v892 = vmul.f32 1.0, %v891
  %v893 = vrcp.pop %v786
  %v894 = vmul.f32 1.0, %v893
  %v895 = vrcp.pop %v787
  %v896 = vmul.f32 1.0, %v895
  %v897 = vrcp.pop %v788
  %v898 = vmul.f32 1.0, %v897
  %v899 = vrcp.pop %v789
  %v900 = vmul.f32 1.0, %v899
  %v901 = vrcp.pop %v790
  %v902 = vmul.f32 1.0, %v901
  %v903 = vrcp.pop %v791
  %v904 = vmul.f32 1.0, %v903
  %v905 = vrcp.pop %v792
  %v906 = vmul.f32 1.0, %v905
  %v907 = vrcp.pop %v793
  %v908 = vmul.f32 1.0, %v907
  %v909 = vrcp.pop %v794
  %v910 = vmul.f32 1.0, %v909
  %v911 = vrcp.pop %v795
  %v912 = vmul.f32 1.0, %v911
  %v913 = vrcp.pop %v796
  %v914 = vmul.f32 1.0, %v913
  %v915 = vrcp.pop %v797
  %v916 = vmul.f32 1.0, %v915
  %v917 = vrcp.pop %v798
  %v918 = vmul.f32 1.0, %v917
  %v919 = vrcp.pop %v799
  %v920 = vmul.f32 1.0, %v919
  %v921 = vrcp.pop %v800
  %v922 = vmul.f32 1.0, %v921
  %v923 = vrcp.pop %v801
  %v924 = vmul.f32 1.0, %v923
  %v925 = vrcp.pop %v802
  %v926 = vmul.f32 1.0, %v925
  %v927 = vrcp.pop %v803
  %v928 = vmul.f32 1.0, %v927
  %v929 = vrcp.pop %v804
  %v930 = vmul.f32 1.0, %v929
  %v931 = vrcp.pop %v805
  %v932 = vmul.f32 1.0, %v931
  %v933 = vrcp.pop %v806
  %v934 = vmul.f32 1.0, %v933
  %v935 = vld [vmem:[%s4] sm:$0x1]
  %v937 = vlaneseq
  %v938 = vshrl.u32 %v937, 7
  %v939 = vsub.s32 0, %v938
  %v940 = vrot.slane %v935, %v939
  %v942 = vmul.f32 %v217, %v940
  %v943 = vmul.f32 %v218, %v940
  %v944 = vmul.f32 %v219, %v940
  %v945 = vmul.f32 %v220, %v940
  %v946 = vmul.f32 %v221, %v940
  %v947 = vmul.f32 %v222, %v940
  %v948 = vmul.f32 %v223, %v940
  %v949 = vmul.f32 %v224, %v940
  %v950 = vmul.f32 %v225, %v940
  %v951 = vmul.f32 %v226, %v940
  %v952 = vmul.f32 %v227, %v940
  %v953 = vmul.f32 %v228, %v940
  %v954 = vmul.f32 %v229, %v940
  %v955 = vmul.f32 %v230, %v940
  %v956 = vmul.f32 %v231, %v940
  %v957 = vmul.f32 %v232, %v940
  %v958 = vmul.f32 %v233, %v940
  %v959 = vmul.f32 %v234, %v940
  %v960 = vmul.f32 %v235, %v940
  %v961 = vmul.f32 %v236, %v940
  %v962 = vmul.f32 %v237, %v940
  %v963 = vmul.f32 %v238, %v940
  %v964 = vmul.f32 %v239, %v940
  %v965 = vmul.f32 %v240, %v940
  %v966 = vmul.f32 %v241, %v940
  %v967 = vmul.f32 %v242, %v940
  %v968 = vmul.f32 %v243, %v940
  %v969 = vmul.f32 %v244, %v940
  %v970 = vmul.f32 %v245, %v940
  %v971 = vmul.f32 %v246, %v940
  %v972 = vmul.f32 %v247, %v940
  %v973 = vmul.f32 %v248, %v940
  %v974 = vmul.f32 %v249, %v940
  %v975 = vmul.f32 %v250, %v940
  %v976 = vmul.f32 %v251, %v940
  %v977 = vmul.f32 %v252, %v940
  %v978 = vmul.f32 %v253, %v940
  %v979 = vmul.f32 %v254, %v940
  %v980 = vmul.f32 %v255, %v940
  %v981 = vmul.f32 %v256, %v940
  %v982 = vmul.f32 %v257, %v940
  %v983 = vmul.f32 %v258, %v940
  %v984 = vmul.f32 %v259, %v940
  %v985 = vmul.f32 %v260, %v940
  %v986 = vmul.f32 %v261, %v940
  %v987 = vmul.f32 %v262, %v940
  %v988 = vmul.f32 %v263, %v940
  %v989 = vmul.f32 %v264, %v940
  %v990 = vmul.f32 %v265, %v940
  %v991 = vmul.f32 %v266, %v940
  %v992 = vmul.f32 %v267, %v940
  %v993 = vmul.f32 %v268, %v940
  %v994 = vmul.f32 %v269, %v940
  %v995 = vmul.f32 %v270, %v940
  %v996 = vmul.f32 %v271, %v940
  %v997 = vmul.f32 %v272, %v940
  %v998 = vmul.f32 %v273, %v940
  %v999 = vmul.f32 %v274, %v940
  %v1000 = vmul.f32 %v275, %v940
  %v1001 = vmul.f32 %v276, %v940
  %v1002 = vmul.f32 %v277, %v940
  %v1003 = vmul.f32 %v278, %v940
  %v1004 = vmul.f32 %v279, %v940
  %v1005 = vmul.f32 %v280, %v940
  %v1006 = vld [vmem:[%s5] sm:$0x1]
  %v1008 = vlaneseq
  %v1009 = vshrl.u32 %v1008, 7
  %v1010 = vsub.s32 0, %v1009
  %v1011 = vrot.slane %v1006, %v1010
  %v1013 = vadd.f32 %v942, %v1011
  %v1014 = vadd.f32 %v943, %v1011
  %v1015 = vadd.f32 %v944, %v1011
  %v1016 = vadd.f32 %v945, %v1011
  %v1017 = vadd.f32 %v946, %v1011
  %v1018 = vadd.f32 %v947, %v1011
  %v1019 = vadd.f32 %v948, %v1011
  %v1020 = vadd.f32 %v949, %v1011
  %v1021 = vadd.f32 %v950, %v1011
  %v1022 = vadd.f32 %v951, %v1011
  %v1023 = vadd.f32 %v952, %v1011
  %v1024 = vadd.f32 %v953, %v1011
  %v1025 = vadd.f32 %v954, %v1011
  %v1026 = vadd.f32 %v955, %v1011
  %v1027 = vadd.f32 %v956, %v1011
  %v1028 = vadd.f32 %v957, %v1011
  %v1029 = vadd.f32 %v958, %v1011
  %v1030 = vadd.f32 %v959, %v1011
  %v1031 = vadd.f32 %v960, %v1011
  %v1032 = vadd.f32 %v961, %v1011
  %v1033 = vadd.f32 %v962, %v1011
  %v1034 = vadd.f32 %v963, %v1011
  %v1035 = vadd.f32 %v964, %v1011
  %v1036 = vadd.f32 %v965, %v1011
  %v1037 = vadd.f32 %v966, %v1011
  %v1038 = vadd.f32 %v967, %v1011
  %v1039 = vadd.f32 %v968, %v1011
  %v1040 = vadd.f32 %v969, %v1011
  %v1041 = vadd.f32 %v970, %v1011
  %v1042 = vadd.f32 %v971, %v1011
  %v1043 = vadd.f32 %v972, %v1011
  %v1044 = vadd.f32 %v973, %v1011
  %v1045 = vadd.f32 %v974, %v1011
  %v1046 = vadd.f32 %v975, %v1011
  %v1047 = vadd.f32 %v976, %v1011
  %v1048 = vadd.f32 %v977, %v1011
  %v1049 = vadd.f32 %v978, %v1011
  %v1050 = vadd.f32 %v979, %v1011
  %v1051 = vadd.f32 %v980, %v1011
  %v1052 = vadd.f32 %v981, %v1011
  %v1053 = vadd.f32 %v982, %v1011
  %v1054 = vadd.f32 %v983, %v1011
  %v1055 = vadd.f32 %v984, %v1011
  %v1056 = vadd.f32 %v985, %v1011
  %v1057 = vadd.f32 %v986, %v1011
  %v1058 = vadd.f32 %v987, %v1011
  %v1059 = vadd.f32 %v988, %v1011
  %v1060 = vadd.f32 %v989, %v1011
  %v1061 = vadd.f32 %v990, %v1011
  %v1062 = vadd.f32 %v991, %v1011
  %v1063 = vadd.f32 %v992, %v1011
  %v1064 = vadd.f32 %v993, %v1011
  %v1065 = vadd.f32 %v994, %v1011
  %v1066 = vadd.f32 %v995, %v1011
  %v1067 = vadd.f32 %v996, %v1011
  %v1068 = vadd.f32 %v997, %v1011
  %v1069 = vadd.f32 %v998, %v1011
  %v1070 = vadd.f32 %v999, %v1011
  %v1071 = vadd.f32 %v1000, %v1011
  %v1072 = vadd.f32 %v1001, %v1011
  %v1073 = vadd.f32 %v1002, %v1011
  %v1074 = vadd.f32 %v1003, %v1011
  %v1075 = vadd.f32 %v1004, %v1011
  %v1076 = vadd.f32 %v1005, %v1011
  %v1077 = vxor.u32 %v1013, 2147483648
  %v1078 = vxor.u32 %v1014, 2147483648
  %v1079 = vxor.u32 %v1015, 2147483648
  %v1080 = vxor.u32 %v1016, 2147483648
  %v1081 = vxor.u32 %v1017, 2147483648
  %v1082 = vxor.u32 %v1018, 2147483648
  %v1083 = vxor.u32 %v1019, 2147483648
  %v1084 = vxor.u32 %v1020, 2147483648
  %v1085 = vxor.u32 %v1021, 2147483648
  %v1086 = vxor.u32 %v1022, 2147483648
  %v1087 = vxor.u32 %v1023, 2147483648
  %v1088 = vxor.u32 %v1024, 2147483648
  %v1089 = vxor.u32 %v1025, 2147483648
  %v1090 = vxor.u32 %v1026, 2147483648
  %v1091 = vxor.u32 %v1027, 2147483648
  %v1092 = vxor.u32 %v1028, 2147483648
  %v1093 = vxor.u32 %v1029, 2147483648
  %v1094 = vxor.u32 %v1030, 2147483648
  %v1095 = vxor.u32 %v1031, 2147483648
  %v1096 = vxor.u32 %v1032, 2147483648
  %v1097 = vxor.u32 %v1033, 2147483648
  %v1098 = vxor.u32 %v1034, 2147483648
  %v1099 = vxor.u32 %v1035, 2147483648
  %v1100 = vxor.u32 %v1036, 2147483648
  %v1101 = vxor.u32 %v1037, 2147483648
  %v1102 = vxor.u32 %v1038, 2147483648
  %v1103 = vxor.u32 %v1039, 2147483648
  %v1104 = vxor.u32 %v1040, 2147483648
  %v1105 = vxor.u32 %v1041, 2147483648
  %v1106 = vxor.u32 %v1042, 2147483648
  %v1107 = vxor.u32 %v1043, 2147483648
  %v1108 = vxor.u32 %v1044, 2147483648
  %v1109 = vxor.u32 %v1045, 2147483648
  %v1110 = vxor.u32 %v1046, 2147483648
  %v1111 = vxor.u32 %v1047, 2147483648
  %v1112 = vxor.u32 %v1048, 2147483648
  %v1113 = vxor.u32 %v1049, 2147483648
  %v1114 = vxor.u32 %v1050, 2147483648
  %v1115 = vxor.u32 %v1051, 2147483648
  %v1116 = vxor.u32 %v1052, 2147483648
  %v1117 = vxor.u32 %v1053, 2147483648
  %v1118 = vxor.u32 %v1054, 2147483648
  %v1119 = vxor.u32 %v1055, 2147483648
  %v1120 = vxor.u32 %v1056, 2147483648
  %v1121 = vxor.u32 %v1057, 2147483648
  %v1122 = vxor.u32 %v1058, 2147483648
  %v1123 = vxor.u32 %v1059, 2147483648
  %v1124 = vxor.u32 %v1060, 2147483648
  %v1125 = vxor.u32 %v1061, 2147483648
  %v1126 = vxor.u32 %v1062, 2147483648
  %v1127 = vxor.u32 %v1063, 2147483648
  %v1128 = vxor.u32 %v1064, 2147483648
  %v1129 = vxor.u32 %v1065, 2147483648
  %v1130 = vxor.u32 %v1066, 2147483648
  %v1131 = vxor.u32 %v1067, 2147483648
  %v1132 = vxor.u32 %v1068, 2147483648
  %v1133 = vxor.u32 %v1069, 2147483648
  %v1134 = vxor.u32 %v1070, 2147483648
  %v1135 = vxor.u32 %v1071, 2147483648
  %v1136 = vxor.u32 %v1072, 2147483648
  %v1137 = vxor.u32 %v1073, 2147483648
  %v1138 = vxor.u32 %v1074, 2147483648
  %v1139 = vxor.u32 %v1075, 2147483648
  %v1140 = vxor.u32 %v1076, 2147483648
  %v1141 = vmul.f32 %v1077, 1.442695
  %v1142 = vpow.pop %v1141
  %v1143 = vmul.f32 %v1078, 1.442695
  %v1144 = vpow.pop %v1143
  %v1145 = vmul.f32 %v1079, 1.442695
  %v1146 = vpow.pop %v1145
  %v1147 = vmul.f32 %v1080, 1.442695
  %v1148 = vpow.pop %v1147
  %v1149 = vmul.f32 %v1081, 1.442695
  %v1150 = vpow.pop %v1149
  %v1151 = vmul.f32 %v1082, 1.442695
  %v1152 = vpow.pop %v1151
  %v1153 = vmul.f32 %v1083, 1.442695
  %v1154 = vpow.pop %v1153
  %v1155 = vmul.f32 %v1084, 1.442695
  %v1156 = vpow.pop %v1155
  %v1157 = vmul.f32 %v1085, 1.442695
  %v1158 = vpow.pop %v1157
  %v1159 = vmul.f32 %v1086, 1.442695
  %v1160 = vpow.pop %v1159
  %v1161 = vmul.f32 %v1087, 1.442695
  %v1162 = vpow.pop %v1161
  %v1163 = vmul.f32 %v1088, 1.442695
  %v1164 = vpow.pop %v1163
  %v1165 = vmul.f32 %v1089, 1.442695
  %v1166 = vpow.pop %v1165
  %v1167 = vmul.f32 %v1090, 1.442695
  %v1168 = vpow.pop %v1167
  %v1169 = vmul.f32 %v1091, 1.442695
  %v1170 = vpow.pop %v1169
  %v1171 = vmul.f32 %v1092, 1.442695
  %v1172 = vpow.pop %v1171
  %v1173 = vmul.f32 %v1093, 1.442695
  %v1174 = vpow.pop %v1173
  %v1175 = vmul.f32 %v1094, 1.442695
  %v1176 = vpow.pop %v1175
  %v1177 = vmul.f32 %v1095, 1.442695
  %v1178 = vpow.pop %v1177
  %v1179 = vmul.f32 %v1096, 1.442695
  %v1180 = vpow.pop %v1179
  %v1181 = vmul.f32 %v1097, 1.442695
  %v1182 = vpow.pop %v1181
  %v1183 = vmul.f32 %v1098, 1.442695
  %v1184 = vpow.pop %v1183
  %v1185 = vmul.f32 %v1099, 1.442695
  %v1186 = vpow.pop %v1185
  %v1187 = vmul.f32 %v1100, 1.442695
  %v1188 = vpow.pop %v1187
  %v1189 = vmul.f32 %v1101, 1.442695
  %v1190 = vpow.pop %v1189
  %v1191 = vmul.f32 %v1102, 1.442695
  %v1192 = vpow.pop %v1191
  %v1193 = vmul.f32 %v1103, 1.442695
  %v1194 = vpow.pop %v1193
  %v1195 = vmul.f32 %v1104, 1.442695
  %v1196 = vpow.pop %v1195
  %v1197 = vmul.f32 %v1105, 1.442695
  %v1198 = vpow.pop %v1197
  %v1199 = vmul.f32 %v1106, 1.442695
  %v1200 = vpow.pop %v1199
  %v1201 = vmul.f32 %v1107, 1.442695
  %v1202 = vpow.pop %v1201
  %v1203 = vmul.f32 %v1108, 1.442695
  %v1204 = vpow.pop %v1203
  %v1205 = vmul.f32 %v1109, 1.442695
  %v1206 = vpow.pop %v1205
  %v1207 = vmul.f32 %v1110, 1.442695
  %v1208 = vpow.pop %v1207
  %v1209 = vmul.f32 %v1111, 1.442695
  %v1210 = vpow.pop %v1209
  %v1211 = vmul.f32 %v1112, 1.442695
  %v1212 = vpow.pop %v1211
  %v1213 = vmul.f32 %v1113, 1.442695
  %v1214 = vpow.pop %v1213
  %v1215 = vmul.f32 %v1114, 1.442695
  %v1216 = vpow.pop %v1215
  %v1217 = vmul.f32 %v1115, 1.442695
  %v1218 = vpow.pop %v1217
  %v1219 = vmul.f32 %v1116, 1.442695
  %v1220 = vpow.pop %v1219
  %v1221 = vmul.f32 %v1117, 1.442695
  %v1222 = vpow.pop %v1221
  %v1223 = vmul.f32 %v1118, 1.442695
  %v1224 = vpow.pop %v1223
  %v1225 = vmul.f32 %v1119, 1.442695
  %v1226 = vpow.pop %v1225
  %v1227 = vmul.f32 %v1120, 1.442695
  %v1228 = vpow.pop %v1227
  %v1229 = vmul.f32 %v1121, 1.442695
  %v1230 = vpow.pop %v1229
  %v1231 = vmul.f32 %v1122, 1.442695
  %v1232 = vpow.pop %v1231
  %v1233 = vmul.f32 %v1123, 1.442695
  %v1234 = vpow.pop %v1233
  %v1235 = vmul.f32 %v1124, 1.442695
  %v1236 = vpow.pop %v1235
  %v1237 = vmul.f32 %v1125, 1.442695
  %v1238 = vpow.pop %v1237
  %v1239 = vmul.f32 %v1126, 1.442695
  %v1240 = vpow.pop %v1239
  %v1241 = vmul.f32 %v1127, 1.442695
  %v1242 = vpow.pop %v1241
  %v1243 = vmul.f32 %v1128, 1.442695
  %v1244 = vpow.pop %v1243
  %v1245 = vmul.f32 %v1129, 1.442695
  %v1246 = vpow.pop %v1245
  %v1247 = vmul.f32 %v1130, 1.442695
  %v1248 = vpow.pop %v1247
  %v1249 = vmul.f32 %v1131, 1.442695
  %v1250 = vpow.pop %v1249
  %v1251 = vmul.f32 %v1132, 1.442695
  %v1252 = vpow.pop %v1251
  %v1253 = vmul.f32 %v1133, 1.442695
  %v1254 = vpow.pop %v1253
  %v1255 = vmul.f32 %v1134, 1.442695
  %v1256 = vpow.pop %v1255
  %v1257 = vmul.f32 %v1135, 1.442695
  %v1258 = vpow.pop %v1257
  %v1259 = vmul.f32 %v1136, 1.442695
  %v1260 = vpow.pop %v1259
  %v1261 = vmul.f32 %v1137, 1.442695
  %v1262 = vpow.pop %v1261
  %v1263 = vmul.f32 %v1138, 1.442695
  %v1264 = vpow.pop %v1263
  %v1265 = vmul.f32 %v1139, 1.442695
  %v1266 = vpow.pop %v1265
  %v1267 = vmul.f32 %v1140, 1.442695
  %v1268 = vpow.pop %v1267
  %v1269 = vadd.f32 %v1142, 1.0
  %v1270 = vadd.f32 %v1144, 1.0
  %v1271 = vadd.f32 %v1146, 1.0
  %v1272 = vadd.f32 %v1148, 1.0
  %v1273 = vadd.f32 %v1150, 1.0
  %v1274 = vadd.f32 %v1152, 1.0
  %v1275 = vadd.f32 %v1154, 1.0
  %v1276 = vadd.f32 %v1156, 1.0
  %v1277 = vadd.f32 %v1158, 1.0
  %v1278 = vadd.f32 %v1160, 1.0
  %v1279 = vadd.f32 %v1162, 1.0
  %v1280 = vadd.f32 %v1164, 1.0
  %v1281 = vadd.f32 %v1166, 1.0
  %v1282 = vadd.f32 %v1168, 1.0
  %v1283 = vadd.f32 %v1170, 1.0
  %v1284 = vadd.f32 %v1172, 1.0
  %v1285 = vadd.f32 %v1174, 1.0
  %v1286 = vadd.f32 %v1176, 1.0
  %v1287 = vadd.f32 %v1178, 1.0
  %v1288 = vadd.f32 %v1180, 1.0
  %v1289 = vadd.f32 %v1182, 1.0
  %v1290 = vadd.f32 %v1184, 1.0
  %v1291 = vadd.f32 %v1186, 1.0
  %v1292 = vadd.f32 %v1188, 1.0
  %v1293 = vadd.f32 %v1190, 1.0
  %v1294 = vadd.f32 %v1192, 1.0
  %v1295 = vadd.f32 %v1194, 1.0
  %v1296 = vadd.f32 %v1196, 1.0
  %v1297 = vadd.f32 %v1198, 1.0
  %v1298 = vadd.f32 %v1200, 1.0
  %v1299 = vadd.f32 %v1202, 1.0
  %v1300 = vadd.f32 %v1204, 1.0
  %v1301 = vadd.f32 %v1206, 1.0
  %v1302 = vadd.f32 %v1208, 1.0
  %v1303 = vadd.f32 %v1210, 1.0
  %v1304 = vadd.f32 %v1212, 1.0
  %v1305 = vadd.f32 %v1214, 1.0
  %v1306 = vadd.f32 %v1216, 1.0
  %v1307 = vadd.f32 %v1218, 1.0
  %v1308 = vadd.f32 %v1220, 1.0
  %v1309 = vadd.f32 %v1222, 1.0
  %v1310 = vadd.f32 %v1224, 1.0
  %v1311 = vadd.f32 %v1226, 1.0
  %v1312 = vadd.f32 %v1228, 1.0
  %v1313 = vadd.f32 %v1230, 1.0
  %v1314 = vadd.f32 %v1232, 1.0
  %v1315 = vadd.f32 %v1234, 1.0
  %v1316 = vadd.f32 %v1236, 1.0
  %v1317 = vadd.f32 %v1238, 1.0
  %v1318 = vadd.f32 %v1240, 1.0
  %v1319 = vadd.f32 %v1242, 1.0
  %v1320 = vadd.f32 %v1244, 1.0
  %v1321 = vadd.f32 %v1246, 1.0
  %v1322 = vadd.f32 %v1248, 1.0
  %v1323 = vadd.f32 %v1250, 1.0
  %v1324 = vadd.f32 %v1252, 1.0
  %v1325 = vadd.f32 %v1254, 1.0
  %v1326 = vadd.f32 %v1256, 1.0
  %v1327 = vadd.f32 %v1258, 1.0
  %v1328 = vadd.f32 %v1260, 1.0
  %v1329 = vadd.f32 %v1262, 1.0
  %v1330 = vadd.f32 %v1264, 1.0
  %v1331 = vadd.f32 %v1266, 1.0
  %v1332 = vadd.f32 %v1268, 1.0
  %v1333 = vrcp.pop %v1269
  %v1334 = vmul.f32 1.0, %v1333
  %v1335 = vrcp.pop %v1270
  %v1336 = vmul.f32 1.0, %v1335
  %v1337 = vrcp.pop %v1271
  %v1338 = vmul.f32 1.0, %v1337
  %v1339 = vrcp.pop %v1272
  %v1340 = vmul.f32 1.0, %v1339
  %v1341 = vrcp.pop %v1273
  %v1342 = vmul.f32 1.0, %v1341
  %v1343 = vrcp.pop %v1274
  %v1344 = vmul.f32 1.0, %v1343
  %v1345 = vrcp.pop %v1275
  %v1346 = vmul.f32 1.0, %v1345
  %v1347 = vrcp.pop %v1276
  %v1348 = vmul.f32 1.0, %v1347
  %v1349 = vrcp.pop %v1277
  %v1350 = vmul.f32 1.0, %v1349
  %v1351 = vrcp.pop %v1278
  %v1352 = vmul.f32 1.0, %v1351
  %v1353 = vrcp.pop %v1279
  %v1354 = vmul.f32 1.0, %v1353
  %v1355 = vrcp.pop %v1280
  %v1356 = vmul.f32 1.0, %v1355
  %v1357 = vrcp.pop %v1281
  %v1358 = vmul.f32 1.0, %v1357
  %v1359 = vrcp.pop %v1282
  %v1360 = vmul.f32 1.0, %v1359
  %v1361 = vrcp.pop %v1283
  %v1362 = vmul.f32 1.0, %v1361
  %v1363 = vrcp.pop %v1284
  %v1364 = vmul.f32 1.0, %v1363
  %v1365 = vrcp.pop %v1285
  %v1366 = vmul.f32 1.0, %v1365
  %v1367 = vrcp.pop %v1286
  %v1368 = vmul.f32 1.0, %v1367
  %v1369 = vrcp.pop %v1287
  %v1370 = vmul.f32 1.0, %v1369
  %v1371 = vrcp.pop %v1288
  %v1372 = vmul.f32 1.0, %v1371
  %v1373 = vrcp.pop %v1289
  %v1374 = vmul.f32 1.0, %v1373
  %v1375 = vrcp.pop %v1290
  %v1376 = vmul.f32 1.0, %v1375
  %v1377 = vrcp.pop %v1291
  %v1378 = vmul.f32 1.0, %v1377
  %v1379 = vrcp.pop %v1292
  %v1380 = vmul.f32 1.0, %v1379
  %v1381 = vrcp.pop %v1293
  %v1382 = vmul.f32 1.0, %v1381
  %v1383 = vrcp.pop %v1294
  %v1384 = vmul.f32 1.0, %v1383
  %v1385 = vrcp.pop %v1295
  %v1386 = vmul.f32 1.0, %v1385
  %v1387 = vrcp.pop %v1296
  %v1388 = vmul.f32 1.0, %v1387
  %v1389 = vrcp.pop %v1297
  %v1390 = vmul.f32 1.0, %v1389
  %v1391 = vrcp.pop %v1298
  %v1392 = vmul.f32 1.0, %v1391
  %v1393 = vrcp.pop %v1299
  %v1394 = vmul.f32 1.0, %v1393
  %v1395 = vrcp.pop %v1300
  %v1396 = vmul.f32 1.0, %v1395
  %v1397 = vrcp.pop %v1301
  %v1398 = vmul.f32 1.0, %v1397
  %v1399 = vrcp.pop %v1302
  %v1400 = vmul.f32 1.0, %v1399
  %v1401 = vrcp.pop %v1303
  %v1402 = vmul.f32 1.0, %v1401
  %v1403 = vrcp.pop %v1304
  %v1404 = vmul.f32 1.0, %v1403
  %v1405 = vrcp.pop %v1305
  %v1406 = vmul.f32 1.0, %v1405
  %v1407 = vrcp.pop %v1306
  %v1408 = vmul.f32 1.0, %v1407
  %v1409 = vrcp.pop %v1307
  %v1410 = vmul.f32 1.0, %v1409
  %v1411 = vrcp.pop %v1308
  %v1412 = vmul.f32 1.0, %v1411
  %v1413 = vrcp.pop %v1309
  %v1414 = vmul.f32 1.0, %v1413
  %v1415 = vrcp.pop %v1310
  %v1416 = vmul.f32 1.0, %v1415
  %v1417 = vrcp.pop %v1311
  %v1418 = vmul.f32 1.0, %v1417
  %v1419 = vrcp.pop %v1312
  %v1420 = vmul.f32 1.0, %v1419
  %v1421 = vrcp.pop %v1313
  %v1422 = vmul.f32 1.0, %v1421
  %v1423 = vrcp.pop %v1314
  %v1424 = vmul.f32 1.0, %v1423
  %v1425 = vrcp.pop %v1315
  %v1426 = vmul.f32 1.0, %v1425
  %v1427 = vrcp.pop %v1316
  %v1428 = vmul.f32 1.0, %v1427
  %v1429 = vrcp.pop %v1317
  %v1430 = vmul.f32 1.0, %v1429
  %v1431 = vrcp.pop %v1318
  %v1432 = vmul.f32 1.0, %v1431
  %v1433 = vrcp.pop %v1319
  %v1434 = vmul.f32 1.0, %v1433
  %v1435 = vrcp.pop %v1320
  %v1436 = vmul.f32 1.0, %v1435
  %v1437 = vrcp.pop %v1321
  %v1438 = vmul.f32 1.0, %v1437
  %v1439 = vrcp.pop %v1322
  %v1440 = vmul.f32 1.0, %v1439
  %v1441 = vrcp.pop %v1323
  %v1442 = vmul.f32 1.0, %v1441
  %v1443 = vrcp.pop %v1324
  %v1444 = vmul.f32 1.0, %v1443
  %v1445 = vrcp.pop %v1325
  %v1446 = vmul.f32 1.0, %v1445
  %v1447 = vrcp.pop %v1326
  %v1448 = vmul.f32 1.0, %v1447
  %v1449 = vrcp.pop %v1327
  %v1450 = vmul.f32 1.0, %v1449
  %v1451 = vrcp.pop %v1328
  %v1452 = vmul.f32 1.0, %v1451
  %v1453 = vrcp.pop %v1329
  %v1454 = vmul.f32 1.0, %v1453
  %v1455 = vrcp.pop %v1330
  %v1456 = vmul.f32 1.0, %v1455
  %v1457 = vrcp.pop %v1331
  %v1458 = vmul.f32 1.0, %v1457
  %v1459 = vrcp.pop %v1332
  %v1460 = vmul.f32 1.0, %v1459
  %v1461 = vmul.f32 %v808, %v345
  %v1462 = vmul.f32 %v810, %v346
  %v1463 = vmul.f32 %v812, %v347
  %v1464 = vmul.f32 %v814, %v348
  %v1465 = vmul.f32 %v816, %v349
  %v1466 = vmul.f32 %v818, %v350
  %v1467 = vmul.f32 %v820, %v351
  %v1468 = vmul.f32 %v822, %v352
  %v1469 = vmul.f32 %v824, %v353
  %v1470 = vmul.f32 %v826, %v354
  %v1471 = vmul.f32 %v828, %v355
  %v1472 = vmul.f32 %v830, %v356
  %v1473 = vmul.f32 %v832, %v357
  %v1474 = vmul.f32 %v834, %v358
  %v1475 = vmul.f32 %v836, %v359
  %v1476 = vmul.f32 %v838, %v360
  %v1477 = vmul.f32 %v840, %v361
  %v1478 = vmul.f32 %v842, %v362
  %v1479 = vmul.f32 %v844, %v363
  %v1480 = vmul.f32 %v846, %v364
  %v1481 = vmul.f32 %v848, %v365
  %v1482 = vmul.f32 %v850, %v366
  %v1483 = vmul.f32 %v852, %v367
  %v1484 = vmul.f32 %v854, %v368
  %v1485 = vmul.f32 %v856, %v369
  %v1486 = vmul.f32 %v858, %v370
  %v1487 = vmul.f32 %v860, %v371
  %v1488 = vmul.f32 %v862, %v372
  %v1489 = vmul.f32 %v864, %v373
  %v1490 = vmul.f32 %v866, %v374
  %v1491 = vmul.f32 %v868, %v375
  %v1492 = vmul.f32 %v870, %v376
  %v1493 = vmul.f32 %v872, %v377
  %v1494 = vmul.f32 %v874, %v378
  %v1495 = vmul.f32 %v876, %v379
  %v1496 = vmul.f32 %v878, %v380
  %v1497 = vmul.f32 %v880, %v381
  %v1498 = vmul.f32 %v882, %v382
  %v1499 = vmul.f32 %v884, %v383
  %v1500 = vmul.f32 %v886, %v384
  %v1501 = vmul.f32 %v888, %v385
  %v1502 = vmul.f32 %v890, %v386
  %v1503 = vmul.f32 %v892, %v387
  %v1504 = vmul.f32 %v894, %v388
  %v1505 = vmul.f32 %v896, %v389
  %v1506 = vmul.f32 %v898, %v390
  %v1507 = vmul.f32 %v900, %v391
  %v1508 = vmul.f32 %v902, %v392
  %v1509 = vmul.f32 %v904, %v393
  %v1510 = vmul.f32 %v906, %v394
  %v1511 = vmul.f32 %v908, %v395
  %v1512 = vmul.f32 %v910, %v396
  %v1513 = vmul.f32 %v912, %v397
  %v1514 = vmul.f32 %v914, %v398
  %v1515 = vmul.f32 %v916, %v399
  %v1516 = vmul.f32 %v918, %v400
  %v1517 = vmul.f32 %v920, %v401
  %v1518 = vmul.f32 %v922, %v402
  %v1519 = vmul.f32 %v924, %v403
  %v1520 = vmul.f32 %v926, %v404
  %v1521 = vmul.f32 %v928, %v405
  %v1522 = vmul.f32 %v930, %v406
  %v1523 = vmul.f32 %v932, %v407
  %v1524 = vmul.f32 %v934, %v408
  %v1525 = vpack.c.bf16 %v1462, %v1461
  %v1526 = vpack.c.bf16 %v1464, %v1463
  %v1527 = vpack.c.bf16 %v1466, %v1465
  %v1528 = vpack.c.bf16 %v1468, %v1467
  %v1529 = vpack.c.bf16 %v1470, %v1469
  %v1530 = vpack.c.bf16 %v1472, %v1471
  %v1531 = vpack.c.bf16 %v1474, %v1473
  %v1532 = vpack.c.bf16 %v1476, %v1475
  %v1533 = vpack.c.bf16 %v1478, %v1477
  %v1534 = vpack.c.bf16 %v1480, %v1479
  %v1535 = vpack.c.bf16 %v1482, %v1481
  %v1536 = vpack.c.bf16 %v1484, %v1483
  %v1537 = vpack.c.bf16 %v1486, %v1485
  %v1538 = vpack.c.bf16 %v1488, %v1487
  %v1539 = vpack.c.bf16 %v1490, %v1489
  %v1540 = vpack.c.bf16 %v1492, %v1491
  %v1541 = vpack.c.bf16 %v1494, %v1493
  %v1542 = vpack.c.bf16 %v1496, %v1495
  %v1543 = vpack.c.bf16 %v1498, %v1497
  %v1544 = vpack.c.bf16 %v1500, %v1499
  %v1545 = vpack.c.bf16 %v1502, %v1501
  %v1546 = vpack.c.bf16 %v1504, %v1503
  %v1547 = vpack.c.bf16 %v1506, %v1505
  %v1548 = vpack.c.bf16 %v1508, %v1507
  %v1549 = vpack.c.bf16 %v1510, %v1509
  %v1550 = vpack.c.bf16 %v1512, %v1511
  %v1551 = vpack.c.bf16 %v1514, %v1513
  %v1552 = vpack.c.bf16 %v1516, %v1515
  %v1553 = vpack.c.bf16 %v1518, %v1517
  %v1554 = vpack.c.bf16 %v1520, %v1519
  %v1555 = vpack.c.bf16 %v1522, %v1521
  %v1556 = vpack.c.bf16 %v1524, %v1523
  %v1589 = vunpack.c.l.b16 %v1525
  %v1590 = vunpack.c.h.b16 %v1525
  %v1591 = vunpack.c.l.b16 %v1526
  %v1592 = vunpack.c.h.b16 %v1526
  %v1593 = vunpack.c.l.b16 %v1527
  %v1594 = vunpack.c.h.b16 %v1527
  %v1595 = vunpack.c.l.b16 %v1528
  %v1596 = vunpack.c.h.b16 %v1528
  %v1597 = vunpack.c.l.b16 %v1529
  %v1598 = vunpack.c.h.b16 %v1529
  %v1599 = vunpack.c.l.b16 %v1530
  %v1600 = vunpack.c.h.b16 %v1530
  %v1601 = vunpack.c.l.b16 %v1531
  %v1602 = vunpack.c.h.b16 %v1531
  %v1603 = vunpack.c.l.b16 %v1532
  %v1604 = vunpack.c.h.b16 %v1532
  %v1605 = vunpack.c.l.b16 %v1533
  %v1606 = vunpack.c.h.b16 %v1533
  %v1607 = vunpack.c.l.b16 %v1534
  %v1608 = vunpack.c.h.b16 %v1534
  %v1609 = vunpack.c.l.b16 %v1535
  %v1610 = vunpack.c.h.b16 %v1535
  %v1611 = vunpack.c.l.b16 %v1536
  %v1612 = vunpack.c.h.b16 %v1536
  %v1613 = vunpack.c.l.b16 %v1537
  %v1614 = vunpack.c.h.b16 %v1537
  %v1615 = vunpack.c.l.b16 %v1538
  %v1616 = vunpack.c.h.b16 %v1538
  %v1617 = vunpack.c.l.b16 %v1539
  %v1618 = vunpack.c.h.b16 %v1539
  %v1619 = vunpack.c.l.b16 %v1540
  %v1620 = vunpack.c.h.b16 %v1540
  %v1621 = vunpack.c.l.b16 %v1541
  %v1622 = vunpack.c.h.b16 %v1541
  %v1623 = vunpack.c.l.b16 %v1542
  %v1624 = vunpack.c.h.b16 %v1542
  %v1625 = vunpack.c.l.b16 %v1543
  %v1626 = vunpack.c.h.b16 %v1543
  %v1627 = vunpack.c.l.b16 %v1544
  %v1628 = vunpack.c.h.b16 %v1544
  %v1629 = vunpack.c.l.b16 %v1545
  %v1630 = vunpack.c.h.b16 %v1545
  %v1631 = vunpack.c.l.b16 %v1546
  %v1632 = vunpack.c.h.b16 %v1546
  %v1633 = vunpack.c.l.b16 %v1547
  %v1634 = vunpack.c.h.b16 %v1547
  %v1635 = vunpack.c.l.b16 %v1548
  %v1636 = vunpack.c.h.b16 %v1548
  %v1637 = vunpack.c.l.b16 %v1549
  %v1638 = vunpack.c.h.b16 %v1549
  %v1639 = vunpack.c.l.b16 %v1550
  %v1640 = vunpack.c.h.b16 %v1550
  %v1641 = vunpack.c.l.b16 %v1551
  %v1642 = vunpack.c.h.b16 %v1551
  %v1643 = vunpack.c.l.b16 %v1552
  %v1644 = vunpack.c.h.b16 %v1552
  %v1645 = vunpack.c.l.b16 %v1553
  %v1646 = vunpack.c.h.b16 %v1553
  %v1647 = vunpack.c.l.b16 %v1554
  %v1648 = vunpack.c.h.b16 %v1554
  %v1649 = vunpack.c.l.b16 %v1555
  %v1650 = vunpack.c.h.b16 %v1555
  %v1651 = vunpack.c.l.b16 %v1556
  %v1652 = vunpack.c.h.b16 %v1556
  %v1653 = vpack.c.b16 %v1589, %v1589
  %v1654 = vpack.c.b16 %v1590, %v1590
  %v1655 = vpack.c.b16 %v1591, %v1591
  %v1656 = vpack.c.b16 %v1592, %v1592
  %v1657 = vpack.c.b16 %v1593, %v1593
  %v1658 = vpack.c.b16 %v1594, %v1594
  %v1659 = vpack.c.b16 %v1595, %v1595
  %v1660 = vpack.c.b16 %v1596, %v1596
  %v1661 = vpack.c.b16 %v1597, %v1597
  %v1662 = vpack.c.b16 %v1598, %v1598
  %v1663 = vpack.c.b16 %v1599, %v1599
  %v1664 = vpack.c.b16 %v1600, %v1600
  %v1665 = vpack.c.b16 %v1601, %v1601
  %v1666 = vpack.c.b16 %v1602, %v1602
  %v1667 = vpack.c.b16 %v1603, %v1603
  %v1668 = vpack.c.b16 %v1604, %v1604
  %v1669 = vpack.c.b16 %v1605, %v1605
  %v1670 = vpack.c.b16 %v1606, %v1606
  %v1671 = vpack.c.b16 %v1607, %v1607
  %v1672 = vpack.c.b16 %v1608, %v1608
  %v1673 = vpack.c.b16 %v1609, %v1609
  %v1674 = vpack.c.b16 %v1610, %v1610
  %v1675 = vpack.c.b16 %v1611, %v1611
  %v1676 = vpack.c.b16 %v1612, %v1612
  %v1677 = vpack.c.b16 %v1613, %v1613
  %v1678 = vpack.c.b16 %v1614, %v1614
  %v1679 = vpack.c.b16 %v1615, %v1615
  %v1680 = vpack.c.b16 %v1616, %v1616
  %v1681 = vpack.c.b16 %v1617, %v1617
  %v1682 = vpack.c.b16 %v1618, %v1618
  %v1683 = vpack.c.b16 %v1619, %v1619
  %v1684 = vpack.c.b16 %v1620, %v1620
  %v1685 = vpack.c.b16 %v1621, %v1621
  %v1686 = vpack.c.b16 %v1622, %v1622
  %v1687 = vpack.c.b16 %v1623, %v1623
  %v1688 = vpack.c.b16 %v1624, %v1624
  %v1689 = vpack.c.b16 %v1625, %v1625
  %v1690 = vpack.c.b16 %v1626, %v1626
  %v1691 = vpack.c.b16 %v1627, %v1627
  %v1692 = vpack.c.b16 %v1628, %v1628
  %v1693 = vpack.c.b16 %v1629, %v1629
  %v1694 = vpack.c.b16 %v1630, %v1630
  %v1695 = vpack.c.b16 %v1631, %v1631
  %v1696 = vpack.c.b16 %v1632, %v1632
  %v1697 = vpack.c.b16 %v1633, %v1633
  %v1698 = vpack.c.b16 %v1634, %v1634
  %v1699 = vpack.c.b16 %v1635, %v1635
  %v1700 = vpack.c.b16 %v1636, %v1636
  %v1701 = vpack.c.b16 %v1637, %v1637
  %v1702 = vpack.c.b16 %v1638, %v1638
  %v1703 = vpack.c.b16 %v1639, %v1639
  %v1704 = vpack.c.b16 %v1640, %v1640
  %v1705 = vpack.c.b16 %v1641, %v1641
  %v1706 = vpack.c.b16 %v1642, %v1642
  %v1707 = vpack.c.b16 %v1643, %v1643
  %v1708 = vpack.c.b16 %v1644, %v1644
  %v1709 = vpack.c.b16 %v1645, %v1645
  %v1710 = vpack.c.b16 %v1646, %v1646
  %v1711 = vpack.c.b16 %v1647, %v1647
  %v1712 = vpack.c.b16 %v1648, %v1648
  %v1713 = vpack.c.b16 %v1649, %v1649
  %v1714 = vpack.c.b16 %v1650, %v1650
  %v1715 = vpack.c.b16 %v1651, %v1651
  %v1716 = vpack.c.b16 %v1652, %v1652
  %1781 = vst [vmem:[%s6] sm:$0xf] %v1653
  %1782 = vst [vmem:[%s6 + $0x4] sm:$0xf] %v1654
  %1783 = vst [vmem:[%s6 + $0x8] sm:$0xf] %v1655
  %1784 = vst [vmem:[%s6 + $0xc] sm:$0xf] %v1656
  %1785 = vst [vmem:[%s6 + $0x10] sm:$0xf] %v1657
  %1786 = vst [vmem:[%s6 + $0x14] sm:$0xf] %v1658
  %1787 = vst [vmem:[%s6 + $0x18] sm:$0xf] %v1659
  %1788 = vst [vmem:[%s6 + $0x1c] sm:$0xf] %v1660
  %1789 = vst [vmem:[%s6 + $0x20] sm:$0xf] %v1661
  %1790 = vst [vmem:[%s6 + $0x24] sm:$0xf] %v1662
  %1791 = vst [vmem:[%s6 + $0x28] sm:$0xf] %v1663
  %1792 = vst [vmem:[%s6 + $0x2c] sm:$0xf] %v1664
  %1793 = vst [vmem:[%s6 + $0x30] sm:$0xf] %v1665
  %1794 = vst [vmem:[%s6 + $0x34] sm:$0xf] %v1666
  %1795 = vst [vmem:[%s6 + $0x38] sm:$0xf] %v1667
  %1796 = vst [vmem:[%s6 + $0x3c] sm:$0xf] %v1668
  %1797 = vst [vmem:[%s6 + $0x40] sm:$0xf] %v1669
  %1798 = vst [vmem:[%s6 + $0x44] sm:$0xf] %v1670
  %1799 = vst [vmem:[%s6 + $0x48] sm:$0xf] %v1671
  %1800 = vst [vmem:[%s6 + $0x4c] sm:$0xf] %v1672
  %1801 = vst [vmem:[%s6 + $0x50] sm:$0xf] %v1673
  %1802 = vst [vmem:[%s6 + $0x54] sm:$0xf] %v1674
  %1803 = vst [vmem:[%s6 + $0x58] sm:$0xf] %v1675
  %1804 = vst [vmem:[%s6 + $0x5c] sm:$0xf] %v1676
  %1805 = vst [vmem:[%s6 + $0x60] sm:$0xf] %v1677
  %1806 = vst [vmem:[%s6 + $0x64] sm:$0xf] %v1678
  %1807 = vst [vmem:[%s6 + $0x68] sm:$0xf] %v1679
  %1808 = vst [vmem:[%s6 + $0x6c] sm:$0xf] %v1680
  %1809 = vst [vmem:[%s6 + $0x70] sm:$0xf] %v1681
  %1810 = vst [vmem:[%s6 + $0x74] sm:$0xf] %v1682
  %1811 = vst [vmem:[%s6 + $0x78] sm:$0xf] %v1683
  %1812 = vst [vmem:[%s6 + $0x7c] sm:$0xf] %v1684
  %1813 = vst [vmem:[%s6 + $0x80] sm:$0xf] %v1685
  %1814 = vst [vmem:[%s6 + $0x84] sm:$0xf] %v1686
  %1815 = vst [vmem:[%s6 + $0x88] sm:$0xf] %v1687
  %1816 = vst [vmem:[%s6 + $0x8c] sm:$0xf] %v1688
  %1817 = vst [vmem:[%s6 + $0x90] sm:$0xf] %v1689
  %1818 = vst [vmem:[%s6 + $0x94] sm:$0xf] %v1690
  %1819 = vst [vmem:[%s6 + $0x98] sm:$0xf] %v1691
  %1820 = vst [vmem:[%s6 + $0x9c] sm:$0xf] %v1692
  %1821 = vst [vmem:[%s6 + $0xa0] sm:$0xf] %v1693
  %1822 = vst [vmem:[%s6 + $0xa4] sm:$0xf] %v1694
  %1823 = vst [vmem:[%s6 + $0xa8] sm:$0xf] %v1695
  %1824 = vst [vmem:[%s6 + $0xac] sm:$0xf] %v1696
  %1825 = vst [vmem:[%s6 + $0xb0] sm:$0xf] %v1697
  %1826 = vst [vmem:[%s6 + $0xb4] sm:$0xf] %v1698
  %1827 = vst [vmem:[%s6 + $0xb8] sm:$0xf] %v1699
  %1828 = vst [vmem:[%s6 + $0xbc] sm:$0xf] %v1700
  %1829 = vst [vmem:[%s6 + $0xc0] sm:$0xf] %v1701
  %1830 = vst [vmem:[%s6 + $0xc4] sm:$0xf] %v1702
  %1831 = vst [vmem:[%s6 + $0xc8] sm:$0xf] %v1703
  %1832 = vst [vmem:[%s6 + $0xcc] sm:$0xf] %v1704
  %1833 = vst [vmem:[%s6 + $0xd0] sm:$0xf] %v1705
  %1834 = vst [vmem:[%s6 + $0xd4] sm:$0xf] %v1706
  %1835 = vst [vmem:[%s6 + $0xd8] sm:$0xf] %v1707
  %1836 = vst [vmem:[%s6 + $0xdc] sm:$0xf] %v1708
  %1837 = vst [vmem:[%s6 + $0xe0] sm:$0xf] %v1709
  %1838 = vst [vmem:[%s6 + $0xe4] sm:$0xf] %v1710
  %1839 = vst [vmem:[%s6 + $0xe8] sm:$0xf] %v1711
  %1840 = vst [vmem:[%s6 + $0xec] sm:$0xf] %v1712
  %1841 = vst [vmem:[%s6 + $0xf0] sm:$0xf] %v1713
  %1842 = vst [vmem:[%s6 + $0xf4] sm:$0xf] %v1714
  %1843 = vst [vmem:[%s6 + $0xf8] sm:$0xf] %v1715
  %1844 = vst [vmem:[%s6 + $0xfc] sm:$0xf] %v1716
  %v1845 = vpack.c.bf16 %v1336, %v1334
  %v1846 = vpack.c.bf16 %v1340, %v1338
  %v1847 = vpack.c.bf16 %v1344, %v1342
  %v1848 = vpack.c.bf16 %v1348, %v1346
  %v1849 = vpack.c.bf16 %v1352, %v1350
  %v1850 = vpack.c.bf16 %v1356, %v1354
  %v1851 = vpack.c.bf16 %v1360, %v1358
  %v1852 = vpack.c.bf16 %v1364, %v1362
  %v1853 = vpack.c.bf16 %v1368, %v1366
  %v1854 = vpack.c.bf16 %v1372, %v1370
  %v1855 = vpack.c.bf16 %v1376, %v1374
  %v1856 = vpack.c.bf16 %v1380, %v1378
  %v1857 = vpack.c.bf16 %v1384, %v1382
  %v1858 = vpack.c.bf16 %v1388, %v1386
  %v1859 = vpack.c.bf16 %v1392, %v1390
  %v1860 = vpack.c.bf16 %v1396, %v1394
  %v1861 = vpack.c.bf16 %v1400, %v1398
  %v1862 = vpack.c.bf16 %v1404, %v1402
  %v1863 = vpack.c.bf16 %v1408, %v1406
  %v1864 = vpack.c.bf16 %v1412, %v1410
  %v1865 = vpack.c.bf16 %v1416, %v1414
  %v1866 = vpack.c.bf16 %v1420, %v1418
  %v1867 = vpack.c.bf16 %v1424, %v1422
  %v1868 = vpack.c.bf16 %v1428, %v1426
  %v1869 = vpack.c.bf16 %v1432, %v1430
  %v1870 = vpack.c.bf16 %v1436, %v1434
  %v1871 = vpack.c.bf16 %v1440, %v1438
  %v1872 = vpack.c.bf16 %v1444, %v1442
  %v1873 = vpack.c.bf16 %v1448, %v1446
  %v1874 = vpack.c.bf16 %v1452, %v1450
  %v1875 = vpack.c.bf16 %v1456, %v1454
  %v1876 = vpack.c.bf16 %v1460, %v1458
  %v1909 = vunpack.c.l.b16 %v1845
  %v1910 = vunpack.c.h.b16 %v1845
  %v1911 = vunpack.c.l.b16 %v1846
  %v1912 = vunpack.c.h.b16 %v1846
  %v1913 = vunpack.c.l.b16 %v1847
  %v1914 = vunpack.c.h.b16 %v1847
  %v1915 = vunpack.c.l.b16 %v1848
  %v1916 = vunpack.c.h.b16 %v1848
  %v1917 = vunpack.c.l.b16 %v1849
  %v1918 = vunpack.c.h.b16 %v1849
  %v1919 = vunpack.c.l.b16 %v1850
  %v1920 = vunpack.c.h.b16 %v1850
  %v1921 = vunpack.c.l.b16 %v1851
  %v1922 = vunpack.c.h.b16 %v1851
  %v1923 = vunpack.c.l.b16 %v1852
  %v1924 = vunpack.c.h.b16 %v1852
  %v1925 = vunpack.c.l.b16 %v1853
  %v1926 = vunpack.c.h.b16 %v1853
  %v1927 = vunpack.c.l.b16 %v1854
  %v1928 = vunpack.c.h.b16 %v1854
  %v1929 = vunpack.c.l.b16 %v1855
  %v1930 = vunpack.c.h.b16 %v1855
  %v1931 = vunpack.c.l.b16 %v1856
  %v1932 = vunpack.c.h.b16 %v1856
  %v1933 = vunpack.c.l.b16 %v1857
  %v1934 = vunpack.c.h.b16 %v1857
  %v1935 = vunpack.c.l.b16 %v1858
  %v1936 = vunpack.c.h.b16 %v1858
  %v1937 = vunpack.c.l.b16 %v1859
  %v1938 = vunpack.c.h.b16 %v1859
  %v1939 = vunpack.c.l.b16 %v1860
  %v1940 = vunpack.c.h.b16 %v1860
  %v1941 = vunpack.c.l.b16 %v1861
  %v1942 = vunpack.c.h.b16 %v1861
  %v1943 = vunpack.c.l.b16 %v1862
  %v1944 = vunpack.c.h.b16 %v1862
  %v1945 = vunpack.c.l.b16 %v1863
  %v1946 = vunpack.c.h.b16 %v1863
  %v1947 = vunpack.c.l.b16 %v1864
  %v1948 = vunpack.c.h.b16 %v1864
  %v1949 = vunpack.c.l.b16 %v1865
  %v1950 = vunpack.c.h.b16 %v1865
  %v1951 = vunpack.c.l.b16 %v1866
  %v1952 = vunpack.c.h.b16 %v1866
  %v1953 = vunpack.c.l.b16 %v1867
  %v1954 = vunpack.c.h.b16 %v1867
  %v1955 = vunpack.c.l.b16 %v1868
  %v1956 = vunpack.c.h.b16 %v1868
  %v1957 = vunpack.c.l.b16 %v1869
  %v1958 = vunpack.c.h.b16 %v1869
  %v1959 = vunpack.c.l.b16 %v1870
  %v1960 = vunpack.c.h.b16 %v1870
  %v1961 = vunpack.c.l.b16 %v1871
  %v1962 = vunpack.c.h.b16 %v1871
  %v1963 = vunpack.c.l.b16 %v1872
  %v1964 = vunpack.c.h.b16 %v1872
  %v1965 = vunpack.c.l.b16 %v1873
  %v1966 = vunpack.c.h.b16 %v1873
  %v1967 = vunpack.c.l.b16 %v1874
  %v1968 = vunpack.c.h.b16 %v1874
  %v1969 = vunpack.c.l.b16 %v1875
  %v1970 = vunpack.c.h.b16 %v1875
  %v1971 = vunpack.c.l.b16 %v1876
  %v1972 = vunpack.c.h.b16 %v1876
  %v1973 = vpack.c.b16 %v1909, %v1909
  %v1974 = vpack.c.b16 %v1910, %v1910
  %v1975 = vpack.c.b16 %v1911, %v1911
  %v1976 = vpack.c.b16 %v1912, %v1912
  %v1977 = vpack.c.b16 %v1913, %v1913
  %v1978 = vpack.c.b16 %v1914, %v1914
  %v1979 = vpack.c.b16 %v1915, %v1915
  %v1980 = vpack.c.b16 %v1916, %v1916
  %v1981 = vpack.c.b16 %v1917, %v1917
  %v1982 = vpack.c.b16 %v1918, %v1918
  %v1983 = vpack.c.b16 %v1919, %v1919
  %v1984 = vpack.c.b16 %v1920, %v1920
  %v1985 = vpack.c.b16 %v1921, %v1921
  %v1986 = vpack.c.b16 %v1922, %v1922
  %v1987 = vpack.c.b16 %v1923, %v1923
  %v1988 = vpack.c.b16 %v1924, %v1924
  %v1989 = vpack.c.b16 %v1925, %v1925
  %v1990 = vpack.c.b16 %v1926, %v1926
  %v1991 = vpack.c.b16 %v1927, %v1927
  %v1992 = vpack.c.b16 %v1928, %v1928
  %v1993 = vpack.c.b16 %v1929, %v1929
  %v1994 = vpack.c.b16 %v1930, %v1930
  %v1995 = vpack.c.b16 %v1931, %v1931
  %v1996 = vpack.c.b16 %v1932, %v1932
  %v1997 = vpack.c.b16 %v1933, %v1933
  %v1998 = vpack.c.b16 %v1934, %v1934
  %v1999 = vpack.c.b16 %v1935, %v1935
  %v2000 = vpack.c.b16 %v1936, %v1936
  %v2001 = vpack.c.b16 %v1937, %v1937
  %v2002 = vpack.c.b16 %v1938, %v1938
  %v2003 = vpack.c.b16 %v1939, %v1939
  %v2004 = vpack.c.b16 %v1940, %v1940
  %v2005 = vpack.c.b16 %v1941, %v1941
  %v2006 = vpack.c.b16 %v1942, %v1942
  %v2007 = vpack.c.b16 %v1943, %v1943
  %v2008 = vpack.c.b16 %v1944, %v1944
  %v2009 = vpack.c.b16 %v1945, %v1945
  %v2010 = vpack.c.b16 %v1946, %v1946
  %v2011 = vpack.c.b16 %v1947, %v1947
  %v2012 = vpack.c.b16 %v1948, %v1948
  %v2013 = vpack.c.b16 %v1949, %v1949
  %v2014 = vpack.c.b16 %v1950, %v1950
  %v2015 = vpack.c.b16 %v1951, %v1951
  %v2016 = vpack.c.b16 %v1952, %v1952
  %v2017 = vpack.c.b16 %v1953, %v1953
  %v2018 = vpack.c.b16 %v1954, %v1954
  %v2019 = vpack.c.b16 %v1955, %v1955
  %v2020 = vpack.c.b16 %v1956, %v1956
  %v2021 = vpack.c.b16 %v1957, %v1957
  %v2022 = vpack.c.b16 %v1958, %v1958
  %v2023 = vpack.c.b16 %v1959, %v1959
  %v2024 = vpack.c.b16 %v1960, %v1960
  %v2025 = vpack.c.b16 %v1961, %v1961
  %v2026 = vpack.c.b16 %v1962, %v1962
  %v2027 = vpack.c.b16 %v1963, %v1963
  %v2028 = vpack.c.b16 %v1964, %v1964
  %v2029 = vpack.c.b16 %v1965, %v1965
  %v2030 = vpack.c.b16 %v1966, %v1966
  %v2031 = vpack.c.b16 %v1967, %v1967
  %v2032 = vpack.c.b16 %v1968, %v1968
  %v2033 = vpack.c.b16 %v1969, %v1969
  %v2034 = vpack.c.b16 %v1970, %v1970
  %v2035 = vpack.c.b16 %v1971, %v1971
  %v2036 = vpack.c.b16 %v1972, %v1972
  %2101 = vst [vmem:[%s7] sm:$0xf] %v1973
  %2102 = vst [vmem:[%s7 + $0x4] sm:$0xf] %v1974
  %2103 = vst [vmem:[%s7 + $0x8] sm:$0xf] %v1975
  %2104 = vst [vmem:[%s7 + $0xc] sm:$0xf] %v1976
  %2105 = vst [vmem:[%s7 + $0x10] sm:$0xf] %v1977
  %2106 = vst [vmem:[%s7 + $0x14] sm:$0xf] %v1978
  %2107 = vst [vmem:[%s7 + $0x18] sm:$0xf] %v1979
  %2108 = vst [vmem:[%s7 + $0x1c] sm:$0xf] %v1980
  %2109 = vst [vmem:[%s7 + $0x20] sm:$0xf] %v1981
  %2110 = vst [vmem:[%s7 + $0x24] sm:$0xf] %v1982
  %2111 = vst [vmem:[%s7 + $0x28] sm:$0xf] %v1983
  %2112 = vst [vmem:[%s7 + $0x2c] sm:$0xf] %v1984
  %2113 = vst [vmem:[%s7 + $0x30] sm:$0xf] %v1985
  %2114 = vst [vmem:[%s7 + $0x34] sm:$0xf] %v1986
  %2115 = vst [vmem:[%s7 + $0x38] sm:$0xf] %v1987
  %2116 = vst [vmem:[%s7 + $0x3c] sm:$0xf] %v1988
  %2117 = vst [vmem:[%s7 + $0x40] sm:$0xf] %v1989
  %2118 = vst [vmem:[%s7 + $0x44] sm:$0xf] %v1990
  %2119 = vst [vmem:[%s7 + $0x48] sm:$0xf] %v1991
  %2120 = vst [vmem:[%s7 + $0x4c] sm:$0xf] %v1992
  %2121 = vst [vmem:[%s7 + $0x50] sm:$0xf] %v1993
  %2122 = vst [vmem:[%s7 + $0x54] sm:$0xf] %v1994
  %2123 = vst [vmem:[%s7 + $0x58] sm:$0xf] %v1995
  %2124 = vst [vmem:[%s7 + $0x5c] sm:$0xf] %v1996
  %2125 = vst [vmem:[%s7 + $0x60] sm:$0xf] %v1997
  %2126 = vst [vmem:[%s7 + $0x64] sm:$0xf] %v1998
  %2127 = vst [vmem:[%s7 + $0x68] sm:$0xf] %v1999
  %2128 = vst [vmem:[%s7 + $0x6c] sm:$0xf] %v2000
  %2129 = vst [vmem:[%s7 + $0x70] sm:$0xf] %v2001
  %2130 = vst [vmem:[%s7 + $0x74] sm:$0xf] %v2002
  %2131 = vst [vmem:[%s7 + $0x78] sm:$0xf] %v2003
  %2132 = vst [vmem:[%s7 + $0x7c] sm:$0xf] %v2004
  %2133 = vst [vmem:[%s7 + $0x80] sm:$0xf] %v2005
  %2134 = vst [vmem:[%s7 + $0x84] sm:$0xf] %v2006
  %2135 = vst [vmem:[%s7 + $0x88] sm:$0xf] %v2007
  %2136 = vst [vmem:[%s7 + $0x8c] sm:$0xf] %v2008
  %2137 = vst [vmem:[%s7 + $0x90] sm:$0xf] %v2009
  %2138 = vst [vmem:[%s7 + $0x94] sm:$0xf] %v2010
  %2139 = vst [vmem:[%s7 + $0x98] sm:$0xf] %v2011
  %2140 = vst [vmem:[%s7 + $0x9c] sm:$0xf] %v2012
  %2141 = vst [vmem:[%s7 + $0xa0] sm:$0xf] %v2013
  %2142 = vst [vmem:[%s7 + $0xa4] sm:$0xf] %v2014
  %2143 = vst [vmem:[%s7 + $0xa8] sm:$0xf] %v2015
  %2144 = vst [vmem:[%s7 + $0xac] sm:$0xf] %v2016
  %2145 = vst [vmem:[%s7 + $0xb0] sm:$0xf] %v2017
  %2146 = vst [vmem:[%s7 + $0xb4] sm:$0xf] %v2018
  %2147 = vst [vmem:[%s7 + $0xb8] sm:$0xf] %v2019
  %2148 = vst [vmem:[%s7 + $0xbc] sm:$0xf] %v2020
  %2149 = vst [vmem:[%s7 + $0xc0] sm:$0xf] %v2021
  %2150 = vst [vmem:[%s7 + $0xc4] sm:$0xf] %v2022
  %2151 = vst [vmem:[%s7 + $0xc8] sm:$0xf] %v2023
  %2152 = vst [vmem:[%s7 + $0xcc] sm:$0xf] %v2024
  %2153 = vst [vmem:[%s7 + $0xd0] sm:$0xf] %v2025
  %2154 = vst [vmem:[%s7 + $0xd4] sm:$0xf] %v2026
  %2155 = vst [vmem:[%s7 + $0xd8] sm:$0xf] %v2027
  %2156 = vst [vmem:[%s7 + $0xdc] sm:$0xf] %v2028
  %2157 = vst [vmem:[%s7 + $0xe0] sm:$0xf] %v2029
  %2158 = vst [vmem:[%s7 + $0xe4] sm:$0xf] %v2030
  %2159 = vst [vmem:[%s7 + $0xe8] sm:$0xf] %v2031
  %2160 = vst [vmem:[%s7 + $0xec] sm:$0xf] %v2032
  %2161 = vst [vmem:[%s7 + $0xf0] sm:$0xf] %v2033
  %2162 = vst [vmem:[%s7 + $0xf4] sm:$0xf] %v2034
  %2163 = vst [vmem:[%s7 + $0xf8] sm:$0xf] %v2035
  %2164 = vst [vmem:[%s7 + $0xfc] sm:$0xf] %v2036
  // Predicated region
  $region26: #{conv_gru_cell_forward.7} parent=0 // pred_check
    _
  $region27: #{conv_gru_cell_forward.7} parent=0 // pred_check_branch
    %2166 = sbr.rel (0) target = $region29
  $region28: #{conv_gru_cell_forward.7} parent=0 // pred_region
    _
  $region29: #{conv_gru_cell_forward.7} parent=0 // pred_fallthru
    _
  // Predicated region
  $region30: #{conv_gru_cell_forward.7} parent=0 // pred_check
    _
  $region31: #{conv_gru_cell_forward.7} parent=0 // pred_check_branch
    %2168 = sbr.rel (0) target = $region33
  $region32: #{conv_gru_cell_forward.7} parent=0 // pred_region
    _
  $region33: #{conv_gru_cell_forward.7} parent=0 // pred_fallthru
    _
  // Predicated region
  $region34: #{conv_gru_cell_forward.7} parent=0 // pred_check
    _
  $region35: #{conv_gru_cell_forward.7} parent=0 // pred_check_branch
    %2170 = sbr.rel (0) target = $region37
  $region36: #{conv_gru_cell_forward.7} parent=0 // pred_region
    _
  $region37: #{conv_gru_cell_forward.7} parent=0 // pred_fallthru
    _
  // Predicated region
  $region38: #{conv_gru_cell_forward.7} parent=0 // pred_check
    _
  $region39: #{conv_gru_cell_forward.7} parent=0 // pred_check_branch
    %2172 = sbr.rel (0) target = $region41
  $region40: #{conv_gru_cell_forward.7} parent=0 // pred_region
    _
  $region41: #{conv_gru_cell_forward.7} parent=0 // pred_fallthru
    _

// kernel: conv_gru_cell_forward.8
$region0: #{conv_gru_cell_forward.8}
  #allocation0 [shape = 'u32[]', space=smem, size = 0x4, offset = 0x4, fixed_abs, tag = 'smem constant byte address 0x4 - core index']
  #allocation1 [shape = 'u32[144,128]{1,0:T(1,128)}', space=vmem, size = 0x12000, scoped, tag = 'internal scratch']
  %s0 = inlined_call_operand.vmem [shape: bf16[512,108], index: 0, kind: input, shape index: {}]
  %s1 = inlined_call_operand.vmem [shape: bf16[108,128], index: 1, kind: input, shape index: {}]
  %s2 = inlined_call_operand.vmem [shape: bf16[512,128], index: 2, kind: output, shape index: {0}]
  %s3 = inlined_call_operand.vmem [shape: f32[1,128], index: 3, kind: output, shape index: {1}]
  %s4 = inlined_call_operand.vmem [shape: f32[1,128], index: 4, kind: output, shape index: {2}]
  %5 = xla_tuple %s2, %s3, %s4
  %s6 = sld [smem:[#allocation0]]
  $region34: #{conv_gru_cell_forward.8} parent=0
    _
  %s8 = ssub.s32 1, %s6
  %s9 = scalar_select 0, %s8, %s6
  // Predicated region
  $region2: #{conv_gru_cell_forward.8} parent=0 // pred_check
    _
  $region3: #{conv_gru_cell_forward.8} parent=0 // pred_check_branch
    %11 = sbr.rel (0) target = $region5
  $region4: #{conv_gru_cell_forward.8} parent=0 // pred_region
    _
  $region5: #{conv_gru_cell_forward.8} parent=0 // pred_fallthru
    _
  // Predicated region
  $region6: #{conv_gru_cell_forward.8} parent=0 // pred_check
    _
  $region7: #{conv_gru_cell_forward.8} parent=0 // pred_check_branch
    %13 = sbr.rel (0) target = $region9
  $region8: #{conv_gru_cell_forward.8} parent=0 // pred_region
    _
  $region9: #{conv_gru_cell_forward.8} parent=0 // pred_fallthru
    _
  %v15 = vld [vmem:[%s0] sm:$0xf]
  %v16 = vld [vmem:[%s0 + $0x4] sm:$0xf]
  %v17 = vld [vmem:[%s0 + $0x8] sm:$0xf]
  %v18 = vld [vmem:[%s0 + $0xc] sm:$0xf]
  %v19 = vld [vmem:[%s0 + $0x10] sm:$0xf]
  %v20 = vld [vmem:[%s0 + $0x14] sm:$0xf]
  %v21 = vld [vmem:[%s0 + $0x18] sm:$0xf]
  %v22 = vld [vmem:[%s0 + $0x1c] sm:$0xf]
  %v23 = vld [vmem:[%s0 + $0x20] sm:$0xf]
  %v24 = vld [vmem:[%s0 + $0x24] sm:$0xf]
  %v25 = vld [vmem:[%s0 + $0x28] sm:$0xf]
  %v26 = vld [vmem:[%s0 + $0x2c] sm:$0xf]
  %v27 = vld [vmem:[%s0 + $0x30] sm:$0xf]
  %v28 = vld [vmem:[%s0 + $0x34] sm:$0xf]
  %v29 = vld [vmem:[%s0 + $0x38] sm:$0xf]
  %v30 = vld [vmem:[%s0 + $0x3c] sm:$0xf]
  %v31 = vld [vmem:[%s0 + $0x40] sm:$0xf]
  %v32 = vld [vmem:[%s0 + $0x44] sm:$0xf]
  %v33 = vld [vmem:[%s0 + $0x48] sm:$0xf]
  %v34 = vld [vmem:[%s0 + $0x4c] sm:$0xf]
  %v35 = vld [vmem:[%s0 + $0x50] sm:$0xf]
  %v36 = vld [vmem:[%s0 + $0x54] sm:$0xf]
  %v37 = vld [vmem:[%s0 + $0x58] sm:$0xf]
  %v38 = vld [vmem:[%s0 + $0x5c] sm:$0xf]
  %v39 = vld [vmem:[%s0 + $0x60] sm:$0xf]
  %v40 = vld [vmem:[%s0 + $0x64] sm:$0xf]
  %v41 = vld [vmem:[%s0 + $0x68] sm:$0xf]
  %v42 = vld [vmem:[%s0 + $0x6c] sm:$0xf]
  %v43 = vld [vmem:[%s0 + $0x70] sm:$0xf]
  %v44 = vld [vmem:[%s0 + $0x74] sm:$0xf]
  %v45 = vld [vmem:[%s0 + $0x78] sm:$0xf]
  %v46 = vld [vmem:[%s0 + $0x7c] sm:$0xf]
  %v47 = vld [vmem:[%s0 + $0x80] sm:$0xf]
  %v48 = vld [vmem:[%s0 + $0x84] sm:$0xf]
  %v49 = vld [vmem:[%s0 + $0x88] sm:$0xf]
  %v50 = vld [vmem:[%s0 + $0x8c] sm:$0xf]
  %v51 = vld [vmem:[%s0 + $0x90] sm:$0xf]
  %v52 = vld [vmem:[%s0 + $0x94] sm:$0xf]
  %v53 = vld [vmem:[%s0 + $0x98] sm:$0xf]
  %v54 = vld [vmem:[%s0 + $0x9c] sm:$0xf]
  %v55 = vld [vmem:[%s0 + $0xa0] sm:$0xf]
  %v56 = vld [vmem:[%s0 + $0xa4] sm:$0xf]
  %v57 = vld [vmem:[%s0 + $0xa8] sm:$0xf]
  %v58 = vld [vmem:[%s0 + $0xac] sm:$0xf]
  %v59 = vld [vmem:[%s0 + $0xb0] sm:$0xf]
  %v60 = vld [vmem:[%s0 + $0xb4] sm:$0xf]
  %v61 = vld [vmem:[%s0 + $0xb8] sm:$0xf]
  %v62 = vld [vmem:[%s0 + $0xbc] sm:$0xf]
  %v63 = vld [vmem:[%s0 + $0xc0] sm:$0xf]
  %v64 = vld [vmem:[%s0 + $0xc4] sm:$0xf]
  %v65 = vld [vmem:[%s0 + $0xc8] sm:$0xf]
  %v66 = vld [vmem:[%s0 + $0xcc] sm:$0xf]
  %v67 = vld [vmem:[%s0 + $0xd0] sm:$0xf]
  %v68 = vld [vmem:[%s0 + $0xd4] sm:$0xf]
  %v69 = vld [vmem:[%s0 + $0xd8] sm:$0xf]
  %v70 = vld [vmem:[%s0 + $0xdc] sm:$0xf]
  %v71 = vld [vmem:[%s0 + $0xe0] sm:$0xf]
  %v72 = vld [vmem:[%s0 + $0xe4] sm:$0xf]
  %v73 = vld [vmem:[%s0 + $0xe8] sm:$0xf]
  %v74 = vld [vmem:[%s0 + $0xec] sm:$0xf]
  %v75 = vld [vmem:[%s0 + $0xf0] sm:$0xf]
  %v76 = vld [vmem:[%s0 + $0xf4] sm:$0xf]
  %v77 = vld [vmem:[%s0 + $0xf8] sm:$0xf]
  %v78 = vld [vmem:[%s0 + $0xfc] sm:$0xf]
  %v79 = vld [vmem:[%s1] sm:$0xf]
  %v80 = vld [vmem:[%s1 + $0x4] sm:$0xf]
  %v81 = vld [vmem:[%s1 + $0x8] sm:$0xf]
  %v82 = vld [vmem:[%s1 + $0xc] sm:$0xf]
  %v83 = vld [vmem:[%s1 + $0x10] sm:$0xf]
  %v84 = vld [vmem:[%s1 + $0x14] sm:$0xf]
  %v85 = vld [vmem:[%s1 + $0x18] sm:$0xf]
  %v86 = vld [vmem:[%s1 + $0x1c] sm:$0xf]
  %v87 = vld [vmem:[%s1 + $0x20] sm:$0xf]
  %v88 = vld [vmem:[%s1 + $0x24] sm:$0xf]
  %v89 = vld [vmem:[%s1 + $0x28] sm:$0xf]
  %v90 = vld [vmem:[%s1 + $0x2c] sm:$0xf]
  %v91 = vld [vmem:[%s1 + $0x30] sm:$0xf]
  %v92 = vld [vmem:[%s1 + $0x34] sm:$0x3]
  %v157 = vunpack.c.l.b16 %v15
  %v158 = vunpack.c.l.b16 %v16
  %v159 = vunpack.c.l.b16 %v17
  %v160 = vunpack.c.l.b16 %v18
  %v161 = vunpack.c.l.b16 %v19
  %v162 = vunpack.c.l.b16 %v20
  %v163 = vunpack.c.l.b16 %v21
  %v164 = vunpack.c.l.b16 %v22
  %v165 = vunpack.c.l.b16 %v23
  %v166 = vunpack.c.l.b16 %v24
  %v167 = vunpack.c.l.b16 %v25
  %v168 = vunpack.c.l.b16 %v26
  %v169 = vunpack.c.l.b16 %v27
  %v170 = vunpack.c.l.b16 %v28
  %v171 = vunpack.c.l.b16 %v29
  %v172 = vunpack.c.l.b16 %v30
  %v173 = vunpack.c.l.b16 %v31
  %v174 = vunpack.c.l.b16 %v32
  %v175 = vunpack.c.l.b16 %v33
  %v176 = vunpack.c.l.b16 %v34
  %v177 = vunpack.c.l.b16 %v35
  %v178 = vunpack.c.l.b16 %v36
  %v179 = vunpack.c.l.b16 %v37
  %v180 = vunpack.c.l.b16 %v38
  %v181 = vunpack.c.l.b16 %v39
  %v182 = vunpack.c.l.b16 %v40
  %v183 = vunpack.c.l.b16 %v41
  %v184 = vunpack.c.l.b16 %v42
  %v185 = vunpack.c.l.b16 %v43
  %v186 = vunpack.c.l.b16 %v44
  %v187 = vunpack.c.l.b16 %v45
  %v188 = vunpack.c.l.b16 %v46
  %v189 = vunpack.c.l.b16 %v47
  %v190 = vunpack.c.l.b16 %v48
  %v191 = vunpack.c.l.b16 %v49
  %v192 = vunpack.c.l.b16 %v50
  %v193 = vunpack.c.l.b16 %v51
  %v194 = vunpack.c.l.b16 %v52
  %v195 = vunpack.c.l.b16 %v53
  %v196 = vunpack.c.l.b16 %v54
  %v197 = vunpack.c.l.b16 %v55
  %v198 = vunpack.c.l.b16 %v56
  %v199 = vunpack.c.l.b16 %v57
  %v200 = vunpack.c.l.b16 %v58
  %v201 = vunpack.c.l.b16 %v59
  %v202 = vunpack.c.l.b16 %v60
  %v203 = vunpack.c.l.b16 %v61
  %v204 = vunpack.c.l.b16 %v62
  %v205 = vunpack.c.l.b16 %v63
  %v206 = vunpack.c.l.b16 %v64
  %v207 = vunpack.c.l.b16 %v65
  %v208 = vunpack.c.l.b16 %v66
  %v209 = vunpack.c.l.b16 %v67
  %v210 = vunpack.c.l.b16 %v68
  %v211 = vunpack.c.l.b16 %v69
  %v212 = vunpack.c.l.b16 %v70
  %v213 = vunpack.c.l.b16 %v71
  %v214 = vunpack.c.l.b16 %v72
  %v215 = vunpack.c.l.b16 %v73
  %v216 = vunpack.c.l.b16 %v74
  %v217 = vunpack.c.l.b16 %v75
  %v218 = vunpack.c.l.b16 %v76
  %v219 = vunpack.c.l.b16 %v77
  %v220 = vunpack.c.l.b16 %v78
  %v221 = vpack.c.b16 %v158, %v157
  %v222 = vpack.c.b16 %v160, %v159
  %v223 = vpack.c.b16 %v162, %v161
  %v224 = vpack.c.b16 %v164, %v163
  %v225 = vpack.c.b16 %v166, %v165
  %v226 = vpack.c.b16 %v168, %v167
  %v227 = vpack.c.b16 %v170, %v169
  %v228 = vpack.c.b16 %v172, %v171
  %v229 = vpack.c.b16 %v174, %v173
  %v230 = vpack.c.b16 %v176, %v175
  %v231 = vpack.c.b16 %v178, %v177
  %v232 = vpack.c.b16 %v180, %v179
  %v233 = vpack.c.b16 %v182, %v181
  %v234 = vpack.c.b16 %v184, %v183
  %v235 = vpack.c.b16 %v186, %v185
  %v236 = vpack.c.b16 %v188, %v187
  %v237 = vpack.c.b16 %v190, %v189
  %v238 = vpack.c.b16 %v192, %v191
  %v239 = vpack.c.b16 %v194, %v193
  %v240 = vpack.c.b16 %v196, %v195
  %v241 = vpack.c.b16 %v198, %v197
  %v242 = vpack.c.b16 %v200, %v199
  %v243 = vpack.c.b16 %v202, %v201
  %v244 = vpack.c.b16 %v204, %v203
  %v245 = vpack.c.b16 %v206, %v205
  %v246 = vpack.c.b16 %v208, %v207
  %v247 = vpack.c.b16 %v210, %v209
  %v248 = vpack.c.b16 %v212, %v211
  %v249 = vpack.c.b16 %v214, %v213
  %v250 = vpack.c.b16 %v216, %v215
  %v251 = vpack.c.b16 %v218, %v217
  %v252 = vpack.c.b16 %v220, %v219
  %v267 = vunpack.c.l.b16 %v79
  %v268 = vunpack.c.l.b16 %v80
  %v269 = vunpack.c.l.b16 %v81
  %v270 = vunpack.c.l.b16 %v82
  %v271 = vunpack.c.l.b16 %v83
  %v272 = vunpack.c.l.b16 %v84
  %v273 = vunpack.c.l.b16 %v85
  %v274 = vunpack.c.l.b16 %v86
  %v275 = vunpack.c.l.b16 %v87
  %v276 = vunpack.c.l.b16 %v88
  %v277 = vunpack.c.l.b16 %v89
  %v278 = vunpack.c.l.b16 %v90
  %v279 = vunpack.c.l.b16 %v91
  %v280 = vunpack.c.l.b16 %v92
  %v281 = vpack.c.b16 %v268, %v267
  %v282 = vpack.c.b16 %v270, %v269
  %v283 = vpack.c.b16 %v272, %v271
  %v284 = vpack.c.b16 %v274, %v273
  %v285 = vpack.c.b16 %v276, %v275
  %v286 = vpack.c.b16 %v278, %v277
  %v287 = vpack.c.b16 %v280, %v279
  %vm294 = vcmask 883712
  %v296 = vsel %vm294, %v221, 0
  %v299 = vsel %vm294, %v222, 0
  %v302 = vsel %vm294, %v223, 0
  %v305 = vsel %vm294, %v224, 0
  %v308 = vsel %vm294, %v225, 0
  %v311 = vsel %vm294, %v226, 0
  %v314 = vsel %vm294, %v227, 0
  %v317 = vsel %vm294, %v228, 0
  %v320 = vsel %vm294, %v229, 0
  %v323 = vsel %vm294, %v230, 0
  %v326 = vsel %vm294, %v231, 0
  %v329 = vsel %vm294, %v232, 0
  %v332 = vsel %vm294, %v233, 0
  %v335 = vsel %vm294, %v234, 0
  %v338 = vsel %vm294, %v235, 0
  %v341 = vsel %vm294, %v236, 0
  %v344 = vsel %vm294, %v237, 0
  %v347 = vsel %vm294, %v238, 0
  %v350 = vsel %vm294, %v239, 0
  %v353 = vsel %vm294, %v240, 0
  %v356 = vsel %vm294, %v241, 0
  %v359 = vsel %vm294, %v242, 0
  %v362 = vsel %vm294, %v243, 0
  %v365 = vsel %vm294, %v244, 0
  %v368 = vsel %vm294, %v245, 0
  %v371 = vsel %vm294, %v246, 0
  %v374 = vsel %vm294, %v247, 0
  %v377 = vsel %vm294, %v248, 0
  %v380 = vsel %vm294, %v249, 0
  %v383 = vsel %vm294, %v250, 0
  %v386 = vsel %vm294, %v251, 0
  %v389 = vsel %vm294, %v252, 0
  %vm391 = vcmask 1045504
  %v393 = vsel %vm391, %v287, 0
  %395 = vmatprep.subr.bf16.mxu0 0
  %396 = vmatpush1.bf16.msra.mxu0 %v281
  %397 = vmatprep.subr.bf16.mxu0 0
  %398 = vmatpush1.bf16.msra.mxu0 %v282
  %399 = vmatprep.subr.bf16.mxu0 0
  %400 = vmatpush1.bf16.msra.mxu0 %v283
  %401 = vmatprep.subr.bf16.mxu0 0
  %402 = vmatpush1.bf16.msra.mxu0 %v284
  %403 = vmatprep.subr.bf16.mxu0 0
  %404 = vmatpush1.bf16.msra.mxu0 %v285
  %405 = vmatprep.subr.bf16.mxu0 0
  %406 = vmatpush1.bf16.msra.mxu0 %v286
  %407 = vmatprep.subr.bf16.mxu0 0
  %408 = vmatpush1.bf16.msra.mxu0 %v393
  %409 = vmatprep.subr.bf16.mxu0 0
  %410 = vmatpush1.bf16.msra.mxu0 0
  %411 = vmatprep.subr.bf16.mxu0 0
  %412 = vmatpush1.bf16.msra.mxu0 0
  %413 = vmatprep.subr.bf16.mxu0 0
  %414 = vmatpush1.bf16.msra.mxu0 0
  %415 = vmatprep.subr.bf16.mxu0 0
  %416 = vmatpush1.bf16.msra.mxu0 0
  %417 = vmatprep.subr.bf16.mxu0 0
  %418 = vmatpush1.bf16.msra.mxu0 0
  %419 = vmatprep.subr.bf16.mxu0 0
  %420 = vmatpush1.bf16.msra.mxu0 0
  %421 = vmatprep.subr.bf16.mxu0 0
  %422 = vmatpush1.bf16.msra.mxu0 0
  %423 = vmatprep.subr.bf16.mxu0 0
  %424 = vmatpush1.bf16.msra.mxu0 0
  %425 = vmatprep.subr.bf16.mxu0 0
  %426 = vmatpush1.bf16.msra.mxu0 0
  %427 = vmatprep.mubr.bf16.mxu0 0
  %428 = vmatmul.mubr.bf16.gmra.mrb[0].mxu0 %v296
  %v429 = vpop.f32.mrb[0].mxu0
  %v430 = vadd.f32 0.0, %v429
  %v431 = vpop.f32.mrb[0].mxu0
  %v432 = vpop.f32.mrb[0].mxu0
  %v433 = vadd.f32 0.0, %v432
  %v434 = vpop.f32.mrb[0].mxu0
  %435 = vmatprep.mubr.bf16.mxu0 0
  %436 = vmatmul.mubr.bf16.gmra.mrb[0].mxu0 %v299
  %v437 = vpop.f32.mrb[0].mxu0
  %v438 = vadd.f32 0.0, %v437
  %v439 = vpop.f32.mrb[0].mxu0
  %v440 = vpop.f32.mrb[0].mxu0
  %v441 = vadd.f32 0.0, %v440
  %v442 = vpop.f32.mrb[0].mxu0
  %443 = vmatprep.mubr.bf16.mxu0 0
  %444 = vmatmul.mubr.bf16.gmra.mrb[0].mxu0 %v302
  %v445 = vpop.f32.mrb[0].mxu0
  %v446 = vadd.f32 0.0, %v445
  %v447 = vpop.f32.mrb[0].mxu0
  %v448 = vpop.f32.mrb[0].mxu0
  %v449 = vadd.f32 0.0, %v448
  %v450 = vpop.f32.mrb[0].mxu0
  %451 = vmatprep.mubr.bf16.mxu0 0
  %452 = vmatmul.mubr.bf16.gmra.mrb[0].mxu0 %v305
  %v453 = vpop.f32.mrb[0].mxu0
  %v454 = vadd.f32 0.0, %v453
  %v455 = vpop.f32.mrb[0].mxu0
  %v456 = vpop.f32.mrb[0].mxu0
  %v457 = vadd.f32 0.0, %v456
  %v458 = vpop.f32.mrb[0].mxu0
  %459 = vmatprep.mubr.bf16.mxu0 0
  %460 = vmatmul.mubr.bf16.gmra.mrb[0].mxu0 %v308
  %v461 = vpop.f32.mrb[0].mxu0
  %v462 = vadd.f32 0.0, %v461
  %v463 = vpop.f32.mrb[0].mxu0
  %v464 = vpop.f32.mrb[0].mxu0
  %v465 = vadd.f32 0.0, %v464
  %v466 = vpop.f32.mrb[0].mxu0
  %467 = vmatprep.mubr.bf16.mxu0 0
  %468 = vmatmul.mubr.bf16.gmra.mrb[0].mxu0 %v311
  %v469 = vpop.f32.mrb[0].mxu0
  %v470 = vadd.f32 0.0, %v469
  %v471 = vpop.f32.mrb[0].mxu0
  %v472 = vpop.f32.mrb[0].mxu0
  %v473 = vadd.f32 0.0, %v472
  %v474 = vpop.f32.mrb[0].mxu0
  %475 = vmatprep.mubr.bf16.mxu0 0
  %476 = vmatmul.mubr.bf16.gmra.mrb[0].mxu0 %v314
  %v477 = vpop.f32.mrb[0].mxu0
  %v478 = vadd.f32 0.0, %v477
  %v479 = vpop.f32.mrb[0].mxu0
  %v480 = vpop.f32.mrb[0].mxu0
  %v481 = vadd.f32 0.0, %v480
  %v482 = vpop.f32.mrb[0].mxu0
  %483 = vmatprep.mubr.bf16.mxu0 0
  %484 = vmatmul.mubr.bf16.gmra.mrb[0].mxu0 %v317
  %v485 = vpop.f32.mrb[0].mxu0
  %v486 = vadd.f32 0.0, %v485
  %v487 = vpop.f32.mrb[0].mxu0
  %v488 = vpop.f32.mrb[0].mxu0
  %v489 = vadd.f32 0.0, %v488
  %v490 = vpop.f32.mrb[0].mxu0
  %491 = vmatprep.mubr.bf16.mxu0 0
  %492 = vmatmul.mubr.bf16.gmra.mrb[0].mxu0 %v320
  %v493 = vpop.f32.mrb[0].mxu0
  %v494 = vadd.f32 0.0, %v493
  %v495 = vpop.f32.mrb[0].mxu0
  %v496 = vpop.f32.mrb[0].mxu0
  %v497 = vadd.f32 0.0, %v496
  %v498 = vpop.f32.mrb[0].mxu0
  %499 = vmatprep.mubr.bf16.mxu0 0
  %500 = vmatmul.mubr.bf16.gmra.mrb[0].mxu0 %v323
  %v501 = vpop.f32.mrb[0].mxu0
  %v502 = vadd.f32 0.0, %v501
  %v503 = vpop.f32.mrb[0].mxu0
  %v504 = vpop.f32.mrb[0].mxu0
  %v505 = vadd.f32 0.0, %v504
  %v506 = vpop.f32.mrb[0].mxu0
  %507 = vmatprep.mubr.bf16.mxu0 0
  %508 = vmatmul.mubr.bf16.gmra.mrb[0].mxu0 %v326
  %v509 = vpop.f32.mrb[0].mxu0
  %v510 = vadd.f32 0.0, %v509
  %v511 = vpop.f32.mrb[0].mxu0
  %v512 = vpop.f32.mrb[0].mxu0
  %v513 = vadd.f32 0.0, %v512
  %v514 = vpop.f32.mrb[0].mxu0
  %515 = vmatprep.mubr.bf16.mxu0 0
  %516 = vmatmul.mubr.bf16.gmra.mrb[0].mxu0 %v329
  %v517 = vpop.f32.mrb[0].mxu0
  %v518 = vadd.f32 0.0, %v517
  %v519 = vpop.f32.mrb[0].mxu0
  %v520 = vpop.f32.mrb[0].mxu0
  %v521 = vadd.f32 0.0, %v520
  %v522 = vpop.f32.mrb[0].mxu0
  %523 = vmatprep.mubr.bf16.mxu0 0
  %524 = vmatmul.mubr.bf16.gmra.mrb[0].mxu0 %v332
  %v525 = vpop.f32.mrb[0].mxu0
  %v526 = vadd.f32 0.0, %v525
  %v527 = vpop.f32.mrb[0].mxu0
  %v528 = vpop.f32.mrb[0].mxu0
  %v529 = vadd.f32 0.0, %v528
  %v530 = vpop.f32.mrb[0].mxu0
  %531 = vmatprep.mubr.bf16.mxu0 0
  %532 = vmatmul.mubr.bf16.gmra.mrb[0].mxu0 %v335
  %v533 = vpop.f32.mrb[0].mxu0
  %v534 = vadd.f32 0.0, %v533
  %v535 = vpop.f32.mrb[0].mxu0
  %v536 = vpop.f32.mrb[0].mxu0
  %v537 = vadd.f32 0.0, %v536
  %v538 = vpop.f32.mrb[0].mxu0
  %539 = vmatprep.mubr.bf16.mxu0 0
  %540 = vmatmul.mubr.bf16.gmra.mrb[0].mxu0 %v338
  %v541 = vpop.f32.mrb[0].mxu0
  %v542 = vadd.f32 0.0, %v541
  %v543 = vpop.f32.mrb[0].mxu0
  %v544 = vpop.f32.mrb[0].mxu0
  %v545 = vadd.f32 0.0, %v544
  %v546 = vpop.f32.mrb[0].mxu0
  %547 = vmatprep.mubr.bf16.mxu0 0
  %548 = vmatmul.mubr.bf16.gmra.mrb[0].mxu0 %v341
  %v549 = vpop.f32.mrb[0].mxu0
  %v550 = vadd.f32 0.0, %v549
  %v551 = vpop.f32.mrb[0].mxu0
  %v552 = vpop.f32.mrb[0].mxu0
  %v553 = vadd.f32 0.0, %v552
  %v554 = vpop.f32.mrb[0].mxu0
  %555 = vmatprep.mubr.bf16.mxu0 0
  %556 = vmatmul.mubr.bf16.gmra.mrb[0].mxu0 %v344
  %v557 = vpop.f32.mrb[0].mxu0
  %v558 = vadd.f32 0.0, %v557
  %v559 = vpop.f32.mrb[0].mxu0
  %v560 = vpop.f32.mrb[0].mxu0
  %v561 = vadd.f32 0.0, %v560
  %v562 = vpop.f32.mrb[0].mxu0
  %563 = vmatprep.mubr.bf16.mxu0 0
  %564 = vmatmul.mubr.bf16.gmra.mrb[0].mxu0 %v347
  %v565 = vpop.f32.mrb[0].mxu0
  %v566 = vadd.f32 0.0, %v565
  %v567 = vpop.f32.mrb[0].mxu0
  %v568 = vpop.f32.mrb[0].mxu0
  %v569 = vadd.f32 0.0, %v568
  %v570 = vpop.f32.mrb[0].mxu0
  %571 = vmatprep.mubr.bf16.mxu0 0
  %572 = vmatmul.mubr.bf16.gmra.mrb[0].mxu0 %v350
  %v573 = vpop.f32.mrb[0].mxu0
  %v574 = vadd.f32 0.0, %v573
  %v575 = vpop.f32.mrb[0].mxu0
  %v576 = vpop.f32.mrb[0].mxu0
  %v577 = vadd.f32 0.0, %v576
  %v578 = vpop.f32.mrb[0].mxu0
  %579 = vmatprep.mubr.bf16.mxu0 0
  %580 = vmatmul.mubr.bf16.gmra.mrb[0].mxu0 %v353
  %v581 = vpop.f32.mrb[0].mxu0
  %v582 = vadd.f32 0.0, %v581
  %v583 = vpop.f32.mrb[0].mxu0
  %v584 = vpop.f32.mrb[0].mxu0
  %v585 = vadd.f32 0.0, %v584
  %v586 = vpop.f32.mrb[0].mxu0
  %587 = vmatprep.mubr.bf16.mxu0 0
  %588 = vmatmul.mubr.bf16.gmra.mrb[0].mxu0 %v356
  %v589 = vpop.f32.mrb[0].mxu0
  %v590 = vadd.f32 0.0, %v589
  %v591 = vpop.f32.mrb[0].mxu0
  %v592 = vpop.f32.mrb[0].mxu0
  %v593 = vadd.f32 0.0, %v592
  %v594 = vpop.f32.mrb[0].mxu0
  %595 = vmatprep.mubr.bf16.mxu0 0
  %596 = vmatmul.mubr.bf16.gmra.mrb[0].mxu0 %v359
  %v597 = vpop.f32.mrb[0].mxu0
  %v598 = vadd.f32 0.0, %v597
  %v599 = vpop.f32.mrb[0].mxu0
  %v600 = vpop.f32.mrb[0].mxu0
  %v601 = vadd.f32 0.0, %v600
  %v602 = vpop.f32.mrb[0].mxu0
  %603 = vmatprep.mubr.bf16.mxu0 0
  %604 = vmatmul.mubr.bf16.gmra.mrb[0].mxu0 %v362
  %v605 = vpop.f32.mrb[0].mxu0
  %v606 = vadd.f32 0.0, %v605
  %v607 = vpop.f32.mrb[0].mxu0
  %v608 = vpop.f32.mrb[0].mxu0
  %v609 = vadd.f32 0.0, %v608
  %v610 = vpop.f32.mrb[0].mxu0
  %611 = vmatprep.mubr.bf16.mxu0 0
  %612 = vmatmul.mubr.bf16.gmra.mrb[0].mxu0 %v365
  %v613 = vpop.f32.mrb[0].mxu0
  %v614 = vadd.f32 0.0, %v613
  %v615 = vpop.f32.mrb[0].mxu0
  %v616 = vpop.f32.mrb[0].mxu0
  %v617 = vadd.f32 0.0, %v616
  %v618 = vpop.f32.mrb[0].mxu0
  %619 = vmatprep.mubr.bf16.mxu0 0
  %620 = vmatmul.mubr.bf16.gmra.mrb[0].mxu0 %v368
  %v621 = vpop.f32.mrb[0].mxu0
  %v622 = vadd.f32 0.0, %v621
  %v623 = vpop.f32.mrb[0].mxu0
  %v624 = vpop.f32.mrb[0].mxu0
  %v625 = vadd.f32 0.0, %v624
  %v626 = vpop.f32.mrb[0].mxu0
  %627 = vmatprep.mubr.bf16.mxu0 0
  %628 = vmatmul.mubr.bf16.gmra.mrb[0].mxu0 %v371
  %v629 = vpop.f32.mrb[0].mxu0
  %v630 = vadd.f32 0.0, %v629
  %v631 = vpop.f32.mrb[0].mxu0
  %v632 = vpop.f32.mrb[0].mxu0
  %v633 = vadd.f32 0.0, %v632
  %v634 = vpop.f32.mrb[0].mxu0
  %635 = vmatprep.mubr.bf16.mxu0 0
  %636 = vmatmul.mubr.bf16.gmra.mrb[0].mxu0 %v374
  %v637 = vpop.f32.mrb[0].mxu0
  %v638 = vadd.f32 0.0, %v637
  %v639 = vpop.f32.mrb[0].mxu0
  %v640 = vpop.f32.mrb[0].mxu0
  %v641 = vadd.f32 0.0, %v640
  %v642 = vpop.f32.mrb[0].mxu0
  %643 = vmatprep.mubr.bf16.mxu0 0
  %644 = vmatmul.mubr.bf16.gmra.mrb[0].mxu0 %v377
  %v645 = vpop.f32.mrb[0].mxu0
  %v646 = vadd.f32 0.0, %v645
  %v647 = vpop.f32.mrb[0].mxu0
  %v648 = vpop.f32.mrb[0].mxu0
  %v649 = vadd.f32 0.0, %v648
  %v650 = vpop.f32.mrb[0].mxu0
  %651 = vmatprep.mubr.bf16.mxu0 0
  %652 = vmatmul.mubr.bf16.gmra.mrb[0].mxu0 %v380
  %v653 = vpop.f32.mrb[0].mxu0
  %v654 = vadd.f32 0.0, %v653
  %v655 = vpop.f32.mrb[0].mxu0
  %v656 = vpop.f32.mrb[0].mxu0
  %v657 = vadd.f32 0.0, %v656
  %v658 = vpop.f32.mrb[0].mxu0
  %659 = vmatprep.mubr.bf16.mxu0 0
  %660 = vmatmul.mubr.bf16.gmra.mrb[0].mxu0 %v383
  %v661 = vpop.f32.mrb[0].mxu0
  %v662 = vadd.f32 0.0, %v661
  %v663 = vpop.f32.mrb[0].mxu0
  %v664 = vpop.f32.mrb[0].mxu0
  %v665 = vadd.f32 0.0, %v664
  %v666 = vpop.f32.mrb[0].mxu0
  %667 = vmatprep.mubr.bf16.mxu0 0
  %668 = vmatmul.mubr.bf16.gmra.mrb[0].mxu0 %v386
  %v669 = vpop.f32.mrb[0].mxu0
  %v670 = vadd.f32 0.0, %v669
  %v671 = vpop.f32.mrb[0].mxu0
  %v672 = vpop.f32.mrb[0].mxu0
  %v673 = vadd.f32 0.0, %v672
  %v674 = vpop.f32.mrb[0].mxu0
  %675 = vmatprep.mubr.bf16.mxu0 0
  %676 = vmatmul.mubr.bf16.gmra.mrb[0].mxu0 %v389
  %v677 = vpop.f32.mrb[0].mxu0
  %v678 = vadd.f32 0.0, %v677
  %v679 = vpop.f32.mrb[0].mxu0
  %v680 = vpop.f32.mrb[0].mxu0
  %v681 = vadd.f32 0.0, %v680
  %v682 = vpop.f32.mrb[0].mxu0
  %683 = vdwg.mxu0
  %v684 = vpack.c.bf16 %v433, %v430
  %v685 = vpack.c.bf16 %v441, %v438
  %v686 = vpack.c.bf16 %v449, %v446
  %v687 = vpack.c.bf16 %v457, %v454
  %v688 = vpack.c.bf16 %v465, %v462
  %v689 = vpack.c.bf16 %v473, %v470
  %v690 = vpack.c.bf16 %v481, %v478
  %v691 = vpack.c.bf16 %v489, %v486
  %v692 = vpack.c.bf16 %v497, %v494
  %v693 = vpack.c.bf16 %v505, %v502
  %v694 = vpack.c.bf16 %v513, %v510
  %v695 = vpack.c.bf16 %v521, %v518
  %v696 = vpack.c.bf16 %v529, %v526
  %v697 = vpack.c.bf16 %v537, %v534
  %v698 = vpack.c.bf16 %v545, %v542
  %v699 = vpack.c.bf16 %v553, %v550
  %v700 = vpack.c.bf16 %v561, %v558
  %v701 = vpack.c.bf16 %v569, %v566
  %v702 = vpack.c.bf16 %v577, %v574
  %v703 = vpack.c.bf16 %v585, %v582
  %v704 = vpack.c.bf16 %v593, %v590
  %v705 = vpack.c.bf16 %v601, %v598
  %v706 = vpack.c.bf16 %v609, %v606
  %v707 = vpack.c.bf16 %v617, %v614
  %v708 = vpack.c.bf16 %v625, %v622
  %v709 = vpack.c.bf16 %v633, %v630
  %v710 = vpack.c.bf16 %v641, %v638
  %v711 = vpack.c.bf16 %v649, %v646
  %v712 = vpack.c.bf16 %v657, %v654
  %v713 = vpack.c.bf16 %v665, %v662
  %v714 = vpack.c.bf16 %v673, %v670
  %v715 = vpack.c.bf16 %v681, %v678
  %v748 = vunpack.c.l.b16 %v684
  %v749 = vunpack.c.h.b16 %v684
  %v750 = vunpack.c.l.b16 %v685
  %v751 = vunpack.c.h.b16 %v685
  %v752 = vunpack.c.l.b16 %v686
  %v753 = vunpack.c.h.b16 %v686
  %v754 = vunpack.c.l.b16 %v687
  %v755 = vunpack.c.h.b16 %v687
  %v756 = vunpack.c.l.b16 %v688
  %v757 = vunpack.c.h.b16 %v688
  %v758 = vunpack.c.l.b16 %v689
  %v759 = vunpack.c.h.b16 %v689
  %v760 = vunpack.c.l.b16 %v690
  %v761 = vunpack.c.h.b16 %v690
  %v762 = vunpack.c.l.b16 %v691
  %v763 = vunpack.c.h.b16 %v691
  %v764 = vunpack.c.l.b16 %v692
  %v765 = vunpack.c.h.b16 %v692
  %v766 = vunpack.c.l.b16 %v693
  %v767 = vunpack.c.h.b16 %v693
  %v768 = vunpack.c.l.b16 %v694
  %v769 = vunpack.c.h.b16 %v694
  %v770 = vunpack.c.l.b16 %v695
  %v771 = vunpack.c.h.b16 %v695
  %v772 = vunpack.c.l.b16 %v696
  %v773 = vunpack.c.h.b16 %v696
  %v774 = vunpack.c.l.b16 %v697
  %v775 = vunpack.c.h.b16 %v697
  %v776 = vunpack.c.l.b16 %v698
  %v777 = vunpack.c.h.b16 %v698
  %v778 = vunpack.c.l.b16 %v699
  %v779 = vunpack.c.h.b16 %v699
  %v780 = vunpack.c.l.b16 %v700
  %v781 = vunpack.c.h.b16 %v700
  %v782 = vunpack.c.l.b16 %v701
  %v783 = vunpack.c.h.b16 %v701
  %v784 = vunpack.c.l.b16 %v702
  %v785 = vunpack.c.h.b16 %v702
  %v786 = vunpack.c.l.b16 %v703
  %v787 = vunpack.c.h.b16 %v703
  %v788 = vunpack.c.l.b16 %v704
  %v789 = vunpack.c.h.b16 %v704
  %v790 = vunpack.c.l.b16 %v705
  %v791 = vunpack.c.h.b16 %v705
  %v792 = vunpack.c.l.b16 %v706
  %v793 = vunpack.c.h.b16 %v706
  %v794 = vunpack.c.l.b16 %v707
  %v795 = vunpack.c.h.b16 %v707
  %v796 = vunpack.c.l.b16 %v708
  %v797 = vunpack.c.h.b16 %v708
  %v798 = vunpack.c.l.b16 %v709
  %v799 = vunpack.c.h.b16 %v709
  %v800 = vunpack.c.l.b16 %v710
  %v801 = vunpack.c.h.b16 %v710
  %v802 = vunpack.c.l.b16 %v711
  %v803 = vunpack.c.h.b16 %v711
  %v804 = vunpack.c.l.b16 %v712
  %v805 = vunpack.c.h.b16 %v712
  %v806 = vunpack.c.l.b16 %v713
  %v807 = vunpack.c.h.b16 %v713
  %v808 = vunpack.c.l.b16 %v714
  %v809 = vunpack.c.h.b16 %v714
  %v810 = vunpack.c.l.b16 %v715
  %v811 = vunpack.c.h.b16 %v715
  %v812 = vpack.c.b16 %v748, %v748
  %v813 = vpack.c.b16 %v749, %v749
  %v814 = vpack.c.b16 %v750, %v750
  %v815 = vpack.c.b16 %v751, %v751
  %v816 = vpack.c.b16 %v752, %v752
  %v817 = vpack.c.b16 %v753, %v753
  %v818 = vpack.c.b16 %v754, %v754
  %v819 = vpack.c.b16 %v755, %v755
  %v820 = vpack.c.b16 %v756, %v756
  %v821 = vpack.c.b16 %v757, %v757
  %v822 = vpack.c.b16 %v758, %v758
  %v823 = vpack.c.b16 %v759, %v759
  %v824 = vpack.c.b16 %v760, %v760
  %v825 = vpack.c.b16 %v761, %v761
  %v826 = vpack.c.b16 %v762, %v762
  %v827 = vpack.c.b16 %v763, %v763
  %v828 = vpack.c.b16 %v764, %v764
  %v829 = vpack.c.b16 %v765, %v765
  %v830 = vpack.c.b16 %v766, %v766
  %v831 = vpack.c.b16 %v767, %v767
  %v832 = vpack.c.b16 %v768, %v768
  %v833 = vpack.c.b16 %v769, %v769
  %v834 = vpack.c.b16 %v770, %v770
  %v835 = vpack.c.b16 %v771, %v771
  %v836 = vpack.c.b16 %v772, %v772
  %v837 = vpack.c.b16 %v773, %v773
  %v838 = vpack.c.b16 %v774, %v774
  %v839 = vpack.c.b16 %v775, %v775
  %v840 = vpack.c.b16 %v776, %v776
  %v841 = vpack.c.b16 %v777, %v777
  %v842 = vpack.c.b16 %v778, %v778
  %v843 = vpack.c.b16 %v779, %v779
  %v844 = vpack.c.b16 %v780, %v780
  %v845 = vpack.c.b16 %v781, %v781
  %v846 = vpack.c.b16 %v782, %v782
  %v847 = vpack.c.b16 %v783, %v783
  %v848 = vpack.c.b16 %v784, %v784
  %v849 = vpack.c.b16 %v785, %v785
  %v850 = vpack.c.b16 %v786, %v786
  %v851 = vpack.c.b16 %v787, %v787
  %v852 = vpack.c.b16 %v788, %v788
  %v853 = vpack.c.b16 %v789, %v789
  %v854 = vpack.c.b16 %v790, %v790
  %v855 = vpack.c.b16 %v791, %v791
  %v856 = vpack.c.b16 %v792, %v792
  %v857 = vpack.c.b16 %v793, %v793
  %v858 = vpack.c.b16 %v794, %v794
  %v859 = vpack.c.b16 %v795, %v795
  %v860 = vpack.c.b16 %v796, %v796
  %v861 = vpack.c.b16 %v797, %v797
  %v862 = vpack.c.b16 %v798, %v798
  %v863 = vpack.c.b16 %v799, %v799
  %v864 = vpack.c.b16 %v800, %v800
  %v865 = vpack.c.b16 %v801, %v801
  %v866 = vpack.c.b16 %v802, %v802
  %v867 = vpack.c.b16 %v803, %v803
  %v868 = vpack.c.b16 %v804, %v804
  %v869 = vpack.c.b16 %v805, %v805
  %v870 = vpack.c.b16 %v806, %v806
  %v871 = vpack.c.b16 %v807, %v807
  %v872 = vpack.c.b16 %v808, %v808
  %v873 = vpack.c.b16 %v809, %v809
  %v874 = vpack.c.b16 %v810, %v810
  %v875 = vpack.c.b16 %v811, %v811
  %940 = vst [vmem:[%s2] sm:$0xf] %v812
  %941 = vst [vmem:[%s2 + $0x4] sm:$0xf] %v813
  %942 = vst [vmem:[%s2 + $0x8] sm:$0xf] %v814
  %943 = vst [vmem:[%s2 + $0xc] sm:$0xf] %v815
  %944 = vst [vmem:[%s2 + $0x10] sm:$0xf] %v816
  %945 = vst [vmem:[%s2 + $0x14] sm:$0xf] %v817
  %946 = vst [vmem:[%s2 + $0x18] sm:$0xf] %v818
  %947 = vst [vmem:[%s2 + $0x1c] sm:$0xf] %v819
  %948 = vst [vmem:[%s2 + $0x20] sm:$0xf] %v820
  %949 = vst [vmem:[%s2 + $0x24] sm:$0xf] %v821
  %950 = vst [vmem:[%s2 + $0x28] sm:$0xf] %v822
  %951 = vst [vmem:[%s2 + $0x2c] sm:$0xf] %v823
  %952 = vst [vmem:[%s2 + $0x30] sm:$0xf] %v824
  %953 = vst [vmem:[%s2 + $0x34] sm:$0xf] %v825
  %954 = vst [vmem:[%s2 + $0x38] sm:$0xf] %v826
  %955 = vst [vmem:[%s2 + $0x3c] sm:$0xf] %v827
  %956 = vst [vmem:[%s2 + $0x40] sm:$0xf] %v828
  %957 = vst [vmem:[%s2 + $0x44] sm:$0xf] %v829
  %958 = vst [vmem:[%s2 + $0x48] sm:$0xf] %v830
  %959 = vst [vmem:[%s2 + $0x4c] sm:$0xf] %v831
  %960 = vst [vmem:[%s2 + $0x50] sm:$0xf] %v832
  %961 = vst [vmem:[%s2 + $0x54] sm:$0xf] %v833
  %962 = vst [vmem:[%s2 + $0x58] sm:$0xf] %v834
  %963 = vst [vmem:[%s2 + $0x5c] sm:$0xf] %v835
  %964 = vst [vmem:[%s2 + $0x60] sm:$0xf] %v836
  %965 = vst [vmem:[%s2 + $0x64] sm:$0xf] %v837
  %966 = vst [vmem:[%s2 + $0x68] sm:$0xf] %v838
  %967 = vst [vmem:[%s2 + $0x6c] sm:$0xf] %v839
  %968 = vst [vmem:[%s2 + $0x70] sm:$0xf] %v840
  %969 = vst [vmem:[%s2 + $0x74] sm:$0xf] %v841
  %970 = vst [vmem:[%s2 + $0x78] sm:$0xf] %v842
  %971 = vst [vmem:[%s2 + $0x7c] sm:$0xf] %v843
  %972 = vst [vmem:[%s2 + $0x80] sm:$0xf] %v844
  %973 = vst [vmem:[%s2 + $0x84] sm:$0xf] %v845
  %974 = vst [vmem:[%s2 + $0x88] sm:$0xf] %v846
  %975 = vst [vmem:[%s2 + $0x8c] sm:$0xf] %v847
  %976 = vst [vmem:[%s2 + $0x90] sm:$0xf] %v848
  %977 = vst [vmem:[%s2 + $0x94] sm:$0xf] %v849
  %978 = vst [vmem:[%s2 + $0x98] sm:$0xf] %v850
  %979 = vst [vmem:[%s2 + $0x9c] sm:$0xf] %v851
  %980 = vst [vmem:[%s2 + $0xa0] sm:$0xf] %v852
  %981 = vst [vmem:[%s2 + $0xa4] sm:$0xf] %v853
  %982 = vst [vmem:[%s2 + $0xa8] sm:$0xf] %v854
  %983 = vst [vmem:[%s2 + $0xac] sm:$0xf] %v855
  %984 = vst [vmem:[%s2 + $0xb0] sm:$0xf] %v856
  %985 = vst [vmem:[%s2 + $0xb4] sm:$0xf] %v857
  %986 = vst [vmem:[%s2 + $0xb8] sm:$0xf] %v858
  %987 = vst [vmem:[%s2 + $0xbc] sm:$0xf] %v859
  %988 = vst [vmem:[%s2 + $0xc0] sm:$0xf] %v860
  %989 = vst [vmem:[%s2 + $0xc4] sm:$0xf] %v861
  %990 = vst [vmem:[%s2 + $0xc8] sm:$0xf] %v862
  %991 = vst [vmem:[%s2 + $0xcc] sm:$0xf] %v863
  %992 = vst [vmem:[%s2 + $0xd0] sm:$0xf] %v864
  %993 = vst [vmem:[%s2 + $0xd4] sm:$0xf] %v865
  %994 = vst [vmem:[%s2 + $0xd8] sm:$0xf] %v866
  %995 = vst [vmem:[%s2 + $0xdc] sm:$0xf] %v867
  %996 = vst [vmem:[%s2 + $0xe0] sm:$0xf] %v868
  %997 = vst [vmem:[%s2 + $0xe4] sm:$0xf] %v869
  %998 = vst [vmem:[%s2 + $0xe8] sm:$0xf] %v870
  %999 = vst [vmem:[%s2 + $0xec] sm:$0xf] %v871
  %1000 = vst [vmem:[%s2 + $0xf0] sm:$0xf] %v872
  %1001 = vst [vmem:[%s2 + $0xf4] sm:$0xf] %v873
  %1002 = vst [vmem:[%s2 + $0xf8] sm:$0xf] %v874
  %1003 = vst [vmem:[%s2 + $0xfc] sm:$0xf] %v875
  %v1004 = vadd.f32 %v430, %v433
  %v1005 = vadd.f32 %v1004, %v438
  %v1006 = vadd.f32 %v1005, %v441
  %v1007 = vadd.f32 %v1006, %v446
  %v1008 = vadd.f32 %v1007, %v449
  %v1009 = vadd.f32 %v1008, %v454
  %v1010 = vadd.f32 %v1009, %v457
  %v1011 = vadd.f32 %v1010, %v462
  %v1012 = vadd.f32 %v1011, %v465
  %v1013 = vadd.f32 %v1012, %v470
  %v1014 = vadd.f32 %v1013, %v473
  %v1015 = vadd.f32 %v1014, %v478
  %v1016 = vadd.f32 %v1015, %v481
  %v1017 = vadd.f32 %v1016, %v486
  %v1018 = vadd.f32 %v1017, %v489
  %v1019 = vadd.f32 %v1018, %v494
  %v1020 = vadd.f32 %v1019, %v497
  %v1021 = vadd.f32 %v1020, %v502
  %v1022 = vadd.f32 %v1021, %v505
  %v1023 = vadd.f32 %v1022, %v510
  %v1024 = vadd.f32 %v1023, %v513
  %v1025 = vadd.f32 %v1024, %v518
  %v1026 = vadd.f32 %v1025, %v521
  %v1027 = vadd.f32 %v1026, %v526
  %v1028 = vadd.f32 %v1027, %v529
  %v1029 = vadd.f32 %v1028, %v534
  %v1030 = vadd.f32 %v1029, %v537
  %v1031 = vadd.f32 %v1030, %v542
  %v1032 = vadd.f32 %v1031, %v545
  %v1033 = vadd.f32 %v1032, %v550
  %v1034 = vadd.f32 %v1033, %v553
  %v1035 = vadd.f32 %v1034, %v558
  %v1036 = vadd.f32 %v1035, %v561
  %v1037 = vadd.f32 %v1036, %v566
  %v1038 = vadd.f32 %v1037, %v569
  %v1039 = vadd.f32 %v1038, %v574
  %v1040 = vadd.f32 %v1039, %v577
  %v1041 = vadd.f32 %v1040, %v582
  %v1042 = vadd.f32 %v1041, %v585
  %v1043 = vadd.f32 %v1042, %v590
  %v1044 = vadd.f32 %v1043, %v593
  %v1045 = vadd.f32 %v1044, %v598
  %v1046 = vadd.f32 %v1045, %v601
  %v1047 = vadd.f32 %v1046, %v606
  %v1048 = vadd.f32 %v1047, %v609
  %v1049 = vadd.f32 %v1048, %v614
  %v1050 = vadd.f32 %v1049, %v617
  %v1051 = vadd.f32 %v1050, %v622
  %v1052 = vadd.f32 %v1051, %v625
  %v1053 = vadd.f32 %v1052, %v630
  %v1054 = vadd.f32 %v1053, %v633
  %v1055 = vadd.f32 %v1054, %v638
  %v1056 = vadd.f32 %v1055, %v641
  %v1057 = vadd.f32 %v1056, %v646
  %v1058 = vadd.f32 %v1057, %v649
  %v1059 = vadd.f32 %v1058, %v654
  %v1060 = vadd.f32 %v1059, %v657
  %v1061 = vadd.f32 %v1060, %v662
  %v1062 = vadd.f32 %v1061, %v665
  %v1063 = vadd.f32 %v1062, %v670
  %v1064 = vadd.f32 %v1063, %v673
  %v1065 = vadd.f32 %v1064, %v678
  %v1066 = vadd.f32 %v1065, %v681
  %v1067 = vrot.slane %v1066, 4
  %v1068 = vadd.f32 %v1066, %v1067
  %v1069 = vrot.slane %v1068, 2
  %v1070 = vadd.f32 %v1068, %v1069
  %v1071 = vrot.slane %v1070, 1
  %v1072 = vadd.f32 %v1070, %v1071
  %1073 = vst [vmem:[%s3] sm:$0x1] %v1072
  %v1074 = vmul.f32 %v430, %v430
  %v1075 = vmul.f32 %v433, %v433
  %v1076 = vmul.f32 %v438, %v438
  %v1077 = vmul.f32 %v441, %v441
  %v1078 = vmul.f32 %v446, %v446
  %v1079 = vmul.f32 %v449, %v449
  %v1080 = vmul.f32 %v454, %v454
  %v1081 = vmul.f32 %v457, %v457
  %v1082 = vmul.f32 %v462, %v462
  %v1083 = vmul.f32 %v465, %v465
  %v1084 = vmul.f32 %v470, %v470
  %v1085 = vmul.f32 %v473, %v473
  %v1086 = vmul.f32 %v478, %v478
  %v1087 = vmul.f32 %v481, %v481
  %v1088 = vmul.f32 %v486, %v486
  %v1089 = vmul.f32 %v489, %v489
  %v1090 = vmul.f32 %v494, %v494
  %v1091 = vmul.f32 %v497, %v497
  %v1092 = vmul.f32 %v502, %v502
  %v1093 = vmul.f32 %v505, %v505
  %v1094 = vmul.f32 %v510, %v510
  %v1095 = vmul.f32 %v513, %v513
  %v1096 = vmul.f32 %v518, %v518
  %v1097 = vmul.f32 %v521, %v521
  %v1098 = vmul.f32 %v526, %v526
  %v1099 = vmul.f32 %v529, %v529
  %v1100 = vmul.f32 %v534, %v534
  %v1101 = vmul.f32 %v537, %v537
  %v1102 = vmul.f32 %v542, %v542
  %v1103 = vmul.f32 %v545, %v545
  %v1104 = vmul.f32 %v550, %v550
  %v1105 = vmul.f32 %v553, %v553
  %v1106 = vmul.f32 %v558, %v558
  %v1107 = vmul.f32 %v561, %v561
  %v1108 = vmul.f32 %v566, %v566
  %v1109 = vmul.f32 %v569, %v569
  %v1110 = vmul.f32 %v574, %v574
  %v1111 = vmul.f32 %v577, %v577
  %v1112 = vmul.f32 %v582, %v582
  %v1113 = vmul.f32 %v585, %v585
  %v1114 = vmul.f32 %v590, %v590
  %v1115 = vmul.f32 %v593, %v593
  %v1116 = vmul.f32 %v598, %v598
  %v1117 = vmul.f32 %v601, %v601
  %v1118 = vmul.f32 %v606, %v606
  %v1119 = vmul.f32 %v609, %v609
  %v1120 = vmul.f32 %v614, %v614
  %v1121 = vmul.f32 %v617, %v617
  %v1122 = vmul.f32 %v622, %v622
  %v1123 = vmul.f32 %v625, %v625
  %v1124 = vmul.f32 %v630, %v630
  %v1125 = vmul.f32 %v633, %v633
  %v1126 = vmul.f32 %v638, %v638
  %v1127 = vmul.f32 %v641, %v641
  %v1128 = vmul.f32 %v646, %v646
  %v1129 = vmul.f32 %v649, %v649
  %v1130 = vmul.f32 %v654, %v654
  %v1131 = vmul.f32 %v657, %v657
  %v1132 = vmul.f32 %v662, %v662
  %v1133 = vmul.f32 %v665, %v665
  %v1134 = vmul.f32 %v670, %v670
  %v1135 = vmul.f32 %v673, %v673
  %v1136 = vmul.f32 %v678, %v678
  %v1137 = vmul.f32 %v681, %v681
  %v1138 = vadd.f32 %v1074, %v1075
  %v1139 = vadd.f32 %v1138, %v1076
  %v1140 = vadd.f32 %v1139, %v1077
  %v1141 = vadd.f32 %v1140, %v1078
  %v1142 = vadd.f32 %v1141, %v1079
  %v1143 = vadd.f32 %v1142, %v1080
  %v1144 = vadd.f32 %v1143, %v1081
  %v1145 = vadd.f32 %v1144, %v1082
  %v1146 = vadd.f32 %v1145, %v1083
  %v1147 = vadd.f32 %v1146, %v1084
  %v1148 = vadd.f32 %v1147, %v1085
  %v1149 = vadd.f32 %v1148, %v1086
  %v1150 = vadd.f32 %v1149, %v1087
  %v1151 = vadd.f32 %v1150, %v1088
  %v1152 = vadd.f32 %v1151, %v1089
  %v1153 = vadd.f32 %v1152, %v1090
  %v1154 = vadd.f32 %v1153, %v1091
  %v1155 = vadd.f32 %v1154, %v1092
  %v1156 = vadd.f32 %v1155, %v1093
  %v1157 = vadd.f32 %v1156, %v1094
  %v1158 = vadd.f32 %v1157, %v1095
  %v1159 = vadd.f32 %v1158, %v1096
  %v1160 = vadd.f32 %v1159, %v1097
  %v1161 = vadd.f32 %v1160, %v1098
  %v1162 = vadd.f32 %v1161, %v1099
  %v1163 = vadd.f32 %v1162, %v1100
  %v1164 = vadd.f32 %v1163, %v1101
  %v1165 = vadd.f32 %v1164, %v1102
  %v1166 = vadd.f32 %v1165, %v1103
  %v1167 = vadd.f32 %v1166, %v1104
  %v1168 = vadd.f32 %v1167, %v1105
  %v1169 = vadd.f32 %v1168, %v1106
  %v1170 = vadd.f32 %v1169, %v1107
  %v1171 = vadd.f32 %v1170, %v1108
  %v1172 = vadd.f32 %v1171, %v1109
  %v1173 = vadd.f32 %v1172, %v1110
  %v1174 = vadd.f32 %v1173, %v1111
  %v1175 = vadd.f32 %v1174, %v1112
  %v1176 = vadd.f32 %v1175, %v1113
  %v1177 = vadd.f32 %v1176, %v1114
  %v1178 = vadd.f32 %v1177, %v1115
  %v1179 = vadd.f32 %v1178, %v1116
  %v1180 = vadd.f32 %v1179, %v1117
  %v1181 = vadd.f32 %v1180, %v1118
  %v1182 = vadd.f32 %v1181, %v1119
  %v1183 = vadd.f32 %v1182, %v1120
  %v1184 = vadd.f32 %v1183, %v1121
  %v1185 = vadd.f32 %v1184, %v1122
  %v1186 = vadd.f32 %v1185, %v1123
  %v1187 = vadd.f32 %v1186, %v1124
  %v1188 = vadd.f32 %v1187, %v1125
  %v1189 = vadd.f32 %v1188, %v1126
  %v1190 = vadd.f32 %v1189, %v1127
  %v1191 = vadd.f32 %v1190, %v1128
  %v1192 = vadd.f32 %v1191, %v1129
  %v1193 = vadd.f32 %v1192, %v1130
  %v1194 = vadd.f32 %v1193, %v1131
  %v1195 = vadd.f32 %v1194, %v1132
  %v1196 = vadd.f32 %v1195, %v1133
  %v1197 = vadd.f32 %v1196, %v1134
  %v1198 = vadd.f32 %v1197, %v1135
  %v1199 = vadd.f32 %v1198, %v1136
  %v1200 = vadd.f32 %v1199, %v1137
  %v1201 = vrot.slane %v1200, 4
  %v1202 = vadd.f32 %v1200, %v1201
  %v1203 = vrot.slane %v1202, 2
  %v1204 = vadd.f32 %v1202, %v1203
  %v1205 = vrot.slane %v1204, 1
  %v1206 = vadd.f32 %v1204, %v1205
  %1207 = vst [vmem:[%s4] sm:$0x1] %v1206
  // Predicated region
  $region10: #{conv_gru_cell_forward.8} parent=0 // pred_check
    _
  $region11: #{conv_gru_cell_forward.8} parent=0 // pred_check_branch
    %1209 = sbr.rel (0) target = $region13
  $region12: #{conv_gru_cell_forward.8} parent=0 // pred_region
    _
  $region13: #{conv_gru_cell_forward.8} parent=0 // pred_fallthru
    _
  // Predicated region
  $region14: #{conv_gru_cell_forward.8} parent=0 // pred_check
    _
  $region15: #{conv_gru_cell_forward.8} parent=0 // pred_check_branch
    %1211 = sbr.rel (0) target = $region17
  $region16: #{conv_gru_cell_forward.8} parent=0 // pred_region
    _
  $region17: #{conv_gru_cell_forward.8} parent=0 // pred_fallthru
    _
  // Predicated region
  $region18: #{conv_gru_cell_forward.8} parent=0 // pred_check
    _
  $region19: #{conv_gru_cell_forward.8} parent=0 // pred_check_branch
    %1213 = sbr.rel (0) target = $region21
  $region20: #{conv_gru_cell_forward.8} parent=0 // pred_region
    _
  $region21: #{conv_gru_cell_forward.8} parent=0 // pred_fallthru
    _
  // Predicated region
  $region22: #{conv_gru_cell_forward.8} parent=0 // pred_check
    _
  $region23: #{conv_gru_cell_forward.8} parent=0 // pred_check_branch
    %1215 = sbr.rel (0) target = $region25
  $region24: #{conv_gru_cell_forward.8} parent=0 // pred_region
    _
  $region25: #{conv_gru_cell_forward.8} parent=0 // pred_fallthru
    _
  // Predicated region
  $region26: #{conv_gru_cell_forward.8} parent=0 // pred_check
    _
  $region27: #{conv_gru_cell_forward.8} parent=0 // pred_check_branch
    %1217 = sbr.rel (0) target = $region29
  $region28: #{conv_gru_cell_forward.8} parent=0 // pred_region
    _
  $region29: #{conv_gru_cell_forward.8} parent=0 // pred_fallthru
    _
  // Predicated region
  $region30: #{conv_gru_cell_forward.8} parent=0 // pred_check
    _
  $region31: #{conv_gru_cell_forward.8} parent=0 // pred_check_branch
    %1219 = sbr.rel (0) target = $region33
  $region32: #{conv_gru_cell_forward.8} parent=0 // pred_region
    _
  $region33: #{conv_gru_cell_forward.8} parent=0 // pred_fallthru
    _

// kernel: conv_gru_cell_forward.9
$region0: #{conv_gru_cell_forward.9}
  #allocation0 [shape = 'u32[]', space=smem, size = 0x4, offset = 0x4, fixed_abs, tag = 'smem constant byte address 0x4 - core index']
  #allocation1 [shape = 'u32[144,128]{1,0:T(1,128)}', space=vmem, size = 0x12000, scoped, tag = 'internal scratch']
  %s0 = inlined_call_operand.vmem [shape: bf16[512,128], index: 0, kind: input, shape index: {}]
  %s1 = inlined_call_operand.vmem [shape: bf16[512,128], index: 1, kind: input, shape index: {}]
  %s2 = inlined_call_operand.vmem [shape: bf16[512,128], index: 2, kind: input, shape index: {}]
  %s3 = inlined_call_operand.vmem [shape: f32[1,128], index: 3, kind: input, shape index: {}]
  %s4 = inlined_call_operand.vmem [shape: f32[1,128], index: 4, kind: input, shape index: {}]
  %s5 = inlined_call_operand.vmem [shape: f32[512,128], index: 5, kind: output, shape index: {}]
  %s6 = sld [smem:[#allocation0]]
  $region30: #{conv_gru_cell_forward.9} parent=0
    _
  %s8 = ssub.s32 1, %s6
  %s9 = scalar_select 0, %s8, %s6
  // Predicated region
  $region2: #{conv_gru_cell_forward.9} parent=0 // pred_check
    _
  $region3: #{conv_gru_cell_forward.9} parent=0 // pred_check_branch
    %11 = sbr.rel (0) target = $region5
  $region4: #{conv_gru_cell_forward.9} parent=0 // pred_region
    _
  $region5: #{conv_gru_cell_forward.9} parent=0 // pred_fallthru
    _
  // Predicated region
  $region6: #{conv_gru_cell_forward.9} parent=0 // pred_check
    _
  $region7: #{conv_gru_cell_forward.9} parent=0 // pred_check_branch
    %13 = sbr.rel (0) target = $region9
  $region8: #{conv_gru_cell_forward.9} parent=0 // pred_region
    _
  $region9: #{conv_gru_cell_forward.9} parent=0 // pred_fallthru
    _
  // Predicated region
  $region10: #{conv_gru_cell_forward.9} parent=0 // pred_check
    _
  $region11: #{conv_gru_cell_forward.9} parent=0 // pred_check_branch
    %15 = sbr.rel (0) target = $region13
  $region12: #{conv_gru_cell_forward.9} parent=0 // pred_region
    _
  $region13: #{conv_gru_cell_forward.9} parent=0 // pred_fallthru
    _
  // Predicated region
  $region14: #{conv_gru_cell_forward.9} parent=0 // pred_check
    _
  $region15: #{conv_gru_cell_forward.9} parent=0 // pred_check_branch
    %17 = sbr.rel (0) target = $region17
  $region16: #{conv_gru_cell_forward.9} parent=0 // pred_region
    _
  $region17: #{conv_gru_cell_forward.9} parent=0 // pred_fallthru
    _
  // Predicated region
  $region18: #{conv_gru_cell_forward.9} parent=0 // pred_check
    _
  $region19: #{conv_gru_cell_forward.9} parent=0 // pred_check_branch
    %19 = sbr.rel (0) target = $region21
  $region20: #{conv_gru_cell_forward.9} parent=0 // pred_region
    _
  $region21: #{conv_gru_cell_forward.9} parent=0 // pred_fallthru
    _
  %v20 = vld [vmem:[%s0] sm:$0xf]
  %v21 = vld [vmem:[%s0 + $0x4] sm:$0xf]
  %v22 = vld [vmem:[%s0 + $0x8] sm:$0xf]
  %v23 = vld [vmem:[%s0 + $0xc] sm:$0xf]
  %v24 = vld [vmem:[%s0 + $0x10] sm:$0xf]
  %v25 = vld [vmem:[%s0 + $0x14] sm:$0xf]
  %v26 = vld [vmem:[%s0 + $0x18] sm:$0xf]
  %v27 = vld [vmem:[%s0 + $0x1c] sm:$0xf]
  %v28 = vld [vmem:[%s0 + $0x20] sm:$0xf]
  %v29 = vld [vmem:[%s0 + $0x24] sm:$0xf]
  %v30 = vld [vmem:[%s0 + $0x28] sm:$0xf]
  %v31 = vld [vmem:[%s0 + $0x2c] sm:$0xf]
  %v32 = vld [vmem:[%s0 + $0x30] sm:$0xf]
  %v33 = vld [vmem:[%s0 + $0x34] sm:$0xf]
  %v34 = vld [vmem:[%s0 + $0x38] sm:$0xf]
  %v35 = vld [vmem:[%s0 + $0x3c] sm:$0xf]
  %v36 = vld [vmem:[%s0 + $0x40] sm:$0xf]
  %v37 = vld [vmem:[%s0 + $0x44] sm:$0xf]
  %v38 = vld [vmem:[%s0 + $0x48] sm:$0xf]
  %v39 = vld [vmem:[%s0 + $0x4c] sm:$0xf]
  %v40 = vld [vmem:[%s0 + $0x50] sm:$0xf]
  %v41 = vld [vmem:[%s0 + $0x54] sm:$0xf]
  %v42 = vld [vmem:[%s0 + $0x58] sm:$0xf]
  %v43 = vld [vmem:[%s0 + $0x5c] sm:$0xf]
  %v44 = vld [vmem:[%s0 + $0x60] sm:$0xf]
  %v45 = vld [vmem:[%s0 + $0x64] sm:$0xf]
  %v46 = vld [vmem:[%s0 + $0x68] sm:$0xf]
  %v47 = vld [vmem:[%s0 + $0x6c] sm:$0xf]
  %v48 = vld [vmem:[%s0 + $0x70] sm:$0xf]
  %v49 = vld [vmem:[%s0 + $0x74] sm:$0xf]
  %v50 = vld [vmem:[%s0 + $0x78] sm:$0xf]
  %v51 = vld [vmem:[%s0 + $0x7c] sm:$0xf]
  %v52 = vld [vmem:[%s0 + $0x80] sm:$0xf]
  %v53 = vld [vmem:[%s0 + $0x84] sm:$0xf]
  %v54 = vld [vmem:[%s0 + $0x88] sm:$0xf]
  %v55 = vld [vmem:[%s0 + $0x8c] sm:$0xf]
  %v56 = vld [vmem:[%s0 + $0x90] sm:$0xf]
  %v57 = vld [vmem:[%s0 + $0x94] sm:$0xf]
  %v58 = vld [vmem:[%s0 + $0x98] sm:$0xf]
  %v59 = vld [vmem:[%s0 + $0x9c] sm:$0xf]
  %v60 = vld [vmem:[%s0 + $0xa0] sm:$0xf]
  %v61 = vld [vmem:[%s0 + $0xa4] sm:$0xf]
  %v62 = vld [vmem:[%s0 + $0xa8] sm:$0xf]
  %v63 = vld [vmem:[%s0 + $0xac] sm:$0xf]
  %v64 = vld [vmem:[%s0 + $0xb0] sm:$0xf]
  %v65 = vld [vmem:[%s0 + $0xb4] sm:$0xf]
  %v66 = vld [vmem:[%s0 + $0xb8] sm:$0xf]
  %v67 = vld [vmem:[%s0 + $0xbc] sm:$0xf]
  %v68 = vld [vmem:[%s0 + $0xc0] sm:$0xf]
  %v69 = vld [vmem:[%s0 + $0xc4] sm:$0xf]
  %v70 = vld [vmem:[%s0 + $0xc8] sm:$0xf]
  %v71 = vld [vmem:[%s0 + $0xcc] sm:$0xf]
  %v72 = vld [vmem:[%s0 + $0xd0] sm:$0xf]
  %v73 = vld [vmem:[%s0 + $0xd4] sm:$0xf]
  %v74 = vld [vmem:[%s0 + $0xd8] sm:$0xf]
  %v75 = vld [vmem:[%s0 + $0xdc] sm:$0xf]
  %v76 = vld [vmem:[%s0 + $0xe0] sm:$0xf]
  %v77 = vld [vmem:[%s0 + $0xe4] sm:$0xf]
  %v78 = vld [vmem:[%s0 + $0xe8] sm:$0xf]
  %v79 = vld [vmem:[%s0 + $0xec] sm:$0xf]
  %v80 = vld [vmem:[%s0 + $0xf0] sm:$0xf]
  %v81 = vld [vmem:[%s0 + $0xf4] sm:$0xf]
  %v82 = vld [vmem:[%s0 + $0xf8] sm:$0xf]
  %v83 = vld [vmem:[%s0 + $0xfc] sm:$0xf]
  %v84 = vunpack.c.l.bf16 %v20
  %v85 = vunpack.c.l.bf16 %v21
  %v86 = vunpack.c.l.bf16 %v22
  %v87 = vunpack.c.l.bf16 %v23
  %v88 = vunpack.c.l.bf16 %v24
  %v89 = vunpack.c.l.bf16 %v25
  %v90 = vunpack.c.l.bf16 %v26
  %v91 = vunpack.c.l.bf16 %v27
  %v92 = vunpack.c.l.bf16 %v28
  %v93 = vunpack.c.l.bf16 %v29
  %v94 = vunpack.c.l.bf16 %v30
  %v95 = vunpack.c.l.bf16 %v31
  %v96 = vunpack.c.l.bf16 %v32
  %v97 = vunpack.c.l.bf16 %v33
  %v98 = vunpack.c.l.bf16 %v34
  %v99 = vunpack.c.l.bf16 %v35
  %v100 = vunpack.c.l.bf16 %v36
  %v101 = vunpack.c.l.bf16 %v37
  %v102 = vunpack.c.l.bf16 %v38
  %v103 = vunpack.c.l.bf16 %v39
  %v104 = vunpack.c.l.bf16 %v40
  %v105 = vunpack.c.l.bf16 %v41
  %v106 = vunpack.c.l.bf16 %v42
  %v107 = vunpack.c.l.bf16 %v43
  %v108 = vunpack.c.l.bf16 %v44
  %v109 = vunpack.c.l.bf16 %v45
  %v110 = vunpack.c.l.bf16 %v46
  %v111 = vunpack.c.l.bf16 %v47
  %v112 = vunpack.c.l.bf16 %v48
  %v113 = vunpack.c.l.bf16 %v49
  %v114 = vunpack.c.l.bf16 %v50
  %v115 = vunpack.c.l.bf16 %v51
  %v116 = vunpack.c.l.bf16 %v52
  %v117 = vunpack.c.l.bf16 %v53
  %v118 = vunpack.c.l.bf16 %v54
  %v119 = vunpack.c.l.bf16 %v55
  %v120 = vunpack.c.l.bf16 %v56
  %v121 = vunpack.c.l.bf16 %v57
  %v122 = vunpack.c.l.bf16 %v58
  %v123 = vunpack.c.l.bf16 %v59
  %v124 = vunpack.c.l.bf16 %v60
  %v125 = vunpack.c.l.bf16 %v61
  %v126 = vunpack.c.l.bf16 %v62
  %v127 = vunpack.c.l.bf16 %v63
  %v128 = vunpack.c.l.bf16 %v64
  %v129 = vunpack.c.l.bf16 %v65
  %v130 = vunpack.c.l.bf16 %v66
  %v131 = vunpack.c.l.bf16 %v67
  %v132 = vunpack.c.l.bf16 %v68
  %v133 = vunpack.c.l.bf16 %v69
  %v134 = vunpack.c.l.bf16 %v70
  %v135 = vunpack.c.l.bf16 %v71
  %v136 = vunpack.c.l.bf16 %v72
  %v137 = vunpack.c.l.bf16 %v73
  %v138 = vunpack.c.l.bf16 %v74
  %v139 = vunpack.c.l.bf16 %v75
  %v140 = vunpack.c.l.bf16 %v76
  %v141 = vunpack.c.l.bf16 %v77
  %v142 = vunpack.c.l.bf16 %v78
  %v143 = vunpack.c.l.bf16 %v79
  %v144 = vunpack.c.l.bf16 %v80
  %v145 = vunpack.c.l.bf16 %v81
  %v146 = vunpack.c.l.bf16 %v82
  %v147 = vunpack.c.l.bf16 %v83
  %v148 = vld [vmem:[%s3] sm:$0x1]
  %v150 = vlaneseq
  %v151 = vshrl.u32 %v150, 7
  %v152 = vsub.s32 0, %v151
  %v153 = vrot.slane %v148, %v152
  %v155 = vmul.f32 %v84, %v153
  %v156 = vmul.f32 %v85, %v153
  %v157 = vmul.f32 %v86, %v153
  %v158 = vmul.f32 %v87, %v153
  %v159 = vmul.f32 %v88, %v153
  %v160 = vmul.f32 %v89, %v153
  %v161 = vmul.f32 %v90, %v153
  %v162 = vmul.f32 %v91, %v153
  %v163 = vmul.f32 %v92, %v153
  %v164 = vmul.f32 %v93, %v153
  %v165 = vmul.f32 %v94, %v153
  %v166 = vmul.f32 %v95, %v153
  %v167 = vmul.f32 %v96, %v153
  %v168 = vmul.f32 %v97, %v153
  %v169 = vmul.f32 %v98, %v153
  %v170 = vmul.f32 %v99, %v153
  %v171 = vmul.f32 %v100, %v153
  %v172 = vmul.f32 %v101, %v153
  %v173 = vmul.f32 %v102, %v153
  %v174 = vmul.f32 %v103, %v153
  %v175 = vmul.f32 %v104, %v153
  %v176 = vmul.f32 %v105, %v153
  %v177 = vmul.f32 %v106, %v153
  %v178 = vmul.f32 %v107, %v153
  %v179 = vmul.f32 %v108, %v153
  %v180 = vmul.f32 %v109, %v153
  %v181 = vmul.f32 %v110, %v153
  %v182 = vmul.f32 %v111, %v153
  %v183 = vmul.f32 %v112, %v153
  %v184 = vmul.f32 %v113, %v153
  %v185 = vmul.f32 %v114, %v153
  %v186 = vmul.f32 %v115, %v153
  %v187 = vmul.f32 %v116, %v153
  %v188 = vmul.f32 %v117, %v153
  %v189 = vmul.f32 %v118, %v153
  %v190 = vmul.f32 %v119, %v153
  %v191 = vmul.f32 %v120, %v153
  %v192 = vmul.f32 %v121, %v153
  %v193 = vmul.f32 %v122, %v153
  %v194 = vmul.f32 %v123, %v153
  %v195 = vmul.f32 %v124, %v153
  %v196 = vmul.f32 %v125, %v153
  %v197 = vmul.f32 %v126, %v153
  %v198 = vmul.f32 %v127, %v153
  %v199 = vmul.f32 %v128, %v153
  %v200 = vmul.f32 %v129, %v153
  %v201 = vmul.f32 %v130, %v153
  %v202 = vmul.f32 %v131, %v153
  %v203 = vmul.f32 %v132, %v153
  %v204 = vmul.f32 %v133, %v153
  %v205 = vmul.f32 %v134, %v153
  %v206 = vmul.f32 %v135, %v153
  %v207 = vmul.f32 %v136, %v153
  %v208 = vmul.f32 %v137, %v153
  %v209 = vmul.f32 %v138, %v153
  %v210 = vmul.f32 %v139, %v153
  %v211 = vmul.f32 %v140, %v153
  %v212 = vmul.f32 %v141, %v153
  %v213 = vmul.f32 %v142, %v153
  %v214 = vmul.f32 %v143, %v153
  %v215 = vmul.f32 %v144, %v153
  %v216 = vmul.f32 %v145, %v153
  %v217 = vmul.f32 %v146, %v153
  %v218 = vmul.f32 %v147, %v153
  %v219 = vld [vmem:[%s4] sm:$0x1]
  %v221 = vlaneseq
  %v222 = vshrl.u32 %v221, 7
  %v223 = vsub.s32 0, %v222
  %v224 = vrot.slane %v219, %v223
  %v226 = vadd.f32 %v155, %v224
  %v227 = vadd.f32 %v156, %v224
  %v228 = vadd.f32 %v157, %v224
  %v229 = vadd.f32 %v158, %v224
  %v230 = vadd.f32 %v159, %v224
  %v231 = vadd.f32 %v160, %v224
  %v232 = vadd.f32 %v161, %v224
  %v233 = vadd.f32 %v162, %v224
  %v234 = vadd.f32 %v163, %v224
  %v235 = vadd.f32 %v164, %v224
  %v236 = vadd.f32 %v165, %v224
  %v237 = vadd.f32 %v166, %v224
  %v238 = vadd.f32 %v167, %v224
  %v239 = vadd.f32 %v168, %v224
  %v240 = vadd.f32 %v169, %v224
  %v241 = vadd.f32 %v170, %v224
  %v242 = vadd.f32 %v171, %v224
  %v243 = vadd.f32 %v172, %v224
  %v244 = vadd.f32 %v173, %v224
  %v245 = vadd.f32 %v174, %v224
  %v246 = vadd.f32 %v175, %v224
  %v247 = vadd.f32 %v176, %v224
  %v248 = vadd.f32 %v177, %v224
  %v249 = vadd.f32 %v178, %v224
  %v250 = vadd.f32 %v179, %v224
  %v251 = vadd.f32 %v180, %v224
  %v252 = vadd.f32 %v181, %v224
  %v253 = vadd.f32 %v182, %v224
  %v254 = vadd.f32 %v183, %v224
  %v255 = vadd.f32 %v184, %v224
  %v256 = vadd.f32 %v185, %v224
  %v257 = vadd.f32 %v186, %v224
  %v258 = vadd.f32 %v187, %v224
  %v259 = vadd.f32 %v188, %v224
  %v260 = vadd.f32 %v189, %v224
  %v261 = vadd.f32 %v190, %v224
  %v262 = vadd.f32 %v191, %v224
  %v263 = vadd.f32 %v192, %v224
  %v264 = vadd.f32 %v193, %v224
  %v265 = vadd.f32 %v194, %v224
  %v266 = vadd.f32 %v195, %v224
  %v267 = vadd.f32 %v196, %v224
  %v268 = vadd.f32 %v197, %v224
  %v269 = vadd.f32 %v198, %v224
  %v270 = vadd.f32 %v199, %v224
  %v271 = vadd.f32 %v200, %v224
  %v272 = vadd.f32 %v201, %v224
  %v273 = vadd.f32 %v202, %v224
  %v274 = vadd.f32 %v203, %v224
  %v275 = vadd.f32 %v204, %v224
  %v276 = vadd.f32 %v205, %v224
  %v277 = vadd.f32 %v206, %v224
  %v278 = vadd.f32 %v207, %v224
  %v279 = vadd.f32 %v208, %v224
  %v280 = vadd.f32 %v209, %v224
  %v281 = vadd.f32 %v210, %v224
  %v282 = vadd.f32 %v211, %v224
  %v283 = vadd.f32 %v212, %v224
  %v284 = vadd.f32 %v213, %v224
  %v285 = vadd.f32 %v214, %v224
  %v286 = vadd.f32 %v215, %v224
  %v287 = vadd.f32 %v216, %v224
  %v288 = vadd.f32 %v217, %v224
  %v289 = vadd.f32 %v218, %v224
  %v290 = vtanh.pop %v226
  %v291 = vtanh.pop %v227
  %v292 = vtanh.pop %v228
  %v293 = vtanh.pop %v229
  %v294 = vtanh.pop %v230
  %v295 = vtanh.pop %v231
  %v296 = vtanh.pop %v232
  %v297 = vtanh.pop %v233
  %v298 = vtanh.pop %v234
  %v299 = vtanh.pop %v235
  %v300 = vtanh.pop %v236
  %v301 = vtanh.pop %v237
  %v302 = vtanh.pop %v238
  %v303 = vtanh.pop %v239
  %v304 = vtanh.pop %v240
  %v305 = vtanh.pop %v241
  %v306 = vtanh.pop %v242
  %v307 = vtanh.pop %v243
  %v308 = vtanh.pop %v244
  %v309 = vtanh.pop %v245
  %v310 = vtanh.pop %v246
  %v311 = vtanh.pop %v247
  %v312 = vtanh.pop %v248
  %v313 = vtanh.pop %v249
  %v314 = vtanh.pop %v250
  %v315 = vtanh.pop %v251
  %v316 = vtanh.pop %v252
  %v317 = vtanh.pop %v253
  %v318 = vtanh.pop %v254
  %v319 = vtanh.pop %v255
  %v320 = vtanh.pop %v256
  %v321 = vtanh.pop %v257
  %v322 = vtanh.pop %v258
  %v323 = vtanh.pop %v259
  %v324 = vtanh.pop %v260
  %v325 = vtanh.pop %v261
  %v326 = vtanh.pop %v262
  %v327 = vtanh.pop %v263
  %v328 = vtanh.pop %v264
  %v329 = vtanh.pop %v265
  %v330 = vtanh.pop %v266
  %v331 = vtanh.pop %v267
  %v332 = vtanh.pop %v268
  %v333 = vtanh.pop %v269
  %v334 = vtanh.pop %v270
  %v335 = vtanh.pop %v271
  %v336 = vtanh.pop %v272
  %v337 = vtanh.pop %v273
  %v338 = vtanh.pop %v274
  %v339 = vtanh.pop %v275
  %v340 = vtanh.pop %v276
  %v341 = vtanh.pop %v277
  %v342 = vtanh.pop %v278
  %v343 = vtanh.pop %v279
  %v344 = vtanh.pop %v280
  %v345 = vtanh.pop %v281
  %v346 = vtanh.pop %v282
  %v347 = vtanh.pop %v283
  %v348 = vtanh.pop %v284
  %v349 = vtanh.pop %v285
  %v350 = vtanh.pop %v286
  %v351 = vtanh.pop %v287
  %v352 = vtanh.pop %v288
  %v353 = vtanh.pop %v289
  %v354 = vld [vmem:[%s1] sm:$0xf]
  %v355 = vld [vmem:[%s1 + $0x4] sm:$0xf]
  %v356 = vld [vmem:[%s1 + $0x8] sm:$0xf]
  %v357 = vld [vmem:[%s1 + $0xc] sm:$0xf]
  %v358 = vld [vmem:[%s1 + $0x10] sm:$0xf]
  %v359 = vld [vmem:[%s1 + $0x14] sm:$0xf]
  %v360 = vld [vmem:[%s1 + $0x18] sm:$0xf]
  %v361 = vld [vmem:[%s1 + $0x1c] sm:$0xf]
  %v362 = vld [vmem:[%s1 + $0x20] sm:$0xf]
  %v363 = vld [vmem:[%s1 + $0x24] sm:$0xf]
  %v364 = vld [vmem:[%s1 + $0x28] sm:$0xf]
  %v365 = vld [vmem:[%s1 + $0x2c] sm:$0xf]
  %v366 = vld [vmem:[%s1 + $0x30] sm:$0xf]
  %v367 = vld [vmem:[%s1 + $0x34] sm:$0xf]
  %v368 = vld [vmem:[%s1 + $0x38] sm:$0xf]
  %v369 = vld [vmem:[%s1 + $0x3c] sm:$0xf]
  %v370 = vld [vmem:[%s1 + $0x40] sm:$0xf]
  %v371 = vld [vmem:[%s1 + $0x44] sm:$0xf]
  %v372 = vld [vmem:[%s1 + $0x48] sm:$0xf]
  %v373 = vld [vmem:[%s1 + $0x4c] sm:$0xf]
  %v374 = vld [vmem:[%s1 + $0x50] sm:$0xf]
  %v375 = vld [vmem:[%s1 + $0x54] sm:$0xf]
  %v376 = vld [vmem:[%s1 + $0x58] sm:$0xf]
  %v377 = vld [vmem:[%s1 + $0x5c] sm:$0xf]
  %v378 = vld [vmem:[%s1 + $0x60] sm:$0xf]
  %v379 = vld [vmem:[%s1 + $0x64] sm:$0xf]
  %v380 = vld [vmem:[%s1 + $0x68] sm:$0xf]
  %v381 = vld [vmem:[%s1 + $0x6c] sm:$0xf]
  %v382 = vld [vmem:[%s1 + $0x70] sm:$0xf]
  %v383 = vld [vmem:[%s1 + $0x74] sm:$0xf]
  %v384 = vld [vmem:[%s1 + $0x78] sm:$0xf]
  %v385 = vld [vmem:[%s1 + $0x7c] sm:$0xf]
  %v386 = vld [vmem:[%s1 + $0x80] sm:$0xf]
  %v387 = vld [vmem:[%s1 + $0x84] sm:$0xf]
  %v388 = vld [vmem:[%s1 + $0x88] sm:$0xf]
  %v389 = vld [vmem:[%s1 + $0x8c] sm:$0xf]
  %v390 = vld [vmem:[%s1 + $0x90] sm:$0xf]
  %v391 = vld [vmem:[%s1 + $0x94] sm:$0xf]
  %v392 = vld [vmem:[%s1 + $0x98] sm:$0xf]
  %v393 = vld [vmem:[%s1 + $0x9c] sm:$0xf]
  %v394 = vld [vmem:[%s1 + $0xa0] sm:$0xf]
  %v395 = vld [vmem:[%s1 + $0xa4] sm:$0xf]
  %v396 = vld [vmem:[%s1 + $0xa8] sm:$0xf]
  %v397 = vld [vmem:[%s1 + $0xac] sm:$0xf]
  %v398 = vld [vmem:[%s1 + $0xb0] sm:$0xf]
  %v399 = vld [vmem:[%s1 + $0xb4] sm:$0xf]
  %v400 = vld [vmem:[%s1 + $0xb8] sm:$0xf]
  %v401 = vld [vmem:[%s1 + $0xbc] sm:$0xf]
  %v402 = vld [vmem:[%s1 + $0xc0] sm:$0xf]
  %v403 = vld [vmem:[%s1 + $0xc4] sm:$0xf]
  %v404 = vld [vmem:[%s1 + $0xc8] sm:$0xf]
  %v405 = vld [vmem:[%s1 + $0xcc] sm:$0xf]
  %v406 = vld [vmem:[%s1 + $0xd0] sm:$0xf]
  %v407 = vld [vmem:[%s1 + $0xd4] sm:$0xf]
  %v408 = vld [vmem:[%s1 + $0xd8] sm:$0xf]
  %v409 = vld [vmem:[%s1 + $0xdc] sm:$0xf]
  %v410 = vld [vmem:[%s1 + $0xe0] sm:$0xf]
  %v411 = vld [vmem:[%s1 + $0xe4] sm:$0xf]
  %v412 = vld [vmem:[%s1 + $0xe8] sm:$0xf]
  %v413 = vld [vmem:[%s1 + $0xec] sm:$0xf]
  %v414 = vld [vmem:[%s1 + $0xf0] sm:$0xf]
  %v415 = vld [vmem:[%s1 + $0xf4] sm:$0xf]
  %v416 = vld [vmem:[%s1 + $0xf8] sm:$0xf]
  %v417 = vld [vmem:[%s1 + $0xfc] sm:$0xf]
  %v418 = vunpack.c.l.bf16 %v354
  %v419 = vunpack.c.l.bf16 %v355
  %v420 = vunpack.c.l.bf16 %v356
  %v421 = vunpack.c.l.bf16 %v357
  %v422 = vunpack.c.l.bf16 %v358
  %v423 = vunpack.c.l.bf16 %v359
  %v424 = vunpack.c.l.bf16 %v360
  %v425 = vunpack.c.l.bf16 %v361
  %v426 = vunpack.c.l.bf16 %v362
  %v427 = vunpack.c.l.bf16 %v363
  %v428 = vunpack.c.l.bf16 %v364
  %v429 = vunpack.c.l.bf16 %v365
  %v430 = vunpack.c.l.bf16 %v366
  %v431 = vunpack.c.l.bf16 %v367
  %v432 = vunpack.c.l.bf16 %v368
  %v433 = vunpack.c.l.bf16 %v369
  %v434 = vunpack.c.l.bf16 %v370
  %v435 = vunpack.c.l.bf16 %v371
  %v436 = vunpack.c.l.bf16 %v372
  %v437 = vunpack.c.l.bf16 %v373
  %v438 = vunpack.c.l.bf16 %v374
  %v439 = vunpack.c.l.bf16 %v375
  %v440 = vunpack.c.l.bf16 %v376
  %v441 = vunpack.c.l.bf16 %v377
  %v442 = vunpack.c.l.bf16 %v378
  %v443 = vunpack.c.l.bf16 %v379
  %v444 = vunpack.c.l.bf16 %v380
  %v445 = vunpack.c.l.bf16 %v381
  %v446 = vunpack.c.l.bf16 %v382
  %v447 = vunpack.c.l.bf16 %v383
  %v448 = vunpack.c.l.bf16 %v384
  %v449 = vunpack.c.l.bf16 %v385
  %v450 = vunpack.c.l.bf16 %v386
  %v451 = vunpack.c.l.bf16 %v387
  %v452 = vunpack.c.l.bf16 %v388
  %v453 = vunpack.c.l.bf16 %v389
  %v454 = vunpack.c.l.bf16 %v390
  %v455 = vunpack.c.l.bf16 %v391
  %v456 = vunpack.c.l.bf16 %v392
  %v457 = vunpack.c.l.bf16 %v393
  %v458 = vunpack.c.l.bf16 %v394
  %v459 = vunpack.c.l.bf16 %v395
  %v460 = vunpack.c.l.bf16 %v396
  %v461 = vunpack.c.l.bf16 %v397
  %v462 = vunpack.c.l.bf16 %v398
  %v463 = vunpack.c.l.bf16 %v399
  %v464 = vunpack.c.l.bf16 %v400
  %v465 = vunpack.c.l.bf16 %v401
  %v466 = vunpack.c.l.bf16 %v402
  %v467 = vunpack.c.l.bf16 %v403
  %v468 = vunpack.c.l.bf16 %v404
  %v469 = vunpack.c.l.bf16 %v405
  %v470 = vunpack.c.l.bf16 %v406
  %v471 = vunpack.c.l.bf16 %v407
  %v472 = vunpack.c.l.bf16 %v408
  %v473 = vunpack.c.l.bf16 %v409
  %v474 = vunpack.c.l.bf16 %v410
  %v475 = vunpack.c.l.bf16 %v411
  %v476 = vunpack.c.l.bf16 %v412
  %v477 = vunpack.c.l.bf16 %v413
  %v478 = vunpack.c.l.bf16 %v414
  %v479 = vunpack.c.l.bf16 %v415
  %v480 = vunpack.c.l.bf16 %v416
  %v481 = vunpack.c.l.bf16 %v417
  %v482 = vld [vmem:[%s2] sm:$0xf]
  %v483 = vld [vmem:[%s2 + $0x4] sm:$0xf]
  %v484 = vld [vmem:[%s2 + $0x8] sm:$0xf]
  %v485 = vld [vmem:[%s2 + $0xc] sm:$0xf]
  %v486 = vld [vmem:[%s2 + $0x10] sm:$0xf]
  %v487 = vld [vmem:[%s2 + $0x14] sm:$0xf]
  %v488 = vld [vmem:[%s2 + $0x18] sm:$0xf]
  %v489 = vld [vmem:[%s2 + $0x1c] sm:$0xf]
  %v490 = vld [vmem:[%s2 + $0x20] sm:$0xf]
  %v491 = vld [vmem:[%s2 + $0x24] sm:$0xf]
  %v492 = vld [vmem:[%s2 + $0x28] sm:$0xf]
  %v493 = vld [vmem:[%s2 + $0x2c] sm:$0xf]
  %v494 = vld [vmem:[%s2 + $0x30] sm:$0xf]
  %v495 = vld [vmem:[%s2 + $0x34] sm:$0xf]
  %v496 = vld [vmem:[%s2 + $0x38] sm:$0xf]
  %v497 = vld [vmem:[%s2 + $0x3c] sm:$0xf]
  %v498 = vld [vmem:[%s2 + $0x40] sm:$0xf]
  %v499 = vld [vmem:[%s2 + $0x44] sm:$0xf]
  %v500 = vld [vmem:[%s2 + $0x48] sm:$0xf]
  %v501 = vld [vmem:[%s2 + $0x4c] sm:$0xf]
  %v502 = vld [vmem:[%s2 + $0x50] sm:$0xf]
  %v503 = vld [vmem:[%s2 + $0x54] sm:$0xf]
  %v504 = vld [vmem:[%s2 + $0x58] sm:$0xf]
  %v505 = vld [vmem:[%s2 + $0x5c] sm:$0xf]
  %v506 = vld [vmem:[%s2 + $0x60] sm:$0xf]
  %v507 = vld [vmem:[%s2 + $0x64] sm:$0xf]
  %v508 = vld [vmem:[%s2 + $0x68] sm:$0xf]
  %v509 = vld [vmem:[%s2 + $0x6c] sm:$0xf]
  %v510 = vld [vmem:[%s2 + $0x70] sm:$0xf]
  %v511 = vld [vmem:[%s2 + $0x74] sm:$0xf]
  %v512 = vld [vmem:[%s2 + $0x78] sm:$0xf]
  %v513 = vld [vmem:[%s2 + $0x7c] sm:$0xf]
  %v514 = vld [vmem:[%s2 + $0x80] sm:$0xf]
  %v515 = vld [vmem:[%s2 + $0x84] sm:$0xf]
  %v516 = vld [vmem:[%s2 + $0x88] sm:$0xf]
  %v517 = vld [vmem:[%s2 + $0x8c] sm:$0xf]
  %v518 = vld [vmem:[%s2 + $0x90] sm:$0xf]
  %v519 = vld [vmem:[%s2 + $0x94] sm:$0xf]
  %v520 = vld [vmem:[%s2 + $0x98] sm:$0xf]
  %v521 = vld [vmem:[%s2 + $0x9c] sm:$0xf]
  %v522 = vld [vmem:[%s2 + $0xa0] sm:$0xf]
  %v523 = vld [vmem:[%s2 + $0xa4] sm:$0xf]
  %v524 = vld [vmem:[%s2 + $0xa8] sm:$0xf]
  %v525 = vld [vmem:[%s2 + $0xac] sm:$0xf]
  %v526 = vld [vmem:[%s2 + $0xb0] sm:$0xf]
  %v527 = vld [vmem:[%s2 + $0xb4] sm:$0xf]
  %v528 = vld [vmem:[%s2 + $0xb8] sm:$0xf]
  %v529 = vld [vmem:[%s2 + $0xbc] sm:$0xf]
  %v530 = vld [vmem:[%s2 + $0xc0] sm:$0xf]
  %v531 = vld [vmem:[%s2 + $0xc4] sm:$0xf]
  %v532 = vld [vmem:[%s2 + $0xc8] sm:$0xf]
  %v533 = vld [vmem:[%s2 + $0xcc] sm:$0xf]
  %v534 = vld [vmem:[%s2 + $0xd0] sm:$0xf]
  %v535 = vld [vmem:[%s2 + $0xd4] sm:$0xf]
  %v536 = vld [vmem:[%s2 + $0xd8] sm:$0xf]
  %v537 = vld [vmem:[%s2 + $0xdc] sm:$0xf]
  %v538 = vld [vmem:[%s2 + $0xe0] sm:$0xf]
  %v539 = vld [vmem:[%s2 + $0xe4] sm:$0xf]
  %v540 = vld [vmem:[%s2 + $0xe8] sm:$0xf]
  %v541 = vld [vmem:[%s2 + $0xec] sm:$0xf]
  %v542 = vld [vmem:[%s2 + $0xf0] sm:$0xf]
  %v543 = vld [vmem:[%s2 + $0xf4] sm:$0xf]
  %v544 = vld [vmem:[%s2 + $0xf8] sm:$0xf]
  %v545 = vld [vmem:[%s2 + $0xfc] sm:$0xf]
  %v546 = vunpack.c.l.bf16 %v482
  %v547 = vunpack.c.l.bf16 %v483
  %v548 = vunpack.c.l.bf16 %v484
  %v549 = vunpack.c.l.bf16 %v485
  %v550 = vunpack.c.l.bf16 %v486
  %v551 = vunpack.c.l.bf16 %v487
  %v552 = vunpack.c.l.bf16 %v488
  %v553 = vunpack.c.l.bf16 %v489
  %v554 = vunpack.c.l.bf16 %v490
  %v555 = vunpack.c.l.bf16 %v491
  %v556 = vunpack.c.l.bf16 %v492
  %v557 = vunpack.c.l.bf16 %v493
  %v558 = vunpack.c.l.bf16 %v494
  %v559 = vunpack.c.l.bf16 %v495
  %v560 = vunpack.c.l.bf16 %v496
  %v561 = vunpack.c.l.bf16 %v497
  %v562 = vunpack.c.l.bf16 %v498
  %v563 = vunpack.c.l.bf16 %v499
  %v564 = vunpack.c.l.bf16 %v500
  %v565 = vunpack.c.l.bf16 %v501
  %v566 = vunpack.c.l.bf16 %v502
  %v567 = vunpack.c.l.bf16 %v503
  %v568 = vunpack.c.l.bf16 %v504
  %v569 = vunpack.c.l.bf16 %v505
  %v570 = vunpack.c.l.bf16 %v506
  %v571 = vunpack.c.l.bf16 %v507
  %v572 = vunpack.c.l.bf16 %v508
  %v573 = vunpack.c.l.bf16 %v509
  %v574 = vunpack.c.l.bf16 %v510
  %v575 = vunpack.c.l.bf16 %v511
  %v576 = vunpack.c.l.bf16 %v512
  %v577 = vunpack.c.l.bf16 %v513
  %v578 = vunpack.c.l.bf16 %v514
  %v579 = vunpack.c.l.bf16 %v515
  %v580 = vunpack.c.l.bf16 %v516
  %v581 = vunpack.c.l.bf16 %v517
  %v582 = vunpack.c.l.bf16 %v518
  %v583 = vunpack.c.l.bf16 %v519
  %v584 = vunpack.c.l.bf16 %v520
  %v585 = vunpack.c.l.bf16 %v521
  %v586 = vunpack.c.l.bf16 %v522
  %v587 = vunpack.c.l.bf16 %v523
  %v588 = vunpack.c.l.bf16 %v524
  %v589 = vunpack.c.l.bf16 %v525
  %v590 = vunpack.c.l.bf16 %v526
  %v591 = vunpack.c.l.bf16 %v527
  %v592 = vunpack.c.l.bf16 %v528
  %v593 = vunpack.c.l.bf16 %v529
  %v594 = vunpack.c.l.bf16 %v530
  %v595 = vunpack.c.l.bf16 %v531
  %v596 = vunpack.c.l.bf16 %v532
  %v597 = vunpack.c.l.bf16 %v533
  %v598 = vunpack.c.l.bf16 %v534
  %v599 = vunpack.c.l.bf16 %v535
  %v600 = vunpack.c.l.bf16 %v536
  %v601 = vunpack.c.l.bf16 %v537
  %v602 = vunpack.c.l.bf16 %v538
  %v603 = vunpack.c.l.bf16 %v539
  %v604 = vunpack.c.l.bf16 %v540
  %v605 = vunpack.c.l.bf16 %v541
  %v606 = vunpack.c.l.bf16 %v542
  %v607 = vunpack.c.l.bf16 %v543
  %v608 = vunpack.c.l.bf16 %v544
  %v609 = vunpack.c.l.bf16 %v545
  %v610 = vsub.f32 1.0, %v418
  %v611 = vsub.f32 1.0, %v419
  %v612 = vsub.f32 1.0, %v420
  %v613 = vsub.f32 1.0, %v421
  %v614 = vsub.f32 1.0, %v422
  %v615 = vsub.f32 1.0, %v423
  %v616 = vsub.f32 1.0, %v424
  %v617 = vsub.f32 1.0, %v425
  %v618 = vsub.f32 1.0, %v426
  %v619 = vsub.f32 1.0, %v427
  %v620 = vsub.f32 1.0, %v428
  %v621 = vsub.f32 1.0, %v429
  %v622 = vsub.f32 1.0, %v430
  %v623 = vsub.f32 1.0, %v431
  %v624 = vsub.f32 1.0, %v432
  %v625 = vsub.f32 1.0, %v433
  %v626 = vsub.f32 1.0, %v434
  %v627 = vsub.f32 1.0, %v435
  %v628 = vsub.f32 1.0, %v436
  %v629 = vsub.f32 1.0, %v437
  %v630 = vsub.f32 1.0, %v438
  %v631 = vsub.f32 1.0, %v439
  %v632 = vsub.f32 1.0, %v440
  %v633 = vsub.f32 1.0, %v441
  %v634 = vsub.f32 1.0, %v442
  %v635 = vsub.f32 1.0, %v443
  %v636 = vsub.f32 1.0, %v444
  %v637 = vsub.f32 1.0, %v445
  %v638 = vsub.f32 1.0, %v446
  %v639 = vsub.f32 1.0, %v447
  %v640 = vsub.f32 1.0, %v448
  %v641 = vsub.f32 1.0, %v449
  %v642 = vsub.f32 1.0, %v450
  %v643 = vsub.f32 1.0, %v451
  %v644 = vsub.f32 1.0, %v452
  %v645 = vsub.f32 1.0, %v453
  %v646 = vsub.f32 1.0, %v454
  %v647 = vsub.f32 1.0, %v455
  %v648 = vsub.f32 1.0, %v456
  %v649 = vsub.f32 1.0, %v457
  %v650 = vsub.f32 1.0, %v458
  %v651 = vsub.f32 1.0, %v459
  %v652 = vsub.f32 1.0, %v460
  %v653 = vsub.f32 1.0, %v461
  %v654 = vsub.f32 1.0, %v462
  %v655 = vsub.f32 1.0, %v463
  %v656 = vsub.f32 1.0, %v464
  %v657 = vsub.f32 1.0, %v465
  %v658 = vsub.f32 1.0, %v466
  %v659 = vsub.f32 1.0, %v467
  %v660 = vsub.f32 1.0, %v468
  %v661 = vsub.f32 1.0, %v469
  %v662 = vsub.f32 1.0, %v470
  %v663 = vsub.f32 1.0, %v471
  %v664 = vsub.f32 1.0, %v472
  %v665 = vsub.f32 1.0, %v473
  %v666 = vsub.f32 1.0, %v474
  %v667 = vsub.f32 1.0, %v475
  %v668 = vsub.f32 1.0, %v476
  %v669 = vsub.f32 1.0, %v477
  %v670 = vsub.f32 1.0, %v478
  %v671 = vsub.f32 1.0, %v479
  %v672 = vsub.f32 1.0, %v480
  %v673 = vsub.f32 1.0, %v481
  %v674 = vmul.f32 %v610, %v546
  %v675 = vmul.f32 %v611, %v547
  %v676 = vmul.f32 %v612, %v548
  %v677 = vmul.f32 %v613, %v549
  %v678 = vmul.f32 %v614, %v550
  %v679 = vmul.f32 %v615, %v551
  %v680 = vmul.f32 %v616, %v552
  %v681 = vmul.f32 %v617, %v553
  %v682 = vmul.f32 %v618, %v554
  %v683 = vmul.f32 %v619, %v555
  %v684 = vmul.f32 %v620, %v556
  %v685 = vmul.f32 %v621, %v557
  %v686 = vmul.f32 %v622, %v558
  %v687 = vmul.f32 %v623, %v559
  %v688 = vmul.f32 %v624, %v560
  %v689 = vmul.f32 %v625, %v561
  %v690 = vmul.f32 %v626, %v562
  %v691 = vmul.f32 %v627, %v563
  %v692 = vmul.f32 %v628, %v564
  %v693 = vmul.f32 %v629, %v565
  %v694 = vmul.f32 %v630, %v566
  %v695 = vmul.f32 %v631, %v567
  %v696 = vmul.f32 %v632, %v568
  %v697 = vmul.f32 %v633, %v569
  %v698 = vmul.f32 %v634, %v570
  %v699 = vmul.f32 %v635, %v571
  %v700 = vmul.f32 %v636, %v572
  %v701 = vmul.f32 %v637, %v573
  %v702 = vmul.f32 %v638, %v574
  %v703 = vmul.f32 %v639, %v575
  %v704 = vmul.f32 %v640, %v576
  %v705 = vmul.f32 %v641, %v577
  %v706 = vmul.f32 %v642, %v578
  %v707 = vmul.f32 %v643, %v579
  %v708 = vmul.f32 %v644, %v580
  %v709 = vmul.f32 %v645, %v581
  %v710 = vmul.f32 %v646, %v582
  %v711 = vmul.f32 %v647, %v583
  %v712 = vmul.f32 %v648, %v584
  %v713 = vmul.f32 %v649, %v585
  %v714 = vmul.f32 %v650, %v586
  %v715 = vmul.f32 %v651, %v587
  %v716 = vmul.f32 %v652, %v588
  %v717 = vmul.f32 %v653, %v589
  %v718 = vmul.f32 %v654, %v590
  %v719 = vmul.f32 %v655, %v591
  %v720 = vmul.f32 %v656, %v592
  %v721 = vmul.f32 %v657, %v593
  %v722 = vmul.f32 %v658, %v594
  %v723 = vmul.f32 %v659, %v595
  %v724 = vmul.f32 %v660, %v596
  %v725 = vmul.f32 %v661, %v597
  %v726 = vmul.f32 %v662, %v598
  %v727 = vmul.f32 %v663, %v599
  %v728 = vmul.f32 %v664, %v600
  %v729 = vmul.f32 %v665, %v601
  %v730 = vmul.f32 %v666, %v602
  %v731 = vmul.f32 %v667, %v603
  %v732 = vmul.f32 %v668, %v604
  %v733 = vmul.f32 %v669, %v605
  %v734 = vmul.f32 %v670, %v606
  %v735 = vmul.f32 %v671, %v607
  %v736 = vmul.f32 %v672, %v608
  %v737 = vmul.f32 %v673, %v609
  %v738 = vmul.f32 %v418, %v290
  %v739 = vmul.f32 %v419, %v291
  %v740 = vmul.f32 %v420, %v292
  %v741 = vmul.f32 %v421, %v293
  %v742 = vmul.f32 %v422, %v294
  %v743 = vmul.f32 %v423, %v295
  %v744 = vmul.f32 %v424, %v296
  %v745 = vmul.f32 %v425, %v297
  %v746 = vmul.f32 %v426, %v298
  %v747 = vmul.f32 %v427, %v299
  %v748 = vmul.f32 %v428, %v300
  %v749 = vmul.f32 %v429, %v301
  %v750 = vmul.f32 %v430, %v302
  %v751 = vmul.f32 %v431, %v303
  %v752 = vmul.f32 %v432, %v304
  %v753 = vmul.f32 %v433, %v305
  %v754 = vmul.f32 %v434, %v306
  %v755 = vmul.f32 %v435, %v307
  %v756 = vmul.f32 %v436, %v308
  %v757 = vmul.f32 %v437, %v309
  %v758 = vmul.f32 %v438, %v310
  %v759 = vmul.f32 %v439, %v311
  %v760 = vmul.f32 %v440, %v312
  %v761 = vmul.f32 %v441, %v313
  %v762 = vmul.f32 %v442, %v314
  %v763 = vmul.f32 %v443, %v315
  %v764 = vmul.f32 %v444, %v316
  %v765 = vmul.f32 %v445, %v317
  %v766 = vmul.f32 %v446, %v318
  %v767 = vmul.f32 %v447, %v319
  %v768 = vmul.f32 %v448, %v320
  %v769 = vmul.f32 %v449, %v321
  %v770 = vmul.f32 %v450, %v322
  %v771 = vmul.f32 %v451, %v323
  %v772 = vmul.f32 %v452, %v324
  %v773 = vmul.f32 %v453, %v325
  %v774 = vmul.f32 %v454, %v326
  %v775 = vmul.f32 %v455, %v327
  %v776 = vmul.f32 %v456, %v328
  %v777 = vmul.f32 %v457, %v329
  %v778 = vmul.f32 %v458, %v330
  %v779 = vmul.f32 %v459, %v331
  %v780 = vmul.f32 %v460, %v332
  %v781 = vmul.f32 %v461, %v333
  %v782 = vmul.f32 %v462, %v334
  %v783 = vmul.f32 %v463, %v335
  %v784 = vmul.f32 %v464, %v336
  %v785 = vmul.f32 %v465, %v337
  %v786 = vmul.f32 %v466, %v338
  %v787 = vmul.f32 %v467, %v339
  %v788 = vmul.f32 %v468, %v340
  %v789 = vmul.f32 %v469, %v341
  %v790 = vmul.f32 %v470, %v342
  %v791 = vmul.f32 %v471, %v343
  %v792 = vmul.f32 %v472, %v344
  %v793 = vmul.f32 %v473, %v345
  %v794 = vmul.f32 %v474, %v346
  %v795 = vmul.f32 %v475, %v347
  %v796 = vmul.f32 %v476, %v348
  %v797 = vmul.f32 %v477, %v349
  %v798 = vmul.f32 %v478, %v350
  %v799 = vmul.f32 %v479, %v351
  %v800 = vmul.f32 %v480, %v352
  %v801 = vmul.f32 %v481, %v353
  %v802 = vadd.f32 %v674, %v738
  %v803 = vadd.f32 %v675, %v739
  %v804 = vadd.f32 %v676, %v740
  %v805 = vadd.f32 %v677, %v741
  %v806 = vadd.f32 %v678, %v742
  %v807 = vadd.f32 %v679, %v743
  %v808 = vadd.f32 %v680, %v744
  %v809 = vadd.f32 %v681, %v745
  %v810 = vadd.f32 %v682, %v746
  %v811 = vadd.f32 %v683, %v747
  %v812 = vadd.f32 %v684, %v748
  %v813 = vadd.f32 %v685, %v749
  %v814 = vadd.f32 %v686, %v750
  %v815 = vadd.f32 %v687, %v751
  %v816 = vadd.f32 %v688, %v752
  %v817 = vadd.f32 %v689, %v753
  %v818 = vadd.f32 %v690, %v754
  %v819 = vadd.f32 %v691, %v755
  %v820 = vadd.f32 %v692, %v756
  %v821 = vadd.f32 %v693, %v757
  %v822 = vadd.f32 %v694, %v758
  %v823 = vadd.f32 %v695, %v759
  %v824 = vadd.f32 %v696, %v760
  %v825 = vadd.f32 %v697, %v761
  %v826 = vadd.f32 %v698, %v762
  %v827 = vadd.f32 %v699, %v763
  %v828 = vadd.f32 %v700, %v764
  %v829 = vadd.f32 %v701, %v765
  %v830 = vadd.f32 %v702, %v766
  %v831 = vadd.f32 %v703, %v767
  %v832 = vadd.f32 %v704, %v768
  %v833 = vadd.f32 %v705, %v769
  %v834 = vadd.f32 %v706, %v770
  %v835 = vadd.f32 %v707, %v771
  %v836 = vadd.f32 %v708, %v772
  %v837 = vadd.f32 %v709, %v773
  %v838 = vadd.f32 %v710, %v774
  %v839 = vadd.f32 %v711, %v775
  %v840 = vadd.f32 %v712, %v776
  %v841 = vadd.f32 %v713, %v777
  %v842 = vadd.f32 %v714, %v778
  %v843 = vadd.f32 %v715, %v779
  %v844 = vadd.f32 %v716, %v780
  %v845 = vadd.f32 %v717, %v781
  %v846 = vadd.f32 %v718, %v782
  %v847 = vadd.f32 %v719, %v783
  %v848 = vadd.f32 %v720, %v784
  %v849 = vadd.f32 %v721, %v785
  %v850 = vadd.f32 %v722, %v786
  %v851 = vadd.f32 %v723, %v787
  %v852 = vadd.f32 %v724, %v788
  %v853 = vadd.f32 %v725, %v789
  %v854 = vadd.f32 %v726, %v790
  %v855 = vadd.f32 %v727, %v791
  %v856 = vadd.f32 %v728, %v792
  %v857 = vadd.f32 %v729, %v793
  %v858 = vadd.f32 %v730, %v794
  %v859 = vadd.f32 %v731, %v795
  %v860 = vadd.f32 %v732, %v796
  %v861 = vadd.f32 %v733, %v797
  %v862 = vadd.f32 %v734, %v798
  %v863 = vadd.f32 %v735, %v799
  %v864 = vadd.f32 %v736, %v800
  %v865 = vadd.f32 %v737, %v801
  %866 = vst [vmem:[%s5] sm:$0xff] %v802
  %867 = vst [vmem:[%s5 + $0x8] sm:$0xff] %v803
  %868 = vst [vmem:[%s5 + $0x10] sm:$0xff] %v804
  %869 = vst [vmem:[%s5 + $0x18] sm:$0xff] %v805
  %870 = vst [vmem:[%s5 + $0x20] sm:$0xff] %v806
  %871 = vst [vmem:[%s5 + $0x28] sm:$0xff] %v807
  %872 = vst [vmem:[%s5 + $0x30] sm:$0xff] %v808
  %873 = vst [vmem:[%s5 + $0x38] sm:$0xff] %v809
  %874 = vst [vmem:[%s5 + $0x40] sm:$0xff] %v810
  %875 = vst [vmem:[%s5 + $0x48] sm:$0xff] %v811
  %876 = vst [vmem:[%s5 + $0x50] sm:$0xff] %v812
  %877 = vst [vmem:[%s5 + $0x58] sm:$0xff] %v813
  %878 = vst [vmem:[%s5 + $0x60] sm:$0xff] %v814
  %879 = vst [vmem:[%s5 + $0x68] sm:$0xff] %v815
  %880 = vst [vmem:[%s5 + $0x70] sm:$0xff] %v816
  %881 = vst [vmem:[%s5 + $0x78] sm:$0xff] %v817
  %882 = vst [vmem:[%s5 + $0x80] sm:$0xff] %v818
  %883 = vst [vmem:[%s5 + $0x88] sm:$0xff] %v819
  %884 = vst [vmem:[%s5 + $0x90] sm:$0xff] %v820
  %885 = vst [vmem:[%s5 + $0x98] sm:$0xff] %v821
  %886 = vst [vmem:[%s5 + $0xa0] sm:$0xff] %v822
  %887 = vst [vmem:[%s5 + $0xa8] sm:$0xff] %v823
  %888 = vst [vmem:[%s5 + $0xb0] sm:$0xff] %v824
  %889 = vst [vmem:[%s5 + $0xb8] sm:$0xff] %v825
  %890 = vst [vmem:[%s5 + $0xc0] sm:$0xff] %v826
  %891 = vst [vmem:[%s5 + $0xc8] sm:$0xff] %v827
  %892 = vst [vmem:[%s5 + $0xd0] sm:$0xff] %v828
  %893 = vst [vmem:[%s5 + $0xd8] sm:$0xff] %v829
  %894 = vst [vmem:[%s5 + $0xe0] sm:$0xff] %v830
  %895 = vst [vmem:[%s5 + $0xe8] sm:$0xff] %v831
  %896 = vst [vmem:[%s5 + $0xf0] sm:$0xff] %v832
  %897 = vst [vmem:[%s5 + $0xf8] sm:$0xff] %v833
  %898 = vst [vmem:[%s5 + $0x100] sm:$0xff] %v834
  %899 = vst [vmem:[%s5 + $0x108] sm:$0xff] %v835
  %900 = vst [vmem:[%s5 + $0x110] sm:$0xff] %v836
  %901 = vst [vmem:[%s5 + $0x118] sm:$0xff] %v837
  %902 = vst [vmem:[%s5 + $0x120] sm:$0xff] %v838
  %903 = vst [vmem:[%s5 + $0x128] sm:$0xff] %v839
  %904 = vst [vmem:[%s5 + $0x130] sm:$0xff] %v840
  %905 = vst [vmem:[%s5 + $0x138] sm:$0xff] %v841
  %906 = vst [vmem:[%s5 + $0x140] sm:$0xff] %v842
  %907 = vst [vmem:[%s5 + $0x148] sm:$0xff] %v843
  %908 = vst [vmem:[%s5 + $0x150] sm:$0xff] %v844
  %909 = vst [vmem:[%s5 + $0x158] sm:$0xff] %v845
  %910 = vst [vmem:[%s5 + $0x160] sm:$0xff] %v846
  %911 = vst [vmem:[%s5 + $0x168] sm:$0xff] %v847
  %912 = vst [vmem:[%s5 + $0x170] sm:$0xff] %v848
  %913 = vst [vmem:[%s5 + $0x178] sm:$0xff] %v849
  %914 = vst [vmem:[%s5 + $0x180] sm:$0xff] %v850
  %915 = vst [vmem:[%s5 + $0x188] sm:$0xff] %v851
  %916 = vst [vmem:[%s5 + $0x190] sm:$0xff] %v852
  %917 = vst [vmem:[%s5 + $0x198] sm:$0xff] %v853
  %918 = vst [vmem:[%s5 + $0x1a0] sm:$0xff] %v854
  %919 = vst [vmem:[%s5 + $0x1a8] sm:$0xff] %v855
  %920 = vst [vmem:[%s5 + $0x1b0] sm:$0xff] %v856
  %921 = vst [vmem:[%s5 + $0x1b8] sm:$0xff] %v857
  %922 = vst [vmem:[%s5 + $0x1c0] sm:$0xff] %v858
  %923 = vst [vmem:[%s5 + $0x1c8] sm:$0xff] %v859
  %924 = vst [vmem:[%s5 + $0x1d0] sm:$0xff] %v860
  %925 = vst [vmem:[%s5 + $0x1d8] sm:$0xff] %v861
  %926 = vst [vmem:[%s5 + $0x1e0] sm:$0xff] %v862
  %927 = vst [vmem:[%s5 + $0x1e8] sm:$0xff] %v863
  %928 = vst [vmem:[%s5 + $0x1f0] sm:$0xff] %v864
  %929 = vst [vmem:[%s5 + $0x1f8] sm:$0xff] %v865
  // Predicated region
  $region22: #{conv_gru_cell_forward.9} parent=0 // pred_check
    _
  $region23: #{conv_gru_cell_forward.9} parent=0 // pred_check_branch
    %931 = sbr.rel (0) target = $region25
  $region24: #{conv_gru_cell_forward.9} parent=0 // pred_region
    _
  $region25: #{conv_gru_cell_forward.9} parent=0 // pred_fallthru
    _
  // Predicated region
  $region26: #{conv_gru_cell_forward.9} parent=0 // pred_check
    _
  $region27: #{conv_gru_cell_forward.9} parent=0 // pred_check_branch
    %933 = sbr.rel (0) target = $region29
  $region28: #{conv_gru_cell_forward.9} parent=0 // pred_region
    _
  $region29: #{conv_gru_cell_forward.9} parent=0 // pred_fallthru
    _

</llo_original>
